<compile_context>
chip_gen: v5e
topology: v5e:2x2
jax: 0.10.0
libtpu: 0.0.40
codegen_flags: <defaults>
</compile_context>

<pallas_src>
import functools

import jax
import jax.numpy as jnp
from jax.experimental import pallas as pl
from jax.experimental.pallas import tpu as pltpu


# ------------------------------------------------------------------ utilities
def _round_up(x, m):
    return (x + m - 1) // m * m


def _divisor_tile(dim, cap):
    """Largest multiple of 128 that divides `dim` and is <= cap; falls back to full dim."""
    if dim % 128 != 0:
        return dim  # full-extent block (always legal)
    best = 128
    t = 128
    while t <= min(dim, cap):
        if dim % t == 0:
            best = t
        t += 128
    return best


def _mm_vmem_limit(tm, tn, tk, out_bytes, extra_bytes=0):
    """Scoped-VMEM request derived from the actual tile footprint (double buffers + f32 acc)."""
    est = (2 * tm * tk * 2            # A tiles, bf16, double buffered
           + 2 * tk * tn * 2          # B tiles, bf16, double buffered
           + 2 * tn * 4               # bias
           + 2 * tm * tn * out_bytes  # output tiles
           + tm * tn * 4              # f32 accumulator scratch
           + extra_bytes)
    # 2x headroom for Mosaic internal scratch / re-layouts; cap at v7x's 64 MiB per-TC VMEM.
    return int(min(64 * 2**20, max(8 * 2**20, 2 * est)))


# ------------------------------------------------------------------ Pallas kernels
def _matmul_bias_kernel(a_ref, b_ref, bias_ref, o_ref, acc_ref, *, relu):
    """Tiled (tm,tk)@(tk,tn) on the MXU, f32 VMEM accumulator, fused bias(+ReLU) epilogue."""
    @pl.when(pl.program_id(2) == 0)
    def _():
        acc_ref[...] = jnp.zeros_like(acc_ref)

    acc_ref[...] += jnp.dot(a_ref[...], b_ref[...], preferred_element_type=jnp.float32)

    @pl.when(pl.program_id(2) == pl.num_programs(2) - 1)
    def _():
        out = acc_ref[...] + bias_ref[...]
        if relu:
            out = jnp.maximum(out, 0.0)
        o_ref[...] = out.astype(o_ref.dtype)


def _matmul_bias_emb_kernel(a_ref, b_ref, bias_ref, w2_ref, o_ref, o2_ref, acc_ref, *, relu):
    """Conv matmul with a second fused (tm,N)@(N,N2) dot in the epilogue (emb_features 1x1).

    Grid is (M blocks, K blocks); N is a single resident tile so the accumulator holds full
    feature rows for the second dot.  Rows of a ragged last M block are garbage but never
    stored (output BlockSpec clips them) and rows are independent in both dots.
    """
    @pl.when(pl.program_id(1) == 0)
    def _():
        acc_ref[...] = jnp.zeros_like(acc_ref)

    acc_ref[...] += jnp.dot(a_ref[...], b_ref[...], preferred_element_type=jnp.float32)

    @pl.when(pl.program_id(1) == pl.num_programs(1) - 1)
    def _():
        feat = acc_ref[...] + bias_ref[...]
        if relu:
            feat = jnp.maximum(feat, 0.0)
        o_ref[...] = feat.astype(o_ref.dtype)
        o2_ref[...] = jnp.dot(feat.astype(jnp.bfloat16), w2_ref[...],
                              preferred_element_type=jnp.float32)


def _maxpool_3x3_s2_kernel(x_ref, o_ref):
    """3x3/stride-2 max-pool from an even/odd-split view: (1,Ho+1,2,Wo+1,2C) -> (1,Ho,Wo,C).

    x_view[b, i, s, j, q*C + c] == x[b, 2i+s, 2j+q, c]; the 9 window taps are static slices.
    """
    _, Ho, Wo, C = o_ref.shape
    v = x_ref[...].astype(jnp.float32)
    m = None
    for a, p in ((0, 0), (0, 1), (1, 0)):          # row offset 2a+p in {0,1,2}
        for b, q in ((0, 0), (0, 1), (1, 0)):      # col offset 2b+q in {0,1,2}
            t = v[0, a:a + Ho, p, b:b + Wo, q * C:(q + 1) * C]
            m = t if m is None else jnp.maximum(m, t)
    o_ref[0] = m.astype(o_ref.dtype)


def _avgpool_linear_kernel(x_ref, w_ref, bias_ref, o_ref):
    """Global avg-pool + Linear: sum over HW (f32), bf16 dot (1/HW folded into w), f32 bias."""
    pooled = jnp.sum(x_ref[...].astype(jnp.float32), axis=1)            # (tb, C)
    o_ref[...] = (
        jnp.dot(pooled.astype(jnp.bfloat16), w_ref[...], preferred_element_type=jnp.float32)
        + bias_ref[...]
    )


# ------------------------------------------------------------------ kernel wrappers
def matmul_bias(a, b, bias=None, relu=False, out_dtype=jnp.float32,
                tm_cap=256, tn_cap=512, tk_cap=2048):
    """a: (M, K), b: (K, N), bias: (N,) or None -> (M, N).

    bf16 operands, f32 VMEM accumulator, (M,N,K) grid with K last, ragged M via cdiv clipping.
    """
    M, K = a.shape
    _, N = b.shape
    if bias is None:
        bias = jnp.zeros((1, N), jnp.float32)
    else:
        bias = bias.reshape(1, N).astype(jnp.float32)

    a = a.astype(jnp.bfloat16)
    b = b.astype(jnp.bfloat16)

    tn = _divisor_tile(N, tn_cap)
    tk = _divisor_tile(K, tk_cap)
    tm = min(tm_cap, _round_up(M, 16))             # multiple of 16 (bf16 sublane packing)
    if N // tn == 1 and tm >= M and M >= 32:       # keep >=2 parallel blocks (v7x megacore)
        tm = _round_up(pl.cdiv(M, 2), 16)
    grid = (pl.cdiv(M, tm), N // tn, K // tk)

    out_bytes = jnp.dtype(out_dtype).itemsize
    out = pl.pallas_call(
        functools.partial(_matmul_bias_kernel, relu=relu),
        out_shape=jax.ShapeDtypeStruct((M, N), out_dtype),
        grid=grid,
        in_specs=[
            pl.BlockSpec((tm, tk), lambda i, j, k: (i, k)),
            pl.BlockSpec((tk, tn), lambda i, j, k: (k, j)),
            pl.BlockSpec((1, tn), lambda i, j, k: (0, j)),
        ],
        out_specs=pl.BlockSpec((tm, tn), lambda i, j, k: (i, j)),
        scratch_shapes=[pltpu.VMEM((tm, tn), jnp.float32)],
        compiler_params=pltpu.CompilerParams(
            dimension_semantics=("parallel", "parallel", "arbitrary"),
            vmem_limit_bytes=_mm_vmem_limit(tm, tn, tk, out_bytes),
        ),
    )(a, b, bias)
    return out


def matmul_bias_fused_emb(a, b, bias, w2, relu=True, out_dtype=jnp.bfloat16,
                          tm_cap=256, tk_cap=2048):
    """(M,K)@(K,N)+bias(+ReLU) with a fused (M,N)@(N,N2) epilogue dot (emb_features)."""
    M, K = a.shape
    _, N = b.shape
    N2 = w2.shape[1]
    a = a.astype(jnp.bfloat16)
    b = b.astype(jnp.bfloat16)
    w2 = w2.astype(jnp.bfloat16)
    bias = bias.reshape(1, N).astype(jnp.float32)

    tk = _divisor_tile(K, tk_cap)
    tm = min(tm_cap, _round_up(M, 16))
    if tm >= M and M >= 32:
        tm = _round_up(pl.cdiv(M, 2), 16)
    grid = (pl.cdiv(M, tm), K // tk)

    vmem = _mm_vmem_limit(tm, N, tk, out_bytes=2,
                          extra_bytes=2 * N * N2 * 2 + 2 * tm * N2 * 4)
    feat, emb = pl.pallas_call(
        functools.partial(_matmul_bias_emb_kernel, relu=relu),
        out_shape=(jax.ShapeDtypeStruct((M, N), out_dtype),
                   jax.ShapeDtypeStruct((M, N2), jnp.float32)),
        grid=grid,
        in_specs=[
            pl.BlockSpec((tm, tk), lambda i, k: (i, k)),
            pl.BlockSpec((tk, N), lambda i, k: (k, 0)),
            pl.BlockSpec((1, N), lambda i, k: (0, 0)),
            pl.BlockSpec((N, N2), lambda i, k: (0, 0)),
        ],
        out_specs=(pl.BlockSpec((tm, N), lambda i, k: (i, 0)),
                   pl.BlockSpec((tm, N2), lambda i, k: (i, 0))),
        scratch_shapes=[pltpu.VMEM((tm, N), jnp.float32)],
        compiler_params=pltpu.CompilerParams(
            dimension_semantics=("parallel", "arbitrary"),
            vmem_limit_bytes=vmem,
        ),
    )(a, b, bias, w2)
    return feat, emb


def _im2col(x, kh, kw, stride, pad):
    """x: (B, H, W, Cin_logical) -> patches (B, Ho, Wo, Kp), Kp = round_up(kh*kw*Cin, 128).

    Patch columns ordered (dy, dx, cin); the pad to Kp is zero-filled (matches zero weight rows).
    """
    B, H, W, C = x.shape
    if pad:
        x = jnp.pad(x, ((0, 0), (pad, pad), (pad, pad), (0, 0)))
        H += 2 * pad
        W += 2 * pad
    Ho = (H - kh) // stride + 1
    Wo = (W - kw) // stride + 1
    cols = []
    for dy in range(kh):
        for dx in range(kw):
            cols.append(
                x[:, dy:dy + stride * (Ho - 1) + 1:stride,
                     dx:dx + stride * (Wo - 1) + 1:stride, :]
            )
    k_log = kh * kw * C
    kp = _round_up(k_log, 128)
    if kp > k_log:
        cols.append(jnp.zeros((B, Ho, Wo, kp - k_log), x.dtype))
    return jnp.concatenate(cols, axis=-1), Ho, Wo, kp


def conv2d(x, w_mat, bias, *, cin, ksize, stride=1, pad=0, relu=True, out_dtype=jnp.bfloat16):
    """x: (B, H, W, Cstore) NHWC bf16; w_mat: (round_up(k*k*cin,128), Cout_p) matmul weight."""
    B = x.shape[0]
    x = x[..., :cin]                                   # drop layout-padding channels
    patches, Ho, Wo, kp = _im2col(x.astype(jnp.bfloat16), ksize, ksize, stride, pad)
    a = patches.reshape(B * Ho * Wo, kp)
    out = matmul_bias(a, w_mat, bias=bias, relu=relu, out_dtype=out_dtype)
    return out.reshape(B, Ho, Wo, w_mat.shape[1])


def maxpool2d_3x3_s2(x):
    """F.max_pool2d(x, kernel_size=3, stride=2) on NHWC input, in-kernel 3x3 windowing."""
    B, H, W, C = x.shape
    Ho = (H - 3) // 2 + 1
    Wo = (W - 3) // 2 + 1
    Hp, Wp = 2 * (Ho + 1), 2 * (Wo + 1)
    # pad so the even/odd split is exact; padded rows/cols are never selected by the windows.
    xp = jnp.pad(x, ((0, 0), (0, Hp - H), (0, Wp - W), (0, 0)))
    xr = xp.reshape(B, Ho + 1, 2, Wo + 1, 2 * C)       # [b, i, s, j, q*C+c] = xp[b, 2i+s, 2j+q, c]
    out = pl.pallas_call(
        _maxpool_3x3_s2_kernel,
        out_shape=jax.ShapeDtypeStruct((B, Ho, Wo, C), x.dtype),
        grid=(B,),
        in_specs=[pl.BlockSpec((1, Ho + 1, 2, Wo + 1, 2 * C),
                               lambda b: (b, 0, 0, 0, 0))],
        out_specs=pl.BlockSpec((1, Ho, Wo, C), lambda b: (b, 0, 0, 0)),
        compiler_params=pltpu.CompilerParams(dimension_semantics=("parallel",)),
    )(xr)
    return out


def avgpool_linear(x, w, bias):
    """F.avg_pool2d(global) + view + nn.Linear fused: x (B,H,W,C) -> (B, Np)."""
    B, H, W, C = x.shape
    Np = w.shape[1]
    xr = x.reshape(B, H * W, C).astype(jnp.bfloat16)
    w_b = (w.astype(jnp.float32) * (1.0 / float(H * W))).astype(jnp.bfloat16)  # fold mean into w
    bias = bias.reshape(1, Np).astype(jnp.float32)
    tb = 8 if B > 8 else B
    return pl.pallas_call(
        _avgpool_linear_kernel,
        out_shape=jax.ShapeDtypeStruct((B, Np), jnp.float32),
        grid=(pl.cdiv(B, tb),),
        in_specs=[
            pl.BlockSpec((tb, H * W, C), lambda i: (i, 0, 0)),
            pl.BlockSpec((C, Np), lambda i: (0, 0)),
            pl.BlockSpec((1, Np), lambda i: (0, 0)),
        ],
        out_specs=pl.BlockSpec((tb, Np), lambda i: (i, 0)),
        compiler_params=pltpu.CompilerParams(dimension_semantics=("parallel",)),
    )(xr, w_b, bias)


# ------------------------------------------------------------------ parameters
def fold_bn(w, gamma, beta, mean, var, eps=1e-3):
    """Fold frozen BatchNorm (Inception BasicConv2d, eval mode) into conv weight/bias."""
    scale = gamma / jnp.sqrt(var + eps)
    return w * scale[:, None, None, None], beta - mean * scale


def _conv_to_matmul(w_f, b_f, cin, cout, ksz):
    """PyTorch (Cout,Cin,kh,kw) conv -> (round_up(k*k*Cin,128), Cout_p) bf16 matmul weight."""
    k_log = ksz * ksz * cin
    kp = _round_up(k_log, 128)
    coutp = _round_up(cout, 128)
    w_t = jnp.transpose(w_f, (2, 3, 1, 0)).reshape(k_log, cout)       # (dy, dx, cin) x cout
    w_mat = jnp.pad(w_t, ((0, kp - k_log), (0, coutp - cout))).astype(jnp.bfloat16)
    bias = jnp.pad(b_f, (0, coutp - cout)).astype(jnp.float32)
    return w_mat, bias


CFG = dict(
    resize=35,      # stands in for the 299x299 resize (same stem arithmetic, ~1/8 scale)
    nef=32,
    c_feat=96,      # stands in for 768  (Mixed_6e output channels)
    c_final=256,    # stands in for 2048 (Mixed_7c output channels)
)


def init_params(key):
    def basic_conv(k, cin, cout, ksz):
        k1, k2, k3, k4, k5 = jax.random.split(k, 5)
        w = 0.1 * jax.random.normal(k1, (cout, cin, ksz, ksz), jnp.float32)
        gamma = 1.0 + 0.01 * jax.random.normal(k2, (cout,), jnp.float32)
        beta = 0.01 * jax.random.normal(k3, (cout,), jnp.float32)
        mean = 0.01 * jax.random.normal(k4, (cout,), jnp.float32)
        var = jnp.abs(1.0 + 0.01 * jax.random.normal(k5, (cout,), jnp.float32))
        w_f, b_f = fold_bn(w, gamma, beta, mean, var)
        return _conv_to_matmul(w_f, b_f, cin, cout, ksz)

    keys = jax.random.split(key, 10)
    p = {}
    # inception stem (frozen), reduced channels (real: 32, 32, 64, 80, 192)
    p["conv1a"] = basic_conv(keys[0], 3, 4, 3)     # Conv2d_1a_3x3 stride 2
    p["conv2a"] = basic_conv(keys[1], 4, 4, 3)     # Conv2d_2a_3x3
    p["conv2b"] = basic_conv(keys[2], 4, 8, 3)     # Conv2d_2b_3x3 pad 1
    p["conv3b"] = basic_conv(keys[3], 8, 10, 1)    # Conv2d_3b_1x1
    p["conv4a"] = basic_conv(keys[4], 10, 24, 3)   # Conv2d_4a_3x3
    # Mixed-block stand-ins (see TODO(synk) at top)
    p["mixed_mid"] = basic_conv(keys[5], 24, CFG["c_feat"], 3)                  # Mixed_5b..6e
    p["mixed_late"] = basic_conv(keys[6], CFG["c_feat"], CFG["c_final"], 3)     # Mixed_7a..7c

    nefp = _round_up(CFG["nef"], 128)
    cfeatp = _round_up(CFG["c_feat"], 128)
    # trainable heads: init_trainable_weights -> uniform(-0.1, 0.1); padded dims hold zeros
    w_feat = jax.random.uniform(keys[7], (CFG["c_feat"], CFG["nef"]), jnp.float32, -0.1, 0.1)
    p["emb_features_w"] = jnp.pad(w_feat, ((0, cfeatp - CFG["c_feat"]), (0, nefp - CFG["nef"])))
    w_code = jax.random.uniform(keys[8], (CFG["c_final"], CFG["nef"]), jnp.float32, -0.1, 0.1)
    p["emb_cnn_code_w"] = jnp.pad(w_code, ((0, 0), (0, nefp - CFG["nef"])))
    b_code = jax.random.uniform(keys[9], (CFG["nef"],), jnp.float32, -0.01, 0.01)
    p["emb_cnn_code_b"] = jnp.pad(b_code, (0, nefp - CFG["nef"]))
    return p


# ------------------------------------------------------------------ forward
@jax.jit
def cnn_encoder_forward(params, x_nchw):
    """Mirrors CNN_ENCODER.forward. Input NCHW f32, outputs (features NCHW, cnn_code)."""
    B, C_in, _, _ = x_nchw.shape
    S = CFG["resize"]
    # nn.functional.interpolate(..., mode='bilinear', align_corners=False)
    x = jax.image.resize(x_nchw, (B, C_in, S, S), method="bilinear", antialias=False)
    x = jnp.transpose(x, (0, 2, 3, 1)).astype(jnp.bfloat16)              # NHWC, bf16 activations

    x = conv2d(x, *params["conv1a"], cin=3, ksize=3, stride=2, pad=0)    # Conv2d_1a_3x3  -> 17x17
    x = conv2d(x, *params["conv2a"], cin=4, ksize=3, stride=1, pad=0)    # Conv2d_2a_3x3  -> 15x15
    x = conv2d(x, *params["conv2b"], cin=4, ksize=3, stride=1, pad=1)    # Conv2d_2b_3x3  -> 15x15
    x = maxpool2d_3x3_s2(x)                                              # F.max_pool2d   -> 7x7
    x = conv2d(x, *params["conv3b"], cin=8, ksize=1, stride=1, pad=0)    # Conv2d_3b_1x1
    x = conv2d(x, *params["conv4a"], cin=10, ksize=3, stride=1, pad=0)   # Conv2d_4a_3x3  -> 5x5
    x = maxpool2d_3x3_s2(x)                                              # F.max_pool2d   -> 2x2

    # TODO(synk): Mixed_5b..Mixed_6e stand-in (frozen pretrained Inception blocks).
    # Fused with the emb_features 1x1 conv (bias=False, no activation) in the matmul epilogue.
    w_mid, b_mid = params["mixed_mid"]
    patches, Hf, Wf, kp = _im2col(x[..., :24].astype(jnp.bfloat16), 3, 3, 1, 1)
    a = patches.reshape(B * Hf * Wf, kp)
    feat128, emb = matmul_bias_fused_emb(a, w_mid, b_mid, params["emb_features_w"], relu=True)
    features_x = feat128.reshape(B, Hf, Wf, w_mid.shape[1])              # feeds Mixed_7a..7c
    features = jnp.transpose(
        emb.reshape(B, Hf, Wf, -1)[..., :CFG["nef"]], (0, 3, 1, 2))      # NCHW, drop N padding

    # TODO(synk): Mixed_7a..Mixed_7c stand-in (frozen pretrained Inception blocks).
    x = conv2d(features_x, *params["mixed_late"], cin=CFG["c_feat"], ksize=3, stride=1, pad=1)

    # F.avg_pool2d(x, <spatial>) + view + emb_cnn_code Linear, fused in one kernel
    cnn_code = avgpool_linear(x, params["emb_cnn_code_w"], params["emb_cnn_code_b"])
    cnn_code = cnn_code[:, :CFG["nef"]]                                  # drop N padding

    return features, cnn_code


# ------------------------------------------------------------------ main
if __name__ == "__main__":
    key = jax.random.PRNGKey(0)
    k_param, k_x = jax.random.split(key)
    params = init_params(k_param)

    # small test input, PyTorch convention NCHW (the module expects RGB images)
    x = jax.random.normal(k_x, (2, 3, 16, 16), jnp.float32)

    features, cnn_code = cnn_encoder_forward(params, x)
    jax.block_until_ready(features)
    jax.block_until_ready(cnn_code)

    assert features.shape == (2, CFG["nef"], 2, 2), features.shape
    assert cnn_code.shape == (2, CFG["nef"]), cnn_code.shape
    assert bool(jnp.all(jnp.isfinite(features))) and bool(jnp.all(jnp.isfinite(cnn_code)))
    print("KERNEL_OK")
</pallas_src>

<mosaic_0001>
module attributes {stable_mosaic.version = 11 : i64} {
  func.func @_matmul_bias_kernel(%arg0: i32, %arg1: i32, %arg2: i32, %arg3: memref<256x128xbf16, #tpu.memory_space<vmem>>, %arg4: memref<128x128xbf16, #tpu.memory_space<vmem>>, %arg5: memref<1x128xf32, #tpu.memory_space<vmem>>, %arg6: memref<256x128xbf16, #tpu.memory_space<vmem>>, %arg7: memref<256x128xf32, #tpu.memory_space<vmem>>) attributes {dimension_semantics = [#tpu.dimension_semantics<parallel>, #tpu.dimension_semantics<parallel>, #tpu.dimension_semantics<arbitrary>], iteration_bounds = array<i64: 3, 1, 1>, scalar_prefetch = 0 : i64, scratch_operands = 1 : i64, tpu.core_type = #tpu.core_type<tc>, window_params = [{transform_indices = @transform_0, window_bounds = array<i64: 256, 128>}, {transform_indices = @transform_1, window_bounds = array<i64: 128, 128>}, {transform_indices = @transform_2, window_bounds = array<i64: 1, 128>}, {transform_indices = @transform_3, window_bounds = array<i64: 256, 128>}]} {
    %c0_i32 = arith.constant 0 : i32
    %0 = arith.cmpi eq, %arg2, %c0_i32 : i32
    %1 = arith.extui %0 : i1 to i32
    %c0_i32_0 = arith.constant 0 : i32
    %2 = arith.cmpi ne, %1, %c0_i32_0 : i32
    scf.if %2 {
      %cst_10 = arith.constant 0.000000e+00 : f32
      %12 = vector.broadcast %cst_10 : f32 to vector<256x128xf32>
      %c0_11 = arith.constant 0 : index
      %c0_12 = arith.constant 0 : index
      %13 = vector.load %arg7[%c0_11, %c0_12] : memref<256x128xf32, #tpu.memory_space<vmem>>, vector<256x128xf32>
      tpu.vector_store %arg7[%c0_11, %c0_12], %12 {strides = array<i32>} : memref<256x128xf32, #tpu.memory_space<vmem>>, vector<256x128xf32>,
    } else {
    }
    %c0 = arith.constant 0 : index
    %c0_1 = arith.constant 0 : index
    %3 = vector.load %arg7[%c0, %c0_1] : memref<256x128xf32, #tpu.memory_space<vmem>>, vector<256x128xf32>
    %c0_2 = arith.constant 0 : index
    %c0_3 = arith.constant 0 : index
    %4 = vector.load %arg3[%c0_2, %c0_3] : memref<256x128xbf16, #tpu.memory_space<vmem>>, vector<256x128xbf16>
    %c0_4 = arith.constant 0 : index
    %c0_5 = arith.constant 0 : index
    %5 = vector.load %arg4[%c0_4, %c0_5] : memref<128x128xbf16, #tpu.memory_space<vmem>>, vector<128x128xbf16>
    %cst = arith.constant dense<0.000000e+00> : vector<256x128xf32>
    %6 = tpu.matmul %4, %5, %cst {dimension_numbers = #tpu.dot_dimension_numbers<[1], [0], [0], [1], [0, 0, 1, 1], [], []>} : vector<256x128xbf16>, vector<128x128xbf16>, vector<256x128xf32> -> vector<256x128xf32>
    %7 = arith.addf %3, %6 : vector<256x128xf32>
    %c0_6 = arith.constant 0 : index
    %c0_7 = arith.constant 0 : index
    %8 = vector.load %arg7[%c0_6, %c0_7] : memref<256x128xf32, #tpu.memory_space<vmem>>, vector<256x128xf32>
    tpu.vector_store %arg7[%c0_6, %c0_7], %7 {strides = array<i32>} : memref<256x128xf32, #tpu.memory_space<vmem>>, vector<256x128xf32>,
    %c0_i32_8 = arith.constant 0 : i32
    %9 = arith.cmpi eq, %arg2, %c0_i32_8 : i32
    %10 = arith.extui %9 : i1 to i32
    %c0_i32_9 = arith.constant 0 : i32
    %11 = arith.cmpi ne, %10, %c0_i32_9 : i32
    scf.if %11 {
      %c0_10 = arith.constant 0 : index
      %c0_11 = arith.constant 0 : index
      %12 = vector.load %arg7[%c0_10, %c0_11] : memref<256x128xf32, #tpu.memory_space<vmem>>, vector<256x128xf32>
      %c0_12 = arith.constant 0 : index
      %c0_13 = arith.constant 0 : index
      %13 = vector.load %arg5[%c0_12, %c0_13] : memref<1x128xf32, #tpu.memory_space<vmem>>, vector<1x128xf32>
      %14 = vector.broadcast %13 : vector<1x128xf32> to vector<256x128xf32>
      %15 = arith.addf %12, %14 : vector<256x128xf32>
      %cst_14 = arith.constant 0.000000e+00 : f32
      %16 = vector.broadcast %cst_14 : f32 to vector<256x128xf32>
      %17 = arith.maximumf %15, %16 : vector<256x128xf32>
      %18 = arith.truncf %17 : vector<256x128xf32> to vector<256x128xbf16>
      %c0_15 = arith.constant 0 : index
      %c0_16 = arith.constant 0 : index
      %19 = vector.load %arg6[%c0_15, %c0_16] : memref<256x128xbf16, #tpu.memory_space<vmem>>, vector<256x128xbf16>
      tpu.vector_store %arg6[%c0_15, %c0_16], %18 {strides = array<i32>} : memref<256x128xbf16, #tpu.memory_space<vmem>>, vector<256x128xbf16>,
    } else {
    }
    return
  }
  func.func @transform_0(%arg0: i32, %arg1: i32, %arg2: i32) -> (i32, i32) {
    %c0_i32 = arith.constant 0 : i32
    return %arg0, %arg2 : i32, i32
  }
  func.func @transform_1(%arg0: i32, %arg1: i32, %arg2: i32) -> (i32, i32) {
    %c0_i32 = arith.constant 0 : i32
    return %arg2, %arg1 : i32, i32
  }
  func.func @transform_2(%arg0: i32, %arg1: i32, %arg2: i32) -> (i32, i32) {
    %c0_i32 = arith.constant 0 : i32
    %c0_i32_0 = arith.constant 0 : i32
    return %c0_i32, %arg1 : i32, i32
  }
  func.func @transform_3(%arg0: i32, %arg1: i32, %arg2: i32) -> (i32, i32) {
    %c0_i32 = arith.constant 0 : i32
    return %arg0, %arg1 : i32, i32
  }
}

module attributes {stable_mosaic.version = 11 : i64} {
  func.func @_matmul_bias_kernel(%arg0: i32, %arg1: i32, %arg2: i32, %arg3: memref<256x128xbf16, #tpu.memory_space<vmem>>, %arg4: memref<128x128xbf16, #tpu.memory_space<vmem>>, %arg5: memref<1x128xf32, #tpu.memory_space<vmem>>, %arg6: memref<256x128xbf16, #tpu.memory_space<vmem>>, %arg7: memref<256x128xf32, #tpu.memory_space<vmem>>) attributes {dimension_semantics = [#tpu.dimension_semantics<parallel>, #tpu.dimension_semantics<parallel>, #tpu.dimension_semantics<arbitrary>], iteration_bounds = array<i64: 2, 1, 1>, scalar_prefetch = 0 : i64, scratch_operands = 1 : i64, tpu.core_type = #tpu.core_type<tc>, window_params = [{transform_indices = @transform_0, window_bounds = array<i64: 256, 128>}, {transform_indices = @transform_1, window_bounds = array<i64: 128, 128>}, {transform_indices = @transform_2, window_bounds = array<i64: 1, 128>}, {transform_indices = @transform_3, window_bounds = array<i64: 256, 128>}]} {
    %c0_i32 = arith.constant 0 : i32
    %0 = arith.cmpi eq, %arg2, %c0_i32 : i32
    %1 = arith.extui %0 : i1 to i32
    %c0_i32_0 = arith.constant 0 : i32
    %2 = arith.cmpi ne, %1, %c0_i32_0 : i32
    scf.if %2 {
      %cst_10 = arith.constant 0.000000e+00 : f32
      %12 = vector.broadcast %cst_10 : f32 to vector<256x128xf32>
      %c0_11 = arith.constant 0 : index
      %c0_12 = arith.constant 0 : index
      %13 = vector.load %arg7[%c0_11, %c0_12] : memref<256x128xf32, #tpu.memory_space<vmem>>, vector<256x128xf32>
      tpu.vector_store %arg7[%c0_11, %c0_12], %12 {strides = array<i32>} : memref<256x128xf32, #tpu.memory_space<vmem>>, vector<256x128xf32>,
    } else {
    }
    %c0 = arith.constant 0 : index
    %c0_1 = arith.constant 0 : index
    %3 = vector.load %arg7[%c0, %c0_1] : memref<256x128xf32, #tpu.memory_space<vmem>>, vector<256x128xf32>
    %c0_2 = arith.constant 0 : index
    %c0_3 = arith.constant 0 : index
    %4 = vector.load %arg3[%c0_2, %c0_3] : memref<256x128xbf16, #tpu.memory_space<vmem>>, vector<256x128xbf16>
    %c0_4 = arith.constant 0 : index
    %c0_5 = arith.constant 0 : index
    %5 = vector.load %arg4[%c0_4, %c0_5] : memref<128x128xbf16, #tpu.memory_space<vmem>>, vector<128x128xbf16>
    %cst = arith.constant dense<0.000000e+00> : vector<256x128xf32>
    %6 = tpu.matmul %4, %5, %cst {dimension_numbers = #tpu.dot_dimension_numbers<[1], [0], [0], [1], [0, 0, 1, 1], [], []>} : vector<256x128xbf16>, vector<128x128xbf16>, vector<256x128xf32> -> vector<256x128xf32>
    %7 = arith.addf %3, %6 : vector<256x128xf32>
    %c0_6 = arith.constant 0 : index
    %c0_7 = arith.constant 0 : index
    %8 = vector.load %arg7[%c0_6, %c0_7] : memref<256x128xf32, #tpu.memory_space<vmem>>, vector<256x128xf32>
    tpu.vector_store %arg7[%c0_6, %c0_7], %7 {strides = array<i32>} : memref<256x128xf32, #tpu.memory_space<vmem>>, vector<256x128xf32>,
    %c0_i32_8 = arith.constant 0 : i32
    %9 = arith.cmpi eq, %arg2, %c0_i32_8 : i32
    %10 = arith.extui %9 : i1 to i32
    %c0_i32_9 = arith.constant 0 : i32
    %11 = arith.cmpi ne, %10, %c0_i32_9 : i32
    scf.if %11 {
      %c0_10 = arith.constant 0 : index
      %c0_11 = arith.constant 0 : index
      %12 = vector.load %arg7[%c0_10, %c0_11] : memref<256x128xf32, #tpu.memory_space<vmem>>, vector<256x128xf32>
      %c0_12 = arith.constant 0 : index
      %c0_13 = arith.constant 0 : index
      %13 = vector.load %arg5[%c0_12, %c0_13] : memref<1x128xf32, #tpu.memory_space<vmem>>, vector<1x128xf32>
      %14 = vector.broadcast %13 : vector<1x128xf32> to vector<256x128xf32>
      %15 = arith.addf %12, %14 : vector<256x128xf32>
      %cst_14 = arith.constant 0.000000e+00 : f32
      %16 = vector.broadcast %cst_14 : f32 to vector<256x128xf32>
      %17 = arith.maximumf %15, %16 : vector<256x128xf32>
      %18 = arith.truncf %17 : vector<256x128xf32> to vector<256x128xbf16>
      %c0_15 = arith.constant 0 : index
      %c0_16 = arith.constant 0 : index
      %19 = vector.load %arg6[%c0_15, %c0_16] : memref<256x128xbf16, #tpu.memory_space<vmem>>, vector<256x128xbf16>
      tpu.vector_store %arg6[%c0_15, %c0_16], %18 {strides = array<i32>} : memref<256x128xbf16, #tpu.memory_space<vmem>>, vector<256x128xbf16>,
    } else {
    }
    return
  }
  func.func @transform_0(%arg0: i32, %arg1: i32, %arg2: i32) -> (i32, i32) {
    %c0_i32 = arith.constant 0 : i32
    return %arg0, %arg2 : i32, i32
  }
  func.func @transform_1(%arg0: i32, %arg1: i32, %arg2: i32) -> (i32, i32) {
    %c0_i32 = arith.constant 0 : i32
    return %arg2, %arg1 : i32, i32
  }
  func.func @transform_2(%arg0: i32, %arg1: i32, %arg2: i32) -> (i32, i32) {
    %c0_i32 = arith.constant 0 : i32
    %c0_i32_0 = arith.constant 0 : i32
    return %c0_i32, %arg1 : i32, i32
  }
  func.func @transform_3(%arg0: i32, %arg1: i32, %arg2: i32) -> (i32, i32) {
    %c0_i32 = arith.constant 0 : i32
    return %arg0, %arg1 : i32, i32
  }
}

module attributes {stable_mosaic.version = 11 : i64} {
  func.func @_maxpool_3x3_s2_kernel(%arg0: i32, %arg1: memref<1x8x2x8x256xbf16, #tpu.memory_space<vmem>>, %arg2: memref<1x7x7x128xbf16, #tpu.memory_space<vmem>>) attributes {dimension_semantics = [#tpu.dimension_semantics<parallel>], iteration_bounds = array<i64: 2>, scalar_prefetch = 0 : i64, scratch_operands = 0 : i64, tpu.core_type = #tpu.core_type<tc>, window_params = [{transform_indices = @transform_0, window_bounds = array<i64: 1, 8, 2, 8, 256>}, {transform_indices = @transform_1, window_bounds = array<i64: 1, 7, 7, 128>}]} {
    %c0 = arith.constant 0 : index
    %c0_0 = arith.constant 0 : index
    %c0_1 = arith.constant 0 : index
    %c0_2 = arith.constant 0 : index
    %c0_3 = arith.constant 0 : index
    %0 = vector.load %arg1[%c0, %c0_0, %c0_1, %c0_2, %c0_3] : memref<1x8x2x8x256xbf16, #tpu.memory_space<vmem>>, vector<1x8x2x8x256xbf16>
    %1 = arith.extf %0 : vector<1x8x2x8x256xbf16> to vector<1x8x2x8x256xf32>
    %2 = vector.extract_strided_slice %1 {offsets = [0, 0, 0, 0, 0], sizes = [1, 7, 1, 7, 128], strides = [1, 1, 1, 1, 1]} : vector<1x8x2x8x256xf32> to vector<1x7x1x7x128xf32>
    %3 = vector.shape_cast %2 : vector<1x7x1x7x128xf32> to vector<7x7x128xf32>
    %4 = vector.extract_strided_slice %1 {offsets = [0, 0, 0, 0, 128], sizes = [1, 7, 1, 7, 128], strides = [1, 1, 1, 1, 1]} : vector<1x8x2x8x256xf32> to vector<1x7x1x7x128xf32>
    %5 = vector.shape_cast %4 : vector<1x7x1x7x128xf32> to vector<7x7x128xf32>
    %6 = arith.maximumf %3, %5 : vector<7x7x128xf32>
    %7 = vector.extract_strided_slice %1 {offsets = [0, 0, 0, 1, 0], sizes = [1, 7, 1, 7, 128], strides = [1, 1, 1, 1, 1]} : vector<1x8x2x8x256xf32> to vector<1x7x1x7x128xf32>
    %8 = vector.shape_cast %7 : vector<1x7x1x7x128xf32> to vector<7x7x128xf32>
    %9 = arith.maximumf %6, %8 : vector<7x7x128xf32>
    %10 = vector.extract_strided_slice %1 {offsets = [0, 0, 1, 0, 0], sizes = [1, 7, 1, 7, 128], strides = [1, 1, 1, 1, 1]} : vector<1x8x2x8x256xf32> to vector<1x7x1x7x128xf32>
    %11 = vector.shape_cast %10 : vector<1x7x1x7x128xf32> to vector<7x7x128xf32>
    %12 = arith.maximumf %9, %11 : vector<7x7x128xf32>
    %13 = vector.extract_strided_slice %1 {offsets = [0, 0, 1, 0, 128], sizes = [1, 7, 1, 7, 128], strides = [1, 1, 1, 1, 1]} : vector<1x8x2x8x256xf32> to vector<1x7x1x7x128xf32>
    %14 = vector.shape_cast %13 : vector<1x7x1x7x128xf32> to vector<7x7x128xf32>
    %15 = arith.maximumf %12, %14 : vector<7x7x128xf32>
    %16 = vector.extract_strided_slice %1 {offsets = [0, 0, 1, 1, 0], sizes = [1, 7, 1, 7, 128], strides = [1, 1, 1, 1, 1]} : vector<1x8x2x8x256xf32> to vector<1x7x1x7x128xf32>
    %17 = vector.shape_cast %16 : vector<1x7x1x7x128xf32> to vector<7x7x128xf32>
    %18 = arith.maximumf %15, %17 : vector<7x7x128xf32>
    %19 = vector.extract_strided_slice %1 {offsets = [0, 1, 0, 0, 0], sizes = [1, 7, 1, 7, 128], strides = [1, 1, 1, 1, 1]} : vector<1x8x2x8x256xf32> to vector<1x7x1x7x128xf32>
    %20 = vector.shape_cast %19 : vector<1x7x1x7x128xf32> to vector<7x7x128xf32>
    %21 = arith.maximumf %18, %20 : vector<7x7x128xf32>
    %22 = vector.extract_strided_slice %1 {offsets = [0, 1, 0, 0, 128], sizes = [1, 7, 1, 7, 128], strides = [1, 1, 1, 1, 1]} : vector<1x8x2x8x256xf32> to vector<1x7x1x7x128xf32>
    %23 = vector.shape_cast %22 : vector<1x7x1x7x128xf32> to vector<7x7x128xf32>
    %24 = arith.maximumf %21, %23 : vector<7x7x128xf32>
    %25 = vector.extract_strided_slice %1 {offsets = [0, 1, 0, 1, 0], sizes = [1, 7, 1, 7, 128], strides = [1, 1, 1, 1, 1]} : vector<1x8x2x8x256xf32> to vector<1x7x1x7x128xf32>
    %26 = vector.shape_cast %25 : vector<1x7x1x7x128xf32> to vector<7x7x128xf32>
    %27 = arith.maximumf %24, %26 : vector<7x7x128xf32>
    %28 = arith.truncf %27 : vector<7x7x128xf32> to vector<7x7x128xbf16>
    %c0_4 = arith.constant 0 : index
    %c0_5 = arith.constant 0 : index
    %c0_6 = arith.constant 0 : index
    %c0_7 = arith.constant 0 : index
    %29 = vector.load %arg2[%c0_4, %c0_5, %c0_6, %c0_7] : memref<1x7x7x128xbf16, #tpu.memory_space<vmem>>, vector<1x7x7x128xbf16>
    %30 = vector.shape_cast %29 : vector<1x7x7x128xbf16> to vector<7x7x128xbf16>
    %31 = vector.shape_cast %28 : vector<7x7x128xbf16> to vector<1x7x7x128xbf16>
    tpu.vector_store %arg2[%c0_4, %c0_5, %c0_6, %c0_7], %31 {strides = array<i32>} : memref<1x7x7x128xbf16, #tpu.memory_space<vmem>>, vector<1x7x7x128xbf16>,
    return
  }
  func.func @transform_0(%arg0: i32) -> (i32, i32, i32, i32, i32) {
    %c0_i32 = arith.constant 0 : i32
    %c0_i32_0 = arith.constant 0 : i32
    %c0_i32_1 = arith.constant 0 : i32
    %c0_i32_2 = arith.constant 0 : i32
    %c0_i32_3 = arith.constant 0 : i32
    return %arg0, %c0_i32, %c0_i32_0, %c0_i32_1, %c0_i32_2 : i32, i32, i32, i32, i32
  }
  func.func @transform_1(%arg0: i32) -> (i32, i32, i32, i32) {
    %c0_i32 = arith.constant 0 : i32
    %c0_i32_0 = arith.constant 0 : i32
    %c0_i32_1 = arith.constant 0 : i32
    %c0_i32_2 = arith.constant 0 : i32
    return %arg0, %c0_i32, %c0_i32_0, %c0_i32_1 : i32, i32, i32, i32
  }
}

module attributes {stable_mosaic.version = 11 : i64} {
  func.func @_matmul_bias_kernel(%arg0: i32, %arg1: i32, %arg2: i32, %arg3: memref<64x128xbf16, #tpu.memory_space<vmem>>, %arg4: memref<128x128xbf16, #tpu.memory_space<vmem>>, %arg5: memref<1x128xf32, #tpu.memory_space<vmem>>, %arg6: memref<64x128xbf16, #tpu.memory_space<vmem>>, %arg7: memref<64x128xf32, #tpu.memory_space<vmem>>) attributes {dimension_semantics = [#tpu.dimension_semantics<parallel>, #tpu.dimension_semantics<parallel>, #tpu.dimension_semantics<arbitrary>], iteration_bounds = array<i64: 2, 1, 1>, scalar_prefetch = 0 : i64, scratch_operands = 1 : i64, tpu.core_type = #tpu.core_type<tc>, window_params = [{transform_indices = @transform_0, window_bounds = array<i64: 64, 128>}, {transform_indices = @transform_1, window_bounds = array<i64: 128, 128>}, {transform_indices = @transform_2, window_bounds = array<i64: 1, 128>}, {transform_indices = @transform_3, window_bounds = array<i64: 64, 128>}]} {
    %c0_i32 = arith.constant 0 : i32
    %0 = arith.cmpi eq, %arg2, %c0_i32 : i32
    %1 = arith.extui %0 : i1 to i32
    %c0_i32_0 = arith.constant 0 : i32
    %2 = arith.cmpi ne, %1, %c0_i32_0 : i32
    scf.if %2 {
      %cst_10 = arith.constant 0.000000e+00 : f32
      %12 = vector.broadcast %cst_10 : f32 to vector<64x128xf32>
      %c0_11 = arith.constant 0 : index
      %c0_12 = arith.constant 0 : index
      %13 = vector.load %arg7[%c0_11, %c0_12] : memref<64x128xf32, #tpu.memory_space<vmem>>, vector<64x128xf32>
      tpu.vector_store %arg7[%c0_11, %c0_12], %12 {strides = array<i32>} : memref<64x128xf32, #tpu.memory_space<vmem>>, vector<64x128xf32>,
    } else {
    }
    %c0 = arith.constant 0 : index
    %c0_1 = arith.constant 0 : index
    %3 = vector.load %arg7[%c0, %c0_1] : memref<64x128xf32, #tpu.memory_space<vmem>>, vector<64x128xf32>
    %c0_2 = arith.constant 0 : index
    %c0_3 = arith.constant 0 : index
    %4 = vector.load %arg3[%c0_2, %c0_3] : memref<64x128xbf16, #tpu.memory_space<vmem>>, vector<64x128xbf16>
    %c0_4 = arith.constant 0 : index
    %c0_5 = arith.constant 0 : index
    %5 = vector.load %arg4[%c0_4, %c0_5] : memref<128x128xbf16, #tpu.memory_space<vmem>>, vector<128x128xbf16>
    %cst = arith.constant dense<0.000000e+00> : vector<64x128xf32>
    %6 = tpu.matmul %4, %5, %cst {dimension_numbers = #tpu.dot_dimension_numbers<[1], [0], [0], [1], [0, 0, 1, 1], [], []>} : vector<64x128xbf16>, vector<128x128xbf16>, vector<64x128xf32> -> vector<64x128xf32>
    %7 = arith.addf %3, %6 : vector<64x128xf32>
    %c0_6 = arith.constant 0 : index
    %c0_7 = arith.constant 0 : index
    %8 = vector.load %arg7[%c0_6, %c0_7] : memref<64x128xf32, #tpu.memory_space<vmem>>, vector<64x128xf32>
    tpu.vector_store %arg7[%c0_6, %c0_7], %7 {strides = array<i32>} : memref<64x128xf32, #tpu.memory_space<vmem>>, vector<64x128xf32>,
    %c0_i32_8 = arith.constant 0 : i32
    %9 = arith.cmpi eq, %arg2, %c0_i32_8 : i32
    %10 = arith.extui %9 : i1 to i32
    %c0_i32_9 = arith.constant 0 : i32
    %11 = arith.cmpi ne, %10, %c0_i32_9 : i32
    scf.if %11 {
      %c0_10 = arith.constant 0 : index
      %c0_11 = arith.constant 0 : index
      %12 = vector.load %arg7[%c0_10, %c0_11] : memref<64x128xf32, #tpu.memory_space<vmem>>, vector<64x128xf32>
      %c0_12 = arith.constant 0 : index
      %c0_13 = arith.constant 0 : index
      %13 = vector.load %arg5[%c0_12, %c0_13] : memref<1x128xf32, #tpu.memory_space<vmem>>, vector<1x128xf32>
      %14 = vector.broadcast %13 : vector<1x128xf32> to vector<64x128xf32>
      %15 = arith.addf %12, %14 : vector<64x128xf32>
      %cst_14 = arith.constant 0.000000e+00 : f32
      %16 = vector.broadcast %cst_14 : f32 to vector<64x128xf32>
      %17 = arith.maximumf %15, %16 : vector<64x128xf32>
      %18 = arith.truncf %17 : vector<64x128xf32> to vector<64x128xbf16>
      %c0_15 = arith.constant 0 : index
      %c0_16 = arith.constant 0 : index
      %19 = vector.load %arg6[%c0_15, %c0_16] : memref<64x128xbf16, #tpu.memory_space<vmem>>, vector<64x128xbf16>
      tpu.vector_store %arg6[%c0_15, %c0_16], %18 {strides = array<i32>} : memref<64x128xbf16, #tpu.memory_space<vmem>>, vector<64x128xbf16>,
    } else {
    }
    return
  }
  func.func @transform_0(%arg0: i32, %arg1: i32, %arg2: i32) -> (i32, i32) {
    %c0_i32 = arith.constant 0 : i32
    return %arg0, %arg2 : i32, i32
  }
  func.func @transform_1(%arg0: i32, %arg1: i32, %arg2: i32) -> (i32, i32) {
    %c0_i32 = arith.constant 0 : i32
    return %arg2, %arg1 : i32, i32
  }
  func.func @transform_2(%arg0: i32, %arg1: i32, %arg2: i32) -> (i32, i32) {
    %c0_i32 = arith.constant 0 : i32
    %c0_i32_0 = arith.constant 0 : i32
    return %c0_i32, %arg1 : i32, i32
  }
  func.func @transform_3(%arg0: i32, %arg1: i32, %arg2: i32) -> (i32, i32) {
    %c0_i32 = arith.constant 0 : i32
    return %arg0, %arg1 : i32, i32
  }
}

module attributes {stable_mosaic.version = 11 : i64} {
  func.func @_matmul_bias_kernel(%arg0: i32, %arg1: i32, %arg2: i32, %arg3: memref<32x128xbf16, #tpu.memory_space<vmem>>, %arg4: memref<128x128xbf16, #tpu.memory_space<vmem>>, %arg5: memref<1x128xf32, #tpu.memory_space<vmem>>, %arg6: memref<32x128xbf16, #tpu.memory_space<vmem>>, %arg7: memref<32x128xf32, #tpu.memory_space<vmem>>) attributes {dimension_semantics = [#tpu.dimension_semantics<parallel>, #tpu.dimension_semantics<parallel>, #tpu.dimension_semantics<arbitrary>], iteration_bounds = array<i64: 2, 1, 1>, scalar_prefetch = 0 : i64, scratch_operands = 1 : i64, tpu.core_type = #tpu.core_type<tc>, window_params = [{transform_indices = @transform_0, window_bounds = array<i64: 32, 128>}, {transform_indices = @transform_1, window_bounds = array<i64: 128, 128>}, {transform_indices = @transform_2, window_bounds = array<i64: 1, 128>}, {transform_indices = @transform_3, window_bounds = array<i64: 32, 128>}]} {
    %c0_i32 = arith.constant 0 : i32
    %0 = arith.cmpi eq, %arg2, %c0_i32 : i32
    %1 = arith.extui %0 : i1 to i32
    %c0_i32_0 = arith.constant 0 : i32
    %2 = arith.cmpi ne, %1, %c0_i32_0 : i32
    scf.if %2 {
      %cst_10 = arith.constant 0.000000e+00 : f32
      %12 = vector.broadcast %cst_10 : f32 to vector<32x128xf32>
      %c0_11 = arith.constant 0 : index
      %c0_12 = arith.constant 0 : index
      %13 = vector.load %arg7[%c0_11, %c0_12] : memref<32x128xf32, #tpu.memory_space<vmem>>, vector<32x128xf32>
      tpu.vector_store %arg7[%c0_11, %c0_12], %12 {strides = array<i32>} : memref<32x128xf32, #tpu.memory_space<vmem>>, vector<32x128xf32>,
    } else {
    }
    %c0 = arith.constant 0 : index
    %c0_1 = arith.constant 0 : index
    %3 = vector.load %arg7[%c0, %c0_1] : memref<32x128xf32, #tpu.memory_space<vmem>>, vector<32x128xf32>
    %c0_2 = arith.constant 0 : index
    %c0_3 = arith.constant 0 : index
    %4 = vector.load %arg3[%c0_2, %c0_3] : memref<32x128xbf16, #tpu.memory_space<vmem>>, vector<32x128xbf16>
    %c0_4 = arith.constant 0 : index
    %c0_5 = arith.constant 0 : index
    %5 = vector.load %arg4[%c0_4, %c0_5] : memref<128x128xbf16, #tpu.memory_space<vmem>>, vector<128x128xbf16>
    %cst = arith.constant dense<0.000000e+00> : vector<32x128xf32>
    %6 = tpu.matmul %4, %5, %cst {dimension_numbers = #tpu.dot_dimension_numbers<[1], [0], [0], [1], [0, 0, 1, 1], [], []>} : vector<32x128xbf16>, vector<128x128xbf16>, vector<32x128xf32> -> vector<32x128xf32>
    %7 = arith.addf %3, %6 : vector<32x128xf32>
    %c0_6 = arith.constant 0 : index
    %c0_7 = arith.constant 0 : index
    %8 = vector.load %arg7[%c0_6, %c0_7] : memref<32x128xf32, #tpu.memory_space<vmem>>, vector<32x128xf32>
    tpu.vector_store %arg7[%c0_6, %c0_7], %7 {strides = array<i32>} : memref<32x128xf32, #tpu.memory_space<vmem>>, vector<32x128xf32>,
    %c0_i32_8 = arith.constant 0 : i32
    %9 = arith.cmpi eq, %arg2, %c0_i32_8 : i32
    %10 = arith.extui %9 : i1 to i32
    %c0_i32_9 = arith.constant 0 : i32
    %11 = arith.cmpi ne, %10, %c0_i32_9 : i32
    scf.if %11 {
      %c0_10 = arith.constant 0 : index
      %c0_11 = arith.constant 0 : index
      %12 = vector.load %arg7[%c0_10, %c0_11] : memref<32x128xf32, #tpu.memory_space<vmem>>, vector<32x128xf32>
      %c0_12 = arith.constant 0 : index
      %c0_13 = arith.constant 0 : index
      %13 = vector.load %arg5[%c0_12, %c0_13] : memref<1x128xf32, #tpu.memory_space<vmem>>, vector<1x128xf32>
      %14 = vector.broadcast %13 : vector<1x128xf32> to vector<32x128xf32>
      %15 = arith.addf %12, %14 : vector<32x128xf32>
      %cst_14 = arith.constant 0.000000e+00 : f32
      %16 = vector.broadcast %cst_14 : f32 to vector<32x128xf32>
      %17 = arith.maximumf %15, %16 : vector<32x128xf32>
      %18 = arith.truncf %17 : vector<32x128xf32> to vector<32x128xbf16>
      %c0_15 = arith.constant 0 : index
      %c0_16 = arith.constant 0 : index
      %19 = vector.load %arg6[%c0_15, %c0_16] : memref<32x128xbf16, #tpu.memory_space<vmem>>, vector<32x128xbf16>
      tpu.vector_store %arg6[%c0_15, %c0_16], %18 {strides = array<i32>} : memref<32x128xbf16, #tpu.memory_space<vmem>>, vector<32x128xbf16>,
    } else {
    }
    return
  }
  func.func @transform_0(%arg0: i32, %arg1: i32, %arg2: i32) -> (i32, i32) {
    %c0_i32 = arith.constant 0 : i32
    return %arg0, %arg2 : i32, i32
  }
  func.func @transform_1(%arg0: i32, %arg1: i32, %arg2: i32) -> (i32, i32) {
    %c0_i32 = arith.constant 0 : i32
    return %arg2, %arg1 : i32, i32
  }
  func.func @transform_2(%arg0: i32, %arg1: i32, %arg2: i32) -> (i32, i32) {
    %c0_i32 = arith.constant 0 : i32
    %c0_i32_0 = arith.constant 0 : i32
    return %c0_i32, %arg1 : i32, i32
  }
  func.func @transform_3(%arg0: i32, %arg1: i32, %arg2: i32) -> (i32, i32) {
    %c0_i32 = arith.constant 0 : i32
    return %arg0, %arg1 : i32, i32
  }
}

module attributes {stable_mosaic.version = 11 : i64} {
  func.func @_maxpool_3x3_s2_kernel(%arg0: i32, %arg1: memref<1x3x2x3x256xbf16, #tpu.memory_space<vmem>>, %arg2: memref<1x2x2x128xbf16, #tpu.memory_space<vmem>>) attributes {dimension_semantics = [#tpu.dimension_semantics<parallel>], iteration_bounds = array<i64: 2>, scalar_prefetch = 0 : i64, scratch_operands = 0 : i64, tpu.core_type = #tpu.core_type<tc>, window_params = [{transform_indices = @transform_0, window_bounds = array<i64: 1, 3, 2, 3, 256>}, {transform_indices = @transform_1, window_bounds = array<i64: 1, 2, 2, 128>}]} {
    %c0 = arith.constant 0 : index
    %c0_0 = arith.constant 0 : index
    %c0_1 = arith.constant 0 : index
    %c0_2 = arith.constant 0 : index
    %c0_3 = arith.constant 0 : index
    %0 = vector.load %arg1[%c0, %c0_0, %c0_1, %c0_2, %c0_3] : memref<1x3x2x3x256xbf16, #tpu.memory_space<vmem>>, vector<1x3x2x3x256xbf16>
    %1 = arith.extf %0 : vector<1x3x2x3x256xbf16> to vector<1x3x2x3x256xf32>
    %2 = vector.extract_strided_slice %1 {offsets = [0, 0, 0, 0, 0], sizes = [1, 2, 1, 2, 128], strides = [1, 1, 1, 1, 1]} : vector<1x3x2x3x256xf32> to vector<1x2x1x2x128xf32>
    %3 = vector.shape_cast %2 : vector<1x2x1x2x128xf32> to vector<2x2x128xf32>
    %4 = vector.extract_strided_slice %1 {offsets = [0, 0, 0, 0, 128], sizes = [1, 2, 1, 2, 128], strides = [1, 1, 1, 1, 1]} : vector<1x3x2x3x256xf32> to vector<1x2x1x2x128xf32>
    %5 = vector.shape_cast %4 : vector<1x2x1x2x128xf32> to vector<2x2x128xf32>
    %6 = arith.maximumf %3, %5 : vector<2x2x128xf32>
    %7 = vector.extract_strided_slice %1 {offsets = [0, 0, 0, 1, 0], sizes = [1, 2, 1, 2, 128], strides = [1, 1, 1, 1, 1]} : vector<1x3x2x3x256xf32> to vector<1x2x1x2x128xf32>
    %8 = vector.shape_cast %7 : vector<1x2x1x2x128xf32> to vector<2x2x128xf32>
    %9 = arith.maximumf %6, %8 : vector<2x2x128xf32>
    %10 = vector.extract_strided_slice %1 {offsets = [0, 0, 1, 0, 0], sizes = [1, 2, 1, 2, 128], strides = [1, 1, 1, 1, 1]} : vector<1x3x2x3x256xf32> to vector<1x2x1x2x128xf32>
    %11 = vector.shape_cast %10 : vector<1x2x1x2x128xf32> to vector<2x2x128xf32>
    %12 = arith.maximumf %9, %11 : vector<2x2x128xf32>
    %13 = vector.extract_strided_slice %1 {offsets = [0, 0, 1, 0, 128], sizes = [1, 2, 1, 2, 128], strides = [1, 1, 1, 1, 1]} : vector<1x3x2x3x256xf32> to vector<1x2x1x2x128xf32>
    %14 = vector.shape_cast %13 : vector<1x2x1x2x128xf32> to vector<2x2x128xf32>
    %15 = arith.maximumf %12, %14 : vector<2x2x128xf32>
    %16 = vector.extract_strided_slice %1 {offsets = [0, 0, 1, 1, 0], sizes = [1, 2, 1, 2, 128], strides = [1, 1, 1, 1, 1]} : vector<1x3x2x3x256xf32> to vector<1x2x1x2x128xf32>
    %17 = vector.shape_cast %16 : vector<1x2x1x2x128xf32> to vector<2x2x128xf32>
    %18 = arith.maximumf %15, %17 : vector<2x2x128xf32>
    %19 = vector.extract_strided_slice %1 {offsets = [0, 1, 0, 0, 0], sizes = [1, 2, 1, 2, 128], strides = [1, 1, 1, 1, 1]} : vector<1x3x2x3x256xf32> to vector<1x2x1x2x128xf32>
    %20 = vector.shape_cast %19 : vector<1x2x1x2x128xf32> to vector<2x2x128xf32>
    %21 = arith.maximumf %18, %20 : vector<2x2x128xf32>
    %22 = vector.extract_strided_slice %1 {offsets = [0, 1, 0, 0, 128], sizes = [1, 2, 1, 2, 128], strides = [1, 1, 1, 1, 1]} : vector<1x3x2x3x256xf32> to vector<1x2x1x2x128xf32>
    %23 = vector.shape_cast %22 : vector<1x2x1x2x128xf32> to vector<2x2x128xf32>
    %24 = arith.maximumf %21, %23 : vector<2x2x128xf32>
    %25 = vector.extract_strided_slice %1 {offsets = [0, 1, 0, 1, 0], sizes = [1, 2, 1, 2, 128], strides = [1, 1, 1, 1, 1]} : vector<1x3x2x3x256xf32> to vector<1x2x1x2x128xf32>
    %26 = vector.shape_cast %25 : vector<1x2x1x2x128xf32> to vector<2x2x128xf32>
    %27 = arith.maximumf %24, %26 : vector<2x2x128xf32>
    %28 = arith.truncf %27 : vector<2x2x128xf32> to vector<2x2x128xbf16>
    %c0_4 = arith.constant 0 : index
    %c0_5 = arith.constant 0 : index
    %c0_6 = arith.constant 0 : index
    %c0_7 = arith.constant 0 : index
    %29 = vector.load %arg2[%c0_4, %c0_5, %c0_6, %c0_7] : memref<1x2x2x128xbf16, #tpu.memory_space<vmem>>, vector<1x2x2x128xbf16>
    %30 = vector.shape_cast %29 : vector<1x2x2x128xbf16> to vector<2x2x128xbf16>
    %31 = vector.shape_cast %28 : vector<2x2x128xbf16> to vector<1x2x2x128xbf16>
    tpu.vector_store %arg2[%c0_4, %c0_5, %c0_6, %c0_7], %31 {strides = array<i32>} : memref<1x2x2x128xbf16, #tpu.memory_space<vmem>>, vector<1x2x2x128xbf16>,
    return
  }
  func.func @transform_0(%arg0: i32) -> (i32, i32, i32, i32, i32) {
    %c0_i32 = arith.constant 0 : i32
    %c0_i32_0 = arith.constant 0 : i32
    %c0_i32_1 = arith.constant 0 : i32
    %c0_i32_2 = arith.constant 0 : i32
    %c0_i32_3 = arith.constant 0 : i32
    return %arg0, %c0_i32, %c0_i32_0, %c0_i32_1, %c0_i32_2 : i32, i32, i32, i32, i32
  }
  func.func @transform_1(%arg0: i32) -> (i32, i32, i32, i32) {
    %c0_i32 = arith.constant 0 : i32
    %c0_i32_0 = arith.constant 0 : i32
    %c0_i32_1 = arith.constant 0 : i32
    %c0_i32_2 = arith.constant 0 : i32
    return %arg0, %c0_i32, %c0_i32_0, %c0_i32_1 : i32, i32, i32, i32
  }
}

module attributes {stable_mosaic.version = 11 : i64} {
  func.func @_matmul_bias_emb_kernel(%arg0: i32, %arg1: i32, %arg2: memref<16x256xbf16, #tpu.memory_space<vmem>>, %arg3: memref<256x128xbf16, #tpu.memory_space<vmem>>, %arg4: memref<1x128xf32, #tpu.memory_space<vmem>>, %arg5: memref<128x128xbf16, #tpu.memory_space<vmem>>, %arg6: memref<16x128xbf16, #tpu.memory_space<vmem>>, %arg7: memref<16x128xf32, #tpu.memory_space<vmem>>, %arg8: memref<16x128xf32, #tpu.memory_space<vmem>>) attributes {dimension_semantics = [#tpu.dimension_semantics<parallel>, #tpu.dimension_semantics<arbitrary>], iteration_bounds = array<i64: 1, 1>, scalar_prefetch = 0 : i64, scratch_operands = 1 : i64, tpu.core_type = #tpu.core_type<tc>, window_params = [{transform_indices = @transform_0, window_bounds = array<i64: 16, 256>}, {transform_indices = @transform_1, window_bounds = array<i64: 256, 128>}, {pipeline_mode = #tpu.pipeline_mode<synchronous>, transform_indices = @transform_2, window_bounds = array<i64: 1, 128>}, {pipeline_mode = #tpu.pipeline_mode<synchronous>, transform_indices = @transform_3, window_bounds = array<i64: 128, 128>}, {transform_indices = @transform_4, window_bounds = array<i64: 16, 128>}, {transform_indices = @transform_5, window_bounds = array<i64: 16, 128>}]} {
    %c0_i32 = arith.constant 0 : i32
    %0 = arith.cmpi eq, %arg1, %c0_i32 : i32
    %1 = arith.extui %0 : i1 to i32
    %c0_i32_0 = arith.constant 0 : i32
    %2 = arith.cmpi ne, %1, %c0_i32_0 : i32
    scf.if %2 {
      %cst_10 = arith.constant 0.000000e+00 : f32
      %12 = vector.broadcast %cst_10 : f32 to vector<16x128xf32>
      %c0_11 = arith.constant 0 : index
      %c0_12 = arith.constant 0 : index
      %13 = vector.load %arg8[%c0_11, %c0_12] : memref<16x128xf32, #tpu.memory_space<vmem>>, vector<16x128xf32>
      tpu.vector_store %arg8[%c0_11, %c0_12], %12 {strides = array<i32>} : memref<16x128xf32, #tpu.memory_space<vmem>>, vector<16x128xf32>,
    } else {
    }
    %c0 = arith.constant 0 : index
    %c0_1 = arith.constant 0 : index
    %3 = vector.load %arg8[%c0, %c0_1] : memref<16x128xf32, #tpu.memory_space<vmem>>, vector<16x128xf32>
    %c0_2 = arith.constant 0 : index
    %c0_3 = arith.constant 0 : index
    %4 = vector.load %arg2[%c0_2, %c0_3] : memref<16x256xbf16, #tpu.memory_space<vmem>>, vector<16x256xbf16>
    %c0_4 = arith.constant 0 : index
    %c0_5 = arith.constant 0 : index
    %5 = vector.load %arg3[%c0_4, %c0_5] : memref<256x128xbf16, #tpu.memory_space<vmem>>, vector<256x128xbf16>
    %cst = arith.constant dense<0.000000e+00> : vector<16x128xf32>
    %6 = tpu.matmul %4, %5, %cst {dimension_numbers = #tpu.dot_dimension_numbers<[1], [0], [0], [1], [0, 0, 1, 1], [], []>} : vector<16x256xbf16>, vector<256x128xbf16>, vector<16x128xf32> -> vector<16x128xf32>
    %7 = arith.addf %3, %6 : vector<16x128xf32>
    %c0_6 = arith.constant 0 : index
    %c0_7 = arith.constant 0 : index
    %8 = vector.load %arg8[%c0_6, %c0_7] : memref<16x128xf32, #tpu.memory_space<vmem>>, vector<16x128xf32>
    tpu.vector_store %arg8[%c0_6, %c0_7], %7 {strides = array<i32>} : memref<16x128xf32, #tpu.memory_space<vmem>>, vector<16x128xf32>,
    %c0_i32_8 = arith.constant 0 : i32
    %9 = arith.cmpi eq, %arg1, %c0_i32_8 : i32
    %10 = arith.extui %9 : i1 to i32
    %c0_i32_9 = arith.constant 0 : i32
    %11 = arith.cmpi ne, %10, %c0_i32_9 : i32
    scf.if %11 {
      %c0_10 = arith.constant 0 : index
      %c0_11 = arith.constant 0 : index
      %12 = vector.load %arg8[%c0_10, %c0_11] : memref<16x128xf32, #tpu.memory_space<vmem>>, vector<16x128xf32>
      %c0_12 = arith.constant 0 : index
      %c0_13 = arith.constant 0 : index
      %13 = vector.load %arg4[%c0_12, %c0_13] : memref<1x128xf32, #tpu.memory_space<vmem>>, vector<1x128xf32>
      %14 = vector.broadcast %13 : vector<1x128xf32> to vector<16x128xf32>
      %15 = arith.addf %12, %14 : vector<16x128xf32>
      %cst_14 = arith.constant 0.000000e+00 : f32
      %16 = vector.broadcast %cst_14 : f32 to vector<16x128xf32>
      %17 = arith.maximumf %15, %16 : vector<16x128xf32>
      %18 = arith.truncf %17 : vector<16x128xf32> to vector<16x128xbf16>
      %c0_15 = arith.constant 0 : index
      %c0_16 = arith.constant 0 : index
      %19 = vector.load %arg6[%c0_15, %c0_16] : memref<16x128xbf16, #tpu.memory_space<vmem>>, vector<16x128xbf16>
      tpu.vector_store %arg6[%c0_15, %c0_16], %18 {strides = array<i32>} : memref<16x128xbf16, #tpu.memory_space<vmem>>, vector<16x128xbf16>,
      %20 = arith.truncf %17 : vector<16x128xf32> to vector<16x128xbf16>
      %c0_17 = arith.constant 0 : index
      %c0_18 = arith.constant 0 : index
      %21 = vector.load %arg5[%c0_17, %c0_18] : memref<128x128xbf16, #tpu.memory_space<vmem>>, vector<128x128xbf16>
      %cst_19 = arith.constant dense<0.000000e+00> : vector<16x128xf32>
      %22 = tpu.matmul %20, %21, %cst_19 {dimension_numbers = #tpu.dot_dimension_numbers<[1], [0], [0], [1], [0, 0, 1, 1], [], []>} : vector<16x128xbf16>, vector<128x128xbf16>, vector<16x128xf32> -> vector<16x128xf32>
      %c0_20 = arith.constant 0 : index
      %c0_21 = arith.constant 0 : index
      %23 = vector.load %arg7[%c0_20, %c0_21] : memref<16x128xf32, #tpu.memory_space<vmem>>, vector<16x128xf32>
      tpu.vector_store %arg7[%c0_20, %c0_21], %22 {strides = array<i32>} : memref<16x128xf32, #tpu.memory_space<vmem>>, vector<16x128xf32>,
    } else {
    }
    return
  }
  func.func @transform_0(%arg0: i32, %arg1: i32) -> (i32, i32) {
    %c0_i32 = arith.constant 0 : i32
    return %arg0, %arg1 : i32, i32
  }
  func.func @transform_1(%arg0: i32, %arg1: i32) -> (i32, i32) {
    %c0_i32 = arith.constant 0 : i32
    %c0_i32_0 = arith.constant 0 : i32
    return %arg1, %c0_i32 : i32, i32
  }
  func.func @transform_2(%arg0: i32, %arg1: i32) -> (i32, i32) {
    %c0_i32 = arith.constant 0 : i32
    %c0_i32_0 = arith.constant 0 : i32
    %c0_i32_1 = arith.constant 0 : i32
    return %c0_i32, %c0_i32_0 : i32, i32
  }
  func.func @transform_3(%arg0: i32, %arg1: i32) -> (i32, i32) {
    %c0_i32 = arith.constant 0 : i32
    %c0_i32_0 = arith.constant 0 : i32
    %c0_i32_1 = arith.constant 0 : i32
    return %c0_i32, %c0_i32_0 : i32, i32
  }
  func.func @transform_4(%arg0: i32, %arg1: i32) -> (i32, i32) {
    %c0_i32 = arith.constant 0 : i32
    %c0_i32_0 = arith.constant 0 : i32
    return %arg0, %c0_i32 : i32, i32
  }
  func.func @transform_5(%arg0: i32, %arg1: i32) -> (i32, i32) {
    %c0_i32 = arith.constant 0 : i32
    %c0_i32_0 = arith.constant 0 : i32
    return %arg0, %c0_i32 : i32, i32
  }
}

module attributes {stable_mosaic.version = 11 : i64} {
  func.func @_matmul_bias_kernel(%arg0: i32, %arg1: i32, %arg2: i32, %arg3: memref<16x896xbf16, #tpu.memory_space<vmem>>, %arg4: memref<896x256xbf16, #tpu.memory_space<vmem>>, %arg5: memref<1x256xf32, #tpu.memory_space<vmem>>, %arg6: memref<16x256xbf16, #tpu.memory_space<vmem>>, %arg7: memref<16x256xf32, #tpu.memory_space<vmem>>) attributes {dimension_semantics = [#tpu.dimension_semantics<parallel>, #tpu.dimension_semantics<parallel>, #tpu.dimension_semantics<arbitrary>], iteration_bounds = array<i64: 1, 1, 1>, scalar_prefetch = 0 : i64, scratch_operands = 1 : i64, tpu.core_type = #tpu.core_type<tc>, window_params = [{transform_indices = @transform_0, window_bounds = array<i64: 16, 896>}, {transform_indices = @transform_1, window_bounds = array<i64: 896, 256>}, {transform_indices = @transform_2, window_bounds = array<i64: 1, 256>}, {transform_indices = @transform_3, window_bounds = array<i64: 16, 256>}]} {
    %c0_i32 = arith.constant 0 : i32
    %0 = arith.cmpi eq, %arg2, %c0_i32 : i32
    %1 = arith.extui %0 : i1 to i32
    %c0_i32_0 = arith.constant 0 : i32
    %2 = arith.cmpi ne, %1, %c0_i32_0 : i32
    scf.if %2 {
      %cst_10 = arith.constant 0.000000e+00 : f32
      %12 = vector.broadcast %cst_10 : f32 to vector<16x256xf32>
      %c0_11 = arith.constant 0 : index
      %c0_12 = arith.constant 0 : index
      %13 = vector.load %arg7[%c0_11, %c0_12] : memref<16x256xf32, #tpu.memory_space<vmem>>, vector<16x256xf32>
      tpu.vector_store %arg7[%c0_11, %c0_12], %12 {strides = array<i32>} : memref<16x256xf32, #tpu.memory_space<vmem>>, vector<16x256xf32>,
    } else {
    }
    %c0 = arith.constant 0 : index
    %c0_1 = arith.constant 0 : index
    %3 = vector.load %arg7[%c0, %c0_1] : memref<16x256xf32, #tpu.memory_space<vmem>>, vector<16x256xf32>
    %c0_2 = arith.constant 0 : index
    %c0_3 = arith.constant 0 : index
    %4 = vector.load %arg3[%c0_2, %c0_3] : memref<16x896xbf16, #tpu.memory_space<vmem>>, vector<16x896xbf16>
    %c0_4 = arith.constant 0 : index
    %c0_5 = arith.constant 0 : index
    %5 = vector.load %arg4[%c0_4, %c0_5] : memref<896x256xbf16, #tpu.memory_space<vmem>>, vector<896x256xbf16>
    %cst = arith.constant dense<0.000000e+00> : vector<16x256xf32>
    %6 = tpu.matmul %4, %5, %cst {dimension_numbers = #tpu.dot_dimension_numbers<[1], [0], [0], [1], [0, 0, 1, 1], [], []>} : vector<16x896xbf16>, vector<896x256xbf16>, vector<16x256xf32> -> vector<16x256xf32>
    %7 = arith.addf %3, %6 : vector<16x256xf32>
    %c0_6 = arith.constant 0 : index
    %c0_7 = arith.constant 0 : index
    %8 = vector.load %arg7[%c0_6, %c0_7] : memref<16x256xf32, #tpu.memory_space<vmem>>, vector<16x256xf32>
    tpu.vector_store %arg7[%c0_6, %c0_7], %7 {strides = array<i32>} : memref<16x256xf32, #tpu.memory_space<vmem>>, vector<16x256xf32>,
    %c0_i32_8 = arith.constant 0 : i32
    %9 = arith.cmpi eq, %arg2, %c0_i32_8 : i32
    %10 = arith.extui %9 : i1 to i32
    %c0_i32_9 = arith.constant 0 : i32
    %11 = arith.cmpi ne, %10, %c0_i32_9 : i32
    scf.if %11 {
      %c0_10 = arith.constant 0 : index
      %c0_11 = arith.constant 0 : index
      %12 = vector.load %arg7[%c0_10, %c0_11] : memref<16x256xf32, #tpu.memory_space<vmem>>, vector<16x256xf32>
      %c0_12 = arith.constant 0 : index
      %c0_13 = arith.constant 0 : index
      %13 = vector.load %arg5[%c0_12, %c0_13] : memref<1x256xf32, #tpu.memory_space<vmem>>, vector<1x256xf32>
      %14 = vector.broadcast %13 : vector<1x256xf32> to vector<16x256xf32>
      %15 = arith.addf %12, %14 : vector<16x256xf32>
      %cst_14 = arith.constant 0.000000e+00 : f32
      %16 = vector.broadcast %cst_14 : f32 to vector<16x256xf32>
      %17 = arith.maximumf %15, %16 : vector<16x256xf32>
      %18 = arith.truncf %17 : vector<16x256xf32> to vector<16x256xbf16>
      %c0_15 = arith.constant 0 : index
      %c0_16 = arith.constant 0 : index
      %19 = vector.load %arg6[%c0_15, %c0_16] : memref<16x256xbf16, #tpu.memory_space<vmem>>, vector<16x256xbf16>
      tpu.vector_store %arg6[%c0_15, %c0_16], %18 {strides = array<i32>} : memref<16x256xbf16, #tpu.memory_space<vmem>>, vector<16x256xbf16>,
    } else {
    }
    return
  }
  func.func @transform_0(%arg0: i32, %arg1: i32, %arg2: i32) -> (i32, i32) {
    %c0_i32 = arith.constant 0 : i32
    return %arg0, %arg2 : i32, i32
  }
  func.func @transform_1(%arg0: i32, %arg1: i32, %arg2: i32) -> (i32, i32) {
    %c0_i32 = arith.constant 0 : i32
    return %arg2, %arg1 : i32, i32
  }
  func.func @transform_2(%arg0: i32, %arg1: i32, %arg2: i32) -> (i32, i32) {
    %c0_i32 = arith.constant 0 : i32
    %c0_i32_0 = arith.constant 0 : i32
    return %c0_i32, %arg1 : i32, i32
  }
  func.func @transform_3(%arg0: i32, %arg1: i32, %arg2: i32) -> (i32, i32) {
    %c0_i32 = arith.constant 0 : i32
    return %arg0, %arg1 : i32, i32
  }
}

module attributes {stable_mosaic.version = 11 : i64} {
  func.func @_avgpool_linear_kernel(%arg0: i32, %arg1: memref<2x4x256xbf16, #tpu.memory_space<vmem>>, %arg2: memref<256x128xbf16, #tpu.memory_space<vmem>>, %arg3: memref<1x128xf32, #tpu.memory_space<vmem>>, %arg4: memref<2x128xf32, #tpu.memory_space<vmem>>) attributes {dimension_semantics = [#tpu.dimension_semantics<parallel>], iteration_bounds = array<i64: 1>, scalar_prefetch = 0 : i64, scratch_operands = 0 : i64, tpu.core_type = #tpu.core_type<tc>, window_params = [{transform_indices = @transform_0, window_bounds = array<i64: 2, 4, 256>}, {pipeline_mode = #tpu.pipeline_mode<synchronous>, transform_indices = @transform_1, window_bounds = array<i64: 256, 128>}, {pipeline_mode = #tpu.pipeline_mode<synchronous>, transform_indices = @transform_2, window_bounds = array<i64: 1, 128>}, {transform_indices = @transform_3, window_bounds = array<i64: 2, 128>}]} {
    %c0 = arith.constant 0 : index
    %c0_0 = arith.constant 0 : index
    %c0_1 = arith.constant 0 : index
    %0 = vector.load %arg1[%c0, %c0_0, %c0_1] : memref<2x4x256xbf16, #tpu.memory_space<vmem>>, vector<2x4x256xbf16>
    %1 = arith.extf %0 : vector<2x4x256xbf16> to vector<2x4x256xf32>
    %cst = arith.constant dense<0.000000e+00> : vector<2x256xf32>
    %2 = vector.multi_reduction <add>, %1, %cst [1] : vector<2x4x256xf32> to vector<2x256xf32>
    %3 = arith.truncf %2 : vector<2x256xf32> to vector<2x256xbf16>
    %c0_2 = arith.constant 0 : index
    %c0_3 = arith.constant 0 : index
    %4 = vector.load %arg2[%c0_2, %c0_3] : memref<256x128xbf16, #tpu.memory_space<vmem>>, vector<256x128xbf16>
    %cst_4 = arith.constant dense<0.000000e+00> : vector<2x128xf32>
    %5 = tpu.matmul %3, %4, %cst_4 {dimension_numbers = #tpu.dot_dimension_numbers<[1], [0], [0], [1], [0, 0, 1, 1], [], []>} : vector<2x256xbf16>, vector<256x128xbf16>, vector<2x128xf32> -> vector<2x128xf32>
    %c0_5 = arith.constant 0 : index
    %c0_6 = arith.constant 0 : index
    %6 = vector.load %arg3[%c0_5, %c0_6] : memref<1x128xf32, #tpu.memory_space<vmem>>, vector<1x128xf32>
    %7 = vector.broadcast %6 : vector<1x128xf32> to vector<2x128xf32>
    %8 = arith.addf %5, %7 : vector<2x128xf32>
    %c0_7 = arith.constant 0 : index
    %c0_8 = arith.constant 0 : index
    %9 = vector.load %arg4[%c0_7, %c0_8] : memref<2x128xf32, #tpu.memory_space<vmem>>, vector<2x128xf32>
    tpu.vector_store %arg4[%c0_7, %c0_8], %8 {strides = array<i32>} : memref<2x128xf32, #tpu.memory_space<vmem>>, vector<2x128xf32>,
    return
  }
  func.func @transform_0(%arg0: i32) -> (i32, i32, i32) {
    %c0_i32 = arith.constant 0 : i32
    %c0_i32_0 = arith.constant 0 : i32
    %c0_i32_1 = arith.constant 0 : i32
    return %arg0, %c0_i32, %c0_i32_0 : i32, i32, i32
  }
  func.func @transform_1(%arg0: i32) -> (i32, i32) {
    %c0_i32 = arith.constant 0 : i32
    %c0_i32_0 = arith.constant 0 : i32
    %c0_i32_1 = arith.constant 0 : i32
    return %c0_i32, %c0_i32_0 : i32, i32
  }
  func.func @transform_2(%arg0: i32) -> (i32, i32) {
    %c0_i32 = arith.constant 0 : i32
    %c0_i32_0 = arith.constant 0 : i32
    %c0_i32_1 = arith.constant 0 : i32
    return %c0_i32, %c0_i32_0 : i32, i32
  }
  func.func @transform_3(%arg0: i32) -> (i32, i32) {
    %c0_i32 = arith.constant 0 : i32
    %c0_i32_0 = arith.constant 0 : i32
    return %arg0, %c0_i32 : i32, i32
  }
}

</mosaic_0001>

<llo_original>
// kernel: cnn_encoder_forward.10
$region0: #{cnn_encoder_forward.10}
  #allocation0 [shape = 'u32[]', space=smem, size = 0x4, offset = 0x4, fixed_abs, tag = 'smem constant byte address 0x4 - core index']
  #allocation1 [shape = 'u32[72,128]{1,0:T(1,128)}', space=vmem, size = 0x9000, scoped, tag = 'internal scratch']
  #allocation2 [shape = 'f32[256,128]{1,0:T(8,128)}', space=vmem, size = 0x20000, scoped, tag = 'scratch operand']
  %s0 = inlined_call_operand.vmem [shape: bf16[578,128], index: 0, kind: input, shape index: {}]
  %s1 = inlined_call_operand.vmem [shape: bf16[128,128], index: 1, kind: input, shape index: {}]
  %s2 = inlined_call_operand.vmem [shape: f32[1,128], index: 2, kind: input, shape index: {}]
  %s3 = inlined_call_operand.vmem [shape: bf16[578,128], index: 3, kind: output, shape index: {}]
  %s4 = sld [smem:[#allocation0]]
  $region97: #{cnn_encoder_forward.10} parent=0
    _
  %s6 = ssub.s32 1, %s4
  %s7 = scalar_select 0, %s6, %s4
  $region1: #{cnn_encoder_forward.10} parent=0
    #allocation3 [shape = 'u8[131072]{0}', space=vmem, size = 0x20000, scoped, tag = 'output window, operand 0']
    loop: start=0, step=1, limit=5
    $region2: #{cnn_encoder_forward.10} parent=1 // loop_pre_header
      _
    $region3: #{cnn_encoder_forward.10} parent=1 // loop_header
      %s9 = sphi 0, %s13
      %p10 = scmp.ge.s32.totalorder %s9, 5
      %s16 = sphi 0, %s35
      %s17 = sphi 0, %s31
      %s18 = sphi 0, %s27
      %s19 = sphi 0, %s16
      %s20 = sphi 0, %s17
      %s21 = sphi 0, %s18
      %s22 = sphi 0, %s19
      %s23 = sphi 0, %s20
      %s24 = sphi 0, %s21
      %s40 = sphi 0, %s42
      %s43 = sphi 0, %s40
      %s44 = sphi 0, %s43
      %s60 = sphi 0, %s44
      %s68 = sphi 0, %s70
      %s71 = sphi 0, %s68
      %s72 = sphi 0, %s71
      %s88 = sphi 0, %s72
      %s94 = sphi 0, %s96
      %s97 = sphi 0, %s94
      %s98 = sphi 0, %s97
      %s114 = sphi 0, %s98
      %s122 = sphi 0, %s124
      %s125 = sphi 0, %s122
      %s126 = sphi 0, %s125
      %s142 = sphi 0, %s126
    $region4: #{cnn_encoder_forward.10} parent=1 // loop_header_branch
      %12 = sbr.rel (%p10) target = $region8
    $region5: #{cnn_encoder_forward.10} parent=1 // loop_body
      %s14 = ssub.s32 %s9, 1
      %s15 = ssub.s32 %s9, 2
      %s25 = sadd.s32 1, %s18
      %p26 = scmp.ge.s32.totalorder %s25, 1
      %s27 = scalar_select %p26, 0, %s25
      %s28 = sadd.s32 1, %s17
      %s29 = scalar_select %p26, %s28, %s17
      %p30 = scmp.ge.s32.totalorder %s29, 1
      %s31 = scalar_select %p30, 0, %s29
      %s32 = sadd.s32 1, %s16
      %s33 = scalar_select %p30, %s32, %s16
      %p34 = scmp.ge.s32.totalorder %s33, 3
      %s35 = scalar_select %p34, 0, %s33
      %s36 = ssub.s32 %s16, %s35
      %s37 = ssub.s32 %s18, %s27
      %s38 = sor.u32 %s36, %s37
      %p39 = scmp.eq.s32.totalorder %s38, 0
      %s41 = sadd.s32 %s40, 1
      %s42 = scalar_select %p39, %s40, %s41
      %p45 = pneg %p39
      %p46 = scmp.eq.s32.totalorder %s9, 2
      %p47 = por %p45, %p46
      %p48 = scmp.ne.s32.totalorder %s40, %s43
      %p49 = scmp.eq.s32.totalorder %s9, 0
      %p50 = por %p48, %p49
      %p51 = scmp.ne.s32.totalorder %s40, %s43
      %p52 = scmp.eq.s32.totalorder %s14, 2
      %p53 = por %p51, %p52
      %p54 = scmp.ne.s32.totalorder %s43, %s44
      %p55 = scmp.eq.s32.totalorder %s14, 0
      %p56 = por %p54, %p55
      %p57 = scmp.ne.s32.totalorder %s43, %s44
      %p58 = scmp.eq.s32.totalorder %s15, 2
      %p59 = por %p57, %p58
      %p61 = scmp.ne.s32.totalorder %s44, %s60
      %p62 = scmp.eq.s32.totalorder %s15, 0
      %p63 = por %p61, %p62
      %s64 = ssub.s32 %s18, %s27
      %s65 = ssub.s32 %s17, %s31
      %s66 = sor.u32 %s64, %s65
      %p67 = scmp.eq.s32.totalorder %s66, 0
      %s69 = sadd.s32 %s68, 1
      %s70 = scalar_select %p67, %s68, %s69
      %p73 = pneg %p67
      %p74 = scmp.eq.s32.totalorder %s9, 2
      %p75 = por %p73, %p74
      %p76 = scmp.ne.s32.totalorder %s68, %s71
      %p77 = scmp.eq.s32.totalorder %s9, 0
      %p78 = por %p76, %p77
      %p79 = scmp.ne.s32.totalorder %s68, %s71
      %p80 = scmp.eq.s32.totalorder %s14, 2
      %p81 = por %p79, %p80
      %p82 = scmp.ne.s32.totalorder %s71, %s72
      %p83 = scmp.eq.s32.totalorder %s14, 0
      %p84 = por %p82, %p83
      %p85 = scmp.ne.s32.totalorder %s71, %s72
      %p86 = scmp.eq.s32.totalorder %s15, 2
      %p87 = por %p85, %p86
      %p89 = scmp.ne.s32.totalorder %s72, %s88
      %p90 = scmp.eq.s32.totalorder %s15, 0
      %p91 = por %p89, %p90
      %s92 = ssub.s32 %s17, %s31
      %p93 = scmp.eq.s32.totalorder %s92, 0
      %s95 = sadd.s32 %s94, 1
      %s96 = scalar_select %p93, %s94, %s95
      %p99 = pneg %p93
      %p100 = scmp.eq.s32.totalorder %s9, 2
      %p101 = por %p99, %p100
      %p102 = scmp.ne.s32.totalorder %s94, %s97
      %p103 = scmp.eq.s32.totalorder %s9, 0
      %p104 = por %p102, %p103
      %p105 = scmp.ne.s32.totalorder %s94, %s97
      %p106 = scmp.eq.s32.totalorder %s14, 2
      %p107 = por %p105, %p106
      %p108 = scmp.ne.s32.totalorder %s97, %s98
      %p109 = scmp.eq.s32.totalorder %s14, 0
      %p110 = por %p108, %p109
      %p111 = scmp.ne.s32.totalorder %s97, %s98
      %p112 = scmp.eq.s32.totalorder %s15, 2
      %p113 = por %p111, %p112
      %p115 = scmp.ne.s32.totalorder %s98, %s114
      %p116 = scmp.eq.s32.totalorder %s15, 0
      %p117 = por %p115, %p116
      %s118 = ssub.s32 %s16, %s35
      %s119 = ssub.s32 %s17, %s31
      %s120 = sor.u32 %s118, %s119
      %p121 = scmp.eq.s32.totalorder %s120, 0
      %s123 = sadd.s32 %s122, 1
      %s124 = scalar_select %p121, %s122, %s123
      %p127 = pneg %p121
      %p128 = scmp.eq.s32.totalorder %s9, 2
      %p129 = por %p127, %p128
      %p130 = scmp.ne.s32.totalorder %s122, %s125
      %p131 = scmp.eq.s32.totalorder %s9, 0
      %p132 = por %p130, %p131
      %p133 = scmp.ne.s32.totalorder %s122, %s125
      %p134 = scmp.eq.s32.totalorder %s14, 2
      %p135 = por %p133, %p134
      %p136 = scmp.ne.s32.totalorder %s125, %s126
      %p137 = scmp.eq.s32.totalorder %s14, 0
      %p138 = por %p136, %p137
      %p139 = scmp.ne.s32.totalorder %s125, %s126
      %p140 = scmp.eq.s32.totalorder %s15, 2
      %p141 = por %p139, %p140
      %p143 = scmp.ne.s32.totalorder %s126, %s142
      %p144 = scmp.eq.s32.totalorder %s15, 0
      %p145 = por %p143, %p144
      %p146 = scmp.le.s32.totalorder 1, %s9
      %p147 = scmp.lt.s32.totalorder %s9, 4
      %p148 = pnand %p146, %p147
      %p149 = pneg %p148
      // Predicated region
      $region9: #{cnn_encoder_forward.10} parent=5 // pred_check
        _
      $region10: #{cnn_encoder_forward.10} parent=5 // pred_check_branch
        %151 = sbr.rel (%p148) target = $region12
      $region11: #{cnn_encoder_forward.10} parent=5 // pred_region
        %s152 = ssub.s32 %s9, 1
        // Predicated region
        $region13: #{cnn_encoder_forward.10} parent=11 // pred_check
          %p153 = pneg %p84
        $region14: #{cnn_encoder_forward.10} parent=11 // pred_check_branch
          %155 = sbr.rel (%p153) target = $region16
        $region15: #{cnn_encoder_forward.10} parent=11 // pred_region
          %s156 = smul.u32 16, %s21
          %p157 = scmp.lt.s32.totalorder %s156, 15
          %s158 = scalar_select %p157, %s156, 15
          %p159 = scmp.lt.s32.totalorder %s20, 0
          %s160 = scalar_select %p159, %s20, 0
          %s161 = sadd.s32 %s160, %s158
          %s162 = smul.addr %s161, 4
          %s163 = scalar_lea.vmem %s1, %s162
          %s164 = smul.u32 16, %s21
        $region16: #{cnn_encoder_forward.10} parent=11 // pred_fallthru
          _
        // Predicated region
        $region17: #{cnn_encoder_forward.10} parent=11 // pred_check
          %p165 = pneg %p110
        $region18: #{cnn_encoder_forward.10} parent=11 // pred_check_branch
          %167 = sbr.rel (%p165) target = $region20
        $region19: #{cnn_encoder_forward.10} parent=11 // pred_region
          %p168 = scmp.lt.s32.totalorder %s20, 0
          %s169 = scalar_select %p168, %s20, 0
          %s170 = scalar_lea.vmem %s2, %s169
        $region20: #{cnn_encoder_forward.10} parent=11 // pred_fallthru
          _
      $region12: #{cnn_encoder_forward.10} parent=5 // pred_fallthru
        _
      %p171 = scmp.lt.s32.totalorder %s9, 3
      // Predicated region
      $region21: #{cnn_encoder_forward.10} parent=5 // pred_check
        %p172 = pneg %p171
      $region22: #{cnn_encoder_forward.10} parent=5 // pred_check_branch
        %174 = sbr.rel (%p172) target = $region24
      $region23: #{cnn_encoder_forward.10} parent=5 // pred_region
        // Predicated region
        $region25: #{cnn_encoder_forward.10} parent=23 // pred_check
          %p175 = pneg %p50
        $region26: #{cnn_encoder_forward.10} parent=23 // pred_check_branch
          %177 = sbr.rel (%p175) target = $region28
        $region27: #{cnn_encoder_forward.10} parent=23 // pred_region
          %s178 = smul.u32 32, %s16
          %s179 = ssub.s32 73, %s178
          %p180 = scmp.lt.s32.totalorder %s179, 32
          %s181 = scalar_select %p180, %s179, 32
          %s182 = smul.u32 4, %s181
          %p183 = scmp.lt.s32.totalorder %s178, 72
          %s184 = scalar_select %p183, %s178, 72
          %p185 = scmp.lt.s32.totalorder %s18, 0
          %s186 = scalar_select %p185, %s18, 0
          %s187 = sadd.s32 %s186, %s184
          %s188 = smul.addr %s187, 4
          %s189 = scalar_lea.vmem %s0, %s188
          %s190 = smul.u32 32, %s16
          %s191 = ssub.s32 73, %s190
          %p192 = scmp.lt.s32.totalorder %s191, 32
          %s193 = scalar_select %p192, %s191, 32
          %s194 = smul.u32 4, %s193
        $region28: #{cnn_encoder_forward.10} parent=23 // pred_fallthru
          _
      $region24: #{cnn_encoder_forward.10} parent=5 // pred_fallthru
        _
      %p195 = scmp.le.s32.totalorder 1, %s9
      %p196 = scmp.lt.s32.totalorder %s9, 4
      %p197 = pnand %p195, %p196
      %p198 = pneg %p197
      // Predicated region
      $region29: #{cnn_encoder_forward.10} parent=5 // pred_check
        _
      $region30: #{cnn_encoder_forward.10} parent=5 // pred_check_branch
        %200 = sbr.rel (%p197) target = $region32
      $region31: #{cnn_encoder_forward.10} parent=5 // pred_region
        %s201 = ssub.s32 %s9, 1
        %s202 = smul.u32 32, %s19
        %s203 = ssub.s32 73, %s202
        %p204 = scmp.lt.s32.totalorder %s203, 32
        %s205 = scalar_select %p204, %s203, 32
        %s206 = smul.u32 4, %s205
        %p207 = scmp.lt.s32.totalorder %s202, 72
        %s208 = scalar_select %p207, %s202, 72
        %p209 = scmp.lt.s32.totalorder %s21, 0
        %s210 = scalar_select %p209, %s21, 0
        %s211 = sadd.s32 %s210, %s208
        %s212 = smul.addr %s211, 4
        %s213 = scalar_lea.vmem %s0, %s212
        %p214 = pneg %p56
        %p215 = pneg %p53
        %s216 = smul.u32 16, %s21
        %p217 = scmp.lt.s32.totalorder %s216, 15
        %s218 = scalar_select %p217, %s216, 15
        %p219 = scmp.lt.s32.totalorder %s20, 0
        %s220 = scalar_select %p219, %s20, 0
        %s221 = sadd.s32 %s220, %s218
        %s222 = smul.addr %s221, 4
        %s223 = scalar_lea.vmem %s1, %s222
        %p224 = pneg %p84
        %p225 = pneg %p81
        %p226 = scmp.lt.s32.totalorder %s20, 0
        %s227 = scalar_select %p226, %s20, 0
        %s228 = scalar_lea.vmem %s2, %s227
        %p229 = pneg %p110
        %p230 = pneg %p107
        %p231 = pneg %p138
        %p232 = pneg %p135
        %s233 = sand.u32 %s125, 1
        %s234 = sand.u32 %s125, 1
        %s235 = smul.addr %s234, 128
        %s236 = scalar_lea.vmem [#allocation3], %s235
        %s237 = smul.u32 32, %s19
        %s238 = ssub.s32 73, %s237
        %p239 = scmp.lt.s32.totalorder %s238, 32
        %s240 = scalar_select %p239, %s238, 32
        %s241 = smul.u32 4, %s240
        %p242 = scmp.lt.s32.totalorder %s237, 72
        %s243 = scalar_select %p242, %s237, 72
        %p244 = scmp.lt.s32.totalorder %s21, 0
        %s245 = scalar_select %p244, %s21, 0
        %s246 = sadd.s32 %s245, %s243
        %s247 = smul.addr %s246, 4
        %s248 = scalar_lea.vmem %s0, %s247
        %s249 = smul.u32 32, %s19
        %s250 = ssub.s32 73, %s249
        %p251 = scmp.lt.s32.totalorder %s250, 32
        %s252 = scalar_select %p251, %s250, 32
        %s253 = smul.u32 4, %s252
        %s254 = smul.u32 16, %s21
        %p255 = scmp.lt.s32.totalorder %s254, 15
        %s256 = scalar_select %p255, %s254, 15
        %p257 = scmp.lt.s32.totalorder %s20, 0
        %s258 = scalar_select %p257, %s20, 0
        %s259 = sadd.s32 %s258, %s256
        %s260 = smul.addr %s259, 4
        %s261 = scalar_lea.vmem %s1, %s260
        %s262 = smul.u32 16, %s21
        %p263 = scmp.lt.s32.totalorder %s20, 0
        %s264 = scalar_select %p263, %s20, 0
        %s265 = scalar_lea.vmem %s2, %s264
        %s266 = smul.u32 32, %s19
        %s267 = ssub.s32 73, %s266
        %p268 = scmp.lt.s32.totalorder %s267, 32
        %s269 = scalar_select %p268, %s267, 32
        %s270 = smul.u32 4, %s269
        %p271 = scmp.eq.s32.totalorder %s21, 0
        // Predicated region
        $region33: #{cnn_encoder_forward.10} parent=31 // pred_check
          %p272 = pneg %p271
        $region34: #{cnn_encoder_forward.10} parent=31 // pred_check_branch
          %274 = sbr.rel (%p272) target = $region36
        $region35: #{cnn_encoder_forward.10} parent=31 // pred_region
          %275 = vst [vmem:[#allocation2] sm:$0xff] 0.0
          %276 = vst [vmem:[#allocation2 + $0x8] sm:$0xff] 0.0
          %277 = vst [vmem:[#allocation2 + $0x10] sm:$0xff] 0.0
          %278 = vst [vmem:[#allocation2 + $0x18] sm:$0xff] 0.0
          %279 = vst [vmem:[#allocation2 + $0x20] sm:$0xff] 0.0
          %280 = vst [vmem:[#allocation2 + $0x28] sm:$0xff] 0.0
          %281 = vst [vmem:[#allocation2 + $0x30] sm:$0xff] 0.0
          %282 = vst [vmem:[#allocation2 + $0x38] sm:$0xff] 0.0
          %283 = vst [vmem:[#allocation2 + $0x40] sm:$0xff] 0.0
          %284 = vst [vmem:[#allocation2 + $0x48] sm:$0xff] 0.0
          %285 = vst [vmem:[#allocation2 + $0x50] sm:$0xff] 0.0
          %286 = vst [vmem:[#allocation2 + $0x58] sm:$0xff] 0.0
          %287 = vst [vmem:[#allocation2 + $0x60] sm:$0xff] 0.0
          %288 = vst [vmem:[#allocation2 + $0x68] sm:$0xff] 0.0
          %289 = vst [vmem:[#allocation2 + $0x70] sm:$0xff] 0.0
          %290 = vst [vmem:[#allocation2 + $0x78] sm:$0xff] 0.0
          %291 = vst [vmem:[#allocation2 + $0x80] sm:$0xff] 0.0
          %292 = vst [vmem:[#allocation2 + $0x88] sm:$0xff] 0.0
          %293 = vst [vmem:[#allocation2 + $0x90] sm:$0xff] 0.0
          %294 = vst [vmem:[#allocation2 + $0x98] sm:$0xff] 0.0
          %295 = vst [vmem:[#allocation2 + $0xa0] sm:$0xff] 0.0
          %296 = vst [vmem:[#allocation2 + $0xa8] sm:$0xff] 0.0
          %297 = vst [vmem:[#allocation2 + $0xb0] sm:$0xff] 0.0
          %298 = vst [vmem:[#allocation2 + $0xb8] sm:$0xff] 0.0
          %299 = vst [vmem:[#allocation2 + $0xc0] sm:$0xff] 0.0
          %300 = vst [vmem:[#allocation2 + $0xc8] sm:$0xff] 0.0
          %301 = vst [vmem:[#allocation2 + $0xd0] sm:$0xff] 0.0
          %302 = vst [vmem:[#allocation2 + $0xd8] sm:$0xff] 0.0
          %303 = vst [vmem:[#allocation2 + $0xe0] sm:$0xff] 0.0
          %304 = vst [vmem:[#allocation2 + $0xe8] sm:$0xff] 0.0
          %305 = vst [vmem:[#allocation2 + $0xf0] sm:$0xff] 0.0
          %306 = vst [vmem:[#allocation2 + $0xf8] sm:$0xff] 0.0
        $region36: #{cnn_encoder_forward.10} parent=31 // pred_fallthru
          _
        %v307 = vld [vmem:[#allocation2] sm:$0xff]
        %v308 = vld [vmem:[#allocation2 + $0x8] sm:$0xff]
        %v309 = vld [vmem:[#allocation2 + $0x10] sm:$0xff]
        %v310 = vld [vmem:[#allocation2 + $0x18] sm:$0xff]
        %v311 = vld [vmem:[#allocation2 + $0x20] sm:$0xff]
        %v312 = vld [vmem:[#allocation2 + $0x28] sm:$0xff]
        %v313 = vld [vmem:[#allocation2 + $0x30] sm:$0xff]
        %v314 = vld [vmem:[#allocation2 + $0x38] sm:$0xff]
        %v315 = vld [vmem:[#allocation2 + $0x40] sm:$0xff]
        %v316 = vld [vmem:[#allocation2 + $0x48] sm:$0xff]
        %v317 = vld [vmem:[#allocation2 + $0x50] sm:$0xff]
        %v318 = vld [vmem:[#allocation2 + $0x58] sm:$0xff]
        %v319 = vld [vmem:[#allocation2 + $0x60] sm:$0xff]
        %v320 = vld [vmem:[#allocation2 + $0x68] sm:$0xff]
        %v321 = vld [vmem:[#allocation2 + $0x70] sm:$0xff]
        %v322 = vld [vmem:[#allocation2 + $0x78] sm:$0xff]
        %v323 = vld [vmem:[#allocation2 + $0x80] sm:$0xff]
        %v324 = vld [vmem:[#allocation2 + $0x88] sm:$0xff]
        %v325 = vld [vmem:[#allocation2 + $0x90] sm:$0xff]
        %v326 = vld [vmem:[#allocation2 + $0x98] sm:$0xff]
        %v327 = vld [vmem:[#allocation2 + $0xa0] sm:$0xff]
        %v328 = vld [vmem:[#allocation2 + $0xa8] sm:$0xff]
        %v329 = vld [vmem:[#allocation2 + $0xb0] sm:$0xff]
        %v330 = vld [vmem:[#allocation2 + $0xb8] sm:$0xff]
        %v331 = vld [vmem:[#allocation2 + $0xc0] sm:$0xff]
        %v332 = vld [vmem:[#allocation2 + $0xc8] sm:$0xff]
        %v333 = vld [vmem:[#allocation2 + $0xd0] sm:$0xff]
        %v334 = vld [vmem:[#allocation2 + $0xd8] sm:$0xff]
        %v335 = vld [vmem:[#allocation2 + $0xe0] sm:$0xff]
        %v336 = vld [vmem:[#allocation2 + $0xe8] sm:$0xff]
        %v337 = vld [vmem:[#allocation2 + $0xf0] sm:$0xff]
        %v338 = vld [vmem:[#allocation2 + $0xf8] sm:$0xff]
        %v339 = vld [vmem:[%s248] sm:$0xf]
        %v340 = vld [vmem:[%s248 + $0x4] sm:$0xf]
        %v341 = vld [vmem:[%s248 + $0x8] sm:$0xf]
        %v342 = vld [vmem:[%s248 + $0xc] sm:$0xf]
        %v343 = vld [vmem:[%s248 + $0x10] sm:$0xf]
        %v344 = vld [vmem:[%s248 + $0x14] sm:$0xf]
        %v345 = vld [vmem:[%s248 + $0x18] sm:$0xf]
        %v346 = vld [vmem:[%s248 + $0x1c] sm:$0xf]
        %v347 = vld [vmem:[%s248 + $0x20] sm:$0xf]
        %v348 = vld [vmem:[%s248 + $0x24] sm:$0xf]
        %v349 = vld [vmem:[%s248 + $0x28] sm:$0xf]
        %v350 = vld [vmem:[%s248 + $0x2c] sm:$0xf]
        %v351 = vld [vmem:[%s248 + $0x30] sm:$0xf]
        %v352 = vld [vmem:[%s248 + $0x34] sm:$0xf]
        %v353 = vld [vmem:[%s248 + $0x38] sm:$0xf]
        %v354 = vld [vmem:[%s248 + $0x3c] sm:$0xf]
        %v355 = vld [vmem:[%s248 + $0x40] sm:$0xf]
        %v356 = vld [vmem:[%s248 + $0x44] sm:$0xf]
        %v357 = vld [vmem:[%s248 + $0x48] sm:$0xf]
        %v358 = vld [vmem:[%s248 + $0x4c] sm:$0xf]
        %v359 = vld [vmem:[%s248 + $0x50] sm:$0xf]
        %v360 = vld [vmem:[%s248 + $0x54] sm:$0xf]
        %v361 = vld [vmem:[%s248 + $0x58] sm:$0xf]
        %v362 = vld [vmem:[%s248 + $0x5c] sm:$0xf]
        %v363 = vld [vmem:[%s248 + $0x60] sm:$0xf]
        %v364 = vld [vmem:[%s248 + $0x64] sm:$0xf]
        %v365 = vld [vmem:[%s248 + $0x68] sm:$0xf]
        %v366 = vld [vmem:[%s248 + $0x6c] sm:$0xf]
        %v367 = vld [vmem:[%s248 + $0x70] sm:$0xf]
        %v368 = vld [vmem:[%s248 + $0x74] sm:$0xf]
        %v369 = vld [vmem:[%s248 + $0x78] sm:$0xf]
        %v370 = vld [vmem:[%s248 + $0x7c] sm:$0xf]
        %v371 = vld [vmem:[%s261] sm:$0xf]
        %v372 = vld [vmem:[%s261 + $0x4] sm:$0xf]
        %v373 = vld [vmem:[%s261 + $0x8] sm:$0xf]
        %v374 = vld [vmem:[%s261 + $0xc] sm:$0xf]
        %v375 = vld [vmem:[%s261 + $0x10] sm:$0xf]
        %v376 = vld [vmem:[%s261 + $0x14] sm:$0xf]
        %v377 = vld [vmem:[%s261 + $0x18] sm:$0xf]
        %v378 = vld [vmem:[%s261 + $0x1c] sm:$0xf]
        %v379 = vld [vmem:[%s261 + $0x20] sm:$0xf]
        %v380 = vld [vmem:[%s261 + $0x24] sm:$0xf]
        %v381 = vld [vmem:[%s261 + $0x28] sm:$0xf]
        %v382 = vld [vmem:[%s261 + $0x2c] sm:$0xf]
        %v383 = vld [vmem:[%s261 + $0x30] sm:$0xf]
        %v384 = vld [vmem:[%s261 + $0x34] sm:$0xf]
        %v385 = vld [vmem:[%s261 + $0x38] sm:$0xf]
        %v386 = vld [vmem:[%s261 + $0x3c] sm:$0xf]
        %v419 = vunpack.c.l.b16 %v339
        %v420 = vunpack.c.l.b16 %v340
        %v421 = vunpack.c.l.b16 %v341
        %v422 = vunpack.c.l.b16 %v342
        %v423 = vunpack.c.l.b16 %v343
        %v424 = vunpack.c.l.b16 %v344
        %v425 = vunpack.c.l.b16 %v345
        %v426 = vunpack.c.l.b16 %v346
        %v427 = vunpack.c.l.b16 %v347
        %v428 = vunpack.c.l.b16 %v348
        %v429 = vunpack.c.l.b16 %v349
        %v430 = vunpack.c.l.b16 %v350
        %v431 = vunpack.c.l.b16 %v351
        %v432 = vunpack.c.l.b16 %v352
        %v433 = vunpack.c.l.b16 %v353
        %v434 = vunpack.c.l.b16 %v354
        %v435 = vunpack.c.l.b16 %v355
        %v436 = vunpack.c.l.b16 %v356
        %v437 = vunpack.c.l.b16 %v357
        %v438 = vunpack.c.l.b16 %v358
        %v439 = vunpack.c.l.b16 %v359
        %v440 = vunpack.c.l.b16 %v360
        %v441 = vunpack.c.l.b16 %v361
        %v442 = vunpack.c.l.b16 %v362
        %v443 = vunpack.c.l.b16 %v363
        %v444 = vunpack.c.l.b16 %v364
        %v445 = vunpack.c.l.b16 %v365
        %v446 = vunpack.c.l.b16 %v366
        %v447 = vunpack.c.l.b16 %v367
        %v448 = vunpack.c.l.b16 %v368
        %v449 = vunpack.c.l.b16 %v369
        %v450 = vunpack.c.l.b16 %v370
        %v451 = vpack.c.b16 %v420, %v419
        %v452 = vpack.c.b16 %v422, %v421
        %v453 = vpack.c.b16 %v424, %v423
        %v454 = vpack.c.b16 %v426, %v425
        %v455 = vpack.c.b16 %v428, %v427
        %v456 = vpack.c.b16 %v430, %v429
        %v457 = vpack.c.b16 %v432, %v431
        %v458 = vpack.c.b16 %v434, %v433
        %v459 = vpack.c.b16 %v436, %v435
        %v460 = vpack.c.b16 %v438, %v437
        %v461 = vpack.c.b16 %v440, %v439
        %v462 = vpack.c.b16 %v442, %v441
        %v463 = vpack.c.b16 %v444, %v443
        %v464 = vpack.c.b16 %v446, %v445
        %v465 = vpack.c.b16 %v448, %v447
        %v466 = vpack.c.b16 %v450, %v449
        %v499 = vunpack.c.l.b16 %v371
        %v500 = vunpack.c.l.b16 %v372
        %v501 = vunpack.c.l.b16 %v373
        %v502 = vunpack.c.l.b16 %v374
        %v503 = vunpack.c.l.b16 %v375
        %v504 = vunpack.c.l.b16 %v376
        %v505 = vunpack.c.l.b16 %v377
        %v506 = vunpack.c.l.b16 %v378
        %v507 = vunpack.c.l.b16 %v379
        %v508 = vunpack.c.l.b16 %v380
        %v509 = vunpack.c.l.b16 %v381
        %v510 = vunpack.c.l.b16 %v382
        %v511 = vunpack.c.l.b16 %v383
        %v512 = vunpack.c.l.b16 %v384
        %v513 = vunpack.c.l.b16 %v385
        %v514 = vunpack.c.l.b16 %v386
        %v515 = vpack.c.b16 %v500, %v499
        %v516 = vpack.c.b16 %v502, %v501
        %v517 = vpack.c.b16 %v504, %v503
        %v518 = vpack.c.b16 %v506, %v505
        %v519 = vpack.c.b16 %v508, %v507
        %v520 = vpack.c.b16 %v510, %v509
        %v521 = vpack.c.b16 %v512, %v511
        %v522 = vpack.c.b16 %v514, %v513
        %531 = vmatpush.bf16.msra.mxu0 %v522
        %532 = vmatpush.bf16.msra.mxu0 %v521
        %533 = vmatpush.bf16.msra.mxu0 %v520
        %534 = vmatpush.bf16.msra.mxu0 %v519
        %535 = vmatpush.bf16.msra.mxu0 %v518
        %536 = vmatpush.bf16.msra.mxu0 %v517
        %537 = vmatpush.bf16.msra.mxu0 %v516
        %538 = vmatpush.bf16.msra.mxu0 %v515
        %539 = vmatmul.bf16.gmra.mxu0 %v451
        %v540 = vpop.f32.mrf.mxu0
        %v541 = vadd.f32 0.0, %v540
        %v542 = vpop.f32.mrf.mxu0
        %v543 = vadd.f32 0.0, %v542
        %544 = vmatmul.bf16.gmra.mxu0 %v452
        %v545 = vpop.f32.mrf.mxu0
        %v546 = vadd.f32 0.0, %v545
        %v547 = vpop.f32.mrf.mxu0
        %v548 = vadd.f32 0.0, %v547
        %549 = vmatmul.bf16.gmra.mxu0 %v453
        %v550 = vpop.f32.mrf.mxu0
        %v551 = vadd.f32 0.0, %v550
        %v552 = vpop.f32.mrf.mxu0
        %v553 = vadd.f32 0.0, %v552
        %554 = vmatmul.bf16.gmra.mxu0 %v454
        %v555 = vpop.f32.mrf.mxu0
        %v556 = vadd.f32 0.0, %v555
        %v557 = vpop.f32.mrf.mxu0
        %v558 = vadd.f32 0.0, %v557
        %559 = vmatmul.bf16.gmra.mxu0 %v455
        %v560 = vpop.f32.mrf.mxu0
        %v561 = vadd.f32 0.0, %v560
        %v562 = vpop.f32.mrf.mxu0
        %v563 = vadd.f32 0.0, %v562
        %564 = vmatmul.bf16.gmra.mxu0 %v456
        %v565 = vpop.f32.mrf.mxu0
        %v566 = vadd.f32 0.0, %v565
        %v567 = vpop.f32.mrf.mxu0
        %v568 = vadd.f32 0.0, %v567
        %569 = vmatmul.bf16.gmra.mxu0 %v457
        %v570 = vpop.f32.mrf.mxu0
        %v571 = vadd.f32 0.0, %v570
        %v572 = vpop.f32.mrf.mxu0
        %v573 = vadd.f32 0.0, %v572
        %574 = vmatmul.bf16.gmra.mxu0 %v458
        %v575 = vpop.f32.mrf.mxu0
        %v576 = vadd.f32 0.0, %v575
        %v577 = vpop.f32.mrf.mxu0
        %v578 = vadd.f32 0.0, %v577
        %579 = vmatmul.bf16.gmra.mxu0 %v459
        %v580 = vpop.f32.mrf.mxu0
        %v581 = vadd.f32 0.0, %v580
        %v582 = vpop.f32.mrf.mxu0
        %v583 = vadd.f32 0.0, %v582
        %584 = vmatmul.bf16.gmra.mxu0 %v460
        %v585 = vpop.f32.mrf.mxu0
        %v586 = vadd.f32 0.0, %v585
        %v587 = vpop.f32.mrf.mxu0
        %v588 = vadd.f32 0.0, %v587
        %589 = vmatmul.bf16.gmra.mxu0 %v461
        %v590 = vpop.f32.mrf.mxu0
        %v591 = vadd.f32 0.0, %v590
        %v592 = vpop.f32.mrf.mxu0
        %v593 = vadd.f32 0.0, %v592
        %594 = vmatmul.bf16.gmra.mxu0 %v462
        %v595 = vpop.f32.mrf.mxu0
        %v596 = vadd.f32 0.0, %v595
        %v597 = vpop.f32.mrf.mxu0
        %v598 = vadd.f32 0.0, %v597
        %599 = vmatmul.bf16.gmra.mxu0 %v463
        %v600 = vpop.f32.mrf.mxu0
        %v601 = vadd.f32 0.0, %v600
        %v602 = vpop.f32.mrf.mxu0
        %v603 = vadd.f32 0.0, %v602
        %604 = vmatmul.bf16.gmra.mxu0 %v464
        %v605 = vpop.f32.mrf.mxu0
        %v606 = vadd.f32 0.0, %v605
        %v607 = vpop.f32.mrf.mxu0
        %v608 = vadd.f32 0.0, %v607
        %609 = vmatmul.bf16.gmra.mxu0 %v465
        %v610 = vpop.f32.mrf.mxu0
        %v611 = vadd.f32 0.0, %v610
        %v612 = vpop.f32.mrf.mxu0
        %v613 = vadd.f32 0.0, %v612
        %614 = vmatmul.bf16.gmra.mxu0 %v466
        %v615 = vpop.f32.mrf.mxu0
        %v616 = vadd.f32 0.0, %v615
        %v617 = vpop.f32.mrf.mxu0
        %v618 = vadd.f32 0.0, %v617
        %619 = vdwg.mxu0
        %v620 = vadd.f32 %v307, %v541
        %v621 = vadd.f32 %v308, %v543
        %v622 = vadd.f32 %v309, %v546
        %v623 = vadd.f32 %v310, %v548
        %v624 = vadd.f32 %v311, %v551
        %v625 = vadd.f32 %v312, %v553
        %v626 = vadd.f32 %v313, %v556
        %v627 = vadd.f32 %v314, %v558
        %v628 = vadd.f32 %v315, %v561
        %v629 = vadd.f32 %v316, %v563
        %v630 = vadd.f32 %v317, %v566
        %v631 = vadd.f32 %v318, %v568
        %v632 = vadd.f32 %v319, %v571
        %v633 = vadd.f32 %v320, %v573
        %v634 = vadd.f32 %v321, %v576
        %v635 = vadd.f32 %v322, %v578
        %v636 = vadd.f32 %v323, %v581
        %v637 = vadd.f32 %v324, %v583
        %v638 = vadd.f32 %v325, %v586
        %v639 = vadd.f32 %v326, %v588
        %v640 = vadd.f32 %v327, %v591
        %v641 = vadd.f32 %v328, %v593
        %v642 = vadd.f32 %v329, %v596
        %v643 = vadd.f32 %v330, %v598
        %v644 = vadd.f32 %v331, %v601
        %v645 = vadd.f32 %v332, %v603
        %v646 = vadd.f32 %v333, %v606
        %v647 = vadd.f32 %v334, %v608
        %v648 = vadd.f32 %v335, %v611
        %v649 = vadd.f32 %v336, %v613
        %v650 = vadd.f32 %v337, %v616
        %v651 = vadd.f32 %v338, %v618
        %652 = vst [vmem:[#allocation2] sm:$0xff] %v620
        %653 = vst [vmem:[#allocation2 + $0x8] sm:$0xff] %v621
        %654 = vst [vmem:[#allocation2 + $0x10] sm:$0xff] %v622
        %655 = vst [vmem:[#allocation2 + $0x18] sm:$0xff] %v623
        %656 = vst [vmem:[#allocation2 + $0x20] sm:$0xff] %v624
        %657 = vst [vmem:[#allocation2 + $0x28] sm:$0xff] %v625
        %658 = vst [vmem:[#allocation2 + $0x30] sm:$0xff] %v626
        %659 = vst [vmem:[#allocation2 + $0x38] sm:$0xff] %v627
        %660 = vst [vmem:[#allocation2 + $0x40] sm:$0xff] %v628
        %661 = vst [vmem:[#allocation2 + $0x48] sm:$0xff] %v629
        %662 = vst [vmem:[#allocation2 + $0x50] sm:$0xff] %v630
        %663 = vst [vmem:[#allocation2 + $0x58] sm:$0xff] %v631
        %664 = vst [vmem:[#allocation2 + $0x60] sm:$0xff] %v632
        %665 = vst [vmem:[#allocation2 + $0x68] sm:$0xff] %v633
        %666 = vst [vmem:[#allocation2 + $0x70] sm:$0xff] %v634
        %667 = vst [vmem:[#allocation2 + $0x78] sm:$0xff] %v635
        %668 = vst [vmem:[#allocation2 + $0x80] sm:$0xff] %v636
        %669 = vst [vmem:[#allocation2 + $0x88] sm:$0xff] %v637
        %670 = vst [vmem:[#allocation2 + $0x90] sm:$0xff] %v638
        %671 = vst [vmem:[#allocation2 + $0x98] sm:$0xff] %v639
        %672 = vst [vmem:[#allocation2 + $0xa0] sm:$0xff] %v640
        %673 = vst [vmem:[#allocation2 + $0xa8] sm:$0xff] %v641
        %674 = vst [vmem:[#allocation2 + $0xb0] sm:$0xff] %v642
        %675 = vst [vmem:[#allocation2 + $0xb8] sm:$0xff] %v643
        %676 = vst [vmem:[#allocation2 + $0xc0] sm:$0xff] %v644
        %677 = vst [vmem:[#allocation2 + $0xc8] sm:$0xff] %v645
        %678 = vst [vmem:[#allocation2 + $0xd0] sm:$0xff] %v646
        %679 = vst [vmem:[#allocation2 + $0xd8] sm:$0xff] %v647
        %680 = vst [vmem:[#allocation2 + $0xe0] sm:$0xff] %v648
        %681 = vst [vmem:[#allocation2 + $0xe8] sm:$0xff] %v649
        %682 = vst [vmem:[#allocation2 + $0xf0] sm:$0xff] %v650
        %683 = vst [vmem:[#allocation2 + $0xf8] sm:$0xff] %v651
        // Predicated region
        $region37: #{cnn_encoder_forward.10} parent=31 // pred_check
          %p684 = pneg %p271
        $region38: #{cnn_encoder_forward.10} parent=31 // pred_check_branch
          %686 = sbr.rel (%p684) target = $region40
        $region39: #{cnn_encoder_forward.10} parent=31 // pred_region
          %v687 = vld [vmem:[#allocation2] sm:$0xff]
          %v688 = vld [vmem:[#allocation2 + $0x8] sm:$0xff]
          %v689 = vld [vmem:[#allocation2 + $0x10] sm:$0xff]
          %v690 = vld [vmem:[#allocation2 + $0x18] sm:$0xff]
          %v691 = vld [vmem:[#allocation2 + $0x20] sm:$0xff]
          %v692 = vld [vmem:[#allocation2 + $0x28] sm:$0xff]
          %v693 = vld [vmem:[#allocation2 + $0x30] sm:$0xff]
          %v694 = vld [vmem:[#allocation2 + $0x38] sm:$0xff]
          %v695 = vld [vmem:[#allocation2 + $0x40] sm:$0xff]
          %v696 = vld [vmem:[#allocation2 + $0x48] sm:$0xff]
          %v697 = vld [vmem:[#allocation2 + $0x50] sm:$0xff]
          %v698 = vld [vmem:[#allocation2 + $0x58] sm:$0xff]
          %v699 = vld [vmem:[#allocation2 + $0x60] sm:$0xff]
          %v700 = vld [vmem:[#allocation2 + $0x68] sm:$0xff]
          %v701 = vld [vmem:[#allocation2 + $0x70] sm:$0xff]
          %v702 = vld [vmem:[#allocation2 + $0x78] sm:$0xff]
          %v703 = vld [vmem:[#allocation2 + $0x80] sm:$0xff]
          %v704 = vld [vmem:[#allocation2 + $0x88] sm:$0xff]
          %v705 = vld [vmem:[#allocation2 + $0x90] sm:$0xff]
          %v706 = vld [vmem:[#allocation2 + $0x98] sm:$0xff]
          %v707 = vld [vmem:[#allocation2 + $0xa0] sm:$0xff]
          %v708 = vld [vmem:[#allocation2 + $0xa8] sm:$0xff]
          %v709 = vld [vmem:[#allocation2 + $0xb0] sm:$0xff]
          %v710 = vld [vmem:[#allocation2 + $0xb8] sm:$0xff]
          %v711 = vld [vmem:[#allocation2 + $0xc0] sm:$0xff]
          %v712 = vld [vmem:[#allocation2 + $0xc8] sm:$0xff]
          %v713 = vld [vmem:[#allocation2 + $0xd0] sm:$0xff]
          %v714 = vld [vmem:[#allocation2 + $0xd8] sm:$0xff]
          %v715 = vld [vmem:[#allocation2 + $0xe0] sm:$0xff]
          %v716 = vld [vmem:[#allocation2 + $0xe8] sm:$0xff]
          %v717 = vld [vmem:[#allocation2 + $0xf0] sm:$0xff]
          %v718 = vld [vmem:[#allocation2 + $0xf8] sm:$0xff]
          %v719 = vld [vmem:[%s265] sm:$0x1]
          %v721 = vperm.slane %v719, 0
          %v723 = vadd.f32 %v687, %v721
          %v724 = vadd.f32 %v688, %v721
          %v725 = vadd.f32 %v689, %v721
          %v726 = vadd.f32 %v690, %v721
          %v727 = vadd.f32 %v691, %v721
          %v728 = vadd.f32 %v692, %v721
          %v729 = vadd.f32 %v693, %v721
          %v730 = vadd.f32 %v694, %v721
          %v731 = vadd.f32 %v695, %v721
          %v732 = vadd.f32 %v696, %v721
          %v733 = vadd.f32 %v697, %v721
          %v734 = vadd.f32 %v698, %v721
          %v735 = vadd.f32 %v699, %v721
          %v736 = vadd.f32 %v700, %v721
          %v737 = vadd.f32 %v701, %v721
          %v738 = vadd.f32 %v702, %v721
          %v739 = vadd.f32 %v703, %v721
          %v740 = vadd.f32 %v704, %v721
          %v741 = vadd.f32 %v705, %v721
          %v742 = vadd.f32 %v706, %v721
          %v743 = vadd.f32 %v707, %v721
          %v744 = vadd.f32 %v708, %v721
          %v745 = vadd.f32 %v709, %v721
          %v746 = vadd.f32 %v710, %v721
          %v747 = vadd.f32 %v711, %v721
          %v748 = vadd.f32 %v712, %v721
          %v749 = vadd.f32 %v713, %v721
          %v750 = vadd.f32 %v714, %v721
          %v751 = vadd.f32 %v715, %v721
          %v752 = vadd.f32 %v716, %v721
          %v753 = vadd.f32 %v717, %v721
          %v754 = vadd.f32 %v718, %v721
          %v755 = vmax.f32 %v723, 0.0
          %v756 = vmax.f32 %v724, 0.0
          %v757 = vmax.f32 %v725, 0.0
          %v758 = vmax.f32 %v726, 0.0
          %v759 = vmax.f32 %v727, 0.0
          %v760 = vmax.f32 %v728, 0.0
          %v761 = vmax.f32 %v729, 0.0
          %v762 = vmax.f32 %v730, 0.0
          %v763 = vmax.f32 %v731, 0.0
          %v764 = vmax.f32 %v732, 0.0
          %v765 = vmax.f32 %v733, 0.0
          %v766 = vmax.f32 %v734, 0.0
          %v767 = vmax.f32 %v735, 0.0
          %v768 = vmax.f32 %v736, 0.0
          %v769 = vmax.f32 %v737, 0.0
          %v770 = vmax.f32 %v738, 0.0
          %v771 = vmax.f32 %v739, 0.0
          %v772 = vmax.f32 %v740, 0.0
          %v773 = vmax.f32 %v741, 0.0
          %v774 = vmax.f32 %v742, 0.0
          %v775 = vmax.f32 %v743, 0.0
          %v776 = vmax.f32 %v744, 0.0
          %v777 = vmax.f32 %v745, 0.0
          %v778 = vmax.f32 %v746, 0.0
          %v779 = vmax.f32 %v747, 0.0
          %v780 = vmax.f32 %v748, 0.0
          %v781 = vmax.f32 %v749, 0.0
          %v782 = vmax.f32 %v750, 0.0
          %v783 = vmax.f32 %v751, 0.0
          %v784 = vmax.f32 %v752, 0.0
          %v785 = vmax.f32 %v753, 0.0
          %v786 = vmax.f32 %v754, 0.0
          %v787 = vpack.c.bf16 %v755, %v755
          %v788 = vpack.c.bf16 %v756, %v756
          %v789 = vpack.c.bf16 %v757, %v757
          %v790 = vpack.c.bf16 %v758, %v758
          %v791 = vpack.c.bf16 %v759, %v759
          %v792 = vpack.c.bf16 %v760, %v760
          %v793 = vpack.c.bf16 %v761, %v761
          %v794 = vpack.c.bf16 %v762, %v762
          %v795 = vpack.c.bf16 %v763, %v763
          %v796 = vpack.c.bf16 %v764, %v764
          %v797 = vpack.c.bf16 %v765, %v765
          %v798 = vpack.c.bf16 %v766, %v766
          %v799 = vpack.c.bf16 %v767, %v767
          %v800 = vpack.c.bf16 %v768, %v768
          %v801 = vpack.c.bf16 %v769, %v769
          %v802 = vpack.c.bf16 %v770, %v770
          %v803 = vpack.c.bf16 %v771, %v771
          %v804 = vpack.c.bf16 %v772, %v772
          %v805 = vpack.c.bf16 %v773, %v773
          %v806 = vpack.c.bf16 %v774, %v774
          %v807 = vpack.c.bf16 %v775, %v775
          %v808 = vpack.c.bf16 %v776, %v776
          %v809 = vpack.c.bf16 %v777, %v777
          %v810 = vpack.c.bf16 %v778, %v778
          %v811 = vpack.c.bf16 %v779, %v779
          %v812 = vpack.c.bf16 %v780, %v780
          %v813 = vpack.c.bf16 %v781, %v781
          %v814 = vpack.c.bf16 %v782, %v782
          %v815 = vpack.c.bf16 %v783, %v783
          %v816 = vpack.c.bf16 %v784, %v784
          %v817 = vpack.c.bf16 %v785, %v785
          %v818 = vpack.c.bf16 %v786, %v786
          %819 = vst [vmem:[%s236] sm:$0xf] %v787
          %820 = vst [vmem:[%s236 + $0x4] sm:$0xf] %v788
          %821 = vst [vmem:[%s236 + $0x8] sm:$0xf] %v789
          %822 = vst [vmem:[%s236 + $0xc] sm:$0xf] %v790
          %823 = vst [vmem:[%s236 + $0x10] sm:$0xf] %v791
          %824 = vst [vmem:[%s236 + $0x14] sm:$0xf] %v792
          %825 = vst [vmem:[%s236 + $0x18] sm:$0xf] %v793
          %826 = vst [vmem:[%s236 + $0x1c] sm:$0xf] %v794
          %827 = vst [vmem:[%s236 + $0x20] sm:$0xf] %v795
          %828 = vst [vmem:[%s236 + $0x24] sm:$0xf] %v796
          %829 = vst [vmem:[%s236 + $0x28] sm:$0xf] %v797
          %830 = vst [vmem:[%s236 + $0x2c] sm:$0xf] %v798
          %831 = vst [vmem:[%s236 + $0x30] sm:$0xf] %v799
          %832 = vst [vmem:[%s236 + $0x34] sm:$0xf] %v800
          %833 = vst [vmem:[%s236 + $0x38] sm:$0xf] %v801
          %834 = vst [vmem:[%s236 + $0x3c] sm:$0xf] %v802
          %835 = vst [vmem:[%s236 + $0x40] sm:$0xf] %v803
          %836 = vst [vmem:[%s236 + $0x44] sm:$0xf] %v804
          %837 = vst [vmem:[%s236 + $0x48] sm:$0xf] %v805
          %838 = vst [vmem:[%s236 + $0x4c] sm:$0xf] %v806
          %839 = vst [vmem:[%s236 + $0x50] sm:$0xf] %v807
          %840 = vst [vmem:[%s236 + $0x54] sm:$0xf] %v808
          %841 = vst [vmem:[%s236 + $0x58] sm:$0xf] %v809
          %842 = vst [vmem:[%s236 + $0x5c] sm:$0xf] %v810
          %843 = vst [vmem:[%s236 + $0x60] sm:$0xf] %v811
          %844 = vst [vmem:[%s236 + $0x64] sm:$0xf] %v812
          %845 = vst [vmem:[%s236 + $0x68] sm:$0xf] %v813
          %846 = vst [vmem:[%s236 + $0x6c] sm:$0xf] %v814
          %847 = vst [vmem:[%s236 + $0x70] sm:$0xf] %v815
          %848 = vst [vmem:[%s236 + $0x74] sm:$0xf] %v816
          %849 = vst [vmem:[%s236 + $0x78] sm:$0xf] %v817
          %850 = vst [vmem:[%s236 + $0x7c] sm:$0xf] %v818
        $region40: #{cnn_encoder_forward.10} parent=31 // pred_fallthru
          _
        %s851 = sand.u32 %s125, 1
        %s852 = sand.u32 %s125, 1
        %s853 = smul.addr %s852, 128
        %s854 = scalar_lea.vmem [#allocation3], %s853
        // Predicated region
        $region41: #{cnn_encoder_forward.10} parent=31 // pred_check
          %p855 = pneg %p135
        $region42: #{cnn_encoder_forward.10} parent=31 // pred_check_branch
          %857 = sbr.rel (%p855) target = $region44
        $region43: #{cnn_encoder_forward.10} parent=31 // pred_region
          %s858 = smul.u32 32, %s19
          %s859 = ssub.s32 73, %s858
          %p860 = scmp.lt.s32.totalorder %s859, 32
          %s861 = scalar_select %p860, %s859, 32
          %s862 = smul.u32 4, %s861
          %p863 = scmp.ne.s32.totalorder 0, %s862
          %s864 = sadd.s32 %s20, %s858
          %s865 = smul.addr %s864, 4
          %s866 = scalar_lea.vmem %s3, %s865
          // Predicated region
          $region45: #{cnn_encoder_forward.10} parent=43 // pred_check
            %p867 = pneg %p863
          $region46: #{cnn_encoder_forward.10} parent=43 // pred_check_branch
            %869 = sbr.rel (%p867) target = $region48
          $region47: #{cnn_encoder_forward.10} parent=43 // pred_region
            // Predicated region
            $region49: #{cnn_encoder_forward.10} parent=47 // pred_check
              _
            $region50: #{cnn_encoder_forward.10} parent=47 // pred_check_branch
              %871 = sbr.rel target = $region52
            $region51: #{cnn_encoder_forward.10} parent=47 // pred_region
              // Predicated region
              $region71: #{cnn_encoder_forward.10} parent=51 // pred_check
                _
              $region72: #{cnn_encoder_forward.10} parent=51 // pred_check_branch
                %983 = sbr.rel (0) target = $region74
              $region73: #{cnn_encoder_forward.10} parent=51 // pred_region
                %s985 = ssub.s32 16, 1
                %s986 = sshrl.u32 %s861, 5
                // While loop
                $region75: #{cnn_encoder_forward.10} parent=73 // loop_pre_header
                  _
                $region76: #{cnn_encoder_forward.10} parent=73 // loop_header
                  %s988 = sphi 0, %s990
                  %p989 = scmp.ge.s32.totalorder %s988, %s986
                  %s993 = sphi 0, %s1062
                  %s994 = sphi %s854, %s1065
                  %s995 = sphi %s866, %s1066
                $region77: #{cnn_encoder_forward.10} parent=73 // loop_header_branch
                  %992 = sbr.rel (%p989) target = $region81
                $region78: #{cnn_encoder_forward.10} parent=73 // loop_body
                  %v996 = vld [vmem:[%s994] sm:%s985]
                  %997 = vst [vmem:[%s995] sm:%s985] %v996
                  %v998 = vld [vmem:[%s994 + $0x4] sm:%s985]
                  %999 = vst [vmem:[%s995 + $0x4] sm:%s985] %v998
                  %v1000 = vld [vmem:[%s994 + $0x8] sm:%s985]
                  %1001 = vst [vmem:[%s995 + $0x8] sm:%s985] %v1000
                  %v1002 = vld [vmem:[%s994 + $0xc] sm:%s985]
                  %1003 = vst [vmem:[%s995 + $0xc] sm:%s985] %v1002
                  %v1004 = vld [vmem:[%s994 + $0x10] sm:%s985]
                  %1005 = vst [vmem:[%s995 + $0x10] sm:%s985] %v1004
                  %v1006 = vld [vmem:[%s994 + $0x14] sm:%s985]
                  %1007 = vst [vmem:[%s995 + $0x14] sm:%s985] %v1006
                  %v1008 = vld [vmem:[%s994 + $0x18] sm:%s985]
                  %1009 = vst [vmem:[%s995 + $0x18] sm:%s985] %v1008
                  %v1010 = vld [vmem:[%s994 + $0x1c] sm:%s985]
                  %1011 = vst [vmem:[%s995 + $0x1c] sm:%s985] %v1010
                  %v1012 = vld [vmem:[%s994 + $0x20] sm:%s985]
                  %1013 = vst [vmem:[%s995 + $0x20] sm:%s985] %v1012
                  %v1014 = vld [vmem:[%s994 + $0x24] sm:%s985]
                  %1015 = vst [vmem:[%s995 + $0x24] sm:%s985] %v1014
                  %v1016 = vld [vmem:[%s994 + $0x28] sm:%s985]
                  %1017 = vst [vmem:[%s995 + $0x28] sm:%s985] %v1016
                  %v1018 = vld [vmem:[%s994 + $0x2c] sm:%s985]
                  %1019 = vst [vmem:[%s995 + $0x2c] sm:%s985] %v1018
                  %v1020 = vld [vmem:[%s994 + $0x30] sm:%s985]
                  %1021 = vst [vmem:[%s995 + $0x30] sm:%s985] %v1020
                  %v1022 = vld [vmem:[%s994 + $0x34] sm:%s985]
                  %1023 = vst [vmem:[%s995 + $0x34] sm:%s985] %v1022
                  %v1024 = vld [vmem:[%s994 + $0x38] sm:%s985]
                  %1025 = vst [vmem:[%s995 + $0x38] sm:%s985] %v1024
                  %v1026 = vld [vmem:[%s994 + $0x3c] sm:%s985]
                  %1027 = vst [vmem:[%s995 + $0x3c] sm:%s985] %v1026
                  %v1028 = vld [vmem:[%s994 + $0x40] sm:%s985]
                  %1029 = vst [vmem:[%s995 + $0x40] sm:%s985] %v1028
                  %v1030 = vld [vmem:[%s994 + $0x44] sm:%s985]
                  %1031 = vst [vmem:[%s995 + $0x44] sm:%s985] %v1030
                  %v1032 = vld [vmem:[%s994 + $0x48] sm:%s985]
                  %1033 = vst [vmem:[%s995 + $0x48] sm:%s985] %v1032
                  %v1034 = vld [vmem:[%s994 + $0x4c] sm:%s985]
                  %1035 = vst [vmem:[%s995 + $0x4c] sm:%s985] %v1034
                  %v1036 = vld [vmem:[%s994 + $0x50] sm:%s985]
                  %1037 = vst [vmem:[%s995 + $0x50] sm:%s985] %v1036
                  %v1038 = vld [vmem:[%s994 + $0x54] sm:%s985]
                  %1039 = vst [vmem:[%s995 + $0x54] sm:%s985] %v1038
                  %v1040 = vld [vmem:[%s994 + $0x58] sm:%s985]
                  %1041 = vst [vmem:[%s995 + $0x58] sm:%s985] %v1040
                  %v1042 = vld [vmem:[%s994 + $0x5c] sm:%s985]
                  %1043 = vst [vmem:[%s995 + $0x5c] sm:%s985] %v1042
                  %v1044 = vld [vmem:[%s994 + $0x60] sm:%s985]
                  %1045 = vst [vmem:[%s995 + $0x60] sm:%s985] %v1044
                  %v1046 = vld [vmem:[%s994 + $0x64] sm:%s985]
                  %1047 = vst [vmem:[%s995 + $0x64] sm:%s985] %v1046
                  %v1048 = vld [vmem:[%s994 + $0x68] sm:%s985]
                  %1049 = vst [vmem:[%s995 + $0x68] sm:%s985] %v1048
                  %v1050 = vld [vmem:[%s994 + $0x6c] sm:%s985]
                  %1051 = vst [vmem:[%s995 + $0x6c] sm:%s985] %v1050
                  %v1052 = vld [vmem:[%s994 + $0x70] sm:%s985]
                  %1053 = vst [vmem:[%s995 + $0x70] sm:%s985] %v1052
                  %v1054 = vld [vmem:[%s994 + $0x74] sm:%s985]
                  %1055 = vst [vmem:[%s995 + $0x74] sm:%s985] %v1054
                  %v1056 = vld [vmem:[%s994 + $0x78] sm:%s985]
                  %1057 = vst [vmem:[%s995 + $0x78] sm:%s985] %v1056
                  %v1058 = vld [vmem:[%s994 + $0x7c] sm:%s985]
                  %1059 = vst [vmem:[%s995 + $0x7c] sm:%s985] %v1058
                  %s1060 = sadd.s32 1, %s993
                  %p1061 = scmp.ge.s32.totalorder %s1060, %s986
                  %s1062 = scalar_select %p1061, 0, %s1060
                  %s1063 = smul.u32 %s1062, 128
                  %s1064 = smul.u32 %s1062, 128
                  %s1065 = scalar_lea.vmem %s854, %s1063 [#allocation3]
                  %s1066 = scalar_lea.vmem %s866, %s1064
                $region79: #{cnn_encoder_forward.10} parent=73 // loop_footer
                  %s990 = sadd.s32 %s988, 1
                $region80: #{cnn_encoder_forward.10} parent=73 // loop_footer_branch
                  %987 = sbr.rel target = $region76
                $region81: #{cnn_encoder_forward.10} parent=73 // loop_exit
                  _
                %s1067 = sshrl.u32 %s861, 5
                %s1068 = sand.u32 %s861, 31
                %s1069 = smul.u32 %s1067, 32
                %s1070 = smul.u32 4, %s1069
                %s1071 = scalar_lea.vmem %s854, %s1070 [#allocation3]
                %s1072 = smul.u32 4, %s1069
                %s1073 = scalar_lea.vmem %s866, %s1072
                // While loop
                $region82: #{cnn_encoder_forward.10} parent=73 // loop_pre_header
                  _
                $region83: #{cnn_encoder_forward.10} parent=73 // loop_header
                  %s1075 = sphi 0, %s1077
                  %p1076 = scmp.ge.s32.totalorder %s1075, %s1068
                  %s1080 = sphi 0, %s1087
                  %s1081 = sphi %s1071, %s1090
                  %s1082 = sphi %s1073, %s1091
                $region84: #{cnn_encoder_forward.10} parent=73 // loop_header_branch
                  %1079 = sbr.rel (%p1076) target = $region88
                $region85: #{cnn_encoder_forward.10} parent=73 // loop_body
                  %v1083 = vld [vmem:[%s1081] sm:%s985]
                  %1084 = vst [vmem:[%s1082] sm:%s985] %v1083
                  %s1085 = sadd.s32 1, %s1080
                  %p1086 = scmp.ge.s32.totalorder %s1085, %s1068
                  %s1087 = scalar_select %p1086, 0, %s1085
                  %s1088 = smul.u32 %s1087, 4
                  %s1089 = smul.u32 %s1087, 4
                  %s1090 = scalar_lea.vmem %s1071, %s1088 [#allocation3]
                  %s1091 = scalar_lea.vmem %s1073, %s1089
                $region86: #{cnn_encoder_forward.10} parent=73 // loop_footer
                  %s1077 = sadd.s32 %s1075, 1
                $region87: #{cnn_encoder_forward.10} parent=73 // loop_footer_branch
                  %1074 = sbr.rel target = $region83
                $region88: #{cnn_encoder_forward.10} parent=73 // loop_exit
                  _
              $region74: #{cnn_encoder_forward.10} parent=51 // pred_fallthru
                _
            $region52: #{cnn_encoder_forward.10} parent=47 // pred_fallthru
              _
            // Predicated region
            $region53: #{cnn_encoder_forward.10} parent=47 // pred_check
              _
            $region54: #{cnn_encoder_forward.10} parent=47 // pred_check_branch
              %873 = sbr.rel (0) target = $region56
            $region55: #{cnn_encoder_forward.10} parent=47 // pred_region
              %s875 = ssub.s32 16, 1
              %s876 = sshrl.u32 %s861, 5
              // While loop
              $region57: #{cnn_encoder_forward.10} parent=55 // loop_pre_header
                _
              $region58: #{cnn_encoder_forward.10} parent=55 // loop_header
                %s878 = sphi 0, %s880
                %p879 = scmp.ge.s32.totalorder %s878, %s876
                %s883 = sphi 0, %s952
                %s884 = sphi %s854, %s955
                %s885 = sphi %s866, %s956
              $region59: #{cnn_encoder_forward.10} parent=55 // loop_header_branch
                %882 = sbr.rel (%p879) target = $region63
              $region60: #{cnn_encoder_forward.10} parent=55 // loop_body
                %v886 = vld [vmem:[%s884] sm:%s875]
                %887 = vst [vmem:[%s885] sm:%s875] %v886
                %v888 = vld [vmem:[%s884 + $0x4] sm:%s875]
                %889 = vst [vmem:[%s885 + $0x4] sm:%s875] %v888
                %v890 = vld [vmem:[%s884 + $0x8] sm:%s875]
                %891 = vst [vmem:[%s885 + $0x8] sm:%s875] %v890
                %v892 = vld [vmem:[%s884 + $0xc] sm:%s875]
                %893 = vst [vmem:[%s885 + $0xc] sm:%s875] %v892
                %v894 = vld [vmem:[%s884 + $0x10] sm:%s875]
                %895 = vst [vmem:[%s885 + $0x10] sm:%s875] %v894
                %v896 = vld [vmem:[%s884 + $0x14] sm:%s875]
                %897 = vst [vmem:[%s885 + $0x14] sm:%s875] %v896
                %v898 = vld [vmem:[%s884 + $0x18] sm:%s875]
                %899 = vst [vmem:[%s885 + $0x18] sm:%s875] %v898
                %v900 = vld [vmem:[%s884 + $0x1c] sm:%s875]
                %901 = vst [vmem:[%s885 + $0x1c] sm:%s875] %v900
                %v902 = vld [vmem:[%s884 + $0x20] sm:%s875]
                %903 = vst [vmem:[%s885 + $0x20] sm:%s875] %v902
                %v904 = vld [vmem:[%s884 + $0x24] sm:%s875]
                %905 = vst [vmem:[%s885 + $0x24] sm:%s875] %v904
                %v906 = vld [vmem:[%s884 + $0x28] sm:%s875]
                %907 = vst [vmem:[%s885 + $0x28] sm:%s875] %v906
                %v908 = vld [vmem:[%s884 + $0x2c] sm:%s875]
                %909 = vst [vmem:[%s885 + $0x2c] sm:%s875] %v908
                %v910 = vld [vmem:[%s884 + $0x30] sm:%s875]
                %911 = vst [vmem:[%s885 + $0x30] sm:%s875] %v910
                %v912 = vld [vmem:[%s884 + $0x34] sm:%s875]
                %913 = vst [vmem:[%s885 + $0x34] sm:%s875] %v912
                %v914 = vld [vmem:[%s884 + $0x38] sm:%s875]
                %915 = vst [vmem:[%s885 + $0x38] sm:%s875] %v914
                %v916 = vld [vmem:[%s884 + $0x3c] sm:%s875]
                %917 = vst [vmem:[%s885 + $0x3c] sm:%s875] %v916
                %v918 = vld [vmem:[%s884 + $0x40] sm:%s875]
                %919 = vst [vmem:[%s885 + $0x40] sm:%s875] %v918
                %v920 = vld [vmem:[%s884 + $0x44] sm:%s875]
                %921 = vst [vmem:[%s885 + $0x44] sm:%s875] %v920
                %v922 = vld [vmem:[%s884 + $0x48] sm:%s875]
                %923 = vst [vmem:[%s885 + $0x48] sm:%s875] %v922
                %v924 = vld [vmem:[%s884 + $0x4c] sm:%s875]
                %925 = vst [vmem:[%s885 + $0x4c] sm:%s875] %v924
                %v926 = vld [vmem:[%s884 + $0x50] sm:%s875]
                %927 = vst [vmem:[%s885 + $0x50] sm:%s875] %v926
                %v928 = vld [vmem:[%s884 + $0x54] sm:%s875]
                %929 = vst [vmem:[%s885 + $0x54] sm:%s875] %v928
                %v930 = vld [vmem:[%s884 + $0x58] sm:%s875]
                %931 = vst [vmem:[%s885 + $0x58] sm:%s875] %v930
                %v932 = vld [vmem:[%s884 + $0x5c] sm:%s875]
                %933 = vst [vmem:[%s885 + $0x5c] sm:%s875] %v932
                %v934 = vld [vmem:[%s884 + $0x60] sm:%s875]
                %935 = vst [vmem:[%s885 + $0x60] sm:%s875] %v934
                %v936 = vld [vmem:[%s884 + $0x64] sm:%s875]
                %937 = vst [vmem:[%s885 + $0x64] sm:%s875] %v936
                %v938 = vld [vmem:[%s884 + $0x68] sm:%s875]
                %939 = vst [vmem:[%s885 + $0x68] sm:%s875] %v938
                %v940 = vld [vmem:[%s884 + $0x6c] sm:%s875]
                %941 = vst [vmem:[%s885 + $0x6c] sm:%s875] %v940
                %v942 = vld [vmem:[%s884 + $0x70] sm:%s875]
                %943 = vst [vmem:[%s885 + $0x70] sm:%s875] %v942
                %v944 = vld [vmem:[%s884 + $0x74] sm:%s875]
                %945 = vst [vmem:[%s885 + $0x74] sm:%s875] %v944
                %v946 = vld [vmem:[%s884 + $0x78] sm:%s875]
                %947 = vst [vmem:[%s885 + $0x78] sm:%s875] %v946
                %v948 = vld [vmem:[%s884 + $0x7c] sm:%s875]
                %949 = vst [vmem:[%s885 + $0x7c] sm:%s875] %v948
                %s950 = sadd.s32 1, %s883
                %p951 = scmp.ge.s32.totalorder %s950, %s876
                %s952 = scalar_select %p951, 0, %s950
                %s953 = smul.u32 %s952, 128
                %s954 = smul.u32 %s952, 128
                %s955 = scalar_lea.vmem %s854, %s953 [#allocation3]
                %s956 = scalar_lea.vmem %s866, %s954
              $region61: #{cnn_encoder_forward.10} parent=55 // loop_footer
                %s880 = sadd.s32 %s878, 1
              $region62: #{cnn_encoder_forward.10} parent=55 // loop_footer_branch
                %877 = sbr.rel target = $region58
              $region63: #{cnn_encoder_forward.10} parent=55 // loop_exit
                _
              %s957 = sshrl.u32 %s861, 5
              %s958 = sand.u32 %s861, 31
              %s959 = smul.u32 %s957, 32
              %s960 = smul.u32 4, %s959
              %s961 = scalar_lea.vmem %s854, %s960 [#allocation3]
              %s962 = smul.u32 4, %s959
              %s963 = scalar_lea.vmem %s866, %s962
              // While loop
              $region64: #{cnn_encoder_forward.10} parent=55 // loop_pre_header
                _
              $region65: #{cnn_encoder_forward.10} parent=55 // loop_header
                %s965 = sphi 0, %s967
                %p966 = scmp.ge.s32.totalorder %s965, %s958
                %s970 = sphi 0, %s977
                %s971 = sphi %s961, %s980
                %s972 = sphi %s963, %s981
              $region66: #{cnn_encoder_forward.10} parent=55 // loop_header_branch
                %969 = sbr.rel (%p966) target = $region70
              $region67: #{cnn_encoder_forward.10} parent=55 // loop_body
                %v973 = vld [vmem:[%s971] sm:%s875]
                %974 = vst [vmem:[%s972] sm:%s875] %v973
                %s975 = sadd.s32 1, %s970
                %p976 = scmp.ge.s32.totalorder %s975, %s958
                %s977 = scalar_select %p976, 0, %s975
                %s978 = smul.u32 %s977, 4
                %s979 = smul.u32 %s977, 4
                %s980 = scalar_lea.vmem %s961, %s978 [#allocation3]
                %s981 = scalar_lea.vmem %s963, %s979
              $region68: #{cnn_encoder_forward.10} parent=55 // loop_footer
                %s967 = sadd.s32 %s965, 1
              $region69: #{cnn_encoder_forward.10} parent=55 // loop_footer_branch
                %964 = sbr.rel target = $region65
              $region70: #{cnn_encoder_forward.10} parent=55 // loop_exit
                _
            $region56: #{cnn_encoder_forward.10} parent=47 // pred_fallthru
              _
          $region48: #{cnn_encoder_forward.10} parent=43 // pred_fallthru
            _
          %1092 = vnop
        $region44: #{cnn_encoder_forward.10} parent=31 // pred_fallthru
          _
      $region32: #{cnn_encoder_forward.10} parent=5 // pred_fallthru
        _
      %p1093 = scmp.le.s32.totalorder 2, %s9
      // Predicated region
      $region89: #{cnn_encoder_forward.10} parent=5 // pred_check
        %p1094 = pneg %p1093
      $region90: #{cnn_encoder_forward.10} parent=5 // pred_check_branch
        %1096 = sbr.rel (%p1094) target = $region92
      $region91: #{cnn_encoder_forward.10} parent=5 // pred_region
        %s1097 = ssub.s32 %s9, 2
        // Predicated region
        $region93: #{cnn_encoder_forward.10} parent=91 // pred_check
          %p1098 = pneg %p141
        $region94: #{cnn_encoder_forward.10} parent=91 // pred_check_branch
          %1100 = sbr.rel (%p1098) target = $region96
        $region95: #{cnn_encoder_forward.10} parent=91 // pred_region
          %s1101 = sand.u32 %s126, 1
          %s1102 = sand.u32 %s126, 1
          %s1103 = smul.addr %s1102, 128
          %s1104 = scalar_lea.vmem [#allocation3], %s1103
        $region96: #{cnn_encoder_forward.10} parent=91 // pred_fallthru
          _
      $region92: #{cnn_encoder_forward.10} parent=5 // pred_fallthru
        _
    $region6: #{cnn_encoder_forward.10} parent=1 // loop_footer
      %s13 = sadd.s32 1, %s9
    $region7: #{cnn_encoder_forward.10} parent=1 // loop_footer_branch
      %8 = sbr.rel target = $region3
    $region8: #{cnn_encoder_forward.10} parent=1 // loop_exit
      _

// kernel: cnn_encoder_forward.11
$region0: #{cnn_encoder_forward.11}
  #allocation0 [shape = 'u32[]', space=smem, size = 0x4, offset = 0x4, fixed_abs, tag = 'smem constant byte address 0x4 - core index']
  #allocation1 [shape = 'u32[72,128]{1,0:T(1,128)}', space=vmem, size = 0x9000, scoped, tag = 'internal scratch']
  #allocation2 [shape = 'f32[256,128]{1,0:T(8,128)}', space=vmem, size = 0x20000, scoped, tag = 'scratch operand']
  %s0 = inlined_call_operand.vmem [shape: bf16[450,128], index: 0, kind: input, shape index: {}]
  %s1 = inlined_call_operand.vmem [shape: bf16[128,128], index: 1, kind: input, shape index: {}]
  %s2 = inlined_call_operand.vmem [shape: f32[1,128], index: 2, kind: input, shape index: {}]
  %s3 = inlined_call_operand.vmem [shape: bf16[450,128], index: 3, kind: output, shape index: {}]
  %s4 = sld [smem:[#allocation0]]
  $region97: #{cnn_encoder_forward.11} parent=0
    _
  %s6 = ssub.s32 1, %s4
  %s7 = scalar_select 0, %s6, %s4
  $region1: #{cnn_encoder_forward.11} parent=0
    #allocation3 [shape = 'u8[131072]{0}', space=vmem, size = 0x20000, scoped, tag = 'output window, operand 0']
    loop: start=0, step=1, limit=4
    $region2: #{cnn_encoder_forward.11} parent=1 // loop_pre_header
      _
    $region3: #{cnn_encoder_forward.11} parent=1 // loop_header
      %s9 = sphi 0, %s13
      %p10 = scmp.ge.s32.totalorder %s9, 4
      %s16 = sphi 0, %s35
      %s17 = sphi 0, %s31
      %s18 = sphi 0, %s27
      %s19 = sphi 0, %s16
      %s20 = sphi 0, %s17
      %s21 = sphi 0, %s18
      %s22 = sphi 0, %s19
      %s23 = sphi 0, %s20
      %s24 = sphi 0, %s21
      %s40 = sphi 0, %s42
      %s43 = sphi 0, %s40
      %s44 = sphi 0, %s43
      %s60 = sphi 0, %s44
      %s68 = sphi 0, %s70
      %s71 = sphi 0, %s68
      %s72 = sphi 0, %s71
      %s88 = sphi 0, %s72
      %s94 = sphi 0, %s96
      %s97 = sphi 0, %s94
      %s98 = sphi 0, %s97
      %s114 = sphi 0, %s98
      %s122 = sphi 0, %s124
      %s125 = sphi 0, %s122
      %s126 = sphi 0, %s125
      %s142 = sphi 0, %s126
    $region4: #{cnn_encoder_forward.11} parent=1 // loop_header_branch
      %12 = sbr.rel (%p10) target = $region8
    $region5: #{cnn_encoder_forward.11} parent=1 // loop_body
      %s14 = ssub.s32 %s9, 1
      %s15 = ssub.s32 %s9, 2
      %s25 = sadd.s32 1, %s18
      %p26 = scmp.ge.s32.totalorder %s25, 1
      %s27 = scalar_select %p26, 0, %s25
      %s28 = sadd.s32 1, %s17
      %s29 = scalar_select %p26, %s28, %s17
      %p30 = scmp.ge.s32.totalorder %s29, 1
      %s31 = scalar_select %p30, 0, %s29
      %s32 = sadd.s32 1, %s16
      %s33 = scalar_select %p30, %s32, %s16
      %p34 = scmp.ge.s32.totalorder %s33, 2
      %s35 = scalar_select %p34, 0, %s33
      %s36 = ssub.s32 %s16, %s35
      %s37 = ssub.s32 %s18, %s27
      %s38 = sor.u32 %s36, %s37
      %p39 = scmp.eq.s32.totalorder %s38, 0
      %s41 = sadd.s32 %s40, 1
      %s42 = scalar_select %p39, %s40, %s41
      %p45 = pneg %p39
      %p46 = scmp.eq.s32.totalorder %s9, 1
      %p47 = por %p45, %p46
      %p48 = scmp.ne.s32.totalorder %s40, %s43
      %p49 = scmp.eq.s32.totalorder %s9, 0
      %p50 = por %p48, %p49
      %p51 = scmp.ne.s32.totalorder %s40, %s43
      %p52 = scmp.eq.s32.totalorder %s14, 1
      %p53 = por %p51, %p52
      %p54 = scmp.ne.s32.totalorder %s43, %s44
      %p55 = scmp.eq.s32.totalorder %s14, 0
      %p56 = por %p54, %p55
      %p57 = scmp.ne.s32.totalorder %s43, %s44
      %p58 = scmp.eq.s32.totalorder %s15, 1
      %p59 = por %p57, %p58
      %p61 = scmp.ne.s32.totalorder %s44, %s60
      %p62 = scmp.eq.s32.totalorder %s15, 0
      %p63 = por %p61, %p62
      %s64 = ssub.s32 %s18, %s27
      %s65 = ssub.s32 %s17, %s31
      %s66 = sor.u32 %s64, %s65
      %p67 = scmp.eq.s32.totalorder %s66, 0
      %s69 = sadd.s32 %s68, 1
      %s70 = scalar_select %p67, %s68, %s69
      %p73 = pneg %p67
      %p74 = scmp.eq.s32.totalorder %s9, 1
      %p75 = por %p73, %p74
      %p76 = scmp.ne.s32.totalorder %s68, %s71
      %p77 = scmp.eq.s32.totalorder %s9, 0
      %p78 = por %p76, %p77
      %p79 = scmp.ne.s32.totalorder %s68, %s71
      %p80 = scmp.eq.s32.totalorder %s14, 1
      %p81 = por %p79, %p80
      %p82 = scmp.ne.s32.totalorder %s71, %s72
      %p83 = scmp.eq.s32.totalorder %s14, 0
      %p84 = por %p82, %p83
      %p85 = scmp.ne.s32.totalorder %s71, %s72
      %p86 = scmp.eq.s32.totalorder %s15, 1
      %p87 = por %p85, %p86
      %p89 = scmp.ne.s32.totalorder %s72, %s88
      %p90 = scmp.eq.s32.totalorder %s15, 0
      %p91 = por %p89, %p90
      %s92 = ssub.s32 %s17, %s31
      %p93 = scmp.eq.s32.totalorder %s92, 0
      %s95 = sadd.s32 %s94, 1
      %s96 = scalar_select %p93, %s94, %s95
      %p99 = pneg %p93
      %p100 = scmp.eq.s32.totalorder %s9, 1
      %p101 = por %p99, %p100
      %p102 = scmp.ne.s32.totalorder %s94, %s97
      %p103 = scmp.eq.s32.totalorder %s9, 0
      %p104 = por %p102, %p103
      %p105 = scmp.ne.s32.totalorder %s94, %s97
      %p106 = scmp.eq.s32.totalorder %s14, 1
      %p107 = por %p105, %p106
      %p108 = scmp.ne.s32.totalorder %s97, %s98
      %p109 = scmp.eq.s32.totalorder %s14, 0
      %p110 = por %p108, %p109
      %p111 = scmp.ne.s32.totalorder %s97, %s98
      %p112 = scmp.eq.s32.totalorder %s15, 1
      %p113 = por %p111, %p112
      %p115 = scmp.ne.s32.totalorder %s98, %s114
      %p116 = scmp.eq.s32.totalorder %s15, 0
      %p117 = por %p115, %p116
      %s118 = ssub.s32 %s16, %s35
      %s119 = ssub.s32 %s17, %s31
      %s120 = sor.u32 %s118, %s119
      %p121 = scmp.eq.s32.totalorder %s120, 0
      %s123 = sadd.s32 %s122, 1
      %s124 = scalar_select %p121, %s122, %s123
      %p127 = pneg %p121
      %p128 = scmp.eq.s32.totalorder %s9, 1
      %p129 = por %p127, %p128
      %p130 = scmp.ne.s32.totalorder %s122, %s125
      %p131 = scmp.eq.s32.totalorder %s9, 0
      %p132 = por %p130, %p131
      %p133 = scmp.ne.s32.totalorder %s122, %s125
      %p134 = scmp.eq.s32.totalorder %s14, 1
      %p135 = por %p133, %p134
      %p136 = scmp.ne.s32.totalorder %s125, %s126
      %p137 = scmp.eq.s32.totalorder %s14, 0
      %p138 = por %p136, %p137
      %p139 = scmp.ne.s32.totalorder %s125, %s126
      %p140 = scmp.eq.s32.totalorder %s15, 1
      %p141 = por %p139, %p140
      %p143 = scmp.ne.s32.totalorder %s126, %s142
      %p144 = scmp.eq.s32.totalorder %s15, 0
      %p145 = por %p143, %p144
      %p146 = scmp.le.s32.totalorder 1, %s9
      %p147 = scmp.lt.s32.totalorder %s9, 3
      %p148 = pnand %p146, %p147
      %p149 = pneg %p148
      // Predicated region
      $region9: #{cnn_encoder_forward.11} parent=5 // pred_check
        _
      $region10: #{cnn_encoder_forward.11} parent=5 // pred_check_branch
        %151 = sbr.rel (%p148) target = $region12
      $region11: #{cnn_encoder_forward.11} parent=5 // pred_region
        %s152 = ssub.s32 %s9, 1
        // Predicated region
        $region13: #{cnn_encoder_forward.11} parent=11 // pred_check
          %p153 = pneg %p84
        $region14: #{cnn_encoder_forward.11} parent=11 // pred_check_branch
          %155 = sbr.rel (%p153) target = $region16
        $region15: #{cnn_encoder_forward.11} parent=11 // pred_region
          %s156 = smul.u32 16, %s21
          %p157 = scmp.lt.s32.totalorder %s156, 15
          %s158 = scalar_select %p157, %s156, 15
          %p159 = scmp.lt.s32.totalorder %s20, 0
          %s160 = scalar_select %p159, %s20, 0
          %s161 = sadd.s32 %s160, %s158
          %s162 = smul.addr %s161, 4
          %s163 = scalar_lea.vmem %s1, %s162
          %s164 = smul.u32 16, %s21
        $region16: #{cnn_encoder_forward.11} parent=11 // pred_fallthru
          _
        // Predicated region
        $region17: #{cnn_encoder_forward.11} parent=11 // pred_check
          %p165 = pneg %p110
        $region18: #{cnn_encoder_forward.11} parent=11 // pred_check_branch
          %167 = sbr.rel (%p165) target = $region20
        $region19: #{cnn_encoder_forward.11} parent=11 // pred_region
          %p168 = scmp.lt.s32.totalorder %s20, 0
          %s169 = scalar_select %p168, %s20, 0
          %s170 = scalar_lea.vmem %s2, %s169
        $region20: #{cnn_encoder_forward.11} parent=11 // pred_fallthru
          _
      $region12: #{cnn_encoder_forward.11} parent=5 // pred_fallthru
        _
      %p171 = scmp.lt.s32.totalorder %s9, 2
      // Predicated region
      $region21: #{cnn_encoder_forward.11} parent=5 // pred_check
        %p172 = pneg %p171
      $region22: #{cnn_encoder_forward.11} parent=5 // pred_check_branch
        %174 = sbr.rel (%p172) target = $region24
      $region23: #{cnn_encoder_forward.11} parent=5 // pred_region
        // Predicated region
        $region25: #{cnn_encoder_forward.11} parent=23 // pred_check
          %p175 = pneg %p50
        $region26: #{cnn_encoder_forward.11} parent=23 // pred_check_branch
          %177 = sbr.rel (%p175) target = $region28
        $region27: #{cnn_encoder_forward.11} parent=23 // pred_region
          %s178 = smul.u32 32, %s16
          %s179 = ssub.s32 57, %s178
          %p180 = scmp.lt.s32.totalorder %s179, 32
          %s181 = scalar_select %p180, %s179, 32
          %s182 = smul.u32 4, %s181
          %p183 = scmp.lt.s32.totalorder %s178, 56
          %s184 = scalar_select %p183, %s178, 56
          %p185 = scmp.lt.s32.totalorder %s18, 0
          %s186 = scalar_select %p185, %s18, 0
          %s187 = sadd.s32 %s186, %s184
          %s188 = smul.addr %s187, 4
          %s189 = scalar_lea.vmem %s0, %s188
          %s190 = smul.u32 32, %s16
          %s191 = ssub.s32 57, %s190
          %p192 = scmp.lt.s32.totalorder %s191, 32
          %s193 = scalar_select %p192, %s191, 32
          %s194 = smul.u32 4, %s193
        $region28: #{cnn_encoder_forward.11} parent=23 // pred_fallthru
          _
      $region24: #{cnn_encoder_forward.11} parent=5 // pred_fallthru
        _
      %p195 = scmp.le.s32.totalorder 1, %s9
      %p196 = scmp.lt.s32.totalorder %s9, 3
      %p197 = pnand %p195, %p196
      %p198 = pneg %p197
      // Predicated region
      $region29: #{cnn_encoder_forward.11} parent=5 // pred_check
        _
      $region30: #{cnn_encoder_forward.11} parent=5 // pred_check_branch
        %200 = sbr.rel (%p197) target = $region32
      $region31: #{cnn_encoder_forward.11} parent=5 // pred_region
        %s201 = ssub.s32 %s9, 1
        %s202 = smul.u32 32, %s19
        %s203 = ssub.s32 57, %s202
        %p204 = scmp.lt.s32.totalorder %s203, 32
        %s205 = scalar_select %p204, %s203, 32
        %s206 = smul.u32 4, %s205
        %p207 = scmp.lt.s32.totalorder %s202, 56
        %s208 = scalar_select %p207, %s202, 56
        %p209 = scmp.lt.s32.totalorder %s21, 0
        %s210 = scalar_select %p209, %s21, 0
        %s211 = sadd.s32 %s210, %s208
        %s212 = smul.addr %s211, 4
        %s213 = scalar_lea.vmem %s0, %s212
        %p214 = pneg %p56
        %p215 = pneg %p53
        %s216 = smul.u32 16, %s21
        %p217 = scmp.lt.s32.totalorder %s216, 15
        %s218 = scalar_select %p217, %s216, 15
        %p219 = scmp.lt.s32.totalorder %s20, 0
        %s220 = scalar_select %p219, %s20, 0
        %s221 = sadd.s32 %s220, %s218
        %s222 = smul.addr %s221, 4
        %s223 = scalar_lea.vmem %s1, %s222
        %p224 = pneg %p84
        %p225 = pneg %p81
        %p226 = scmp.lt.s32.totalorder %s20, 0
        %s227 = scalar_select %p226, %s20, 0
        %s228 = scalar_lea.vmem %s2, %s227
        %p229 = pneg %p110
        %p230 = pneg %p107
        %p231 = pneg %p138
        %p232 = pneg %p135
        %s233 = sand.u32 %s125, 1
        %s234 = sand.u32 %s125, 1
        %s235 = smul.addr %s234, 128
        %s236 = scalar_lea.vmem [#allocation3], %s235
        %s237 = smul.u32 32, %s19
        %s238 = ssub.s32 57, %s237
        %p239 = scmp.lt.s32.totalorder %s238, 32
        %s240 = scalar_select %p239, %s238, 32
        %s241 = smul.u32 4, %s240
        %p242 = scmp.lt.s32.totalorder %s237, 56
        %s243 = scalar_select %p242, %s237, 56
        %p244 = scmp.lt.s32.totalorder %s21, 0
        %s245 = scalar_select %p244, %s21, 0
        %s246 = sadd.s32 %s245, %s243
        %s247 = smul.addr %s246, 4
        %s248 = scalar_lea.vmem %s0, %s247
        %s249 = smul.u32 32, %s19
        %s250 = ssub.s32 57, %s249
        %p251 = scmp.lt.s32.totalorder %s250, 32
        %s252 = scalar_select %p251, %s250, 32
        %s253 = smul.u32 4, %s252
        %s254 = smul.u32 16, %s21
        %p255 = scmp.lt.s32.totalorder %s254, 15
        %s256 = scalar_select %p255, %s254, 15
        %p257 = scmp.lt.s32.totalorder %s20, 0
        %s258 = scalar_select %p257, %s20, 0
        %s259 = sadd.s32 %s258, %s256
        %s260 = smul.addr %s259, 4
        %s261 = scalar_lea.vmem %s1, %s260
        %s262 = smul.u32 16, %s21
        %p263 = scmp.lt.s32.totalorder %s20, 0
        %s264 = scalar_select %p263, %s20, 0
        %s265 = scalar_lea.vmem %s2, %s264
        %s266 = smul.u32 32, %s19
        %s267 = ssub.s32 57, %s266
        %p268 = scmp.lt.s32.totalorder %s267, 32
        %s269 = scalar_select %p268, %s267, 32
        %s270 = smul.u32 4, %s269
        %p271 = scmp.eq.s32.totalorder %s21, 0
        // Predicated region
        $region33: #{cnn_encoder_forward.11} parent=31 // pred_check
          %p272 = pneg %p271
        $region34: #{cnn_encoder_forward.11} parent=31 // pred_check_branch
          %274 = sbr.rel (%p272) target = $region36
        $region35: #{cnn_encoder_forward.11} parent=31 // pred_region
          %275 = vst [vmem:[#allocation2] sm:$0xff] 0.0
          %276 = vst [vmem:[#allocation2 + $0x8] sm:$0xff] 0.0
          %277 = vst [vmem:[#allocation2 + $0x10] sm:$0xff] 0.0
          %278 = vst [vmem:[#allocation2 + $0x18] sm:$0xff] 0.0
          %279 = vst [vmem:[#allocation2 + $0x20] sm:$0xff] 0.0
          %280 = vst [vmem:[#allocation2 + $0x28] sm:$0xff] 0.0
          %281 = vst [vmem:[#allocation2 + $0x30] sm:$0xff] 0.0
          %282 = vst [vmem:[#allocation2 + $0x38] sm:$0xff] 0.0
          %283 = vst [vmem:[#allocation2 + $0x40] sm:$0xff] 0.0
          %284 = vst [vmem:[#allocation2 + $0x48] sm:$0xff] 0.0
          %285 = vst [vmem:[#allocation2 + $0x50] sm:$0xff] 0.0
          %286 = vst [vmem:[#allocation2 + $0x58] sm:$0xff] 0.0
          %287 = vst [vmem:[#allocation2 + $0x60] sm:$0xff] 0.0
          %288 = vst [vmem:[#allocation2 + $0x68] sm:$0xff] 0.0
          %289 = vst [vmem:[#allocation2 + $0x70] sm:$0xff] 0.0
          %290 = vst [vmem:[#allocation2 + $0x78] sm:$0xff] 0.0
          %291 = vst [vmem:[#allocation2 + $0x80] sm:$0xff] 0.0
          %292 = vst [vmem:[#allocation2 + $0x88] sm:$0xff] 0.0
          %293 = vst [vmem:[#allocation2 + $0x90] sm:$0xff] 0.0
          %294 = vst [vmem:[#allocation2 + $0x98] sm:$0xff] 0.0
          %295 = vst [vmem:[#allocation2 + $0xa0] sm:$0xff] 0.0
          %296 = vst [vmem:[#allocation2 + $0xa8] sm:$0xff] 0.0
          %297 = vst [vmem:[#allocation2 + $0xb0] sm:$0xff] 0.0
          %298 = vst [vmem:[#allocation2 + $0xb8] sm:$0xff] 0.0
          %299 = vst [vmem:[#allocation2 + $0xc0] sm:$0xff] 0.0
          %300 = vst [vmem:[#allocation2 + $0xc8] sm:$0xff] 0.0
          %301 = vst [vmem:[#allocation2 + $0xd0] sm:$0xff] 0.0
          %302 = vst [vmem:[#allocation2 + $0xd8] sm:$0xff] 0.0
          %303 = vst [vmem:[#allocation2 + $0xe0] sm:$0xff] 0.0
          %304 = vst [vmem:[#allocation2 + $0xe8] sm:$0xff] 0.0
          %305 = vst [vmem:[#allocation2 + $0xf0] sm:$0xff] 0.0
          %306 = vst [vmem:[#allocation2 + $0xf8] sm:$0xff] 0.0
        $region36: #{cnn_encoder_forward.11} parent=31 // pred_fallthru
          _
        %v307 = vld [vmem:[#allocation2] sm:$0xff]
        %v308 = vld [vmem:[#allocation2 + $0x8] sm:$0xff]
        %v309 = vld [vmem:[#allocation2 + $0x10] sm:$0xff]
        %v310 = vld [vmem:[#allocation2 + $0x18] sm:$0xff]
        %v311 = vld [vmem:[#allocation2 + $0x20] sm:$0xff]
        %v312 = vld [vmem:[#allocation2 + $0x28] sm:$0xff]
        %v313 = vld [vmem:[#allocation2 + $0x30] sm:$0xff]
        %v314 = vld [vmem:[#allocation2 + $0x38] sm:$0xff]
        %v315 = vld [vmem:[#allocation2 + $0x40] sm:$0xff]
        %v316 = vld [vmem:[#allocation2 + $0x48] sm:$0xff]
        %v317 = vld [vmem:[#allocation2 + $0x50] sm:$0xff]
        %v318 = vld [vmem:[#allocation2 + $0x58] sm:$0xff]
        %v319 = vld [vmem:[#allocation2 + $0x60] sm:$0xff]
        %v320 = vld [vmem:[#allocation2 + $0x68] sm:$0xff]
        %v321 = vld [vmem:[#allocation2 + $0x70] sm:$0xff]
        %v322 = vld [vmem:[#allocation2 + $0x78] sm:$0xff]
        %v323 = vld [vmem:[#allocation2 + $0x80] sm:$0xff]
        %v324 = vld [vmem:[#allocation2 + $0x88] sm:$0xff]
        %v325 = vld [vmem:[#allocation2 + $0x90] sm:$0xff]
        %v326 = vld [vmem:[#allocation2 + $0x98] sm:$0xff]
        %v327 = vld [vmem:[#allocation2 + $0xa0] sm:$0xff]
        %v328 = vld [vmem:[#allocation2 + $0xa8] sm:$0xff]
        %v329 = vld [vmem:[#allocation2 + $0xb0] sm:$0xff]
        %v330 = vld [vmem:[#allocation2 + $0xb8] sm:$0xff]
        %v331 = vld [vmem:[#allocation2 + $0xc0] sm:$0xff]
        %v332 = vld [vmem:[#allocation2 + $0xc8] sm:$0xff]
        %v333 = vld [vmem:[#allocation2 + $0xd0] sm:$0xff]
        %v334 = vld [vmem:[#allocation2 + $0xd8] sm:$0xff]
        %v335 = vld [vmem:[#allocation2 + $0xe0] sm:$0xff]
        %v336 = vld [vmem:[#allocation2 + $0xe8] sm:$0xff]
        %v337 = vld [vmem:[#allocation2 + $0xf0] sm:$0xff]
        %v338 = vld [vmem:[#allocation2 + $0xf8] sm:$0xff]
        %v339 = vld [vmem:[%s248] sm:$0xf]
        %v340 = vld [vmem:[%s248 + $0x4] sm:$0xf]
        %v341 = vld [vmem:[%s248 + $0x8] sm:$0xf]
        %v342 = vld [vmem:[%s248 + $0xc] sm:$0xf]
        %v343 = vld [vmem:[%s248 + $0x10] sm:$0xf]
        %v344 = vld [vmem:[%s248 + $0x14] sm:$0xf]
        %v345 = vld [vmem:[%s248 + $0x18] sm:$0xf]
        %v346 = vld [vmem:[%s248 + $0x1c] sm:$0xf]
        %v347 = vld [vmem:[%s248 + $0x20] sm:$0xf]
        %v348 = vld [vmem:[%s248 + $0x24] sm:$0xf]
        %v349 = vld [vmem:[%s248 + $0x28] sm:$0xf]
        %v350 = vld [vmem:[%s248 + $0x2c] sm:$0xf]
        %v351 = vld [vmem:[%s248 + $0x30] sm:$0xf]
        %v352 = vld [vmem:[%s248 + $0x34] sm:$0xf]
        %v353 = vld [vmem:[%s248 + $0x38] sm:$0xf]
        %v354 = vld [vmem:[%s248 + $0x3c] sm:$0xf]
        %v355 = vld [vmem:[%s248 + $0x40] sm:$0xf]
        %v356 = vld [vmem:[%s248 + $0x44] sm:$0xf]
        %v357 = vld [vmem:[%s248 + $0x48] sm:$0xf]
        %v358 = vld [vmem:[%s248 + $0x4c] sm:$0xf]
        %v359 = vld [vmem:[%s248 + $0x50] sm:$0xf]
        %v360 = vld [vmem:[%s248 + $0x54] sm:$0xf]
        %v361 = vld [vmem:[%s248 + $0x58] sm:$0xf]
        %v362 = vld [vmem:[%s248 + $0x5c] sm:$0xf]
        %v363 = vld [vmem:[%s248 + $0x60] sm:$0xf]
        %v364 = vld [vmem:[%s248 + $0x64] sm:$0xf]
        %v365 = vld [vmem:[%s248 + $0x68] sm:$0xf]
        %v366 = vld [vmem:[%s248 + $0x6c] sm:$0xf]
        %v367 = vld [vmem:[%s248 + $0x70] sm:$0xf]
        %v368 = vld [vmem:[%s248 + $0x74] sm:$0xf]
        %v369 = vld [vmem:[%s248 + $0x78] sm:$0xf]
        %v370 = vld [vmem:[%s248 + $0x7c] sm:$0xf]
        %v371 = vld [vmem:[%s261] sm:$0xf]
        %v372 = vld [vmem:[%s261 + $0x4] sm:$0xf]
        %v373 = vld [vmem:[%s261 + $0x8] sm:$0xf]
        %v374 = vld [vmem:[%s261 + $0xc] sm:$0xf]
        %v375 = vld [vmem:[%s261 + $0x10] sm:$0xf]
        %v376 = vld [vmem:[%s261 + $0x14] sm:$0xf]
        %v377 = vld [vmem:[%s261 + $0x18] sm:$0xf]
        %v378 = vld [vmem:[%s261 + $0x1c] sm:$0xf]
        %v379 = vld [vmem:[%s261 + $0x20] sm:$0xf]
        %v380 = vld [vmem:[%s261 + $0x24] sm:$0xf]
        %v381 = vld [vmem:[%s261 + $0x28] sm:$0xf]
        %v382 = vld [vmem:[%s261 + $0x2c] sm:$0xf]
        %v383 = vld [vmem:[%s261 + $0x30] sm:$0xf]
        %v384 = vld [vmem:[%s261 + $0x34] sm:$0xf]
        %v385 = vld [vmem:[%s261 + $0x38] sm:$0xf]
        %v386 = vld [vmem:[%s261 + $0x3c] sm:$0xf]
        %v419 = vunpack.c.l.b16 %v339
        %v420 = vunpack.c.l.b16 %v340
        %v421 = vunpack.c.l.b16 %v341
        %v422 = vunpack.c.l.b16 %v342
        %v423 = vunpack.c.l.b16 %v343
        %v424 = vunpack.c.l.b16 %v344
        %v425 = vunpack.c.l.b16 %v345
        %v426 = vunpack.c.l.b16 %v346
        %v427 = vunpack.c.l.b16 %v347
        %v428 = vunpack.c.l.b16 %v348
        %v429 = vunpack.c.l.b16 %v349
        %v430 = vunpack.c.l.b16 %v350
        %v431 = vunpack.c.l.b16 %v351
        %v432 = vunpack.c.l.b16 %v352
        %v433 = vunpack.c.l.b16 %v353
        %v434 = vunpack.c.l.b16 %v354
        %v435 = vunpack.c.l.b16 %v355
        %v436 = vunpack.c.l.b16 %v356
        %v437 = vunpack.c.l.b16 %v357
        %v438 = vunpack.c.l.b16 %v358
        %v439 = vunpack.c.l.b16 %v359
        %v440 = vunpack.c.l.b16 %v360
        %v441 = vunpack.c.l.b16 %v361
        %v442 = vunpack.c.l.b16 %v362
        %v443 = vunpack.c.l.b16 %v363
        %v444 = vunpack.c.l.b16 %v364
        %v445 = vunpack.c.l.b16 %v365
        %v446 = vunpack.c.l.b16 %v366
        %v447 = vunpack.c.l.b16 %v367
        %v448 = vunpack.c.l.b16 %v368
        %v449 = vunpack.c.l.b16 %v369
        %v450 = vunpack.c.l.b16 %v370
        %v451 = vpack.c.b16 %v420, %v419
        %v452 = vpack.c.b16 %v422, %v421
        %v453 = vpack.c.b16 %v424, %v423
        %v454 = vpack.c.b16 %v426, %v425
        %v455 = vpack.c.b16 %v428, %v427
        %v456 = vpack.c.b16 %v430, %v429
        %v457 = vpack.c.b16 %v432, %v431
        %v458 = vpack.c.b16 %v434, %v433
        %v459 = vpack.c.b16 %v436, %v435
        %v460 = vpack.c.b16 %v438, %v437
        %v461 = vpack.c.b16 %v440, %v439
        %v462 = vpack.c.b16 %v442, %v441
        %v463 = vpack.c.b16 %v444, %v443
        %v464 = vpack.c.b16 %v446, %v445
        %v465 = vpack.c.b16 %v448, %v447
        %v466 = vpack.c.b16 %v450, %v449
        %v499 = vunpack.c.l.b16 %v371
        %v500 = vunpack.c.l.b16 %v372
        %v501 = vunpack.c.l.b16 %v373
        %v502 = vunpack.c.l.b16 %v374
        %v503 = vunpack.c.l.b16 %v375
        %v504 = vunpack.c.l.b16 %v376
        %v505 = vunpack.c.l.b16 %v377
        %v506 = vunpack.c.l.b16 %v378
        %v507 = vunpack.c.l.b16 %v379
        %v508 = vunpack.c.l.b16 %v380
        %v509 = vunpack.c.l.b16 %v381
        %v510 = vunpack.c.l.b16 %v382
        %v511 = vunpack.c.l.b16 %v383
        %v512 = vunpack.c.l.b16 %v384
        %v513 = vunpack.c.l.b16 %v385
        %v514 = vunpack.c.l.b16 %v386
        %v515 = vpack.c.b16 %v500, %v499
        %v516 = vpack.c.b16 %v502, %v501
        %v517 = vpack.c.b16 %v504, %v503
        %v518 = vpack.c.b16 %v506, %v505
        %v519 = vpack.c.b16 %v508, %v507
        %v520 = vpack.c.b16 %v510, %v509
        %v521 = vpack.c.b16 %v512, %v511
        %v522 = vpack.c.b16 %v514, %v513
        %531 = vmatpush.bf16.msra.mxu0 %v522
        %532 = vmatpush.bf16.msra.mxu0 %v521
        %533 = vmatpush.bf16.msra.mxu0 %v520
        %534 = vmatpush.bf16.msra.mxu0 %v519
        %535 = vmatpush.bf16.msra.mxu0 %v518
        %536 = vmatpush.bf16.msra.mxu0 %v517
        %537 = vmatpush.bf16.msra.mxu0 %v516
        %538 = vmatpush.bf16.msra.mxu0 %v515
        %539 = vmatmul.bf16.gmra.mxu0 %v451
        %v540 = vpop.f32.mrf.mxu0
        %v541 = vadd.f32 0.0, %v540
        %v542 = vpop.f32.mrf.mxu0
        %v543 = vadd.f32 0.0, %v542
        %544 = vmatmul.bf16.gmra.mxu0 %v452
        %v545 = vpop.f32.mrf.mxu0
        %v546 = vadd.f32 0.0, %v545
        %v547 = vpop.f32.mrf.mxu0
        %v548 = vadd.f32 0.0, %v547
        %549 = vmatmul.bf16.gmra.mxu0 %v453
        %v550 = vpop.f32.mrf.mxu0
        %v551 = vadd.f32 0.0, %v550
        %v552 = vpop.f32.mrf.mxu0
        %v553 = vadd.f32 0.0, %v552
        %554 = vmatmul.bf16.gmra.mxu0 %v454
        %v555 = vpop.f32.mrf.mxu0
        %v556 = vadd.f32 0.0, %v555
        %v557 = vpop.f32.mrf.mxu0
        %v558 = vadd.f32 0.0, %v557
        %559 = vmatmul.bf16.gmra.mxu0 %v455
        %v560 = vpop.f32.mrf.mxu0
        %v561 = vadd.f32 0.0, %v560
        %v562 = vpop.f32.mrf.mxu0
        %v563 = vadd.f32 0.0, %v562
        %564 = vmatmul.bf16.gmra.mxu0 %v456
        %v565 = vpop.f32.mrf.mxu0
        %v566 = vadd.f32 0.0, %v565
        %v567 = vpop.f32.mrf.mxu0
        %v568 = vadd.f32 0.0, %v567
        %569 = vmatmul.bf16.gmra.mxu0 %v457
        %v570 = vpop.f32.mrf.mxu0
        %v571 = vadd.f32 0.0, %v570
        %v572 = vpop.f32.mrf.mxu0
        %v573 = vadd.f32 0.0, %v572
        %574 = vmatmul.bf16.gmra.mxu0 %v458
        %v575 = vpop.f32.mrf.mxu0
        %v576 = vadd.f32 0.0, %v575
        %v577 = vpop.f32.mrf.mxu0
        %v578 = vadd.f32 0.0, %v577
        %579 = vmatmul.bf16.gmra.mxu0 %v459
        %v580 = vpop.f32.mrf.mxu0
        %v581 = vadd.f32 0.0, %v580
        %v582 = vpop.f32.mrf.mxu0
        %v583 = vadd.f32 0.0, %v582
        %584 = vmatmul.bf16.gmra.mxu0 %v460
        %v585 = vpop.f32.mrf.mxu0
        %v586 = vadd.f32 0.0, %v585
        %v587 = vpop.f32.mrf.mxu0
        %v588 = vadd.f32 0.0, %v587
        %589 = vmatmul.bf16.gmra.mxu0 %v461
        %v590 = vpop.f32.mrf.mxu0
        %v591 = vadd.f32 0.0, %v590
        %v592 = vpop.f32.mrf.mxu0
        %v593 = vadd.f32 0.0, %v592
        %594 = vmatmul.bf16.gmra.mxu0 %v462
        %v595 = vpop.f32.mrf.mxu0
        %v596 = vadd.f32 0.0, %v595
        %v597 = vpop.f32.mrf.mxu0
        %v598 = vadd.f32 0.0, %v597
        %599 = vmatmul.bf16.gmra.mxu0 %v463
        %v600 = vpop.f32.mrf.mxu0
        %v601 = vadd.f32 0.0, %v600
        %v602 = vpop.f32.mrf.mxu0
        %v603 = vadd.f32 0.0, %v602
        %604 = vmatmul.bf16.gmra.mxu0 %v464
        %v605 = vpop.f32.mrf.mxu0
        %v606 = vadd.f32 0.0, %v605
        %v607 = vpop.f32.mrf.mxu0
        %v608 = vadd.f32 0.0, %v607
        %609 = vmatmul.bf16.gmra.mxu0 %v465
        %v610 = vpop.f32.mrf.mxu0
        %v611 = vadd.f32 0.0, %v610
        %v612 = vpop.f32.mrf.mxu0
        %v613 = vadd.f32 0.0, %v612
        %614 = vmatmul.bf16.gmra.mxu0 %v466
        %v615 = vpop.f32.mrf.mxu0
        %v616 = vadd.f32 0.0, %v615
        %v617 = vpop.f32.mrf.mxu0
        %v618 = vadd.f32 0.0, %v617
        %619 = vdwg.mxu0
        %v620 = vadd.f32 %v307, %v541
        %v621 = vadd.f32 %v308, %v543
        %v622 = vadd.f32 %v309, %v546
        %v623 = vadd.f32 %v310, %v548
        %v624 = vadd.f32 %v311, %v551
        %v625 = vadd.f32 %v312, %v553
        %v626 = vadd.f32 %v313, %v556
        %v627 = vadd.f32 %v314, %v558
        %v628 = vadd.f32 %v315, %v561
        %v629 = vadd.f32 %v316, %v563
        %v630 = vadd.f32 %v317, %v566
        %v631 = vadd.f32 %v318, %v568
        %v632 = vadd.f32 %v319, %v571
        %v633 = vadd.f32 %v320, %v573
        %v634 = vadd.f32 %v321, %v576
        %v635 = vadd.f32 %v322, %v578
        %v636 = vadd.f32 %v323, %v581
        %v637 = vadd.f32 %v324, %v583
        %v638 = vadd.f32 %v325, %v586
        %v639 = vadd.f32 %v326, %v588
        %v640 = vadd.f32 %v327, %v591
        %v641 = vadd.f32 %v328, %v593
        %v642 = vadd.f32 %v329, %v596
        %v643 = vadd.f32 %v330, %v598
        %v644 = vadd.f32 %v331, %v601
        %v645 = vadd.f32 %v332, %v603
        %v646 = vadd.f32 %v333, %v606
        %v647 = vadd.f32 %v334, %v608
        %v648 = vadd.f32 %v335, %v611
        %v649 = vadd.f32 %v336, %v613
        %v650 = vadd.f32 %v337, %v616
        %v651 = vadd.f32 %v338, %v618
        %652 = vst [vmem:[#allocation2] sm:$0xff] %v620
        %653 = vst [vmem:[#allocation2 + $0x8] sm:$0xff] %v621
        %654 = vst [vmem:[#allocation2 + $0x10] sm:$0xff] %v622
        %655 = vst [vmem:[#allocation2 + $0x18] sm:$0xff] %v623
        %656 = vst [vmem:[#allocation2 + $0x20] sm:$0xff] %v624
        %657 = vst [vmem:[#allocation2 + $0x28] sm:$0xff] %v625
        %658 = vst [vmem:[#allocation2 + $0x30] sm:$0xff] %v626
        %659 = vst [vmem:[#allocation2 + $0x38] sm:$0xff] %v627
        %660 = vst [vmem:[#allocation2 + $0x40] sm:$0xff] %v628
        %661 = vst [vmem:[#allocation2 + $0x48] sm:$0xff] %v629
        %662 = vst [vmem:[#allocation2 + $0x50] sm:$0xff] %v630
        %663 = vst [vmem:[#allocation2 + $0x58] sm:$0xff] %v631
        %664 = vst [vmem:[#allocation2 + $0x60] sm:$0xff] %v632
        %665 = vst [vmem:[#allocation2 + $0x68] sm:$0xff] %v633
        %666 = vst [vmem:[#allocation2 + $0x70] sm:$0xff] %v634
        %667 = vst [vmem:[#allocation2 + $0x78] sm:$0xff] %v635
        %668 = vst [vmem:[#allocation2 + $0x80] sm:$0xff] %v636
        %669 = vst [vmem:[#allocation2 + $0x88] sm:$0xff] %v637
        %670 = vst [vmem:[#allocation2 + $0x90] sm:$0xff] %v638
        %671 = vst [vmem:[#allocation2 + $0x98] sm:$0xff] %v639
        %672 = vst [vmem:[#allocation2 + $0xa0] sm:$0xff] %v640
        %673 = vst [vmem:[#allocation2 + $0xa8] sm:$0xff] %v641
        %674 = vst [vmem:[#allocation2 + $0xb0] sm:$0xff] %v642
        %675 = vst [vmem:[#allocation2 + $0xb8] sm:$0xff] %v643
        %676 = vst [vmem:[#allocation2 + $0xc0] sm:$0xff] %v644
        %677 = vst [vmem:[#allocation2 + $0xc8] sm:$0xff] %v645
        %678 = vst [vmem:[#allocation2 + $0xd0] sm:$0xff] %v646
        %679 = vst [vmem:[#allocation2 + $0xd8] sm:$0xff] %v647
        %680 = vst [vmem:[#allocation2 + $0xe0] sm:$0xff] %v648
        %681 = vst [vmem:[#allocation2 + $0xe8] sm:$0xff] %v649
        %682 = vst [vmem:[#allocation2 + $0xf0] sm:$0xff] %v650
        %683 = vst [vmem:[#allocation2 + $0xf8] sm:$0xff] %v651
        // Predicated region
        $region37: #{cnn_encoder_forward.11} parent=31 // pred_check
          %p684 = pneg %p271
        $region38: #{cnn_encoder_forward.11} parent=31 // pred_check_branch
          %686 = sbr.rel (%p684) target = $region40
        $region39: #{cnn_encoder_forward.11} parent=31 // pred_region
          %v687 = vld [vmem:[#allocation2] sm:$0xff]
          %v688 = vld [vmem:[#allocation2 + $0x8] sm:$0xff]
          %v689 = vld [vmem:[#allocation2 + $0x10] sm:$0xff]
          %v690 = vld [vmem:[#allocation2 + $0x18] sm:$0xff]
          %v691 = vld [vmem:[#allocation2 + $0x20] sm:$0xff]
          %v692 = vld [vmem:[#allocation2 + $0x28] sm:$0xff]
          %v693 = vld [vmem:[#allocation2 + $0x30] sm:$0xff]
          %v694 = vld [vmem:[#allocation2 + $0x38] sm:$0xff]
          %v695 = vld [vmem:[#allocation2 + $0x40] sm:$0xff]
          %v696 = vld [vmem:[#allocation2 + $0x48] sm:$0xff]
          %v697 = vld [vmem:[#allocation2 + $0x50] sm:$0xff]
          %v698 = vld [vmem:[#allocation2 + $0x58] sm:$0xff]
          %v699 = vld [vmem:[#allocation2 + $0x60] sm:$0xff]
          %v700 = vld [vmem:[#allocation2 + $0x68] sm:$0xff]
          %v701 = vld [vmem:[#allocation2 + $0x70] sm:$0xff]
          %v702 = vld [vmem:[#allocation2 + $0x78] sm:$0xff]
          %v703 = vld [vmem:[#allocation2 + $0x80] sm:$0xff]
          %v704 = vld [vmem:[#allocation2 + $0x88] sm:$0xff]
          %v705 = vld [vmem:[#allocation2 + $0x90] sm:$0xff]
          %v706 = vld [vmem:[#allocation2 + $0x98] sm:$0xff]
          %v707 = vld [vmem:[#allocation2 + $0xa0] sm:$0xff]
          %v708 = vld [vmem:[#allocation2 + $0xa8] sm:$0xff]
          %v709 = vld [vmem:[#allocation2 + $0xb0] sm:$0xff]
          %v710 = vld [vmem:[#allocation2 + $0xb8] sm:$0xff]
          %v711 = vld [vmem:[#allocation2 + $0xc0] sm:$0xff]
          %v712 = vld [vmem:[#allocation2 + $0xc8] sm:$0xff]
          %v713 = vld [vmem:[#allocation2 + $0xd0] sm:$0xff]
          %v714 = vld [vmem:[#allocation2 + $0xd8] sm:$0xff]
          %v715 = vld [vmem:[#allocation2 + $0xe0] sm:$0xff]
          %v716 = vld [vmem:[#allocation2 + $0xe8] sm:$0xff]
          %v717 = vld [vmem:[#allocation2 + $0xf0] sm:$0xff]
          %v718 = vld [vmem:[#allocation2 + $0xf8] sm:$0xff]
          %v719 = vld [vmem:[%s265] sm:$0x1]
          %v721 = vperm.slane %v719, 0
          %v723 = vadd.f32 %v687, %v721
          %v724 = vadd.f32 %v688, %v721
          %v725 = vadd.f32 %v689, %v721
          %v726 = vadd.f32 %v690, %v721
          %v727 = vadd.f32 %v691, %v721
          %v728 = vadd.f32 %v692, %v721
          %v729 = vadd.f32 %v693, %v721
          %v730 = vadd.f32 %v694, %v721
          %v731 = vadd.f32 %v695, %v721
          %v732 = vadd.f32 %v696, %v721
          %v733 = vadd.f32 %v697, %v721
          %v734 = vadd.f32 %v698, %v721
          %v735 = vadd.f32 %v699, %v721
          %v736 = vadd.f32 %v700, %v721
          %v737 = vadd.f32 %v701, %v721
          %v738 = vadd.f32 %v702, %v721
          %v739 = vadd.f32 %v703, %v721
          %v740 = vadd.f32 %v704, %v721
          %v741 = vadd.f32 %v705, %v721
          %v742 = vadd.f32 %v706, %v721
          %v743 = vadd.f32 %v707, %v721
          %v744 = vadd.f32 %v708, %v721
          %v745 = vadd.f32 %v709, %v721
          %v746 = vadd.f32 %v710, %v721
          %v747 = vadd.f32 %v711, %v721
          %v748 = vadd.f32 %v712, %v721
          %v749 = vadd.f32 %v713, %v721
          %v750 = vadd.f32 %v714, %v721
          %v751 = vadd.f32 %v715, %v721
          %v752 = vadd.f32 %v716, %v721
          %v753 = vadd.f32 %v717, %v721
          %v754 = vadd.f32 %v718, %v721
          %v755 = vmax.f32 %v723, 0.0
          %v756 = vmax.f32 %v724, 0.0
          %v757 = vmax.f32 %v725, 0.0
          %v758 = vmax.f32 %v726, 0.0
          %v759 = vmax.f32 %v727, 0.0
          %v760 = vmax.f32 %v728, 0.0
          %v761 = vmax.f32 %v729, 0.0
          %v762 = vmax.f32 %v730, 0.0
          %v763 = vmax.f32 %v731, 0.0
          %v764 = vmax.f32 %v732, 0.0
          %v765 = vmax.f32 %v733, 0.0
          %v766 = vmax.f32 %v734, 0.0
          %v767 = vmax.f32 %v735, 0.0
          %v768 = vmax.f32 %v736, 0.0
          %v769 = vmax.f32 %v737, 0.0
          %v770 = vmax.f32 %v738, 0.0
          %v771 = vmax.f32 %v739, 0.0
          %v772 = vmax.f32 %v740, 0.0
          %v773 = vmax.f32 %v741, 0.0
          %v774 = vmax.f32 %v742, 0.0
          %v775 = vmax.f32 %v743, 0.0
          %v776 = vmax.f32 %v744, 0.0
          %v777 = vmax.f32 %v745, 0.0
          %v778 = vmax.f32 %v746, 0.0
          %v779 = vmax.f32 %v747, 0.0
          %v780 = vmax.f32 %v748, 0.0
          %v781 = vmax.f32 %v749, 0.0
          %v782 = vmax.f32 %v750, 0.0
          %v783 = vmax.f32 %v751, 0.0
          %v784 = vmax.f32 %v752, 0.0
          %v785 = vmax.f32 %v753, 0.0
          %v786 = vmax.f32 %v754, 0.0
          %v787 = vpack.c.bf16 %v755, %v755
          %v788 = vpack.c.bf16 %v756, %v756
          %v789 = vpack.c.bf16 %v757, %v757
          %v790 = vpack.c.bf16 %v758, %v758
          %v791 = vpack.c.bf16 %v759, %v759
          %v792 = vpack.c.bf16 %v760, %v760
          %v793 = vpack.c.bf16 %v761, %v761
          %v794 = vpack.c.bf16 %v762, %v762
          %v795 = vpack.c.bf16 %v763, %v763
          %v796 = vpack.c.bf16 %v764, %v764
          %v797 = vpack.c.bf16 %v765, %v765
          %v798 = vpack.c.bf16 %v766, %v766
          %v799 = vpack.c.bf16 %v767, %v767
          %v800 = vpack.c.bf16 %v768, %v768
          %v801 = vpack.c.bf16 %v769, %v769
          %v802 = vpack.c.bf16 %v770, %v770
          %v803 = vpack.c.bf16 %v771, %v771
          %v804 = vpack.c.bf16 %v772, %v772
          %v805 = vpack.c.bf16 %v773, %v773
          %v806 = vpack.c.bf16 %v774, %v774
          %v807 = vpack.c.bf16 %v775, %v775
          %v808 = vpack.c.bf16 %v776, %v776
          %v809 = vpack.c.bf16 %v777, %v777
          %v810 = vpack.c.bf16 %v778, %v778
          %v811 = vpack.c.bf16 %v779, %v779
          %v812 = vpack.c.bf16 %v780, %v780
          %v813 = vpack.c.bf16 %v781, %v781
          %v814 = vpack.c.bf16 %v782, %v782
          %v815 = vpack.c.bf16 %v783, %v783
          %v816 = vpack.c.bf16 %v784, %v784
          %v817 = vpack.c.bf16 %v785, %v785
          %v818 = vpack.c.bf16 %v786, %v786
          %819 = vst [vmem:[%s236] sm:$0xf] %v787
          %820 = vst [vmem:[%s236 + $0x4] sm:$0xf] %v788
          %821 = vst [vmem:[%s236 + $0x8] sm:$0xf] %v789
          %822 = vst [vmem:[%s236 + $0xc] sm:$0xf] %v790
          %823 = vst [vmem:[%s236 + $0x10] sm:$0xf] %v791
          %824 = vst [vmem:[%s236 + $0x14] sm:$0xf] %v792
          %825 = vst [vmem:[%s236 + $0x18] sm:$0xf] %v793
          %826 = vst [vmem:[%s236 + $0x1c] sm:$0xf] %v794
          %827 = vst [vmem:[%s236 + $0x20] sm:$0xf] %v795
          %828 = vst [vmem:[%s236 + $0x24] sm:$0xf] %v796
          %829 = vst [vmem:[%s236 + $0x28] sm:$0xf] %v797
          %830 = vst [vmem:[%s236 + $0x2c] sm:$0xf] %v798
          %831 = vst [vmem:[%s236 + $0x30] sm:$0xf] %v799
          %832 = vst [vmem:[%s236 + $0x34] sm:$0xf] %v800
          %833 = vst [vmem:[%s236 + $0x38] sm:$0xf] %v801
          %834 = vst [vmem:[%s236 + $0x3c] sm:$0xf] %v802
          %835 = vst [vmem:[%s236 + $0x40] sm:$0xf] %v803
          %836 = vst [vmem:[%s236 + $0x44] sm:$0xf] %v804
          %837 = vst [vmem:[%s236 + $0x48] sm:$0xf] %v805
          %838 = vst [vmem:[%s236 + $0x4c] sm:$0xf] %v806
          %839 = vst [vmem:[%s236 + $0x50] sm:$0xf] %v807
          %840 = vst [vmem:[%s236 + $0x54] sm:$0xf] %v808
          %841 = vst [vmem:[%s236 + $0x58] sm:$0xf] %v809
          %842 = vst [vmem:[%s236 + $0x5c] sm:$0xf] %v810
          %843 = vst [vmem:[%s236 + $0x60] sm:$0xf] %v811
          %844 = vst [vmem:[%s236 + $0x64] sm:$0xf] %v812
          %845 = vst [vmem:[%s236 + $0x68] sm:$0xf] %v813
          %846 = vst [vmem:[%s236 + $0x6c] sm:$0xf] %v814
          %847 = vst [vmem:[%s236 + $0x70] sm:$0xf] %v815
          %848 = vst [vmem:[%s236 + $0x74] sm:$0xf] %v816
          %849 = vst [vmem:[%s236 + $0x78] sm:$0xf] %v817
          %850 = vst [vmem:[%s236 + $0x7c] sm:$0xf] %v818
        $region40: #{cnn_encoder_forward.11} parent=31 // pred_fallthru
          _
        %s851 = sand.u32 %s125, 1
        %s852 = sand.u32 %s125, 1
        %s853 = smul.addr %s852, 128
        %s854 = scalar_lea.vmem [#allocation3], %s853
        // Predicated region
        $region41: #{cnn_encoder_forward.11} parent=31 // pred_check
          %p855 = pneg %p135
        $region42: #{cnn_encoder_forward.11} parent=31 // pred_check_branch
          %857 = sbr.rel (%p855) target = $region44
        $region43: #{cnn_encoder_forward.11} parent=31 // pred_region
          %s858 = smul.u32 32, %s19
          %s859 = ssub.s32 57, %s858
          %p860 = scmp.lt.s32.totalorder %s859, 32
          %s861 = scalar_select %p860, %s859, 32
          %s862 = smul.u32 4, %s861
          %p863 = scmp.ne.s32.totalorder 0, %s862
          %s864 = sadd.s32 %s20, %s858
          %s865 = smul.addr %s864, 4
          %s866 = scalar_lea.vmem %s3, %s865
          // Predicated region
          $region45: #{cnn_encoder_forward.11} parent=43 // pred_check
            %p867 = pneg %p863
          $region46: #{cnn_encoder_forward.11} parent=43 // pred_check_branch
            %869 = sbr.rel (%p867) target = $region48
          $region47: #{cnn_encoder_forward.11} parent=43 // pred_region
            // Predicated region
            $region49: #{cnn_encoder_forward.11} parent=47 // pred_check
              _
            $region50: #{cnn_encoder_forward.11} parent=47 // pred_check_branch
              %871 = sbr.rel target = $region52
            $region51: #{cnn_encoder_forward.11} parent=47 // pred_region
              // Predicated region
              $region71: #{cnn_encoder_forward.11} parent=51 // pred_check
                _
              $region72: #{cnn_encoder_forward.11} parent=51 // pred_check_branch
                %983 = sbr.rel (0) target = $region74
              $region73: #{cnn_encoder_forward.11} parent=51 // pred_region
                %s985 = ssub.s32 16, 1
                %s986 = sshrl.u32 %s861, 5
                // While loop
                $region75: #{cnn_encoder_forward.11} parent=73 // loop_pre_header
                  _
                $region76: #{cnn_encoder_forward.11} parent=73 // loop_header
                  %s988 = sphi 0, %s990
                  %p989 = scmp.ge.s32.totalorder %s988, %s986
                  %s993 = sphi 0, %s1062
                  %s994 = sphi %s854, %s1065
                  %s995 = sphi %s866, %s1066
                $region77: #{cnn_encoder_forward.11} parent=73 // loop_header_branch
                  %992 = sbr.rel (%p989) target = $region81
                $region78: #{cnn_encoder_forward.11} parent=73 // loop_body
                  %v996 = vld [vmem:[%s994] sm:%s985]
                  %997 = vst [vmem:[%s995] sm:%s985] %v996
                  %v998 = vld [vmem:[%s994 + $0x4] sm:%s985]
                  %999 = vst [vmem:[%s995 + $0x4] sm:%s985] %v998
                  %v1000 = vld [vmem:[%s994 + $0x8] sm:%s985]
                  %1001 = vst [vmem:[%s995 + $0x8] sm:%s985] %v1000
                  %v1002 = vld [vmem:[%s994 + $0xc] sm:%s985]
                  %1003 = vst [vmem:[%s995 + $0xc] sm:%s985] %v1002
                  %v1004 = vld [vmem:[%s994 + $0x10] sm:%s985]
                  %1005 = vst [vmem:[%s995 + $0x10] sm:%s985] %v1004
                  %v1006 = vld [vmem:[%s994 + $0x14] sm:%s985]
                  %1007 = vst [vmem:[%s995 + $0x14] sm:%s985] %v1006
                  %v1008 = vld [vmem:[%s994 + $0x18] sm:%s985]
                  %1009 = vst [vmem:[%s995 + $0x18] sm:%s985] %v1008
                  %v1010 = vld [vmem:[%s994 + $0x1c] sm:%s985]
                  %1011 = vst [vmem:[%s995 + $0x1c] sm:%s985] %v1010
                  %v1012 = vld [vmem:[%s994 + $0x20] sm:%s985]
                  %1013 = vst [vmem:[%s995 + $0x20] sm:%s985] %v1012
                  %v1014 = vld [vmem:[%s994 + $0x24] sm:%s985]
                  %1015 = vst [vmem:[%s995 + $0x24] sm:%s985] %v1014
                  %v1016 = vld [vmem:[%s994 + $0x28] sm:%s985]
                  %1017 = vst [vmem:[%s995 + $0x28] sm:%s985] %v1016
                  %v1018 = vld [vmem:[%s994 + $0x2c] sm:%s985]
                  %1019 = vst [vmem:[%s995 + $0x2c] sm:%s985] %v1018
                  %v1020 = vld [vmem:[%s994 + $0x30] sm:%s985]
                  %1021 = vst [vmem:[%s995 + $0x30] sm:%s985] %v1020
                  %v1022 = vld [vmem:[%s994 + $0x34] sm:%s985]
                  %1023 = vst [vmem:[%s995 + $0x34] sm:%s985] %v1022
                  %v1024 = vld [vmem:[%s994 + $0x38] sm:%s985]
                  %1025 = vst [vmem:[%s995 + $0x38] sm:%s985] %v1024
                  %v1026 = vld [vmem:[%s994 + $0x3c] sm:%s985]
                  %1027 = vst [vmem:[%s995 + $0x3c] sm:%s985] %v1026
                  %v1028 = vld [vmem:[%s994 + $0x40] sm:%s985]
                  %1029 = vst [vmem:[%s995 + $0x40] sm:%s985] %v1028
                  %v1030 = vld [vmem:[%s994 + $0x44] sm:%s985]
                  %1031 = vst [vmem:[%s995 + $0x44] sm:%s985] %v1030
                  %v1032 = vld [vmem:[%s994 + $0x48] sm:%s985]
                  %1033 = vst [vmem:[%s995 + $0x48] sm:%s985] %v1032
                  %v1034 = vld [vmem:[%s994 + $0x4c] sm:%s985]
                  %1035 = vst [vmem:[%s995 + $0x4c] sm:%s985] %v1034
                  %v1036 = vld [vmem:[%s994 + $0x50] sm:%s985]
                  %1037 = vst [vmem:[%s995 + $0x50] sm:%s985] %v1036
                  %v1038 = vld [vmem:[%s994 + $0x54] sm:%s985]
                  %1039 = vst [vmem:[%s995 + $0x54] sm:%s985] %v1038
                  %v1040 = vld [vmem:[%s994 + $0x58] sm:%s985]
                  %1041 = vst [vmem:[%s995 + $0x58] sm:%s985] %v1040
                  %v1042 = vld [vmem:[%s994 + $0x5c] sm:%s985]
                  %1043 = vst [vmem:[%s995 + $0x5c] sm:%s985] %v1042
                  %v1044 = vld [vmem:[%s994 + $0x60] sm:%s985]
                  %1045 = vst [vmem:[%s995 + $0x60] sm:%s985] %v1044
                  %v1046 = vld [vmem:[%s994 + $0x64] sm:%s985]
                  %1047 = vst [vmem:[%s995 + $0x64] sm:%s985] %v1046
                  %v1048 = vld [vmem:[%s994 + $0x68] sm:%s985]
                  %1049 = vst [vmem:[%s995 + $0x68] sm:%s985] %v1048
                  %v1050 = vld [vmem:[%s994 + $0x6c] sm:%s985]
                  %1051 = vst [vmem:[%s995 + $0x6c] sm:%s985] %v1050
                  %v1052 = vld [vmem:[%s994 + $0x70] sm:%s985]
                  %1053 = vst [vmem:[%s995 + $0x70] sm:%s985] %v1052
                  %v1054 = vld [vmem:[%s994 + $0x74] sm:%s985]
                  %1055 = vst [vmem:[%s995 + $0x74] sm:%s985] %v1054
                  %v1056 = vld [vmem:[%s994 + $0x78] sm:%s985]
                  %1057 = vst [vmem:[%s995 + $0x78] sm:%s985] %v1056
                  %v1058 = vld [vmem:[%s994 + $0x7c] sm:%s985]
                  %1059 = vst [vmem:[%s995 + $0x7c] sm:%s985] %v1058
                  %s1060 = sadd.s32 1, %s993
                  %p1061 = scmp.ge.s32.totalorder %s1060, %s986
                  %s1062 = scalar_select %p1061, 0, %s1060
                  %s1063 = smul.u32 %s1062, 128
                  %s1064 = smul.u32 %s1062, 128
                  %s1065 = scalar_lea.vmem %s854, %s1063 [#allocation3]
                  %s1066 = scalar_lea.vmem %s866, %s1064
                $region79: #{cnn_encoder_forward.11} parent=73 // loop_footer
                  %s990 = sadd.s32 %s988, 1
                $region80: #{cnn_encoder_forward.11} parent=73 // loop_footer_branch
                  %987 = sbr.rel target = $region76
                $region81: #{cnn_encoder_forward.11} parent=73 // loop_exit
                  _
                %s1067 = sshrl.u32 %s861, 5
                %s1068 = sand.u32 %s861, 31
                %s1069 = smul.u32 %s1067, 32
                %s1070 = smul.u32 4, %s1069
                %s1071 = scalar_lea.vmem %s854, %s1070 [#allocation3]
                %s1072 = smul.u32 4, %s1069
                %s1073 = scalar_lea.vmem %s866, %s1072
                // While loop
                $region82: #{cnn_encoder_forward.11} parent=73 // loop_pre_header
                  _
                $region83: #{cnn_encoder_forward.11} parent=73 // loop_header
                  %s1075 = sphi 0, %s1077
                  %p1076 = scmp.ge.s32.totalorder %s1075, %s1068
                  %s1080 = sphi 0, %s1087
                  %s1081 = sphi %s1071, %s1090
                  %s1082 = sphi %s1073, %s1091
                $region84: #{cnn_encoder_forward.11} parent=73 // loop_header_branch
                  %1079 = sbr.rel (%p1076) target = $region88
                $region85: #{cnn_encoder_forward.11} parent=73 // loop_body
                  %v1083 = vld [vmem:[%s1081] sm:%s985]
                  %1084 = vst [vmem:[%s1082] sm:%s985] %v1083
                  %s1085 = sadd.s32 1, %s1080
                  %p1086 = scmp.ge.s32.totalorder %s1085, %s1068
                  %s1087 = scalar_select %p1086, 0, %s1085
                  %s1088 = smul.u32 %s1087, 4
                  %s1089 = smul.u32 %s1087, 4
                  %s1090 = scalar_lea.vmem %s1071, %s1088 [#allocation3]
                  %s1091 = scalar_lea.vmem %s1073, %s1089
                $region86: #{cnn_encoder_forward.11} parent=73 // loop_footer
                  %s1077 = sadd.s32 %s1075, 1
                $region87: #{cnn_encoder_forward.11} parent=73 // loop_footer_branch
                  %1074 = sbr.rel target = $region83
                $region88: #{cnn_encoder_forward.11} parent=73 // loop_exit
                  _
              $region74: #{cnn_encoder_forward.11} parent=51 // pred_fallthru
                _
            $region52: #{cnn_encoder_forward.11} parent=47 // pred_fallthru
              _
            // Predicated region
            $region53: #{cnn_encoder_forward.11} parent=47 // pred_check
              _
            $region54: #{cnn_encoder_forward.11} parent=47 // pred_check_branch
              %873 = sbr.rel (0) target = $region56
            $region55: #{cnn_encoder_forward.11} parent=47 // pred_region
              %s875 = ssub.s32 16, 1
              %s876 = sshrl.u32 %s861, 5
              // While loop
              $region57: #{cnn_encoder_forward.11} parent=55 // loop_pre_header
                _
              $region58: #{cnn_encoder_forward.11} parent=55 // loop_header
                %s878 = sphi 0, %s880
                %p879 = scmp.ge.s32.totalorder %s878, %s876
                %s883 = sphi 0, %s952
                %s884 = sphi %s854, %s955
                %s885 = sphi %s866, %s956
              $region59: #{cnn_encoder_forward.11} parent=55 // loop_header_branch
                %882 = sbr.rel (%p879) target = $region63
              $region60: #{cnn_encoder_forward.11} parent=55 // loop_body
                %v886 = vld [vmem:[%s884] sm:%s875]
                %887 = vst [vmem:[%s885] sm:%s875] %v886
                %v888 = vld [vmem:[%s884 + $0x4] sm:%s875]
                %889 = vst [vmem:[%s885 + $0x4] sm:%s875] %v888
                %v890 = vld [vmem:[%s884 + $0x8] sm:%s875]
                %891 = vst [vmem:[%s885 + $0x8] sm:%s875] %v890
                %v892 = vld [vmem:[%s884 + $0xc] sm:%s875]
                %893 = vst [vmem:[%s885 + $0xc] sm:%s875] %v892
                %v894 = vld [vmem:[%s884 + $0x10] sm:%s875]
                %895 = vst [vmem:[%s885 + $0x10] sm:%s875] %v894
                %v896 = vld [vmem:[%s884 + $0x14] sm:%s875]
                %897 = vst [vmem:[%s885 + $0x14] sm:%s875] %v896
                %v898 = vld [vmem:[%s884 + $0x18] sm:%s875]
                %899 = vst [vmem:[%s885 + $0x18] sm:%s875] %v898
                %v900 = vld [vmem:[%s884 + $0x1c] sm:%s875]
                %901 = vst [vmem:[%s885 + $0x1c] sm:%s875] %v900
                %v902 = vld [vmem:[%s884 + $0x20] sm:%s875]
                %903 = vst [vmem:[%s885 + $0x20] sm:%s875] %v902
                %v904 = vld [vmem:[%s884 + $0x24] sm:%s875]
                %905 = vst [vmem:[%s885 + $0x24] sm:%s875] %v904
                %v906 = vld [vmem:[%s884 + $0x28] sm:%s875]
                %907 = vst [vmem:[%s885 + $0x28] sm:%s875] %v906
                %v908 = vld [vmem:[%s884 + $0x2c] sm:%s875]
                %909 = vst [vmem:[%s885 + $0x2c] sm:%s875] %v908
                %v910 = vld [vmem:[%s884 + $0x30] sm:%s875]
                %911 = vst [vmem:[%s885 + $0x30] sm:%s875] %v910
                %v912 = vld [vmem:[%s884 + $0x34] sm:%s875]
                %913 = vst [vmem:[%s885 + $0x34] sm:%s875] %v912
                %v914 = vld [vmem:[%s884 + $0x38] sm:%s875]
                %915 = vst [vmem:[%s885 + $0x38] sm:%s875] %v914
                %v916 = vld [vmem:[%s884 + $0x3c] sm:%s875]
                %917 = vst [vmem:[%s885 + $0x3c] sm:%s875] %v916
                %v918 = vld [vmem:[%s884 + $0x40] sm:%s875]
                %919 = vst [vmem:[%s885 + $0x40] sm:%s875] %v918
                %v920 = vld [vmem:[%s884 + $0x44] sm:%s875]
                %921 = vst [vmem:[%s885 + $0x44] sm:%s875] %v920
                %v922 = vld [vmem:[%s884 + $0x48] sm:%s875]
                %923 = vst [vmem:[%s885 + $0x48] sm:%s875] %v922
                %v924 = vld [vmem:[%s884 + $0x4c] sm:%s875]
                %925 = vst [vmem:[%s885 + $0x4c] sm:%s875] %v924
                %v926 = vld [vmem:[%s884 + $0x50] sm:%s875]
                %927 = vst [vmem:[%s885 + $0x50] sm:%s875] %v926
                %v928 = vld [vmem:[%s884 + $0x54] sm:%s875]
                %929 = vst [vmem:[%s885 + $0x54] sm:%s875] %v928
                %v930 = vld [vmem:[%s884 + $0x58] sm:%s875]
                %931 = vst [vmem:[%s885 + $0x58] sm:%s875] %v930
                %v932 = vld [vmem:[%s884 + $0x5c] sm:%s875]
                %933 = vst [vmem:[%s885 + $0x5c] sm:%s875] %v932
                %v934 = vld [vmem:[%s884 + $0x60] sm:%s875]
                %935 = vst [vmem:[%s885 + $0x60] sm:%s875] %v934
                %v936 = vld [vmem:[%s884 + $0x64] sm:%s875]
                %937 = vst [vmem:[%s885 + $0x64] sm:%s875] %v936
                %v938 = vld [vmem:[%s884 + $0x68] sm:%s875]
                %939 = vst [vmem:[%s885 + $0x68] sm:%s875] %v938
                %v940 = vld [vmem:[%s884 + $0x6c] sm:%s875]
                %941 = vst [vmem:[%s885 + $0x6c] sm:%s875] %v940
                %v942 = vld [vmem:[%s884 + $0x70] sm:%s875]
                %943 = vst [vmem:[%s885 + $0x70] sm:%s875] %v942
                %v944 = vld [vmem:[%s884 + $0x74] sm:%s875]
                %945 = vst [vmem:[%s885 + $0x74] sm:%s875] %v944
                %v946 = vld [vmem:[%s884 + $0x78] sm:%s875]
                %947 = vst [vmem:[%s885 + $0x78] sm:%s875] %v946
                %v948 = vld [vmem:[%s884 + $0x7c] sm:%s875]
                %949 = vst [vmem:[%s885 + $0x7c] sm:%s875] %v948
                %s950 = sadd.s32 1, %s883
                %p951 = scmp.ge.s32.totalorder %s950, %s876
                %s952 = scalar_select %p951, 0, %s950
                %s953 = smul.u32 %s952, 128
                %s954 = smul.u32 %s952, 128
                %s955 = scalar_lea.vmem %s854, %s953 [#allocation3]
                %s956 = scalar_lea.vmem %s866, %s954
              $region61: #{cnn_encoder_forward.11} parent=55 // loop_footer
                %s880 = sadd.s32 %s878, 1
              $region62: #{cnn_encoder_forward.11} parent=55 // loop_footer_branch
                %877 = sbr.rel target = $region58
              $region63: #{cnn_encoder_forward.11} parent=55 // loop_exit
                _
              %s957 = sshrl.u32 %s861, 5
              %s958 = sand.u32 %s861, 31
              %s959 = smul.u32 %s957, 32
              %s960 = smul.u32 4, %s959
              %s961 = scalar_lea.vmem %s854, %s960 [#allocation3]
              %s962 = smul.u32 4, %s959
              %s963 = scalar_lea.vmem %s866, %s962
              // While loop
              $region64: #{cnn_encoder_forward.11} parent=55 // loop_pre_header
                _
              $region65: #{cnn_encoder_forward.11} parent=55 // loop_header
                %s965 = sphi 0, %s967
                %p966 = scmp.ge.s32.totalorder %s965, %s958
                %s970 = sphi 0, %s977
                %s971 = sphi %s961, %s980
                %s972 = sphi %s963, %s981
              $region66: #{cnn_encoder_forward.11} parent=55 // loop_header_branch
                %969 = sbr.rel (%p966) target = $region70
              $region67: #{cnn_encoder_forward.11} parent=55 // loop_body
                %v973 = vld [vmem:[%s971] sm:%s875]
                %974 = vst [vmem:[%s972] sm:%s875] %v973
                %s975 = sadd.s32 1, %s970
                %p976 = scmp.ge.s32.totalorder %s975, %s958
                %s977 = scalar_select %p976, 0, %s975
                %s978 = smul.u32 %s977, 4
                %s979 = smul.u32 %s977, 4
                %s980 = scalar_lea.vmem %s961, %s978 [#allocation3]
                %s981 = scalar_lea.vmem %s963, %s979
              $region68: #{cnn_encoder_forward.11} parent=55 // loop_footer
                %s967 = sadd.s32 %s965, 1
              $region69: #{cnn_encoder_forward.11} parent=55 // loop_footer_branch
                %964 = sbr.rel target = $region65
              $region70: #{cnn_encoder_forward.11} parent=55 // loop_exit
                _
            $region56: #{cnn_encoder_forward.11} parent=47 // pred_fallthru
              _
          $region48: #{cnn_encoder_forward.11} parent=43 // pred_fallthru
            _
          %1092 = vnop
        $region44: #{cnn_encoder_forward.11} parent=31 // pred_fallthru
          _
      $region32: #{cnn_encoder_forward.11} parent=5 // pred_fallthru
        _
      %p1093 = scmp.le.s32.totalorder 2, %s9
      // Predicated region
      $region89: #{cnn_encoder_forward.11} parent=5 // pred_check
        %p1094 = pneg %p1093
      $region90: #{cnn_encoder_forward.11} parent=5 // pred_check_branch
        %1096 = sbr.rel (%p1094) target = $region92
      $region91: #{cnn_encoder_forward.11} parent=5 // pred_region
        %s1097 = ssub.s32 %s9, 2
        // Predicated region
        $region93: #{cnn_encoder_forward.11} parent=91 // pred_check
          %p1098 = pneg %p141
        $region94: #{cnn_encoder_forward.11} parent=91 // pred_check_branch
          %1100 = sbr.rel (%p1098) target = $region96
        $region95: #{cnn_encoder_forward.11} parent=91 // pred_region
          %s1101 = sand.u32 %s126, 1
          %s1102 = sand.u32 %s126, 1
          %s1103 = smul.addr %s1102, 128
          %s1104 = scalar_lea.vmem [#allocation3], %s1103
        $region96: #{cnn_encoder_forward.11} parent=91 // pred_fallthru
          _
      $region92: #{cnn_encoder_forward.11} parent=5 // pred_fallthru
        _
    $region6: #{cnn_encoder_forward.11} parent=1 // loop_footer
      %s13 = sadd.s32 1, %s9
    $region7: #{cnn_encoder_forward.11} parent=1 // loop_footer_branch
      %8 = sbr.rel target = $region3
    $region8: #{cnn_encoder_forward.11} parent=1 // loop_exit
      _

// kernel: cnn_encoder_forward.13
$region0: #{cnn_encoder_forward.13}
  #allocation0 [shape = 'u32[]', space=smem, size = 0x4, offset = 0x4, fixed_abs, tag = 'smem constant byte address 0x4 - core index']
  #allocation1 [shape = 'u32[72,128]{1,0:T(1,128)}', space=vmem, size = 0x9000, scoped, tag = 'internal scratch']
  %s0 = inlined_call_operand.vmem [shape: bf16[2,8,2,8,256], index: 0, kind: input, shape index: {}]
  %s1 = inlined_call_operand.vmem [shape: bf16[2,7,7,128], index: 1, kind: output, shape index: {}]
  %s2 = sld [smem:[#allocation0]]
  $region37: #{cnn_encoder_forward.13} parent=0
    _
  %s4 = ssub.s32 1, %s2
  %s5 = scalar_select 0, %s4, %s2
  loop: start=0, step=1, limit=4
  $region2: #{cnn_encoder_forward.13} parent=0 // loop_pre_header
    _
  $region3: #{cnn_encoder_forward.13} parent=0 // loop_header
    %s7 = sphi 0, %s11
    %p8 = scmp.ge.s32.totalorder %s7, 4
    %s17 = sphi 0, %s19
    %s20 = sphi 0, %s17
    %s21 = sphi 0, %s20
    %s37 = sphi 0, %s21
    %s43 = sphi 0, %s45
    %s46 = sphi 0, %s43
    %s47 = sphi 0, %s46
    %s63 = sphi 0, %s47
  $region4: #{cnn_encoder_forward.13} parent=0 // loop_header_branch
    %10 = sbr.rel (%p8) target = $region8
  $region5: #{cnn_encoder_forward.13} parent=0 // loop_body
    %s12 = ssub.s32 %s7, 1
    %s13 = ssub.s32 %s7, 2
    %s14 = sadd.s32 %s7, 1
    %s15 = ssub.s32 %s7, %s14
    %p16 = scmp.eq.s32.totalorder %s15, 0
    %s18 = sadd.s32 %s17, 1
    %s19 = scalar_select %p16, %s17, %s18
    %p22 = pneg %p16
    %p23 = scmp.eq.s32.totalorder %s7, 1
    %p24 = por %p22, %p23
    %p25 = scmp.ne.s32.totalorder %s17, %s20
    %p26 = scmp.eq.s32.totalorder %s7, 0
    %p27 = por %p25, %p26
    %p28 = scmp.ne.s32.totalorder %s17, %s20
    %p29 = scmp.eq.s32.totalorder %s12, 1
    %p30 = por %p28, %p29
    %p31 = scmp.ne.s32.totalorder %s20, %s21
    %p32 = scmp.eq.s32.totalorder %s12, 0
    %p33 = por %p31, %p32
    %p34 = scmp.ne.s32.totalorder %s20, %s21
    %p35 = scmp.eq.s32.totalorder %s13, 1
    %p36 = por %p34, %p35
    %p38 = scmp.ne.s32.totalorder %s21, %s37
    %p39 = scmp.eq.s32.totalorder %s13, 0
    %p40 = por %p38, %p39
    %s41 = ssub.s32 %s7, %s14
    %p42 = scmp.eq.s32.totalorder %s41, 0
    %s44 = sadd.s32 %s43, 1
    %s45 = scalar_select %p42, %s43, %s44
    %p48 = pneg %p42
    %p49 = scmp.eq.s32.totalorder %s7, 1
    %p50 = por %p48, %p49
    %p51 = scmp.ne.s32.totalorder %s43, %s46
    %p52 = scmp.eq.s32.totalorder %s7, 0
    %p53 = por %p51, %p52
    %p54 = scmp.ne.s32.totalorder %s43, %s46
    %p55 = scmp.eq.s32.totalorder %s12, 1
    %p56 = por %p54, %p55
    %p57 = scmp.ne.s32.totalorder %s46, %s47
    %p58 = scmp.eq.s32.totalorder %s12, 0
    %p59 = por %p57, %p58
    %p60 = scmp.ne.s32.totalorder %s46, %s47
    %p61 = scmp.eq.s32.totalorder %s13, 1
    %p62 = por %p60, %p61
    %p64 = scmp.ne.s32.totalorder %s47, %s63
    %p65 = scmp.eq.s32.totalorder %s13, 0
    %p66 = por %p64, %p65
    %p67 = scmp.le.s32.totalorder 1, %s7
    %p68 = scmp.lt.s32.totalorder %s7, 3
    %p69 = pnand %p67, %p68
    %p70 = pneg %p69
    // Predicated region
    $region9: #{cnn_encoder_forward.13} parent=5 // pred_check
      _
    $region10: #{cnn_encoder_forward.13} parent=5 // pred_check_branch
      %72 = sbr.rel (%p69) target = $region12
    $region11: #{cnn_encoder_forward.13} parent=5 // pred_region
      %s73 = ssub.s32 %s7, 1
    $region12: #{cnn_encoder_forward.13} parent=5 // pred_fallthru
      _
    %p74 = scmp.lt.s32.totalorder %s7, 2
    // Predicated region
    $region13: #{cnn_encoder_forward.13} parent=5 // pred_check
      %p75 = pneg %p74
    $region14: #{cnn_encoder_forward.13} parent=5 // pred_check_branch
      %77 = sbr.rel (%p75) target = $region16
    $region15: #{cnn_encoder_forward.13} parent=5 // pred_region
      // Predicated region
      $region17: #{cnn_encoder_forward.13} parent=15 // pred_check
        %p78 = pneg %p27
      $region18: #{cnn_encoder_forward.13} parent=15 // pred_check_branch
        %80 = sbr.rel (%p78) target = $region20
      $region19: #{cnn_encoder_forward.13} parent=15 // pred_region
        %p81 = scmp.lt.s32.totalorder %s7, 1
        %s82 = scalar_select %p81, %s7, 1
        %s83 = smul.addr %s82, 32
        %s84 = smul.addr %s83, 4
        %s85 = scalar_lea.vmem %s0, %s84
      $region20: #{cnn_encoder_forward.13} parent=15 // pred_fallthru
        _
    $region16: #{cnn_encoder_forward.13} parent=5 // pred_fallthru
      _
    %p86 = scmp.le.s32.totalorder 1, %s7
    %p87 = scmp.lt.s32.totalorder %s7, 3
    %p88 = pnand %p86, %p87
    %p89 = pneg %p88
    // Predicated region
    $region21: #{cnn_encoder_forward.13} parent=5 // pred_check
      _
    $region22: #{cnn_encoder_forward.13} parent=5 // pred_check_branch
      %91 = sbr.rel (%p88) target = $region24
    $region23: #{cnn_encoder_forward.13} parent=5 // pred_region
      %s92 = ssub.s32 %s7, 1
      %p93 = scmp.lt.s32.totalorder %s12, 1
      %s94 = scalar_select %p93, %s12, 1
      %s95 = smul.addr %s94, 32
      %s96 = smul.addr %s95, 4
      %s97 = scalar_lea.vmem %s0, %s96
      %p98 = pneg %p33
      %p99 = pneg %p30
      %p100 = pneg %p59
      %p101 = pneg %p56
      %p102 = scmp.lt.s32.totalorder %s12, 1
      %s103 = scalar_select %p102, %s12, 1
      %s104 = smul.addr %s103, 7
      %s105 = smul.addr %s104, 4
      %s106 = scalar_lea.vmem %s1, %s105
      %p107 = scmp.lt.s32.totalorder %s12, 1
      %s108 = scalar_select %p107, %s12, 1
      %s109 = smul.addr %s108, 32
      %s110 = smul.addr %s109, 4
      %s111 = scalar_lea.vmem %s0, %s110
      %p112 = scmp.lt.s32.totalorder %s12, 1
      %s113 = scalar_select %p112, %s12, 1
      %s114 = smul.addr %s113, 7
      %s115 = smul.addr %s114, 4
      %s116 = scalar_lea.vmem %s1, %s115
      %v117 = vld [vmem:[%s111] sm:$0xff]
      %v118 = vld [vmem:[%s111 + $0x8] sm:$0xff]
      %v119 = vld [vmem:[%s111 + $0x10] sm:$0xff]
      %v120 = vld [vmem:[%s111 + $0x18] sm:$0xff]
      %v121 = vld [vmem:[%s111 + $0x20] sm:$0xff]
      %v122 = vld [vmem:[%s111 + $0x28] sm:$0xff]
      %v123 = vld [vmem:[%s111 + $0x30] sm:$0xff]
      %v124 = vld [vmem:[%s111 + $0x38] sm:$0xff]
      %v125 = vld [vmem:[%s111 + $0x40] sm:$0xff]
      %v126 = vld [vmem:[%s111 + $0x48] sm:$0xff]
      %v127 = vld [vmem:[%s111 + $0x50] sm:$0xff]
      %v128 = vld [vmem:[%s111 + $0x58] sm:$0xff]
      %v129 = vld [vmem:[%s111 + $0x60] sm:$0xff]
      %v130 = vld [vmem:[%s111 + $0x68] sm:$0xff]
      %v131 = vld [vmem:[%s111 + $0x70] sm:$0xff]
      %v132 = vunpack.c.l.bf16 %v117
      %v133 = vunpack.c.h.bf16 %v117
      %v134 = vunpack.c.l.bf16 %v118
      %v135 = vunpack.c.h.bf16 %v118
      %v136 = vunpack.c.l.bf16 %v119
      %v137 = vunpack.c.h.bf16 %v119
      %v138 = vunpack.c.l.bf16 %v120
      %v139 = vunpack.c.h.bf16 %v120
      %v140 = vunpack.c.l.bf16 %v121
      %v141 = vunpack.c.h.bf16 %v121
      %v142 = vunpack.c.l.bf16 %v122
      %v143 = vunpack.c.h.bf16 %v122
      %v144 = vunpack.c.l.bf16 %v123
      %v145 = vunpack.c.h.bf16 %v123
      %v146 = vunpack.c.l.bf16 %v124
      %v147 = vunpack.c.h.bf16 %v124
      %v148 = vunpack.c.l.bf16 %v125
      %v149 = vunpack.c.h.bf16 %v125
      %v150 = vunpack.c.l.bf16 %v126
      %v151 = vunpack.c.h.bf16 %v126
      %v152 = vunpack.c.l.bf16 %v127
      %v153 = vunpack.c.h.bf16 %v127
      %v154 = vunpack.c.l.bf16 %v128
      %v155 = vunpack.c.h.bf16 %v128
      %v156 = vunpack.c.l.bf16 %v129
      %v157 = vunpack.c.h.bf16 %v129
      %v158 = vunpack.c.l.bf16 %v130
      %v159 = vunpack.c.h.bf16 %v130
      %v160 = vunpack.c.l.bf16 %v131
      %v161 = vunpack.c.h.bf16 %v131
      %v162 = vmax.f32 %v132, %v133
      %v163 = vmax.f32 %v136, %v137
      %v164 = vmax.f32 %v140, %v141
      %v165 = vmax.f32 %v144, %v145
      %v166 = vmax.f32 %v148, %v149
      %v167 = vmax.f32 %v152, %v153
      %v168 = vmax.f32 %v156, %v157
      %v176 = vrot.slane %v132, 1
      %v177 = vrot.slane %v136, 1
      %v178 = vrot.slane %v140, 1
      %v179 = vrot.slane %v144, 1
      %v180 = vrot.slane %v148, 1
      %v181 = vrot.slane %v152, 1
      %v182 = vrot.slane %v156, 1
      %v190 = vmax.f32 %v162, %v176
      %v191 = vmax.f32 %v163, %v177
      %v192 = vmax.f32 %v164, %v178
      %v193 = vmax.f32 %v165, %v179
      %v194 = vmax.f32 %v166, %v180
      %v195 = vmax.f32 %v167, %v181
      %v196 = vmax.f32 %v168, %v182
      %v197 = vmax.f32 %v190, %v134
      %v198 = vmax.f32 %v191, %v138
      %v199 = vmax.f32 %v192, %v142
      %v200 = vmax.f32 %v193, %v146
      %v201 = vmax.f32 %v194, %v150
      %v202 = vmax.f32 %v195, %v154
      %v203 = vmax.f32 %v196, %v158
      %v204 = vmax.f32 %v197, %v135
      %v205 = vmax.f32 %v198, %v139
      %v206 = vmax.f32 %v199, %v143
      %v207 = vmax.f32 %v200, %v147
      %v208 = vmax.f32 %v201, %v151
      %v209 = vmax.f32 %v202, %v155
      %v210 = vmax.f32 %v203, %v159
      %v218 = vrot.slane %v134, 1
      %v219 = vrot.slane %v138, 1
      %v220 = vrot.slane %v142, 1
      %v221 = vrot.slane %v146, 1
      %v222 = vrot.slane %v150, 1
      %v223 = vrot.slane %v154, 1
      %v224 = vrot.slane %v158, 1
      %v232 = vmax.f32 %v204, %v218
      %v233 = vmax.f32 %v205, %v219
      %v234 = vmax.f32 %v206, %v220
      %v235 = vmax.f32 %v207, %v221
      %v236 = vmax.f32 %v208, %v222
      %v237 = vmax.f32 %v209, %v223
      %v238 = vmax.f32 %v210, %v224
      %v239 = vmax.f32 %v232, %v136
      %v240 = vmax.f32 %v233, %v140
      %v241 = vmax.f32 %v234, %v144
      %v242 = vmax.f32 %v235, %v148
      %v243 = vmax.f32 %v236, %v152
      %v244 = vmax.f32 %v237, %v156
      %v245 = vmax.f32 %v238, %v160
      %v246 = vmax.f32 %v239, %v137
      %v247 = vmax.f32 %v240, %v141
      %v248 = vmax.f32 %v241, %v145
      %v249 = vmax.f32 %v242, %v149
      %v250 = vmax.f32 %v243, %v153
      %v251 = vmax.f32 %v244, %v157
      %v252 = vmax.f32 %v245, %v161
      %v254 = vrot.slane %v160, 1
      %v256 = vmax.f32 %v246, %v177
      %v257 = vmax.f32 %v247, %v178
      %v258 = vmax.f32 %v248, %v179
      %v259 = vmax.f32 %v249, %v180
      %v260 = vmax.f32 %v250, %v181
      %v261 = vmax.f32 %v251, %v182
      %v262 = vmax.f32 %v252, %v254
      %v263 = vpack.c.bf16 %v256, %v256
      %v264 = vpack.c.bf16 %v257, %v257
      %v265 = vpack.c.bf16 %v258, %v258
      %v266 = vpack.c.bf16 %v259, %v259
      %v267 = vpack.c.bf16 %v260, %v260
      %v268 = vpack.c.bf16 %v261, %v261
      %v269 = vpack.c.bf16 %v262, %v262
      %vm270 = vcmask 1043456
      %vm271 = vsmask.f32 3328
      %vm272 = vmand %vm270, %vm271
      %v273 = vld [vmem:[%s116] sm:$0xf]
      %v274 = vsel %vm272, %v263, %v273
      %275 = vst [vmem:[%s116] sm:$0xf] %v274
      %v276 = vld [vmem:[%s116 + $0x4] sm:$0xf]
      %v277 = vsel %vm272, %v264, %v276
      %278 = vst [vmem:[%s116 + $0x4] sm:$0xf] %v277
      %v279 = vld [vmem:[%s116 + $0x8] sm:$0xf]
      %v280 = vsel %vm272, %v265, %v279
      %281 = vst [vmem:[%s116 + $0x8] sm:$0xf] %v280
      %v282 = vld [vmem:[%s116 + $0xc] sm:$0xf]
      %v283 = vsel %vm272, %v266, %v282
      %284 = vst [vmem:[%s116 + $0xc] sm:$0xf] %v283
      %v285 = vld [vmem:[%s116 + $0x10] sm:$0xf]
      %v286 = vsel %vm272, %v267, %v285
      %287 = vst [vmem:[%s116 + $0x10] sm:$0xf] %v286
      %v288 = vld [vmem:[%s116 + $0x14] sm:$0xf]
      %v289 = vsel %vm272, %v268, %v288
      %290 = vst [vmem:[%s116 + $0x14] sm:$0xf] %v289
      %v291 = vld [vmem:[%s116 + $0x18] sm:$0xf]
      %v292 = vsel %vm272, %v269, %v291
      %293 = vst [vmem:[%s116 + $0x18] sm:$0xf] %v292
      %p294 = scmp.lt.s32.totalorder %s12, 1
      %s295 = scalar_select %p294, %s12, 1
      %s296 = smul.addr %s295, 7
      %s297 = smul.addr %s296, 4
      %s298 = scalar_lea.vmem %s1, %s297
      // Predicated region
      $region25: #{cnn_encoder_forward.13} parent=23 // pred_check
        %p299 = pneg %p56
      $region26: #{cnn_encoder_forward.13} parent=23 // pred_check_branch
        %301 = sbr.rel (%p299) target = $region28
      $region27: #{cnn_encoder_forward.13} parent=23 // pred_region
        _
      $region28: #{cnn_encoder_forward.13} parent=23 // pred_fallthru
        _
    $region24: #{cnn_encoder_forward.13} parent=5 // pred_fallthru
      _
    %p302 = scmp.le.s32.totalorder 2, %s7
    // Predicated region
    $region29: #{cnn_encoder_forward.13} parent=5 // pred_check
      %p303 = pneg %p302
    $region30: #{cnn_encoder_forward.13} parent=5 // pred_check_branch
      %305 = sbr.rel (%p303) target = $region32
    $region31: #{cnn_encoder_forward.13} parent=5 // pred_region
      %s306 = ssub.s32 %s7, 2
      // Predicated region
      $region33: #{cnn_encoder_forward.13} parent=31 // pred_check
        %p307 = pneg %p62
      $region34: #{cnn_encoder_forward.13} parent=31 // pred_check_branch
        %309 = sbr.rel (%p307) target = $region36
      $region35: #{cnn_encoder_forward.13} parent=31 // pred_region
        %p310 = scmp.lt.s32.totalorder %s13, 1
        %s311 = scalar_select %p310, %s13, 1
        %s312 = smul.addr %s311, 7
        %s313 = smul.addr %s312, 4
        %s314 = scalar_lea.vmem %s1, %s313
      $region36: #{cnn_encoder_forward.13} parent=31 // pred_fallthru
        _
    $region32: #{cnn_encoder_forward.13} parent=5 // pred_fallthru
      _
  $region6: #{cnn_encoder_forward.13} parent=0 // loop_footer
    %s11 = sadd.s32 1, %s7
  $region7: #{cnn_encoder_forward.13} parent=0 // loop_footer_branch
    %6 = sbr.rel target = $region3
  $region8: #{cnn_encoder_forward.13} parent=0 // loop_exit
    _

// kernel: cnn_encoder_forward.14
$region0: #{cnn_encoder_forward.14}
  #allocation0 [shape = 'u32[]', space=smem, size = 0x4, offset = 0x4, fixed_abs, tag = 'smem constant byte address 0x4 - core index']
  #allocation1 [shape = 'u32[72,128]{1,0:T(1,128)}', space=vmem, size = 0x9000, scoped, tag = 'internal scratch']
  #allocation2 [shape = 'f32[64,128]{1,0:T(8,128)}', space=vmem, size = 0x8000, scoped, tag = 'scratch operand']
  %s0 = inlined_call_operand.vmem [shape: bf16[98,128], index: 0, kind: input, shape index: {}]
  %s1 = inlined_call_operand.vmem [shape: bf16[128,128], index: 1, kind: input, shape index: {}]
  %s2 = inlined_call_operand.vmem [shape: f32[1,128], index: 2, kind: input, shape index: {}]
  %s3 = inlined_call_operand.vmem [shape: bf16[98,128], index: 3, kind: output, shape index: {}]
  %s4 = sld [smem:[#allocation0]]
  $region97: #{cnn_encoder_forward.14} parent=0
    _
  %s6 = ssub.s32 1, %s4
  %s7 = scalar_select 0, %s6, %s4
  $region1: #{cnn_encoder_forward.14} parent=0
    #allocation3 [shape = 'u8[32768]{0}', space=vmem, size = 0x8000, scoped, tag = 'output window, operand 0']
    loop: start=0, step=1, limit=4
    $region2: #{cnn_encoder_forward.14} parent=1 // loop_pre_header
      _
    $region3: #{cnn_encoder_forward.14} parent=1 // loop_header
      %s9 = sphi 0, %s13
      %p10 = scmp.ge.s32.totalorder %s9, 4
      %s16 = sphi 0, %s35
      %s17 = sphi 0, %s31
      %s18 = sphi 0, %s27
      %s19 = sphi 0, %s16
      %s20 = sphi 0, %s17
      %s21 = sphi 0, %s18
      %s22 = sphi 0, %s19
      %s23 = sphi 0, %s20
      %s24 = sphi 0, %s21
      %s40 = sphi 0, %s42
      %s43 = sphi 0, %s40
      %s44 = sphi 0, %s43
      %s60 = sphi 0, %s44
      %s68 = sphi 0, %s70
      %s71 = sphi 0, %s68
      %s72 = sphi 0, %s71
      %s88 = sphi 0, %s72
      %s94 = sphi 0, %s96
      %s97 = sphi 0, %s94
      %s98 = sphi 0, %s97
      %s114 = sphi 0, %s98
      %s122 = sphi 0, %s124
      %s125 = sphi 0, %s122
      %s126 = sphi 0, %s125
      %s142 = sphi 0, %s126
    $region4: #{cnn_encoder_forward.14} parent=1 // loop_header_branch
      %12 = sbr.rel (%p10) target = $region8
    $region5: #{cnn_encoder_forward.14} parent=1 // loop_body
      %s14 = ssub.s32 %s9, 1
      %s15 = ssub.s32 %s9, 2
      %s25 = sadd.s32 1, %s18
      %p26 = scmp.ge.s32.totalorder %s25, 1
      %s27 = scalar_select %p26, 0, %s25
      %s28 = sadd.s32 1, %s17
      %s29 = scalar_select %p26, %s28, %s17
      %p30 = scmp.ge.s32.totalorder %s29, 1
      %s31 = scalar_select %p30, 0, %s29
      %s32 = sadd.s32 1, %s16
      %s33 = scalar_select %p30, %s32, %s16
      %p34 = scmp.ge.s32.totalorder %s33, 2
      %s35 = scalar_select %p34, 0, %s33
      %s36 = ssub.s32 %s16, %s35
      %s37 = ssub.s32 %s18, %s27
      %s38 = sor.u32 %s36, %s37
      %p39 = scmp.eq.s32.totalorder %s38, 0
      %s41 = sadd.s32 %s40, 1
      %s42 = scalar_select %p39, %s40, %s41
      %p45 = pneg %p39
      %p46 = scmp.eq.s32.totalorder %s9, 1
      %p47 = por %p45, %p46
      %p48 = scmp.ne.s32.totalorder %s40, %s43
      %p49 = scmp.eq.s32.totalorder %s9, 0
      %p50 = por %p48, %p49
      %p51 = scmp.ne.s32.totalorder %s40, %s43
      %p52 = scmp.eq.s32.totalorder %s14, 1
      %p53 = por %p51, %p52
      %p54 = scmp.ne.s32.totalorder %s43, %s44
      %p55 = scmp.eq.s32.totalorder %s14, 0
      %p56 = por %p54, %p55
      %p57 = scmp.ne.s32.totalorder %s43, %s44
      %p58 = scmp.eq.s32.totalorder %s15, 1
      %p59 = por %p57, %p58
      %p61 = scmp.ne.s32.totalorder %s44, %s60
      %p62 = scmp.eq.s32.totalorder %s15, 0
      %p63 = por %p61, %p62
      %s64 = ssub.s32 %s18, %s27
      %s65 = ssub.s32 %s17, %s31
      %s66 = sor.u32 %s64, %s65
      %p67 = scmp.eq.s32.totalorder %s66, 0
      %s69 = sadd.s32 %s68, 1
      %s70 = scalar_select %p67, %s68, %s69
      %p73 = pneg %p67
      %p74 = scmp.eq.s32.totalorder %s9, 1
      %p75 = por %p73, %p74
      %p76 = scmp.ne.s32.totalorder %s68, %s71
      %p77 = scmp.eq.s32.totalorder %s9, 0
      %p78 = por %p76, %p77
      %p79 = scmp.ne.s32.totalorder %s68, %s71
      %p80 = scmp.eq.s32.totalorder %s14, 1
      %p81 = por %p79, %p80
      %p82 = scmp.ne.s32.totalorder %s71, %s72
      %p83 = scmp.eq.s32.totalorder %s14, 0
      %p84 = por %p82, %p83
      %p85 = scmp.ne.s32.totalorder %s71, %s72
      %p86 = scmp.eq.s32.totalorder %s15, 1
      %p87 = por %p85, %p86
      %p89 = scmp.ne.s32.totalorder %s72, %s88
      %p90 = scmp.eq.s32.totalorder %s15, 0
      %p91 = por %p89, %p90
      %s92 = ssub.s32 %s17, %s31
      %p93 = scmp.eq.s32.totalorder %s92, 0
      %s95 = sadd.s32 %s94, 1
      %s96 = scalar_select %p93, %s94, %s95
      %p99 = pneg %p93
      %p100 = scmp.eq.s32.totalorder %s9, 1
      %p101 = por %p99, %p100
      %p102 = scmp.ne.s32.totalorder %s94, %s97
      %p103 = scmp.eq.s32.totalorder %s9, 0
      %p104 = por %p102, %p103
      %p105 = scmp.ne.s32.totalorder %s94, %s97
      %p106 = scmp.eq.s32.totalorder %s14, 1
      %p107 = por %p105, %p106
      %p108 = scmp.ne.s32.totalorder %s97, %s98
      %p109 = scmp.eq.s32.totalorder %s14, 0
      %p110 = por %p108, %p109
      %p111 = scmp.ne.s32.totalorder %s97, %s98
      %p112 = scmp.eq.s32.totalorder %s15, 1
      %p113 = por %p111, %p112
      %p115 = scmp.ne.s32.totalorder %s98, %s114
      %p116 = scmp.eq.s32.totalorder %s15, 0
      %p117 = por %p115, %p116
      %s118 = ssub.s32 %s16, %s35
      %s119 = ssub.s32 %s17, %s31
      %s120 = sor.u32 %s118, %s119
      %p121 = scmp.eq.s32.totalorder %s120, 0
      %s123 = sadd.s32 %s122, 1
      %s124 = scalar_select %p121, %s122, %s123
      %p127 = pneg %p121
      %p128 = scmp.eq.s32.totalorder %s9, 1
      %p129 = por %p127, %p128
      %p130 = scmp.ne.s32.totalorder %s122, %s125
      %p131 = scmp.eq.s32.totalorder %s9, 0
      %p132 = por %p130, %p131
      %p133 = scmp.ne.s32.totalorder %s122, %s125
      %p134 = scmp.eq.s32.totalorder %s14, 1
      %p135 = por %p133, %p134
      %p136 = scmp.ne.s32.totalorder %s125, %s126
      %p137 = scmp.eq.s32.totalorder %s14, 0
      %p138 = por %p136, %p137
      %p139 = scmp.ne.s32.totalorder %s125, %s126
      %p140 = scmp.eq.s32.totalorder %s15, 1
      %p141 = por %p139, %p140
      %p143 = scmp.ne.s32.totalorder %s126, %s142
      %p144 = scmp.eq.s32.totalorder %s15, 0
      %p145 = por %p143, %p144
      %p146 = scmp.le.s32.totalorder 1, %s9
      %p147 = scmp.lt.s32.totalorder %s9, 3
      %p148 = pnand %p146, %p147
      %p149 = pneg %p148
      // Predicated region
      $region9: #{cnn_encoder_forward.14} parent=5 // pred_check
        _
      $region10: #{cnn_encoder_forward.14} parent=5 // pred_check_branch
        %151 = sbr.rel (%p148) target = $region12
      $region11: #{cnn_encoder_forward.14} parent=5 // pred_region
        %s152 = ssub.s32 %s9, 1
        // Predicated region
        $region13: #{cnn_encoder_forward.14} parent=11 // pred_check
          %p153 = pneg %p84
        $region14: #{cnn_encoder_forward.14} parent=11 // pred_check_branch
          %155 = sbr.rel (%p153) target = $region16
        $region15: #{cnn_encoder_forward.14} parent=11 // pred_region
          %s156 = smul.u32 16, %s21
          %p157 = scmp.lt.s32.totalorder %s156, 15
          %s158 = scalar_select %p157, %s156, 15
          %p159 = scmp.lt.s32.totalorder %s20, 0
          %s160 = scalar_select %p159, %s20, 0
          %s161 = sadd.s32 %s160, %s158
          %s162 = smul.addr %s161, 4
          %s163 = scalar_lea.vmem %s1, %s162
          %s164 = smul.u32 16, %s21
        $region16: #{cnn_encoder_forward.14} parent=11 // pred_fallthru
          _
        // Predicated region
        $region17: #{cnn_encoder_forward.14} parent=11 // pred_check
          %p165 = pneg %p110
        $region18: #{cnn_encoder_forward.14} parent=11 // pred_check_branch
          %167 = sbr.rel (%p165) target = $region20
        $region19: #{cnn_encoder_forward.14} parent=11 // pred_region
          %p168 = scmp.lt.s32.totalorder %s20, 0
          %s169 = scalar_select %p168, %s20, 0
          %s170 = scalar_lea.vmem %s2, %s169
        $region20: #{cnn_encoder_forward.14} parent=11 // pred_fallthru
          _
      $region12: #{cnn_encoder_forward.14} parent=5 // pred_fallthru
        _
      %p171 = scmp.lt.s32.totalorder %s9, 2
      // Predicated region
      $region21: #{cnn_encoder_forward.14} parent=5 // pred_check
        %p172 = pneg %p171
      $region22: #{cnn_encoder_forward.14} parent=5 // pred_check_branch
        %174 = sbr.rel (%p172) target = $region24
      $region23: #{cnn_encoder_forward.14} parent=5 // pred_region
        // Predicated region
        $region25: #{cnn_encoder_forward.14} parent=23 // pred_check
          %p175 = pneg %p50
        $region26: #{cnn_encoder_forward.14} parent=23 // pred_check_branch
          %177 = sbr.rel (%p175) target = $region28
        $region27: #{cnn_encoder_forward.14} parent=23 // pred_region
          %s178 = smul.u32 8, %s16
          %s179 = ssub.s32 13, %s178
          %p180 = scmp.lt.s32.totalorder %s179, 8
          %s181 = scalar_select %p180, %s179, 8
          %s182 = smul.u32 4, %s181
          %p183 = scmp.lt.s32.totalorder %s178, 12
          %s184 = scalar_select %p183, %s178, 12
          %p185 = scmp.lt.s32.totalorder %s18, 0
          %s186 = scalar_select %p185, %s18, 0
          %s187 = sadd.s32 %s186, %s184
          %s188 = smul.addr %s187, 4
          %s189 = scalar_lea.vmem %s0, %s188
          %s190 = smul.u32 8, %s16
          %s191 = ssub.s32 13, %s190
          %p192 = scmp.lt.s32.totalorder %s191, 8
          %s193 = scalar_select %p192, %s191, 8
          %s194 = smul.u32 4, %s193
        $region28: #{cnn_encoder_forward.14} parent=23 // pred_fallthru
          _
      $region24: #{cnn_encoder_forward.14} parent=5 // pred_fallthru
        _
      %p195 = scmp.le.s32.totalorder 1, %s9
      %p196 = scmp.lt.s32.totalorder %s9, 3
      %p197 = pnand %p195, %p196
      %p198 = pneg %p197
      // Predicated region
      $region29: #{cnn_encoder_forward.14} parent=5 // pred_check
        _
      $region30: #{cnn_encoder_forward.14} parent=5 // pred_check_branch
        %200 = sbr.rel (%p197) target = $region32
      $region31: #{cnn_encoder_forward.14} parent=5 // pred_region
        %s201 = ssub.s32 %s9, 1
        %s202 = smul.u32 8, %s19
        %s203 = ssub.s32 13, %s202
        %p204 = scmp.lt.s32.totalorder %s203, 8
        %s205 = scalar_select %p204, %s203, 8
        %s206 = smul.u32 4, %s205
        %p207 = scmp.lt.s32.totalorder %s202, 12
        %s208 = scalar_select %p207, %s202, 12
        %p209 = scmp.lt.s32.totalorder %s21, 0
        %s210 = scalar_select %p209, %s21, 0
        %s211 = sadd.s32 %s210, %s208
        %s212 = smul.addr %s211, 4
        %s213 = scalar_lea.vmem %s0, %s212
        %p214 = pneg %p56
        %p215 = pneg %p53
        %s216 = smul.u32 16, %s21
        %p217 = scmp.lt.s32.totalorder %s216, 15
        %s218 = scalar_select %p217, %s216, 15
        %p219 = scmp.lt.s32.totalorder %s20, 0
        %s220 = scalar_select %p219, %s20, 0
        %s221 = sadd.s32 %s220, %s218
        %s222 = smul.addr %s221, 4
        %s223 = scalar_lea.vmem %s1, %s222
        %p224 = pneg %p84
        %p225 = pneg %p81
        %p226 = scmp.lt.s32.totalorder %s20, 0
        %s227 = scalar_select %p226, %s20, 0
        %s228 = scalar_lea.vmem %s2, %s227
        %p229 = pneg %p110
        %p230 = pneg %p107
        %p231 = pneg %p138
        %p232 = pneg %p135
        %s233 = sand.u32 %s125, 1
        %s234 = sand.u32 %s125, 1
        %s235 = smul.addr %s234, 32
        %s236 = scalar_lea.vmem [#allocation3], %s235
        %s237 = smul.u32 8, %s19
        %s238 = ssub.s32 13, %s237
        %p239 = scmp.lt.s32.totalorder %s238, 8
        %s240 = scalar_select %p239, %s238, 8
        %s241 = smul.u32 4, %s240
        %p242 = scmp.lt.s32.totalorder %s237, 12
        %s243 = scalar_select %p242, %s237, 12
        %p244 = scmp.lt.s32.totalorder %s21, 0
        %s245 = scalar_select %p244, %s21, 0
        %s246 = sadd.s32 %s245, %s243
        %s247 = smul.addr %s246, 4
        %s248 = scalar_lea.vmem %s0, %s247
        %s249 = smul.u32 8, %s19
        %s250 = ssub.s32 13, %s249
        %p251 = scmp.lt.s32.totalorder %s250, 8
        %s252 = scalar_select %p251, %s250, 8
        %s253 = smul.u32 4, %s252
        %s254 = smul.u32 16, %s21
        %p255 = scmp.lt.s32.totalorder %s254, 15
        %s256 = scalar_select %p255, %s254, 15
        %p257 = scmp.lt.s32.totalorder %s20, 0
        %s258 = scalar_select %p257, %s20, 0
        %s259 = sadd.s32 %s258, %s256
        %s260 = smul.addr %s259, 4
        %s261 = scalar_lea.vmem %s1, %s260
        %s262 = smul.u32 16, %s21
        %p263 = scmp.lt.s32.totalorder %s20, 0
        %s264 = scalar_select %p263, %s20, 0
        %s265 = scalar_lea.vmem %s2, %s264
        %s266 = smul.u32 8, %s19
        %s267 = ssub.s32 13, %s266
        %p268 = scmp.lt.s32.totalorder %s267, 8
        %s269 = scalar_select %p268, %s267, 8
        %s270 = smul.u32 4, %s269
        %p271 = scmp.eq.s32.totalorder %s21, 0
        // Predicated region
        $region33: #{cnn_encoder_forward.14} parent=31 // pred_check
          %p272 = pneg %p271
        $region34: #{cnn_encoder_forward.14} parent=31 // pred_check_branch
          %274 = sbr.rel (%p272) target = $region36
        $region35: #{cnn_encoder_forward.14} parent=31 // pred_region
          %275 = vst [vmem:[#allocation2] sm:$0xff] 0.0
          %276 = vst [vmem:[#allocation2 + $0x8] sm:$0xff] 0.0
          %277 = vst [vmem:[#allocation2 + $0x10] sm:$0xff] 0.0
          %278 = vst [vmem:[#allocation2 + $0x18] sm:$0xff] 0.0
          %279 = vst [vmem:[#allocation2 + $0x20] sm:$0xff] 0.0
          %280 = vst [vmem:[#allocation2 + $0x28] sm:$0xff] 0.0
          %281 = vst [vmem:[#allocation2 + $0x30] sm:$0xff] 0.0
          %282 = vst [vmem:[#allocation2 + $0x38] sm:$0xff] 0.0
        $region36: #{cnn_encoder_forward.14} parent=31 // pred_fallthru
          _
        %v283 = vld [vmem:[#allocation2] sm:$0xff]
        %v284 = vld [vmem:[#allocation2 + $0x8] sm:$0xff]
        %v285 = vld [vmem:[#allocation2 + $0x10] sm:$0xff]
        %v286 = vld [vmem:[#allocation2 + $0x18] sm:$0xff]
        %v287 = vld [vmem:[#allocation2 + $0x20] sm:$0xff]
        %v288 = vld [vmem:[#allocation2 + $0x28] sm:$0xff]
        %v289 = vld [vmem:[#allocation2 + $0x30] sm:$0xff]
        %v290 = vld [vmem:[#allocation2 + $0x38] sm:$0xff]
        %v291 = vld [vmem:[%s248] sm:$0xf]
        %v292 = vld [vmem:[%s248 + $0x4] sm:$0xf]
        %v293 = vld [vmem:[%s248 + $0x8] sm:$0xf]
        %v294 = vld [vmem:[%s248 + $0xc] sm:$0xf]
        %v295 = vld [vmem:[%s248 + $0x10] sm:$0xf]
        %v296 = vld [vmem:[%s248 + $0x14] sm:$0xf]
        %v297 = vld [vmem:[%s248 + $0x18] sm:$0xf]
        %v298 = vld [vmem:[%s248 + $0x1c] sm:$0xf]
        %v299 = vld [vmem:[%s261] sm:$0xf]
        %v300 = vld [vmem:[%s261 + $0x4] sm:$0xf]
        %v301 = vld [vmem:[%s261 + $0x8] sm:$0xf]
        %v302 = vld [vmem:[%s261 + $0xc] sm:$0xf]
        %v303 = vld [vmem:[%s261 + $0x10] sm:$0xf]
        %v304 = vld [vmem:[%s261 + $0x14] sm:$0xf]
        %v305 = vld [vmem:[%s261 + $0x18] sm:$0xf]
        %v306 = vld [vmem:[%s261 + $0x1c] sm:$0xf]
        %v307 = vld [vmem:[%s261 + $0x20] sm:$0xf]
        %v308 = vld [vmem:[%s261 + $0x24] sm:$0xf]
        %v309 = vld [vmem:[%s261 + $0x28] sm:$0xf]
        %v310 = vld [vmem:[%s261 + $0x2c] sm:$0xf]
        %v311 = vld [vmem:[%s261 + $0x30] sm:$0xf]
        %v312 = vld [vmem:[%s261 + $0x34] sm:$0xf]
        %v313 = vld [vmem:[%s261 + $0x38] sm:$0xf]
        %v314 = vld [vmem:[%s261 + $0x3c] sm:$0xf]
        %v323 = vunpack.c.l.b16 %v291
        %v324 = vunpack.c.l.b16 %v292
        %v325 = vunpack.c.l.b16 %v293
        %v326 = vunpack.c.l.b16 %v294
        %v327 = vunpack.c.l.b16 %v295
        %v328 = vunpack.c.l.b16 %v296
        %v329 = vunpack.c.l.b16 %v297
        %v330 = vunpack.c.l.b16 %v298
        %v331 = vpack.c.b16 %v324, %v323
        %v332 = vpack.c.b16 %v326, %v325
        %v333 = vpack.c.b16 %v328, %v327
        %v334 = vpack.c.b16 %v330, %v329
        %v355 = vunpack.c.l.b16 %v299
        %v356 = vunpack.c.l.b16 %v300
        %v357 = vunpack.c.l.b16 %v301
        %v358 = vunpack.c.l.b16 %v302
        %v359 = vunpack.c.l.b16 %v303
        %v360 = vunpack.c.l.b16 %v304
        %v361 = vunpack.c.l.b16 %v305
        %v362 = vunpack.c.l.b16 %v306
        %v363 = vunpack.c.l.b16 %v307
        %v364 = vunpack.c.l.b16 %v308
        %v365 = vunpack.c.l.b16 %v309
        %v366 = vunpack.c.l.b16 %v310
        %v367 = vunpack.c.l.b16 %v311
        %v368 = vunpack.c.l.b16 %v312
        %v369 = vunpack.c.l.b16 %v313
        %v370 = vunpack.c.l.b16 %v314
        %v371 = vpack.c.b16 %v356, %v355
        %v372 = vpack.c.b16 %v358, %v357
        %v373 = vpack.c.b16 %v360, %v359
        %v374 = vpack.c.b16 %v362, %v361
        %v375 = vpack.c.b16 %v364, %v363
        %v376 = vpack.c.b16 %v366, %v365
        %v377 = vpack.c.b16 %v368, %v367
        %v378 = vpack.c.b16 %v370, %v369
        %387 = vmatpush.bf16.msra.mxu0 %v378
        %388 = vmatpush.bf16.msra.mxu0 %v377
        %389 = vmatpush.bf16.msra.mxu0 %v376
        %390 = vmatpush.bf16.msra.mxu0 %v375
        %391 = vmatpush.bf16.msra.mxu0 %v374
        %392 = vmatpush.bf16.msra.mxu0 %v373
        %393 = vmatpush.bf16.msra.mxu0 %v372
        %394 = vmatpush.bf16.msra.mxu0 %v371
        %395 = vmatmul.bf16.gmra.mxu0 %v331
        %v396 = vpop.f32.mrf.mxu0
        %v397 = vadd.f32 0.0, %v396
        %v398 = vpop.f32.mrf.mxu0
        %v399 = vadd.f32 0.0, %v398
        %400 = vmatmul.bf16.gmra.mxu0 %v332
        %v401 = vpop.f32.mrf.mxu0
        %v402 = vadd.f32 0.0, %v401
        %v403 = vpop.f32.mrf.mxu0
        %v404 = vadd.f32 0.0, %v403
        %405 = vmatmul.bf16.gmra.mxu0 %v333
        %v406 = vpop.f32.mrf.mxu0
        %v407 = vadd.f32 0.0, %v406
        %v408 = vpop.f32.mrf.mxu0
        %v409 = vadd.f32 0.0, %v408
        %410 = vmatmul.bf16.gmra.mxu0 %v334
        %v411 = vpop.f32.mrf.mxu0
        %v412 = vadd.f32 0.0, %v411
        %v413 = vpop.f32.mrf.mxu0
        %v414 = vadd.f32 0.0, %v413
        %415 = vdwg.mxu0
        %v416 = vadd.f32 %v283, %v397
        %v417 = vadd.f32 %v284, %v399
        %v418 = vadd.f32 %v285, %v402
        %v419 = vadd.f32 %v286, %v404
        %v420 = vadd.f32 %v287, %v407
        %v421 = vadd.f32 %v288, %v409
        %v422 = vadd.f32 %v289, %v412
        %v423 = vadd.f32 %v290, %v414
        %424 = vst [vmem:[#allocation2] sm:$0xff] %v416
        %425 = vst [vmem:[#allocation2 + $0x8] sm:$0xff] %v417
        %426 = vst [vmem:[#allocation2 + $0x10] sm:$0xff] %v418
        %427 = vst [vmem:[#allocation2 + $0x18] sm:$0xff] %v419
        %428 = vst [vmem:[#allocation2 + $0x20] sm:$0xff] %v420
        %429 = vst [vmem:[#allocation2 + $0x28] sm:$0xff] %v421
        %430 = vst [vmem:[#allocation2 + $0x30] sm:$0xff] %v422
        %431 = vst [vmem:[#allocation2 + $0x38] sm:$0xff] %v423
        // Predicated region
        $region37: #{cnn_encoder_forward.14} parent=31 // pred_check
          %p432 = pneg %p271
        $region38: #{cnn_encoder_forward.14} parent=31 // pred_check_branch
          %434 = sbr.rel (%p432) target = $region40
        $region39: #{cnn_encoder_forward.14} parent=31 // pred_region
          %v435 = vld [vmem:[#allocation2] sm:$0xff]
          %v436 = vld [vmem:[#allocation2 + $0x8] sm:$0xff]
          %v437 = vld [vmem:[#allocation2 + $0x10] sm:$0xff]
          %v438 = vld [vmem:[#allocation2 + $0x18] sm:$0xff]
          %v439 = vld [vmem:[#allocation2 + $0x20] sm:$0xff]
          %v440 = vld [vmem:[#allocation2 + $0x28] sm:$0xff]
          %v441 = vld [vmem:[#allocation2 + $0x30] sm:$0xff]
          %v442 = vld [vmem:[#allocation2 + $0x38] sm:$0xff]
          %v443 = vld [vmem:[%s265] sm:$0x1]
          %v445 = vperm.slane %v443, 0
          %v447 = vadd.f32 %v435, %v445
          %v448 = vadd.f32 %v436, %v445
          %v449 = vadd.f32 %v437, %v445
          %v450 = vadd.f32 %v438, %v445
          %v451 = vadd.f32 %v439, %v445
          %v452 = vadd.f32 %v440, %v445
          %v453 = vadd.f32 %v441, %v445
          %v454 = vadd.f32 %v442, %v445
          %v455 = vmax.f32 %v447, 0.0
          %v456 = vmax.f32 %v448, 0.0
          %v457 = vmax.f32 %v449, 0.0
          %v458 = vmax.f32 %v450, 0.0
          %v459 = vmax.f32 %v451, 0.0
          %v460 = vmax.f32 %v452, 0.0
          %v461 = vmax.f32 %v453, 0.0
          %v462 = vmax.f32 %v454, 0.0
          %v463 = vpack.c.bf16 %v455, %v455
          %v464 = vpack.c.bf16 %v456, %v456
          %v465 = vpack.c.bf16 %v457, %v457
          %v466 = vpack.c.bf16 %v458, %v458
          %v467 = vpack.c.bf16 %v459, %v459
          %v468 = vpack.c.bf16 %v460, %v460
          %v469 = vpack.c.bf16 %v461, %v461
          %v470 = vpack.c.bf16 %v462, %v462
          %471 = vst [vmem:[%s236] sm:$0xf] %v463
          %472 = vst [vmem:[%s236 + $0x4] sm:$0xf] %v464
          %473 = vst [vmem:[%s236 + $0x8] sm:$0xf] %v465
          %474 = vst [vmem:[%s236 + $0xc] sm:$0xf] %v466
          %475 = vst [vmem:[%s236 + $0x10] sm:$0xf] %v467
          %476 = vst [vmem:[%s236 + $0x14] sm:$0xf] %v468
          %477 = vst [vmem:[%s236 + $0x18] sm:$0xf] %v469
          %478 = vst [vmem:[%s236 + $0x1c] sm:$0xf] %v470
        $region40: #{cnn_encoder_forward.14} parent=31 // pred_fallthru
          _
        %s479 = sand.u32 %s125, 1
        %s480 = sand.u32 %s125, 1
        %s481 = smul.addr %s480, 32
        %s482 = scalar_lea.vmem [#allocation3], %s481
        // Predicated region
        $region41: #{cnn_encoder_forward.14} parent=31 // pred_check
          %p483 = pneg %p135
        $region42: #{cnn_encoder_forward.14} parent=31 // pred_check_branch
          %485 = sbr.rel (%p483) target = $region44
        $region43: #{cnn_encoder_forward.14} parent=31 // pred_region
          %s486 = smul.u32 8, %s19
          %s487 = ssub.s32 13, %s486
          %p488 = scmp.lt.s32.totalorder %s487, 8
          %s489 = scalar_select %p488, %s487, 8
          %s490 = smul.u32 4, %s489
          %p491 = scmp.ne.s32.totalorder 0, %s490
          %s492 = sadd.s32 %s20, %s486
          %s493 = smul.addr %s492, 4
          %s494 = scalar_lea.vmem %s3, %s493
          // Predicated region
          $region45: #{cnn_encoder_forward.14} parent=43 // pred_check
            %p495 = pneg %p491
          $region46: #{cnn_encoder_forward.14} parent=43 // pred_check_branch
            %497 = sbr.rel (%p495) target = $region48
          $region47: #{cnn_encoder_forward.14} parent=43 // pred_region
            // Predicated region
            $region49: #{cnn_encoder_forward.14} parent=47 // pred_check
              _
            $region50: #{cnn_encoder_forward.14} parent=47 // pred_check_branch
              %499 = sbr.rel target = $region52
            $region51: #{cnn_encoder_forward.14} parent=47 // pred_region
              // Predicated region
              $region71: #{cnn_encoder_forward.14} parent=51 // pred_check
                _
              $region72: #{cnn_encoder_forward.14} parent=51 // pred_check_branch
                %563 = sbr.rel (0) target = $region74
              $region73: #{cnn_encoder_forward.14} parent=51 // pred_region
                %s565 = ssub.s32 16, 1
                %s566 = sshrl.u32 %s489, 3
                // While loop
                $region75: #{cnn_encoder_forward.14} parent=73 // loop_pre_header
                  _
                $region76: #{cnn_encoder_forward.14} parent=73 // loop_header
                  %s568 = sphi 0, %s570
                  %p569 = scmp.ge.s32.totalorder %s568, %s566
                  %s573 = sphi 0, %s594
                  %s574 = sphi %s482, %s597
                  %s575 = sphi %s494, %s598
                $region77: #{cnn_encoder_forward.14} parent=73 // loop_header_branch
                  %572 = sbr.rel (%p569) target = $region81
                $region78: #{cnn_encoder_forward.14} parent=73 // loop_body
                  %v576 = vld [vmem:[%s574] sm:%s565]
                  %577 = vst [vmem:[%s575] sm:%s565] %v576
                  %v578 = vld [vmem:[%s574 + $0x4] sm:%s565]
                  %579 = vst [vmem:[%s575 + $0x4] sm:%s565] %v578
                  %v580 = vld [vmem:[%s574 + $0x8] sm:%s565]
                  %581 = vst [vmem:[%s575 + $0x8] sm:%s565] %v580
                  %v582 = vld [vmem:[%s574 + $0xc] sm:%s565]
                  %583 = vst [vmem:[%s575 + $0xc] sm:%s565] %v582
                  %v584 = vld [vmem:[%s574 + $0x10] sm:%s565]
                  %585 = vst [vmem:[%s575 + $0x10] sm:%s565] %v584
                  %v586 = vld [vmem:[%s574 + $0x14] sm:%s565]
                  %587 = vst [vmem:[%s575 + $0x14] sm:%s565] %v586
                  %v588 = vld [vmem:[%s574 + $0x18] sm:%s565]
                  %589 = vst [vmem:[%s575 + $0x18] sm:%s565] %v588
                  %v590 = vld [vmem:[%s574 + $0x1c] sm:%s565]
                  %591 = vst [vmem:[%s575 + $0x1c] sm:%s565] %v590
                  %s592 = sadd.s32 1, %s573
                  %p593 = scmp.ge.s32.totalorder %s592, %s566
                  %s594 = scalar_select %p593, 0, %s592
                  %s595 = smul.u32 %s594, 32
                  %s596 = smul.u32 %s594, 32
                  %s597 = scalar_lea.vmem %s482, %s595 [#allocation3]
                  %s598 = scalar_lea.vmem %s494, %s596
                $region79: #{cnn_encoder_forward.14} parent=73 // loop_footer
                  %s570 = sadd.s32 %s568, 1
                $region80: #{cnn_encoder_forward.14} parent=73 // loop_footer_branch
                  %567 = sbr.rel target = $region76
                $region81: #{cnn_encoder_forward.14} parent=73 // loop_exit
                  _
                %s599 = sshrl.u32 %s489, 3
                %s600 = sand.u32 %s489, 7
                %s601 = smul.u32 %s599, 8
                %s602 = smul.u32 4, %s601
                %s603 = scalar_lea.vmem %s482, %s602 [#allocation3]
                %s604 = smul.u32 4, %s601
                %s605 = scalar_lea.vmem %s494, %s604
                // While loop
                $region82: #{cnn_encoder_forward.14} parent=73 // loop_pre_header
                  _
                $region83: #{cnn_encoder_forward.14} parent=73 // loop_header
                  %s607 = sphi 0, %s609
                  %p608 = scmp.ge.s32.totalorder %s607, %s600
                  %s612 = sphi 0, %s619
                  %s613 = sphi %s603, %s622
                  %s614 = sphi %s605, %s623
                $region84: #{cnn_encoder_forward.14} parent=73 // loop_header_branch
                  %611 = sbr.rel (%p608) target = $region88
                $region85: #{cnn_encoder_forward.14} parent=73 // loop_body
                  %v615 = vld [vmem:[%s613] sm:%s565]
                  %616 = vst [vmem:[%s614] sm:%s565] %v615
                  %s617 = sadd.s32 1, %s612
                  %p618 = scmp.ge.s32.totalorder %s617, %s600
                  %s619 = scalar_select %p618, 0, %s617
                  %s620 = smul.u32 %s619, 4
                  %s621 = smul.u32 %s619, 4
                  %s622 = scalar_lea.vmem %s603, %s620 [#allocation3]
                  %s623 = scalar_lea.vmem %s605, %s621
                $region86: #{cnn_encoder_forward.14} parent=73 // loop_footer
                  %s609 = sadd.s32 %s607, 1
                $region87: #{cnn_encoder_forward.14} parent=73 // loop_footer_branch
                  %606 = sbr.rel target = $region83
                $region88: #{cnn_encoder_forward.14} parent=73 // loop_exit
                  _
              $region74: #{cnn_encoder_forward.14} parent=51 // pred_fallthru
                _
            $region52: #{cnn_encoder_forward.14} parent=47 // pred_fallthru
              _
            // Predicated region
            $region53: #{cnn_encoder_forward.14} parent=47 // pred_check
              _
            $region54: #{cnn_encoder_forward.14} parent=47 // pred_check_branch
              %501 = sbr.rel (0) target = $region56
            $region55: #{cnn_encoder_forward.14} parent=47 // pred_region
              %s503 = ssub.s32 16, 1
              %s504 = sshrl.u32 %s489, 3
              // While loop
              $region57: #{cnn_encoder_forward.14} parent=55 // loop_pre_header
                _
              $region58: #{cnn_encoder_forward.14} parent=55 // loop_header
                %s506 = sphi 0, %s508
                %p507 = scmp.ge.s32.totalorder %s506, %s504
                %s511 = sphi 0, %s532
                %s512 = sphi %s482, %s535
                %s513 = sphi %s494, %s536
              $region59: #{cnn_encoder_forward.14} parent=55 // loop_header_branch
                %510 = sbr.rel (%p507) target = $region63
              $region60: #{cnn_encoder_forward.14} parent=55 // loop_body
                %v514 = vld [vmem:[%s512] sm:%s503]
                %515 = vst [vmem:[%s513] sm:%s503] %v514
                %v516 = vld [vmem:[%s512 + $0x4] sm:%s503]
                %517 = vst [vmem:[%s513 + $0x4] sm:%s503] %v516
                %v518 = vld [vmem:[%s512 + $0x8] sm:%s503]
                %519 = vst [vmem:[%s513 + $0x8] sm:%s503] %v518
                %v520 = vld [vmem:[%s512 + $0xc] sm:%s503]
                %521 = vst [vmem:[%s513 + $0xc] sm:%s503] %v520
                %v522 = vld [vmem:[%s512 + $0x10] sm:%s503]
                %523 = vst [vmem:[%s513 + $0x10] sm:%s503] %v522
                %v524 = vld [vmem:[%s512 + $0x14] sm:%s503]
                %525 = vst [vmem:[%s513 + $0x14] sm:%s503] %v524
                %v526 = vld [vmem:[%s512 + $0x18] sm:%s503]
                %527 = vst [vmem:[%s513 + $0x18] sm:%s503] %v526
                %v528 = vld [vmem:[%s512 + $0x1c] sm:%s503]
                %529 = vst [vmem:[%s513 + $0x1c] sm:%s503] %v528
                %s530 = sadd.s32 1, %s511
                %p531 = scmp.ge.s32.totalorder %s530, %s504
                %s532 = scalar_select %p531, 0, %s530
                %s533 = smul.u32 %s532, 32
                %s534 = smul.u32 %s532, 32
                %s535 = scalar_lea.vmem %s482, %s533 [#allocation3]
                %s536 = scalar_lea.vmem %s494, %s534
              $region61: #{cnn_encoder_forward.14} parent=55 // loop_footer
                %s508 = sadd.s32 %s506, 1
              $region62: #{cnn_encoder_forward.14} parent=55 // loop_footer_branch
                %505 = sbr.rel target = $region58
              $region63: #{cnn_encoder_forward.14} parent=55 // loop_exit
                _
              %s537 = sshrl.u32 %s489, 3
              %s538 = sand.u32 %s489, 7
              %s539 = smul.u32 %s537, 8
              %s540 = smul.u32 4, %s539
              %s541 = scalar_lea.vmem %s482, %s540 [#allocation3]
              %s542 = smul.u32 4, %s539
              %s543 = scalar_lea.vmem %s494, %s542
              // While loop
              $region64: #{cnn_encoder_forward.14} parent=55 // loop_pre_header
                _
              $region65: #{cnn_encoder_forward.14} parent=55 // loop_header
                %s545 = sphi 0, %s547
                %p546 = scmp.ge.s32.totalorder %s545, %s538
                %s550 = sphi 0, %s557
                %s551 = sphi %s541, %s560
                %s552 = sphi %s543, %s561
              $region66: #{cnn_encoder_forward.14} parent=55 // loop_header_branch
                %549 = sbr.rel (%p546) target = $region70
              $region67: #{cnn_encoder_forward.14} parent=55 // loop_body
                %v553 = vld [vmem:[%s551] sm:%s503]
                %554 = vst [vmem:[%s552] sm:%s503] %v553
                %s555 = sadd.s32 1, %s550
                %p556 = scmp.ge.s32.totalorder %s555, %s538
                %s557 = scalar_select %p556, 0, %s555
                %s558 = smul.u32 %s557, 4
                %s559 = smul.u32 %s557, 4
                %s560 = scalar_lea.vmem %s541, %s558 [#allocation3]
                %s561 = scalar_lea.vmem %s543, %s559
              $region68: #{cnn_encoder_forward.14} parent=55 // loop_footer
                %s547 = sadd.s32 %s545, 1
              $region69: #{cnn_encoder_forward.14} parent=55 // loop_footer_branch
                %544 = sbr.rel target = $region65
              $region70: #{cnn_encoder_forward.14} parent=55 // loop_exit
                _
            $region56: #{cnn_encoder_forward.14} parent=47 // pred_fallthru
              _
          $region48: #{cnn_encoder_forward.14} parent=43 // pred_fallthru
            _
          %624 = vnop
        $region44: #{cnn_encoder_forward.14} parent=31 // pred_fallthru
          _
      $region32: #{cnn_encoder_forward.14} parent=5 // pred_fallthru
        _
      %p625 = scmp.le.s32.totalorder 2, %s9
      // Predicated region
      $region89: #{cnn_encoder_forward.14} parent=5 // pred_check
        %p626 = pneg %p625
      $region90: #{cnn_encoder_forward.14} parent=5 // pred_check_branch
        %628 = sbr.rel (%p626) target = $region92
      $region91: #{cnn_encoder_forward.14} parent=5 // pred_region
        %s629 = ssub.s32 %s9, 2
        // Predicated region
        $region93: #{cnn_encoder_forward.14} parent=91 // pred_check
          %p630 = pneg %p141
        $region94: #{cnn_encoder_forward.14} parent=91 // pred_check_branch
          %632 = sbr.rel (%p630) target = $region96
        $region95: #{cnn_encoder_forward.14} parent=91 // pred_region
          %s633 = sand.u32 %s126, 1
          %s634 = sand.u32 %s126, 1
          %s635 = smul.addr %s634, 32
          %s636 = scalar_lea.vmem [#allocation3], %s635
        $region96: #{cnn_encoder_forward.14} parent=91 // pred_fallthru
          _
      $region92: #{cnn_encoder_forward.14} parent=5 // pred_fallthru
        _
    $region6: #{cnn_encoder_forward.14} parent=1 // loop_footer
      %s13 = sadd.s32 1, %s9
    $region7: #{cnn_encoder_forward.14} parent=1 // loop_footer_branch
      %8 = sbr.rel target = $region3
    $region8: #{cnn_encoder_forward.14} parent=1 // loop_exit
      _

// kernel: cnn_encoder_forward.15
$region0: #{cnn_encoder_forward.15}
  #allocation0 [shape = 'u32[]', space=smem, size = 0x4, offset = 0x4, fixed_abs, tag = 'smem constant byte address 0x4 - core index']
  #allocation1 [shape = 'u32[72,128]{1,0:T(1,128)}', space=vmem, size = 0x9000, scoped, tag = 'internal scratch']
  #allocation2 [shape = 'f32[32,128]{1,0:T(8,128)}', space=vmem, size = 0x4000, scoped, tag = 'scratch operand']
  %s0 = inlined_call_operand.vmem [shape: bf16[50,128], index: 0, kind: input, shape index: {}]
  %s1 = inlined_call_operand.vmem [shape: bf16[128,128], index: 1, kind: input, shape index: {}]
  %s2 = inlined_call_operand.vmem [shape: f32[1,128], index: 2, kind: input, shape index: {}]
  %s3 = inlined_call_operand.vmem [shape: bf16[50,128], index: 3, kind: output, shape index: {}]
  %s4 = sld [smem:[#allocation0]]
  $region97: #{cnn_encoder_forward.15} parent=0
    _
  %s6 = ssub.s32 1, %s4
  %s7 = scalar_select 0, %s6, %s4
  $region1: #{cnn_encoder_forward.15} parent=0
    #allocation3 [shape = 'u8[16384]{0}', space=vmem, size = 0x4000, scoped, tag = 'output window, operand 0']
    loop: start=0, step=1, limit=4
    $region2: #{cnn_encoder_forward.15} parent=1 // loop_pre_header
      _
    $region3: #{cnn_encoder_forward.15} parent=1 // loop_header
      %s9 = sphi 0, %s13
      %p10 = scmp.ge.s32.totalorder %s9, 4
      %s16 = sphi 0, %s35
      %s17 = sphi 0, %s31
      %s18 = sphi 0, %s27
      %s19 = sphi 0, %s16
      %s20 = sphi 0, %s17
      %s21 = sphi 0, %s18
      %s22 = sphi 0, %s19
      %s23 = sphi 0, %s20
      %s24 = sphi 0, %s21
      %s40 = sphi 0, %s42
      %s43 = sphi 0, %s40
      %s44 = sphi 0, %s43
      %s60 = sphi 0, %s44
      %s68 = sphi 0, %s70
      %s71 = sphi 0, %s68
      %s72 = sphi 0, %s71
      %s88 = sphi 0, %s72
      %s94 = sphi 0, %s96
      %s97 = sphi 0, %s94
      %s98 = sphi 0, %s97
      %s114 = sphi 0, %s98
      %s122 = sphi 0, %s124
      %s125 = sphi 0, %s122
      %s126 = sphi 0, %s125
      %s142 = sphi 0, %s126
    $region4: #{cnn_encoder_forward.15} parent=1 // loop_header_branch
      %12 = sbr.rel (%p10) target = $region8
    $region5: #{cnn_encoder_forward.15} parent=1 // loop_body
      %s14 = ssub.s32 %s9, 1
      %s15 = ssub.s32 %s9, 2
      %s25 = sadd.s32 1, %s18
      %p26 = scmp.ge.s32.totalorder %s25, 1
      %s27 = scalar_select %p26, 0, %s25
      %s28 = sadd.s32 1, %s17
      %s29 = scalar_select %p26, %s28, %s17
      %p30 = scmp.ge.s32.totalorder %s29, 1
      %s31 = scalar_select %p30, 0, %s29
      %s32 = sadd.s32 1, %s16
      %s33 = scalar_select %p30, %s32, %s16
      %p34 = scmp.ge.s32.totalorder %s33, 2
      %s35 = scalar_select %p34, 0, %s33
      %s36 = ssub.s32 %s16, %s35
      %s37 = ssub.s32 %s18, %s27
      %s38 = sor.u32 %s36, %s37
      %p39 = scmp.eq.s32.totalorder %s38, 0
      %s41 = sadd.s32 %s40, 1
      %s42 = scalar_select %p39, %s40, %s41
      %p45 = pneg %p39
      %p46 = scmp.eq.s32.totalorder %s9, 1
      %p47 = por %p45, %p46
      %p48 = scmp.ne.s32.totalorder %s40, %s43
      %p49 = scmp.eq.s32.totalorder %s9, 0
      %p50 = por %p48, %p49
      %p51 = scmp.ne.s32.totalorder %s40, %s43
      %p52 = scmp.eq.s32.totalorder %s14, 1
      %p53 = por %p51, %p52
      %p54 = scmp.ne.s32.totalorder %s43, %s44
      %p55 = scmp.eq.s32.totalorder %s14, 0
      %p56 = por %p54, %p55
      %p57 = scmp.ne.s32.totalorder %s43, %s44
      %p58 = scmp.eq.s32.totalorder %s15, 1
      %p59 = por %p57, %p58
      %p61 = scmp.ne.s32.totalorder %s44, %s60
      %p62 = scmp.eq.s32.totalorder %s15, 0
      %p63 = por %p61, %p62
      %s64 = ssub.s32 %s18, %s27
      %s65 = ssub.s32 %s17, %s31
      %s66 = sor.u32 %s64, %s65
      %p67 = scmp.eq.s32.totalorder %s66, 0
      %s69 = sadd.s32 %s68, 1
      %s70 = scalar_select %p67, %s68, %s69
      %p73 = pneg %p67
      %p74 = scmp.eq.s32.totalorder %s9, 1
      %p75 = por %p73, %p74
      %p76 = scmp.ne.s32.totalorder %s68, %s71
      %p77 = scmp.eq.s32.totalorder %s9, 0
      %p78 = por %p76, %p77
      %p79 = scmp.ne.s32.totalorder %s68, %s71
      %p80 = scmp.eq.s32.totalorder %s14, 1
      %p81 = por %p79, %p80
      %p82 = scmp.ne.s32.totalorder %s71, %s72
      %p83 = scmp.eq.s32.totalorder %s14, 0
      %p84 = por %p82, %p83
      %p85 = scmp.ne.s32.totalorder %s71, %s72
      %p86 = scmp.eq.s32.totalorder %s15, 1
      %p87 = por %p85, %p86
      %p89 = scmp.ne.s32.totalorder %s72, %s88
      %p90 = scmp.eq.s32.totalorder %s15, 0
      %p91 = por %p89, %p90
      %s92 = ssub.s32 %s17, %s31
      %p93 = scmp.eq.s32.totalorder %s92, 0
      %s95 = sadd.s32 %s94, 1
      %s96 = scalar_select %p93, %s94, %s95
      %p99 = pneg %p93
      %p100 = scmp.eq.s32.totalorder %s9, 1
      %p101 = por %p99, %p100
      %p102 = scmp.ne.s32.totalorder %s94, %s97
      %p103 = scmp.eq.s32.totalorder %s9, 0
      %p104 = por %p102, %p103
      %p105 = scmp.ne.s32.totalorder %s94, %s97
      %p106 = scmp.eq.s32.totalorder %s14, 1
      %p107 = por %p105, %p106
      %p108 = scmp.ne.s32.totalorder %s97, %s98
      %p109 = scmp.eq.s32.totalorder %s14, 0
      %p110 = por %p108, %p109
      %p111 = scmp.ne.s32.totalorder %s97, %s98
      %p112 = scmp.eq.s32.totalorder %s15, 1
      %p113 = por %p111, %p112
      %p115 = scmp.ne.s32.totalorder %s98, %s114
      %p116 = scmp.eq.s32.totalorder %s15, 0
      %p117 = por %p115, %p116
      %s118 = ssub.s32 %s16, %s35
      %s119 = ssub.s32 %s17, %s31
      %s120 = sor.u32 %s118, %s119
      %p121 = scmp.eq.s32.totalorder %s120, 0
      %s123 = sadd.s32 %s122, 1
      %s124 = scalar_select %p121, %s122, %s123
      %p127 = pneg %p121
      %p128 = scmp.eq.s32.totalorder %s9, 1
      %p129 = por %p127, %p128
      %p130 = scmp.ne.s32.totalorder %s122, %s125
      %p131 = scmp.eq.s32.totalorder %s9, 0
      %p132 = por %p130, %p131
      %p133 = scmp.ne.s32.totalorder %s122, %s125
      %p134 = scmp.eq.s32.totalorder %s14, 1
      %p135 = por %p133, %p134
      %p136 = scmp.ne.s32.totalorder %s125, %s126
      %p137 = scmp.eq.s32.totalorder %s14, 0
      %p138 = por %p136, %p137
      %p139 = scmp.ne.s32.totalorder %s125, %s126
      %p140 = scmp.eq.s32.totalorder %s15, 1
      %p141 = por %p139, %p140
      %p143 = scmp.ne.s32.totalorder %s126, %s142
      %p144 = scmp.eq.s32.totalorder %s15, 0
      %p145 = por %p143, %p144
      %p146 = scmp.le.s32.totalorder 1, %s9
      %p147 = scmp.lt.s32.totalorder %s9, 3
      %p148 = pnand %p146, %p147
      %p149 = pneg %p148
      // Predicated region
      $region9: #{cnn_encoder_forward.15} parent=5 // pred_check
        _
      $region10: #{cnn_encoder_forward.15} parent=5 // pred_check_branch
        %151 = sbr.rel (%p148) target = $region12
      $region11: #{cnn_encoder_forward.15} parent=5 // pred_region
        %s152 = ssub.s32 %s9, 1
        // Predicated region
        $region13: #{cnn_encoder_forward.15} parent=11 // pred_check
          %p153 = pneg %p84
        $region14: #{cnn_encoder_forward.15} parent=11 // pred_check_branch
          %155 = sbr.rel (%p153) target = $region16
        $region15: #{cnn_encoder_forward.15} parent=11 // pred_region
          %s156 = smul.u32 16, %s21
          %p157 = scmp.lt.s32.totalorder %s156, 15
          %s158 = scalar_select %p157, %s156, 15
          %p159 = scmp.lt.s32.totalorder %s20, 0
          %s160 = scalar_select %p159, %s20, 0
          %s161 = sadd.s32 %s160, %s158
          %s162 = smul.addr %s161, 4
          %s163 = scalar_lea.vmem %s1, %s162
          %s164 = smul.u32 16, %s21
        $region16: #{cnn_encoder_forward.15} parent=11 // pred_fallthru
          _
        // Predicated region
        $region17: #{cnn_encoder_forward.15} parent=11 // pred_check
          %p165 = pneg %p110
        $region18: #{cnn_encoder_forward.15} parent=11 // pred_check_branch
          %167 = sbr.rel (%p165) target = $region20
        $region19: #{cnn_encoder_forward.15} parent=11 // pred_region
          %p168 = scmp.lt.s32.totalorder %s20, 0
          %s169 = scalar_select %p168, %s20, 0
          %s170 = scalar_lea.vmem %s2, %s169
        $region20: #{cnn_encoder_forward.15} parent=11 // pred_fallthru
          _
      $region12: #{cnn_encoder_forward.15} parent=5 // pred_fallthru
        _
      %p171 = scmp.lt.s32.totalorder %s9, 2
      // Predicated region
      $region21: #{cnn_encoder_forward.15} parent=5 // pred_check
        %p172 = pneg %p171
      $region22: #{cnn_encoder_forward.15} parent=5 // pred_check_branch
        %174 = sbr.rel (%p172) target = $region24
      $region23: #{cnn_encoder_forward.15} parent=5 // pred_region
        // Predicated region
        $region25: #{cnn_encoder_forward.15} parent=23 // pred_check
          %p175 = pneg %p50
        $region26: #{cnn_encoder_forward.15} parent=23 // pred_check_branch
          %177 = sbr.rel (%p175) target = $region28
        $region27: #{cnn_encoder_forward.15} parent=23 // pred_region
          %s178 = smul.u32 4, %s16
          %s179 = ssub.s32 7, %s178
          %p180 = scmp.lt.s32.totalorder %s179, 4
          %s181 = scalar_select %p180, %s179, 4
          %s182 = smul.u32 4, %s181
          %p183 = scmp.lt.s32.totalorder %s178, 6
          %s184 = scalar_select %p183, %s178, 6
          %p185 = scmp.lt.s32.totalorder %s18, 0
          %s186 = scalar_select %p185, %s18, 0
          %s187 = sadd.s32 %s186, %s184
          %s188 = smul.addr %s187, 4
          %s189 = scalar_lea.vmem %s0, %s188
          %s190 = smul.u32 4, %s16
          %s191 = ssub.s32 7, %s190
          %p192 = scmp.lt.s32.totalorder %s191, 4
          %s193 = scalar_select %p192, %s191, 4
          %s194 = smul.u32 4, %s193
        $region28: #{cnn_encoder_forward.15} parent=23 // pred_fallthru
          _
      $region24: #{cnn_encoder_forward.15} parent=5 // pred_fallthru
        _
      %p195 = scmp.le.s32.totalorder 1, %s9
      %p196 = scmp.lt.s32.totalorder %s9, 3
      %p197 = pnand %p195, %p196
      %p198 = pneg %p197
      // Predicated region
      $region29: #{cnn_encoder_forward.15} parent=5 // pred_check
        _
      $region30: #{cnn_encoder_forward.15} parent=5 // pred_check_branch
        %200 = sbr.rel (%p197) target = $region32
      $region31: #{cnn_encoder_forward.15} parent=5 // pred_region
        %s201 = ssub.s32 %s9, 1
        %s202 = smul.u32 4, %s19
        %s203 = ssub.s32 7, %s202
        %p204 = scmp.lt.s32.totalorder %s203, 4
        %s205 = scalar_select %p204, %s203, 4
        %s206 = smul.u32 4, %s205
        %p207 = scmp.lt.s32.totalorder %s202, 6
        %s208 = scalar_select %p207, %s202, 6
        %p209 = scmp.lt.s32.totalorder %s21, 0
        %s210 = scalar_select %p209, %s21, 0
        %s211 = sadd.s32 %s210, %s208
        %s212 = smul.addr %s211, 4
        %s213 = scalar_lea.vmem %s0, %s212
        %p214 = pneg %p56
        %p215 = pneg %p53
        %s216 = smul.u32 16, %s21
        %p217 = scmp.lt.s32.totalorder %s216, 15
        %s218 = scalar_select %p217, %s216, 15
        %p219 = scmp.lt.s32.totalorder %s20, 0
        %s220 = scalar_select %p219, %s20, 0
        %s221 = sadd.s32 %s220, %s218
        %s222 = smul.addr %s221, 4
        %s223 = scalar_lea.vmem %s1, %s222
        %p224 = pneg %p84
        %p225 = pneg %p81
        %p226 = scmp.lt.s32.totalorder %s20, 0
        %s227 = scalar_select %p226, %s20, 0
        %s228 = scalar_lea.vmem %s2, %s227
        %p229 = pneg %p110
        %p230 = pneg %p107
        %p231 = pneg %p138
        %p232 = pneg %p135
        %s233 = sand.u32 %s125, 1
        %s234 = sand.u32 %s125, 1
        %s235 = smul.addr %s234, 16
        %s236 = scalar_lea.vmem [#allocation3], %s235
        %s237 = smul.u32 4, %s19
        %s238 = ssub.s32 7, %s237
        %p239 = scmp.lt.s32.totalorder %s238, 4
        %s240 = scalar_select %p239, %s238, 4
        %s241 = smul.u32 4, %s240
        %p242 = scmp.lt.s32.totalorder %s237, 6
        %s243 = scalar_select %p242, %s237, 6
        %p244 = scmp.lt.s32.totalorder %s21, 0
        %s245 = scalar_select %p244, %s21, 0
        %s246 = sadd.s32 %s245, %s243
        %s247 = smul.addr %s246, 4
        %s248 = scalar_lea.vmem %s0, %s247
        %s249 = smul.u32 4, %s19
        %s250 = ssub.s32 7, %s249
        %p251 = scmp.lt.s32.totalorder %s250, 4
        %s252 = scalar_select %p251, %s250, 4
        %s253 = smul.u32 4, %s252
        %s254 = smul.u32 16, %s21
        %p255 = scmp.lt.s32.totalorder %s254, 15
        %s256 = scalar_select %p255, %s254, 15
        %p257 = scmp.lt.s32.totalorder %s20, 0
        %s258 = scalar_select %p257, %s20, 0
        %s259 = sadd.s32 %s258, %s256
        %s260 = smul.addr %s259, 4
        %s261 = scalar_lea.vmem %s1, %s260
        %s262 = smul.u32 16, %s21
        %p263 = scmp.lt.s32.totalorder %s20, 0
        %s264 = scalar_select %p263, %s20, 0
        %s265 = scalar_lea.vmem %s2, %s264
        %s266 = smul.u32 4, %s19
        %s267 = ssub.s32 7, %s266
        %p268 = scmp.lt.s32.totalorder %s267, 4
        %s269 = scalar_select %p268, %s267, 4
        %s270 = smul.u32 4, %s269
        %p271 = scmp.eq.s32.totalorder %s21, 0
        // Predicated region
        $region33: #{cnn_encoder_forward.15} parent=31 // pred_check
          %p272 = pneg %p271
        $region34: #{cnn_encoder_forward.15} parent=31 // pred_check_branch
          %274 = sbr.rel (%p272) target = $region36
        $region35: #{cnn_encoder_forward.15} parent=31 // pred_region
          %275 = vst [vmem:[#allocation2] sm:$0xff] 0.0
          %276 = vst [vmem:[#allocation2 + $0x8] sm:$0xff] 0.0
          %277 = vst [vmem:[#allocation2 + $0x10] sm:$0xff] 0.0
          %278 = vst [vmem:[#allocation2 + $0x18] sm:$0xff] 0.0
        $region36: #{cnn_encoder_forward.15} parent=31 // pred_fallthru
          _
        %v279 = vld [vmem:[#allocation2] sm:$0xff]
        %v280 = vld [vmem:[#allocation2 + $0x8] sm:$0xff]
        %v281 = vld [vmem:[#allocation2 + $0x10] sm:$0xff]
        %v282 = vld [vmem:[#allocation2 + $0x18] sm:$0xff]
        %v283 = vld [vmem:[%s248] sm:$0xf]
        %v284 = vld [vmem:[%s248 + $0x4] sm:$0xf]
        %v285 = vld [vmem:[%s248 + $0x8] sm:$0xf]
        %v286 = vld [vmem:[%s248 + $0xc] sm:$0xf]
        %v287 = vld [vmem:[%s261] sm:$0xf]
        %v288 = vld [vmem:[%s261 + $0x4] sm:$0xf]
        %v289 = vld [vmem:[%s261 + $0x8] sm:$0xf]
        %v290 = vld [vmem:[%s261 + $0xc] sm:$0xf]
        %v291 = vld [vmem:[%s261 + $0x10] sm:$0xf]
        %v292 = vld [vmem:[%s261 + $0x14] sm:$0xf]
        %v293 = vld [vmem:[%s261 + $0x18] sm:$0xf]
        %v294 = vld [vmem:[%s261 + $0x1c] sm:$0xf]
        %v295 = vld [vmem:[%s261 + $0x20] sm:$0xf]
        %v296 = vld [vmem:[%s261 + $0x24] sm:$0xf]
        %v297 = vld [vmem:[%s261 + $0x28] sm:$0xf]
        %v298 = vld [vmem:[%s261 + $0x2c] sm:$0xf]
        %v299 = vld [vmem:[%s261 + $0x30] sm:$0xf]
        %v300 = vld [vmem:[%s261 + $0x34] sm:$0xf]
        %v301 = vld [vmem:[%s261 + $0x38] sm:$0xf]
        %v302 = vld [vmem:[%s261 + $0x3c] sm:$0xf]
        %v307 = vunpack.c.l.b16 %v283
        %v308 = vunpack.c.l.b16 %v284
        %v309 = vunpack.c.l.b16 %v285
        %v310 = vunpack.c.l.b16 %v286
        %v311 = vpack.c.b16 %v308, %v307
        %v312 = vpack.c.b16 %v310, %v309
        %v331 = vunpack.c.l.b16 %v287
        %v332 = vunpack.c.l.b16 %v288
        %v333 = vunpack.c.l.b16 %v289
        %v334 = vunpack.c.l.b16 %v290
        %v335 = vunpack.c.l.b16 %v291
        %v336 = vunpack.c.l.b16 %v292
        %v337 = vunpack.c.l.b16 %v293
        %v338 = vunpack.c.l.b16 %v294
        %v339 = vunpack.c.l.b16 %v295
        %v340 = vunpack.c.l.b16 %v296
        %v341 = vunpack.c.l.b16 %v297
        %v342 = vunpack.c.l.b16 %v298
        %v343 = vunpack.c.l.b16 %v299
        %v344 = vunpack.c.l.b16 %v300
        %v345 = vunpack.c.l.b16 %v301
        %v346 = vunpack.c.l.b16 %v302
        %v347 = vpack.c.b16 %v332, %v331
        %v348 = vpack.c.b16 %v334, %v333
        %v349 = vpack.c.b16 %v336, %v335
        %v350 = vpack.c.b16 %v338, %v337
        %v351 = vpack.c.b16 %v340, %v339
        %v352 = vpack.c.b16 %v342, %v341
        %v353 = vpack.c.b16 %v344, %v343
        %v354 = vpack.c.b16 %v346, %v345
        %363 = vmatpush.bf16.msra.mxu0 %v354
        %364 = vmatpush.bf16.msra.mxu0 %v353
        %365 = vmatpush.bf16.msra.mxu0 %v352
        %366 = vmatpush.bf16.msra.mxu0 %v351
        %367 = vmatpush.bf16.msra.mxu0 %v350
        %368 = vmatpush.bf16.msra.mxu0 %v349
        %369 = vmatpush.bf16.msra.mxu0 %v348
        %370 = vmatpush.bf16.msra.mxu0 %v347
        %371 = vmatmul.bf16.gmra.mxu0 %v311
        %v372 = vpop.f32.mrf.mxu0
        %v373 = vadd.f32 0.0, %v372
        %v374 = vpop.f32.mrf.mxu0
        %v375 = vadd.f32 0.0, %v374
        %376 = vmatmul.bf16.gmra.mxu0 %v312
        %v377 = vpop.f32.mrf.mxu0
        %v378 = vadd.f32 0.0, %v377
        %v379 = vpop.f32.mrf.mxu0
        %v380 = vadd.f32 0.0, %v379
        %381 = vdwg.mxu0
        %v382 = vadd.f32 %v279, %v373
        %v383 = vadd.f32 %v280, %v375
        %v384 = vadd.f32 %v281, %v378
        %v385 = vadd.f32 %v282, %v380
        %386 = vst [vmem:[#allocation2] sm:$0xff] %v382
        %387 = vst [vmem:[#allocation2 + $0x8] sm:$0xff] %v383
        %388 = vst [vmem:[#allocation2 + $0x10] sm:$0xff] %v384
        %389 = vst [vmem:[#allocation2 + $0x18] sm:$0xff] %v385
        // Predicated region
        $region37: #{cnn_encoder_forward.15} parent=31 // pred_check
          %p390 = pneg %p271
        $region38: #{cnn_encoder_forward.15} parent=31 // pred_check_branch
          %392 = sbr.rel (%p390) target = $region40
        $region39: #{cnn_encoder_forward.15} parent=31 // pred_region
          %v393 = vld [vmem:[#allocation2] sm:$0xff]
          %v394 = vld [vmem:[#allocation2 + $0x8] sm:$0xff]
          %v395 = vld [vmem:[#allocation2 + $0x10] sm:$0xff]
          %v396 = vld [vmem:[#allocation2 + $0x18] sm:$0xff]
          %v397 = vld [vmem:[%s265] sm:$0x1]
          %v399 = vperm.slane %v397, 0
          %v401 = vadd.f32 %v393, %v399
          %v402 = vadd.f32 %v394, %v399
          %v403 = vadd.f32 %v395, %v399
          %v404 = vadd.f32 %v396, %v399
          %v405 = vmax.f32 %v401, 0.0
          %v406 = vmax.f32 %v402, 0.0
          %v407 = vmax.f32 %v403, 0.0
          %v408 = vmax.f32 %v404, 0.0
          %v409 = vpack.c.bf16 %v405, %v405
          %v410 = vpack.c.bf16 %v406, %v406
          %v411 = vpack.c.bf16 %v407, %v407
          %v412 = vpack.c.bf16 %v408, %v408
          %413 = vst [vmem:[%s236] sm:$0xf] %v409
          %414 = vst [vmem:[%s236 + $0x4] sm:$0xf] %v410
          %415 = vst [vmem:[%s236 + $0x8] sm:$0xf] %v411
          %416 = vst [vmem:[%s236 + $0xc] sm:$0xf] %v412
        $region40: #{cnn_encoder_forward.15} parent=31 // pred_fallthru
          _
        %s417 = sand.u32 %s125, 1
        %s418 = sand.u32 %s125, 1
        %s419 = smul.addr %s418, 16
        %s420 = scalar_lea.vmem [#allocation3], %s419
        // Predicated region
        $region41: #{cnn_encoder_forward.15} parent=31 // pred_check
          %p421 = pneg %p135
        $region42: #{cnn_encoder_forward.15} parent=31 // pred_check_branch
          %423 = sbr.rel (%p421) target = $region44
        $region43: #{cnn_encoder_forward.15} parent=31 // pred_region
          %s424 = smul.u32 4, %s19
          %s425 = ssub.s32 7, %s424
          %p426 = scmp.lt.s32.totalorder %s425, 4
          %s427 = scalar_select %p426, %s425, 4
          %s428 = smul.u32 4, %s427
          %p429 = scmp.ne.s32.totalorder 0, %s428
          %s430 = sadd.s32 %s20, %s424
          %s431 = smul.addr %s430, 4
          %s432 = scalar_lea.vmem %s3, %s431
          // Predicated region
          $region45: #{cnn_encoder_forward.15} parent=43 // pred_check
            %p433 = pneg %p429
          $region46: #{cnn_encoder_forward.15} parent=43 // pred_check_branch
            %435 = sbr.rel (%p433) target = $region48
          $region47: #{cnn_encoder_forward.15} parent=43 // pred_region
            // Predicated region
            $region49: #{cnn_encoder_forward.15} parent=47 // pred_check
              _
            $region50: #{cnn_encoder_forward.15} parent=47 // pred_check_branch
              %437 = sbr.rel target = $region52
            $region51: #{cnn_encoder_forward.15} parent=47 // pred_region
              // Predicated region
              $region71: #{cnn_encoder_forward.15} parent=51 // pred_check
                _
              $region72: #{cnn_encoder_forward.15} parent=51 // pred_check_branch
                %493 = sbr.rel (0) target = $region74
              $region73: #{cnn_encoder_forward.15} parent=51 // pred_region
                %s495 = ssub.s32 16, 1
                %s496 = sshrl.u32 %s427, 2
                // While loop
                $region75: #{cnn_encoder_forward.15} parent=73 // loop_pre_header
                  _
                $region76: #{cnn_encoder_forward.15} parent=73 // loop_header
                  %s498 = sphi 0, %s500
                  %p499 = scmp.ge.s32.totalorder %s498, %s496
                  %s503 = sphi 0, %s516
                  %s504 = sphi %s420, %s519
                  %s505 = sphi %s432, %s520
                $region77: #{cnn_encoder_forward.15} parent=73 // loop_header_branch
                  %502 = sbr.rel (%p499) target = $region81
                $region78: #{cnn_encoder_forward.15} parent=73 // loop_body
                  %v506 = vld [vmem:[%s504] sm:%s495]
                  %507 = vst [vmem:[%s505] sm:%s495] %v506
                  %v508 = vld [vmem:[%s504 + $0x4] sm:%s495]
                  %509 = vst [vmem:[%s505 + $0x4] sm:%s495] %v508
                  %v510 = vld [vmem:[%s504 + $0x8] sm:%s495]
                  %511 = vst [vmem:[%s505 + $0x8] sm:%s495] %v510
                  %v512 = vld [vmem:[%s504 + $0xc] sm:%s495]
                  %513 = vst [vmem:[%s505 + $0xc] sm:%s495] %v512
                  %s514 = sadd.s32 1, %s503
                  %p515 = scmp.ge.s32.totalorder %s514, %s496
                  %s516 = scalar_select %p515, 0, %s514
                  %s517 = smul.u32 %s516, 16
                  %s518 = smul.u32 %s516, 16
                  %s519 = scalar_lea.vmem %s420, %s517 [#allocation3]
                  %s520 = scalar_lea.vmem %s432, %s518
                $region79: #{cnn_encoder_forward.15} parent=73 // loop_footer
                  %s500 = sadd.s32 %s498, 1
                $region80: #{cnn_encoder_forward.15} parent=73 // loop_footer_branch
                  %497 = sbr.rel target = $region76
                $region81: #{cnn_encoder_forward.15} parent=73 // loop_exit
                  _
                %s521 = sshrl.u32 %s427, 2
                %s522 = sand.u32 %s427, 3
                %s523 = smul.u32 %s521, 4
                %s524 = smul.u32 4, %s523
                %s525 = scalar_lea.vmem %s420, %s524 [#allocation3]
                %s526 = smul.u32 4, %s523
                %s527 = scalar_lea.vmem %s432, %s526
                // While loop
                $region82: #{cnn_encoder_forward.15} parent=73 // loop_pre_header
                  _
                $region83: #{cnn_encoder_forward.15} parent=73 // loop_header
                  %s529 = sphi 0, %s531
                  %p530 = scmp.ge.s32.totalorder %s529, %s522
                  %s534 = sphi 0, %s541
                  %s535 = sphi %s525, %s544
                  %s536 = sphi %s527, %s545
                $region84: #{cnn_encoder_forward.15} parent=73 // loop_header_branch
                  %533 = sbr.rel (%p530) target = $region88
                $region85: #{cnn_encoder_forward.15} parent=73 // loop_body
                  %v537 = vld [vmem:[%s535] sm:%s495]
                  %538 = vst [vmem:[%s536] sm:%s495] %v537
                  %s539 = sadd.s32 1, %s534
                  %p540 = scmp.ge.s32.totalorder %s539, %s522
                  %s541 = scalar_select %p540, 0, %s539
                  %s542 = smul.u32 %s541, 4
                  %s543 = smul.u32 %s541, 4
                  %s544 = scalar_lea.vmem %s525, %s542 [#allocation3]
                  %s545 = scalar_lea.vmem %s527, %s543
                $region86: #{cnn_encoder_forward.15} parent=73 // loop_footer
                  %s531 = sadd.s32 %s529, 1
                $region87: #{cnn_encoder_forward.15} parent=73 // loop_footer_branch
                  %528 = sbr.rel target = $region83
                $region88: #{cnn_encoder_forward.15} parent=73 // loop_exit
                  _
              $region74: #{cnn_encoder_forward.15} parent=51 // pred_fallthru
                _
            $region52: #{cnn_encoder_forward.15} parent=47 // pred_fallthru
              _
            // Predicated region
            $region53: #{cnn_encoder_forward.15} parent=47 // pred_check
              _
            $region54: #{cnn_encoder_forward.15} parent=47 // pred_check_branch
              %439 = sbr.rel (0) target = $region56
            $region55: #{cnn_encoder_forward.15} parent=47 // pred_region
              %s441 = ssub.s32 16, 1
              %s442 = sshrl.u32 %s427, 2
              // While loop
              $region57: #{cnn_encoder_forward.15} parent=55 // loop_pre_header
                _
              $region58: #{cnn_encoder_forward.15} parent=55 // loop_header
                %s444 = sphi 0, %s446
                %p445 = scmp.ge.s32.totalorder %s444, %s442
                %s449 = sphi 0, %s462
                %s450 = sphi %s420, %s465
                %s451 = sphi %s432, %s466
              $region59: #{cnn_encoder_forward.15} parent=55 // loop_header_branch
                %448 = sbr.rel (%p445) target = $region63
              $region60: #{cnn_encoder_forward.15} parent=55 // loop_body
                %v452 = vld [vmem:[%s450] sm:%s441]
                %453 = vst [vmem:[%s451] sm:%s441] %v452
                %v454 = vld [vmem:[%s450 + $0x4] sm:%s441]
                %455 = vst [vmem:[%s451 + $0x4] sm:%s441] %v454
                %v456 = vld [vmem:[%s450 + $0x8] sm:%s441]
                %457 = vst [vmem:[%s451 + $0x8] sm:%s441] %v456
                %v458 = vld [vmem:[%s450 + $0xc] sm:%s441]
                %459 = vst [vmem:[%s451 + $0xc] sm:%s441] %v458
                %s460 = sadd.s32 1, %s449
                %p461 = scmp.ge.s32.totalorder %s460, %s442
                %s462 = scalar_select %p461, 0, %s460
                %s463 = smul.u32 %s462, 16
                %s464 = smul.u32 %s462, 16
                %s465 = scalar_lea.vmem %s420, %s463 [#allocation3]
                %s466 = scalar_lea.vmem %s432, %s464
              $region61: #{cnn_encoder_forward.15} parent=55 // loop_footer
                %s446 = sadd.s32 %s444, 1
              $region62: #{cnn_encoder_forward.15} parent=55 // loop_footer_branch
                %443 = sbr.rel target = $region58
              $region63: #{cnn_encoder_forward.15} parent=55 // loop_exit
                _
              %s467 = sshrl.u32 %s427, 2
              %s468 = sand.u32 %s427, 3
              %s469 = smul.u32 %s467, 4
              %s470 = smul.u32 4, %s469
              %s471 = scalar_lea.vmem %s420, %s470 [#allocation3]
              %s472 = smul.u32 4, %s469
              %s473 = scalar_lea.vmem %s432, %s472
              // While loop
              $region64: #{cnn_encoder_forward.15} parent=55 // loop_pre_header
                _
              $region65: #{cnn_encoder_forward.15} parent=55 // loop_header
                %s475 = sphi 0, %s477
                %p476 = scmp.ge.s32.totalorder %s475, %s468
                %s480 = sphi 0, %s487
                %s481 = sphi %s471, %s490
                %s482 = sphi %s473, %s491
              $region66: #{cnn_encoder_forward.15} parent=55 // loop_header_branch
                %479 = sbr.rel (%p476) target = $region70
              $region67: #{cnn_encoder_forward.15} parent=55 // loop_body
                %v483 = vld [vmem:[%s481] sm:%s441]
                %484 = vst [vmem:[%s482] sm:%s441] %v483
                %s485 = sadd.s32 1, %s480
                %p486 = scmp.ge.s32.totalorder %s485, %s468
                %s487 = scalar_select %p486, 0, %s485
                %s488 = smul.u32 %s487, 4
                %s489 = smul.u32 %s487, 4
                %s490 = scalar_lea.vmem %s471, %s488 [#allocation3]
                %s491 = scalar_lea.vmem %s473, %s489
              $region68: #{cnn_encoder_forward.15} parent=55 // loop_footer
                %s477 = sadd.s32 %s475, 1
              $region69: #{cnn_encoder_forward.15} parent=55 // loop_footer_branch
                %474 = sbr.rel target = $region65
              $region70: #{cnn_encoder_forward.15} parent=55 // loop_exit
                _
            $region56: #{cnn_encoder_forward.15} parent=47 // pred_fallthru
              _
          $region48: #{cnn_encoder_forward.15} parent=43 // pred_fallthru
            _
          %546 = vnop
        $region44: #{cnn_encoder_forward.15} parent=31 // pred_fallthru
          _
      $region32: #{cnn_encoder_forward.15} parent=5 // pred_fallthru
        _
      %p547 = scmp.le.s32.totalorder 2, %s9
      // Predicated region
      $region89: #{cnn_encoder_forward.15} parent=5 // pred_check
        %p548 = pneg %p547
      $region90: #{cnn_encoder_forward.15} parent=5 // pred_check_branch
        %550 = sbr.rel (%p548) target = $region92
      $region91: #{cnn_encoder_forward.15} parent=5 // pred_region
        %s551 = ssub.s32 %s9, 2
        // Predicated region
        $region93: #{cnn_encoder_forward.15} parent=91 // pred_check
          %p552 = pneg %p141
        $region94: #{cnn_encoder_forward.15} parent=91 // pred_check_branch
          %554 = sbr.rel (%p552) target = $region96
        $region95: #{cnn_encoder_forward.15} parent=91 // pred_region
          %s555 = sand.u32 %s126, 1
          %s556 = sand.u32 %s126, 1
          %s557 = smul.addr %s556, 16
          %s558 = scalar_lea.vmem [#allocation3], %s557
        $region96: #{cnn_encoder_forward.15} parent=91 // pred_fallthru
          _
      $region92: #{cnn_encoder_forward.15} parent=5 // pred_fallthru
        _
    $region6: #{cnn_encoder_forward.15} parent=1 // loop_footer
      %s13 = sadd.s32 1, %s9
    $region7: #{cnn_encoder_forward.15} parent=1 // loop_footer_branch
      %8 = sbr.rel target = $region3
    $region8: #{cnn_encoder_forward.15} parent=1 // loop_exit
      _

// kernel: cnn_encoder_forward.16
$region0: #{cnn_encoder_forward.16}
  #allocation0 [shape = 'u32[]', space=smem, size = 0x4, offset = 0x4, fixed_abs, tag = 'smem constant byte address 0x4 - core index']
  #allocation1 [shape = 'u32[72,128]{1,0:T(1,128)}', space=vmem, size = 0x9000, scoped, tag = 'internal scratch']
  %s0 = inlined_call_operand.vmem [shape: bf16[2,3,2,3,256], index: 0, kind: input, shape index: {}]
  %s1 = inlined_call_operand.vmem [shape: bf16[2,2,2,128], index: 1, kind: output, shape index: {}]
  %s2 = sld [smem:[#allocation0]]
  $region37: #{cnn_encoder_forward.16} parent=0
    _
  %s4 = ssub.s32 1, %s2
  %s5 = scalar_select 0, %s4, %s2
  loop: start=0, step=1, limit=4
  $region2: #{cnn_encoder_forward.16} parent=0 // loop_pre_header
    _
  $region3: #{cnn_encoder_forward.16} parent=0 // loop_header
    %s7 = sphi 0, %s11
    %p8 = scmp.ge.s32.totalorder %s7, 4
    %s17 = sphi 0, %s19
    %s20 = sphi 0, %s17
    %s21 = sphi 0, %s20
    %s37 = sphi 0, %s21
    %s43 = sphi 0, %s45
    %s46 = sphi 0, %s43
    %s47 = sphi 0, %s46
    %s63 = sphi 0, %s47
  $region4: #{cnn_encoder_forward.16} parent=0 // loop_header_branch
    %10 = sbr.rel (%p8) target = $region8
  $region5: #{cnn_encoder_forward.16} parent=0 // loop_body
    %s12 = ssub.s32 %s7, 1
    %s13 = ssub.s32 %s7, 2
    %s14 = sadd.s32 %s7, 1
    %s15 = ssub.s32 %s7, %s14
    %p16 = scmp.eq.s32.totalorder %s15, 0
    %s18 = sadd.s32 %s17, 1
    %s19 = scalar_select %p16, %s17, %s18
    %p22 = pneg %p16
    %p23 = scmp.eq.s32.totalorder %s7, 1
    %p24 = por %p22, %p23
    %p25 = scmp.ne.s32.totalorder %s17, %s20
    %p26 = scmp.eq.s32.totalorder %s7, 0
    %p27 = por %p25, %p26
    %p28 = scmp.ne.s32.totalorder %s17, %s20
    %p29 = scmp.eq.s32.totalorder %s12, 1
    %p30 = por %p28, %p29
    %p31 = scmp.ne.s32.totalorder %s20, %s21
    %p32 = scmp.eq.s32.totalorder %s12, 0
    %p33 = por %p31, %p32
    %p34 = scmp.ne.s32.totalorder %s20, %s21
    %p35 = scmp.eq.s32.totalorder %s13, 1
    %p36 = por %p34, %p35
    %p38 = scmp.ne.s32.totalorder %s21, %s37
    %p39 = scmp.eq.s32.totalorder %s13, 0
    %p40 = por %p38, %p39
    %s41 = ssub.s32 %s7, %s14
    %p42 = scmp.eq.s32.totalorder %s41, 0
    %s44 = sadd.s32 %s43, 1
    %s45 = scalar_select %p42, %s43, %s44
    %p48 = pneg %p42
    %p49 = scmp.eq.s32.totalorder %s7, 1
    %p50 = por %p48, %p49
    %p51 = scmp.ne.s32.totalorder %s43, %s46
    %p52 = scmp.eq.s32.totalorder %s7, 0
    %p53 = por %p51, %p52
    %p54 = scmp.ne.s32.totalorder %s43, %s46
    %p55 = scmp.eq.s32.totalorder %s12, 1
    %p56 = por %p54, %p55
    %p57 = scmp.ne.s32.totalorder %s46, %s47
    %p58 = scmp.eq.s32.totalorder %s12, 0
    %p59 = por %p57, %p58
    %p60 = scmp.ne.s32.totalorder %s46, %s47
    %p61 = scmp.eq.s32.totalorder %s13, 1
    %p62 = por %p60, %p61
    %p64 = scmp.ne.s32.totalorder %s47, %s63
    %p65 = scmp.eq.s32.totalorder %s13, 0
    %p66 = por %p64, %p65
    %p67 = scmp.le.s32.totalorder 1, %s7
    %p68 = scmp.lt.s32.totalorder %s7, 3
    %p69 = pnand %p67, %p68
    %p70 = pneg %p69
    // Predicated region
    $region9: #{cnn_encoder_forward.16} parent=5 // pred_check
      _
    $region10: #{cnn_encoder_forward.16} parent=5 // pred_check_branch
      %72 = sbr.rel (%p69) target = $region12
    $region11: #{cnn_encoder_forward.16} parent=5 // pred_region
      %s73 = ssub.s32 %s7, 1
    $region12: #{cnn_encoder_forward.16} parent=5 // pred_fallthru
      _
    %p74 = scmp.lt.s32.totalorder %s7, 2
    // Predicated region
    $region13: #{cnn_encoder_forward.16} parent=5 // pred_check
      %p75 = pneg %p74
    $region14: #{cnn_encoder_forward.16} parent=5 // pred_check_branch
      %77 = sbr.rel (%p75) target = $region16
    $region15: #{cnn_encoder_forward.16} parent=5 // pred_region
      // Predicated region
      $region17: #{cnn_encoder_forward.16} parent=15 // pred_check
        %p78 = pneg %p27
      $region18: #{cnn_encoder_forward.16} parent=15 // pred_check_branch
        %80 = sbr.rel (%p78) target = $region20
      $region19: #{cnn_encoder_forward.16} parent=15 // pred_region
        %p81 = scmp.lt.s32.totalorder %s7, 1
        %s82 = scalar_select %p81, %s7, 1
        %s83 = smul.addr %s82, 12
        %s84 = smul.addr %s83, 2
        %s85 = scalar_lea.vmem %s0, %s84
      $region20: #{cnn_encoder_forward.16} parent=15 // pred_fallthru
        _
    $region16: #{cnn_encoder_forward.16} parent=5 // pred_fallthru
      _
    %p86 = scmp.le.s32.totalorder 1, %s7
    %p87 = scmp.lt.s32.totalorder %s7, 3
    %p88 = pnand %p86, %p87
    %p89 = pneg %p88
    // Predicated region
    $region21: #{cnn_encoder_forward.16} parent=5 // pred_check
      _
    $region22: #{cnn_encoder_forward.16} parent=5 // pred_check_branch
      %91 = sbr.rel (%p88) target = $region24
    $region23: #{cnn_encoder_forward.16} parent=5 // pred_region
      %s92 = ssub.s32 %s7, 1
      %p93 = scmp.lt.s32.totalorder %s12, 1
      %s94 = scalar_select %p93, %s12, 1
      %s95 = smul.addr %s94, 12
      %s96 = smul.addr %s95, 2
      %s97 = scalar_lea.vmem %s0, %s96
      %p98 = pneg %p33
      %p99 = pneg %p30
      %p100 = pneg %p59
      %p101 = pneg %p56
      %p102 = scmp.lt.s32.totalorder %s12, 1
      %s103 = scalar_select %p102, %s12, 1
      %s104 = smul.addr %s103, 2
      %s105 = scalar_lea.vmem %s1, %s104
      %p106 = scmp.lt.s32.totalorder %s12, 1
      %s107 = scalar_select %p106, %s12, 1
      %s108 = smul.addr %s107, 12
      %s109 = smul.addr %s108, 2
      %s110 = scalar_lea.vmem %s0, %s109
      %p111 = scmp.lt.s32.totalorder %s12, 1
      %s112 = scalar_select %p111, %s12, 1
      %s113 = smul.addr %s112, 2
      %s114 = scalar_lea.vmem %s1, %s113
      %v115 = vld [vmem:[%s110] sm:$0xf]
      %v116 = vld [vmem:[%s110 + $0x4] sm:$0xf]
      %v117 = vld [vmem:[%s110 + $0x8] sm:$0xf]
      %v118 = vld [vmem:[%s110 + $0xc] sm:$0xf]
      %v119 = vld [vmem:[%s110 + $0x10] sm:$0xf]
      %v120 = vunpack.c.l.bf16 %v115
      %v121 = vunpack.c.l.bf16 %v116
      %v122 = vunpack.c.l.bf16 %v117
      %v123 = vunpack.c.l.bf16 %v118
      %v124 = vunpack.c.l.bf16 %v119
      %v127 = vrot.slane %v120, 4
      %v128 = vrot.slane %v122, 4
      %v131 = vmax.f32 %v120, %v127
      %v132 = vmax.f32 %v122, %v128
      %v133 = vrot.slane %v120, 5
      %v134 = vrot.slane %v133, 4
      %v135 = vrot.slane %v122, 5
      %v136 = vrot.slane %v135, 4
      %v139 = vmax.f32 %v131, %v134
      %v140 = vmax.f32 %v132, %v136
      %v141 = vmax.f32 %v139, %v121
      %v142 = vmax.f32 %v140, %v123
      %v145 = vrot.slane %v121, 4
      %v146 = vrot.slane %v123, 4
      %v149 = vmax.f32 %v141, %v145
      %v150 = vmax.f32 %v142, %v146
      %v151 = vrot.slane %v121, 5
      %v152 = vrot.slane %v151, 4
      %v153 = vrot.slane %v123, 5
      %v154 = vrot.slane %v153, 4
      %v157 = vmax.f32 %v149, %v152
      %v158 = vmax.f32 %v150, %v154
      %v159 = vmax.f32 %v157, %v122
      %v160 = vmax.f32 %v158, %v124
      %v162 = vrot.slane %v124, 4
      %v164 = vmax.f32 %v159, %v128
      %v165 = vmax.f32 %v160, %v162
      %v166 = vrot.slane %v124, 5
      %v167 = vrot.slane %v166, 4
      %v169 = vmax.f32 %v164, %v136
      %v170 = vmax.f32 %v165, %v167
      %v171 = vpack.c.bf16 %v169, %v169
      %v172 = vpack.c.bf16 %v170, %v170
      %173 = vst [vmem:[%s114] sm:$0x1] %v171
      %174 = vst [vmem:[%s114 + $0x1] sm:$0x1] %v172
      %p175 = scmp.lt.s32.totalorder %s12, 1
      %s176 = scalar_select %p175, %s12, 1
      %s177 = smul.addr %s176, 2
      %s178 = scalar_lea.vmem %s1, %s177
      // Predicated region
      $region25: #{cnn_encoder_forward.16} parent=23 // pred_check
        %p179 = pneg %p56
      $region26: #{cnn_encoder_forward.16} parent=23 // pred_check_branch
        %181 = sbr.rel (%p179) target = $region28
      $region27: #{cnn_encoder_forward.16} parent=23 // pred_region
        _
      $region28: #{cnn_encoder_forward.16} parent=23 // pred_fallthru
        _
    $region24: #{cnn_encoder_forward.16} parent=5 // pred_fallthru
      _
    %p182 = scmp.le.s32.totalorder 2, %s7
    // Predicated region
    $region29: #{cnn_encoder_forward.16} parent=5 // pred_check
      %p183 = pneg %p182
    $region30: #{cnn_encoder_forward.16} parent=5 // pred_check_branch
      %185 = sbr.rel (%p183) target = $region32
    $region31: #{cnn_encoder_forward.16} parent=5 // pred_region
      %s186 = ssub.s32 %s7, 2
      // Predicated region
      $region33: #{cnn_encoder_forward.16} parent=31 // pred_check
        %p187 = pneg %p62
      $region34: #{cnn_encoder_forward.16} parent=31 // pred_check_branch
        %189 = sbr.rel (%p187) target = $region36
      $region35: #{cnn_encoder_forward.16} parent=31 // pred_region
        %p190 = scmp.lt.s32.totalorder %s13, 1
        %s191 = scalar_select %p190, %s13, 1
        %s192 = smul.addr %s191, 2
        %s193 = scalar_lea.vmem %s1, %s192
      $region36: #{cnn_encoder_forward.16} parent=31 // pred_fallthru
        _
    $region32: #{cnn_encoder_forward.16} parent=5 // pred_fallthru
      _
  $region6: #{cnn_encoder_forward.16} parent=0 // loop_footer
    %s11 = sadd.s32 1, %s7
  $region7: #{cnn_encoder_forward.16} parent=0 // loop_footer_branch
    %6 = sbr.rel target = $region3
  $region8: #{cnn_encoder_forward.16} parent=0 // loop_exit
    _

// kernel: cnn_encoder_forward.17
$region0: #{cnn_encoder_forward.17}
  #allocation0 [shape = 'u32[]', space=smem, size = 0x4, offset = 0x4, fixed_abs, tag = 'smem constant byte address 0x4 - core index']
  #allocation1 [shape = 'u32[72,128]{1,0:T(1,128)}', space=vmem, size = 0x9000, scoped, tag = 'internal scratch']
  #allocation2 [shape = 'f32[16,128]{1,0:T(8,128)}', space=vmem, size = 0x2000, scoped, tag = 'scratch operand']
  %s0 = inlined_call_operand.vmem [shape: bf16[8,256], index: 0, kind: input, shape index: {}]
  %s1 = inlined_call_operand.vmem [shape: bf16[256,128], index: 1, kind: input, shape index: {}]
  %s2 = inlined_call_operand.vmem [shape: f32[1,128], index: 2, kind: input, shape index: {}]
  %s3 = inlined_call_operand.vmem [shape: bf16[128,128], index: 3, kind: input, shape index: {}]
  %s4 = inlined_call_operand.vmem [shape: bf16[8,128], index: 4, kind: output, shape index: {0}]
  %s5 = inlined_call_operand.vmem [shape: f32[8,128], index: 5, kind: output, shape index: {1}]
  %6 = xla_tuple %s4, %s5
  %s7 = sld [smem:[#allocation0]]
  $region106: #{cnn_encoder_forward.17} parent=0
    _
  %s9 = ssub.s32 1, %s7
  %s10 = scalar_select 0, %s9, %s7
  $region1: #{cnn_encoder_forward.17} parent=0
    #allocation3 [shape = 'u8[4096]{0}', space=vmem, size = 0x1000, scoped, tag = 'output window, operand 0, single buffered']
    #allocation4 [shape = 'u8[8192]{0}', space=vmem, size = 0x2000, scoped, tag = 'output window, operand 1, single buffered']
    // Predicated region
    $region2: #{cnn_encoder_forward.17} parent=1 // pred_check
      _
    $region3: #{cnn_encoder_forward.17} parent=1 // pred_check_branch
      %12 = sbr.rel (0) target = $region5
    $region4: #{cnn_encoder_forward.17} parent=1 // pred_region
      _
    $region5: #{cnn_encoder_forward.17} parent=1 // pred_fallthru
      _
    // Predicated region
    $region6: #{cnn_encoder_forward.17} parent=1 // pred_check
      _
    $region7: #{cnn_encoder_forward.17} parent=1 // pred_check_branch
      %14 = sbr.rel (0) target = $region9
    $region8: #{cnn_encoder_forward.17} parent=1 // pred_region
      _
    $region9: #{cnn_encoder_forward.17} parent=1 // pred_fallthru
      _
    // Predicated region
    $region10: #{cnn_encoder_forward.17} parent=1 // pred_check
      _
    $region11: #{cnn_encoder_forward.17} parent=1 // pred_check_branch
      %16 = sbr.rel (0) target = $region13
    $region12: #{cnn_encoder_forward.17} parent=1 // pred_region
      _
    $region13: #{cnn_encoder_forward.17} parent=1 // pred_fallthru
      _
    // Predicated region
    $region14: #{cnn_encoder_forward.17} parent=1 // pred_check
      _
    $region15: #{cnn_encoder_forward.17} parent=1 // pred_check_branch
      %18 = sbr.rel (0) target = $region17
    $region16: #{cnn_encoder_forward.17} parent=1 // pred_region
      _
    $region17: #{cnn_encoder_forward.17} parent=1 // pred_fallthru
      _
    %p19 = scmp.eq.s32.totalorder 0, 0
    // Predicated region
    $region18: #{cnn_encoder_forward.17} parent=1 // pred_check
      %p20 = pneg %p19
    $region19: #{cnn_encoder_forward.17} parent=1 // pred_check_branch
      %22 = sbr.rel (%p20) target = $region21
    $region20: #{cnn_encoder_forward.17} parent=1 // pred_region
      %23 = vst [vmem:[#allocation2] sm:$0xff] 0.0
      %24 = vst [vmem:[#allocation2 + $0x8] sm:$0xff] 0.0
    $region21: #{cnn_encoder_forward.17} parent=1 // pred_fallthru
      _
    %v25 = vld [vmem:[#allocation2] sm:$0xff]
    %v26 = vld [vmem:[#allocation2 + $0x8] sm:$0xff]
    %v27 = vld [vmem:[%s0] sm:$0xff]
    %v28 = vld [vmem:[%s0 + $0x8] sm:$0xff]
    %v29 = vld [vmem:[%s1] sm:$0xf]
    %v30 = vld [vmem:[%s1 + $0x4] sm:$0xf]
    %v31 = vld [vmem:[%s1 + $0x8] sm:$0xf]
    %v32 = vld [vmem:[%s1 + $0xc] sm:$0xf]
    %v33 = vld [vmem:[%s1 + $0x10] sm:$0xf]
    %v34 = vld [vmem:[%s1 + $0x14] sm:$0xf]
    %v35 = vld [vmem:[%s1 + $0x18] sm:$0xf]
    %v36 = vld [vmem:[%s1 + $0x1c] sm:$0xf]
    %v37 = vld [vmem:[%s1 + $0x20] sm:$0xf]
    %v38 = vld [vmem:[%s1 + $0x24] sm:$0xf]
    %v39 = vld [vmem:[%s1 + $0x28] sm:$0xf]
    %v40 = vld [vmem:[%s1 + $0x2c] sm:$0xf]
    %v41 = vld [vmem:[%s1 + $0x30] sm:$0xf]
    %v42 = vld [vmem:[%s1 + $0x34] sm:$0xf]
    %v43 = vld [vmem:[%s1 + $0x38] sm:$0xf]
    %v44 = vld [vmem:[%s1 + $0x3c] sm:$0xf]
    %v45 = vld [vmem:[%s1 + $0x40] sm:$0xf]
    %v46 = vld [vmem:[%s1 + $0x44] sm:$0xf]
    %v47 = vld [vmem:[%s1 + $0x48] sm:$0xf]
    %v48 = vld [vmem:[%s1 + $0x4c] sm:$0xf]
    %v49 = vld [vmem:[%s1 + $0x50] sm:$0xf]
    %v50 = vld [vmem:[%s1 + $0x54] sm:$0xf]
    %v51 = vld [vmem:[%s1 + $0x58] sm:$0xf]
    %v52 = vld [vmem:[%s1 + $0x5c] sm:$0xf]
    %v53 = vld [vmem:[%s1 + $0x60] sm:$0xf]
    %v54 = vld [vmem:[%s1 + $0x64] sm:$0xf]
    %v55 = vld [vmem:[%s1 + $0x68] sm:$0xf]
    %v56 = vld [vmem:[%s1 + $0x6c] sm:$0xf]
    %v57 = vld [vmem:[%s1 + $0x70] sm:$0xf]
    %v58 = vld [vmem:[%s1 + $0x74] sm:$0xf]
    %v59 = vld [vmem:[%s1 + $0x78] sm:$0xf]
    %v60 = vld [vmem:[%s1 + $0x7c] sm:$0xf]
    %v63 = vunpack.c.l.b16 %v27
    %v64 = vunpack.c.h.b16 %v27
    %v65 = vunpack.c.l.b16 %v28
    %v66 = vunpack.c.h.b16 %v28
    %v67 = vpack.c.b16 %v65, %v63
    %v68 = vpack.c.b16 %v66, %v64
    %v103 = vunpack.c.l.b16 %v29
    %v104 = vunpack.c.l.b16 %v30
    %v105 = vunpack.c.l.b16 %v31
    %v106 = vunpack.c.l.b16 %v32
    %v107 = vunpack.c.l.b16 %v33
    %v108 = vunpack.c.l.b16 %v34
    %v109 = vunpack.c.l.b16 %v35
    %v110 = vunpack.c.l.b16 %v36
    %v111 = vunpack.c.l.b16 %v37
    %v112 = vunpack.c.l.b16 %v38
    %v113 = vunpack.c.l.b16 %v39
    %v114 = vunpack.c.l.b16 %v40
    %v115 = vunpack.c.l.b16 %v41
    %v116 = vunpack.c.l.b16 %v42
    %v117 = vunpack.c.l.b16 %v43
    %v118 = vunpack.c.l.b16 %v44
    %v119 = vunpack.c.l.b16 %v45
    %v120 = vunpack.c.l.b16 %v46
    %v121 = vunpack.c.l.b16 %v47
    %v122 = vunpack.c.l.b16 %v48
    %v123 = vunpack.c.l.b16 %v49
    %v124 = vunpack.c.l.b16 %v50
    %v125 = vunpack.c.l.b16 %v51
    %v126 = vunpack.c.l.b16 %v52
    %v127 = vunpack.c.l.b16 %v53
    %v128 = vunpack.c.l.b16 %v54
    %v129 = vunpack.c.l.b16 %v55
    %v130 = vunpack.c.l.b16 %v56
    %v131 = vunpack.c.l.b16 %v57
    %v132 = vunpack.c.l.b16 %v58
    %v133 = vunpack.c.l.b16 %v59
    %v134 = vunpack.c.l.b16 %v60
    %v135 = vpack.c.b16 %v104, %v103
    %v136 = vpack.c.b16 %v106, %v105
    %v137 = vpack.c.b16 %v108, %v107
    %v138 = vpack.c.b16 %v110, %v109
    %v139 = vpack.c.b16 %v112, %v111
    %v140 = vpack.c.b16 %v114, %v113
    %v141 = vpack.c.b16 %v116, %v115
    %v142 = vpack.c.b16 %v118, %v117
    %v143 = vpack.c.b16 %v120, %v119
    %v144 = vpack.c.b16 %v122, %v121
    %v145 = vpack.c.b16 %v124, %v123
    %v146 = vpack.c.b16 %v126, %v125
    %v147 = vpack.c.b16 %v128, %v127
    %v148 = vpack.c.b16 %v130, %v129
    %v149 = vpack.c.b16 %v132, %v131
    %v150 = vpack.c.b16 %v134, %v133
    %167 = vmatpush.bf16.msra.mxu0 %v142
    %168 = vmatpush.bf16.msra.mxu0 %v141
    %169 = vmatpush.bf16.msra.mxu0 %v140
    %170 = vmatpush.bf16.msra.mxu0 %v139
    %171 = vmatpush.bf16.msra.mxu0 %v138
    %172 = vmatpush.bf16.msra.mxu0 %v137
    %173 = vmatpush.bf16.msra.mxu0 %v136
    %174 = vmatpush.bf16.msra.mxu0 %v135
    %175 = vmatmul.bf16.gmra.mxu0 %v67
    %v176 = vpop.f32.mrf.mxu0
    %v177 = vadd.f32 0.0, %v176
    %v178 = vpop.f32.mrf.mxu0
    %v179 = vadd.f32 0.0, %v178
    %180 = vdwg.mxu0
    %181 = vmatpush.bf16.msra.mxu0 %v150
    %182 = vmatpush.bf16.msra.mxu0 %v149
    %183 = vmatpush.bf16.msra.mxu0 %v148
    %184 = vmatpush.bf16.msra.mxu0 %v147
    %185 = vmatpush.bf16.msra.mxu0 %v146
    %186 = vmatpush.bf16.msra.mxu0 %v145
    %187 = vmatpush.bf16.msra.mxu0 %v144
    %188 = vmatpush.bf16.msra.mxu0 %v143
    %189 = vmatmul.bf16.gmra.mxu0 %v68
    %v190 = vpop.f32.mrf.mxu0
    %v191 = vadd.f32 %v177, %v190
    %v192 = vpop.f32.mrf.mxu0
    %v193 = vadd.f32 %v179, %v192
    %194 = vdwg.mxu0
    %v195 = vadd.f32 %v25, %v191
    %v196 = vadd.f32 %v26, %v193
    %197 = vst [vmem:[#allocation2] sm:$0xff] %v195
    %198 = vst [vmem:[#allocation2 + $0x8] sm:$0xff] %v196
    // Predicated region
    $region22: #{cnn_encoder_forward.17} parent=1 // pred_check
      %p199 = pneg %p19
    $region23: #{cnn_encoder_forward.17} parent=1 // pred_check_branch
      %201 = sbr.rel (%p199) target = $region25
    $region24: #{cnn_encoder_forward.17} parent=1 // pred_region
      %v202 = vld [vmem:[#allocation2] sm:$0xff]
      %v203 = vld [vmem:[#allocation2 + $0x8] sm:$0xff]
      %v204 = vld [vmem:[%s2] sm:$0x1]
      %v206 = vperm.slane %v204, 0
      %v208 = vadd.f32 %v202, %v206
      %v209 = vadd.f32 %v203, %v206
      %v210 = vmax.f32 %v208, 0.0
      %v211 = vmax.f32 %v209, 0.0
      %v212 = vpack.c.bf16 %v210, %v210
      %v213 = vpack.c.bf16 %v211, %v211
      %214 = vst [vmem:[#allocation3] sm:$0xf] %v212
      %215 = vst [vmem:[#allocation3 + $0x4] sm:$0xf] %v213
      %v216 = vld [vmem:[%s3] sm:$0xf]
      %v217 = vld [vmem:[%s3 + $0x4] sm:$0xf]
      %v218 = vld [vmem:[%s3 + $0x8] sm:$0xf]
      %v219 = vld [vmem:[%s3 + $0xc] sm:$0xf]
      %v220 = vld [vmem:[%s3 + $0x10] sm:$0xf]
      %v221 = vld [vmem:[%s3 + $0x14] sm:$0xf]
      %v222 = vld [vmem:[%s3 + $0x18] sm:$0xf]
      %v223 = vld [vmem:[%s3 + $0x1c] sm:$0xf]
      %v224 = vld [vmem:[%s3 + $0x20] sm:$0xf]
      %v225 = vld [vmem:[%s3 + $0x24] sm:$0xf]
      %v226 = vld [vmem:[%s3 + $0x28] sm:$0xf]
      %v227 = vld [vmem:[%s3 + $0x2c] sm:$0xf]
      %v228 = vld [vmem:[%s3 + $0x30] sm:$0xf]
      %v229 = vld [vmem:[%s3 + $0x34] sm:$0xf]
      %v230 = vld [vmem:[%s3 + $0x38] sm:$0xf]
      %v231 = vld [vmem:[%s3 + $0x3c] sm:$0xf]
      %v234 = vunpack.c.l.b16 %v212
      %v235 = vunpack.c.l.b16 %v213
      %v236 = vpack.c.b16 %v235, %v234
      %v254 = vunpack.c.l.b16 %v216
      %v255 = vunpack.c.l.b16 %v217
      %v256 = vunpack.c.l.b16 %v218
      %v257 = vunpack.c.l.b16 %v219
      %v258 = vunpack.c.l.b16 %v220
      %v259 = vunpack.c.l.b16 %v221
      %v260 = vunpack.c.l.b16 %v222
      %v261 = vunpack.c.l.b16 %v223
      %v262 = vunpack.c.l.b16 %v224
      %v263 = vunpack.c.l.b16 %v225
      %v264 = vunpack.c.l.b16 %v226
      %v265 = vunpack.c.l.b16 %v227
      %v266 = vunpack.c.l.b16 %v228
      %v267 = vunpack.c.l.b16 %v229
      %v268 = vunpack.c.l.b16 %v230
      %v269 = vunpack.c.l.b16 %v231
      %v270 = vpack.c.b16 %v255, %v254
      %v271 = vpack.c.b16 %v257, %v256
      %v272 = vpack.c.b16 %v259, %v258
      %v273 = vpack.c.b16 %v261, %v260
      %v274 = vpack.c.b16 %v263, %v262
      %v275 = vpack.c.b16 %v265, %v264
      %v276 = vpack.c.b16 %v267, %v266
      %v277 = vpack.c.b16 %v269, %v268
      %286 = vmatpush.bf16.msra.mxu0 %v277
      %287 = vmatpush.bf16.msra.mxu0 %v276
      %288 = vmatpush.bf16.msra.mxu0 %v275
      %289 = vmatpush.bf16.msra.mxu0 %v274
      %290 = vmatpush.bf16.msra.mxu0 %v273
      %291 = vmatpush.bf16.msra.mxu0 %v272
      %292 = vmatpush.bf16.msra.mxu0 %v271
      %293 = vmatpush.bf16.msra.mxu0 %v270
      %294 = vmatmul.bf16.gmra.mxu0 %v236
      %v295 = vpop.f32.mrf.mxu0
      %v296 = vadd.f32 0.0, %v295
      %v297 = vpop.f32.mrf.mxu0
      %v298 = vadd.f32 0.0, %v297
      %299 = vdwg.mxu0
      %300 = vst [vmem:[#allocation4] sm:$0xff] %v296
      %301 = vst [vmem:[#allocation4 + $0x8] sm:$0xff] %v298
    $region25: #{cnn_encoder_forward.17} parent=1 // pred_fallthru
      _
    // Predicated region
    $region26: #{cnn_encoder_forward.17} parent=1 // pred_check
      _
    $region27: #{cnn_encoder_forward.17} parent=1 // pred_check_branch
      %303 = sbr.rel (0) target = $region29
    $region28: #{cnn_encoder_forward.17} parent=1 // pred_region
      // Predicated region
      $region30: #{cnn_encoder_forward.17} parent=28 // pred_check
        _
      $region31: #{cnn_encoder_forward.17} parent=28 // pred_check_branch
        %305 = sbr.rel (0) target = $region33
      $region32: #{cnn_encoder_forward.17} parent=28 // pred_region
        // Predicated region
        $region34: #{cnn_encoder_forward.17} parent=32 // pred_check
          _
        $region35: #{cnn_encoder_forward.17} parent=32 // pred_check_branch
          %307 = sbr.rel target = $region37
        $region36: #{cnn_encoder_forward.17} parent=32 // pred_region
          // Predicated region
          $region49: #{cnn_encoder_forward.17} parent=36 // pred_check
            _
          $region50: #{cnn_encoder_forward.17} parent=36 // pred_check_branch
            %323 = sbr.rel (0) target = $region52
          $region51: #{cnn_encoder_forward.17} parent=36 // pred_region
            %s325 = ssub.s32 16, 1
            loop: start=0, step=1, limit=1
            $region53: #{cnn_encoder_forward.17} parent=51 // loop_pre_header
              _
            $region54: #{cnn_encoder_forward.17} parent=51 // loop_header
              %s327 = sphi 0, %s331
              %p328 = scmp.ge.s32.totalorder %s327, 1
              %s332 = sphi [#allocation3], [#allocation3]
              %s333 = sphi %s4, %s4
            $region55: #{cnn_encoder_forward.17} parent=51 // loop_header_branch
              %330 = sbr.rel (%p328) target = $region59
            $region56: #{cnn_encoder_forward.17} parent=51 // loop_body
              %v334 = vld [vmem:[%s332] sm:%s325]
              %335 = vst [vmem:[%s333] sm:%s325] %v334
            $region57: #{cnn_encoder_forward.17} parent=51 // loop_footer
              %s331 = sadd.s32 1, %s327
            $region58: #{cnn_encoder_forward.17} parent=51 // loop_footer_branch
              %326 = sbr.rel target = $region54
            $region59: #{cnn_encoder_forward.17} parent=51 // loop_exit
              _
          $region52: #{cnn_encoder_forward.17} parent=36 // pred_fallthru
            _
        $region37: #{cnn_encoder_forward.17} parent=32 // pred_fallthru
          _
        // Predicated region
        $region38: #{cnn_encoder_forward.17} parent=32 // pred_check
          _
        $region39: #{cnn_encoder_forward.17} parent=32 // pred_check_branch
          %309 = sbr.rel (0) target = $region41
        $region40: #{cnn_encoder_forward.17} parent=32 // pred_region
          %s311 = ssub.s32 16, 1
          loop: start=0, step=1, limit=1
          $region42: #{cnn_encoder_forward.17} parent=40 // loop_pre_header
            _
          $region43: #{cnn_encoder_forward.17} parent=40 // loop_header
            %s313 = sphi 0, %s317
            %p314 = scmp.ge.s32.totalorder %s313, 1
            %s318 = sphi [#allocation3], [#allocation3]
            %s319 = sphi %s4, %s4
          $region44: #{cnn_encoder_forward.17} parent=40 // loop_header_branch
            %316 = sbr.rel (%p314) target = $region48
          $region45: #{cnn_encoder_forward.17} parent=40 // loop_body
            %v320 = vld [vmem:[%s318] sm:%s311]
            %321 = vst [vmem:[%s319] sm:%s311] %v320
          $region46: #{cnn_encoder_forward.17} parent=40 // loop_footer
            %s317 = sadd.s32 1, %s313
          $region47: #{cnn_encoder_forward.17} parent=40 // loop_footer_branch
            %312 = sbr.rel target = $region43
          $region48: #{cnn_encoder_forward.17} parent=40 // loop_exit
            _
        $region41: #{cnn_encoder_forward.17} parent=32 // pred_fallthru
          _
      $region33: #{cnn_encoder_forward.17} parent=28 // pred_fallthru
        _
      %336 = vnop
    $region29: #{cnn_encoder_forward.17} parent=1 // pred_fallthru
      _
    // Predicated region
    $region60: #{cnn_encoder_forward.17} parent=1 // pred_check
      _
    $region61: #{cnn_encoder_forward.17} parent=1 // pred_check_branch
      %338 = sbr.rel (0) target = $region63
    $region62: #{cnn_encoder_forward.17} parent=1 // pred_region
      // Predicated region
      $region64: #{cnn_encoder_forward.17} parent=62 // pred_check
        _
      $region65: #{cnn_encoder_forward.17} parent=62 // pred_check_branch
        %340 = sbr.rel (0) target = $region67
      $region66: #{cnn_encoder_forward.17} parent=62 // pred_region
        // Predicated region
        $region68: #{cnn_encoder_forward.17} parent=66 // pred_check
          _
        $region69: #{cnn_encoder_forward.17} parent=66 // pred_check_branch
          %342 = sbr.rel (0) target = $region71
        $region70: #{cnn_encoder_forward.17} parent=66 // pred_region
          // Predicated region
          $region83: #{cnn_encoder_forward.17} parent=70 // pred_check
            _
          $region84: #{cnn_encoder_forward.17} parent=70 // pred_check_branch
            %358 = sbr.rel (0) target = $region86
          $region85: #{cnn_encoder_forward.17} parent=70 // pred_region
            loop: start=0, step=1, limit=1
            $region87: #{cnn_encoder_forward.17} parent=85 // loop_pre_header
              _
            $region88: #{cnn_encoder_forward.17} parent=85 // loop_header
              %s360 = sphi 0, %s364
              %p361 = scmp.ge.s32.totalorder %s360, 1
              %s365 = sphi [#allocation4], [#allocation4]
              %s366 = sphi %s5, %s5
            $region89: #{cnn_encoder_forward.17} parent=85 // loop_header_branch
              %363 = sbr.rel (%p361) target = $region93
            $region90: #{cnn_encoder_forward.17} parent=85 // loop_body
              %v367 = vld [vmem:[%s365] sm:$0xff]
              %368 = vst [vmem:[%s366] sm:$0xff] %v367
            $region91: #{cnn_encoder_forward.17} parent=85 // loop_footer
              %s364 = sadd.s32 1, %s360
            $region92: #{cnn_encoder_forward.17} parent=85 // loop_footer_branch
              %359 = sbr.rel target = $region88
            $region93: #{cnn_encoder_forward.17} parent=85 // loop_exit
              _
          $region86: #{cnn_encoder_forward.17} parent=70 // pred_fallthru
            _
          // Predicated region
          $region94: #{cnn_encoder_forward.17} parent=70 // pred_check
            _
          $region95: #{cnn_encoder_forward.17} parent=70 // pred_check_branch
            %370 = sbr.rel target = $region97
          $region96: #{cnn_encoder_forward.17} parent=70 // pred_region
            _
          $region97: #{cnn_encoder_forward.17} parent=70 // pred_fallthru
            _
        $region71: #{cnn_encoder_forward.17} parent=66 // pred_fallthru
          _
        // Predicated region
        $region72: #{cnn_encoder_forward.17} parent=66 // pred_check
          _
        $region73: #{cnn_encoder_forward.17} parent=66 // pred_check_branch
          %344 = sbr.rel target = $region75
        $region74: #{cnn_encoder_forward.17} parent=66 // pred_region
          %s346 = ssub.s32 256, 1
          loop: start=0, step=1, limit=1
          $region76: #{cnn_encoder_forward.17} parent=74 // loop_pre_header
            _
          $region77: #{cnn_encoder_forward.17} parent=74 // loop_header
            %s348 = sphi 0, %s352
            %p349 = scmp.ge.s32.totalorder %s348, 1
            %s353 = sphi [#allocation4], [#allocation4]
            %s354 = sphi %s5, %s5
          $region78: #{cnn_encoder_forward.17} parent=74 // loop_header_branch
            %351 = sbr.rel (%p349) target = $region82
          $region79: #{cnn_encoder_forward.17} parent=74 // loop_body
            %v355 = vld [vmem:[%s353] sm:%s346]
            %356 = vst [vmem:[%s354] sm:%s346] %v355
          $region80: #{cnn_encoder_forward.17} parent=74 // loop_footer
            %s352 = sadd.s32 1, %s348
          $region81: #{cnn_encoder_forward.17} parent=74 // loop_footer_branch
            %347 = sbr.rel target = $region77
          $region82: #{cnn_encoder_forward.17} parent=74 // loop_exit
            _
        $region75: #{cnn_encoder_forward.17} parent=66 // pred_fallthru
          _
      $region67: #{cnn_encoder_forward.17} parent=62 // pred_fallthru
        _
      %371 = vnop
    $region63: #{cnn_encoder_forward.17} parent=1 // pred_fallthru
      _
    // Predicated region
    $region98: #{cnn_encoder_forward.17} parent=1 // pred_check
      _
    $region99: #{cnn_encoder_forward.17} parent=1 // pred_check_branch
      %373 = sbr.rel (0) target = $region101
    $region100: #{cnn_encoder_forward.17} parent=1 // pred_region
      _
    $region101: #{cnn_encoder_forward.17} parent=1 // pred_fallthru
      _
    // Predicated region
    $region102: #{cnn_encoder_forward.17} parent=1 // pred_check
      _
    $region103: #{cnn_encoder_forward.17} parent=1 // pred_check_branch
      %375 = sbr.rel (0) target = $region105
    $region104: #{cnn_encoder_forward.17} parent=1 // pred_region
      _
    $region105: #{cnn_encoder_forward.17} parent=1 // pred_fallthru
      _

// kernel: cnn_encoder_forward.19
$region0: #{cnn_encoder_forward.19}
  #allocation0 [shape = 'u32[]', space=smem, size = 0x4, offset = 0x4, fixed_abs, tag = 'smem constant byte address 0x4 - core index']
  #allocation1 [shape = 'u32[72,128]{1,0:T(1,128)}', space=vmem, size = 0x9000, scoped, tag = 'internal scratch']
  %s0 = inlined_call_operand.vmem [shape: bf16[2,4,256], index: 0, kind: input, shape index: {}]
  %s1 = inlined_call_operand.vmem [shape: bf16[256,128], index: 1, kind: input, shape index: {}]
  %s2 = inlined_call_operand.vmem [shape: f32[1,128], index: 2, kind: input, shape index: {}]
  %s3 = inlined_call_operand.hbm [shape: f32[2,128], index: 3, kind: output, shape index: {}]
  %s4 = sld [smem:[#allocation0]]
  $region22: #{cnn_encoder_forward.19} parent=0
    _
  %s6 = ssub.s32 1, %s4
  %s7 = scalar_select 0, %s6, %s4
  $region1: #{cnn_encoder_forward.19} parent=0
    #allocation2 [shape = 'u8[1024]{0}', space=vmem, size = 0x400, scoped, tag = 'output window, operand 0, single buffered']
    #allocation3 [shape = 's32[1]{0}', space=sflag, size = 0x4, scoped, tag = 'scoped memory for cnn_encoder_forward.19']
    %8 = vsyncpa [#allocation3], 0
    // Predicated region
    $region2: #{cnn_encoder_forward.19} parent=1 // pred_check
      _
    $region3: #{cnn_encoder_forward.19} parent=1 // pred_check_branch
      %10 = sbr.rel (0) target = $region5
    $region4: #{cnn_encoder_forward.19} parent=1 // pred_region
      _
    $region5: #{cnn_encoder_forward.19} parent=1 // pred_fallthru
      _
    // Predicated region
    $region6: #{cnn_encoder_forward.19} parent=1 // pred_check
      _
    $region7: #{cnn_encoder_forward.19} parent=1 // pred_check_branch
      %12 = sbr.rel (0) target = $region9
    $region8: #{cnn_encoder_forward.19} parent=1 // pred_region
      _
    $region9: #{cnn_encoder_forward.19} parent=1 // pred_fallthru
      _
    // Predicated region
    $region10: #{cnn_encoder_forward.19} parent=1 // pred_check
      _
    $region11: #{cnn_encoder_forward.19} parent=1 // pred_check_branch
      %14 = sbr.rel (0) target = $region13
    $region12: #{cnn_encoder_forward.19} parent=1 // pred_region
      _
    $region13: #{cnn_encoder_forward.19} parent=1 // pred_fallthru
      _
    %v15 = vld [vmem:[%s0] sm:$0xf]
    %v16 = vld [vmem:[%s0 + $0x4] sm:$0xf]
    %v17 = vunpack.c.l.bf16 %v15
    %v18 = vunpack.c.l.bf16 %v16
    %21 = vst [vmem:[#allocation1] ss:$2 sm:$0xff] %v17
    %v22 = vld.sshfl [vmem:[#allocation1] sm:$0xff pattern:$0x75316420]
    %v23 = vld.sshfl [vmem:[#allocation1 + $0x8] sm:$0xff pattern:$0x75316420]
    %s24 = scalar_lea.vmem [#allocation1], 16
    %25 = vst [vmem:[%s24] ss:$2 sm:$0xff] %v18
    %v26 = vld.sshfl [vmem:[#allocation1 + $0x10] sm:$0xff pattern:$0x75316420]
    %v27 = vld.sshfl [vmem:[#allocation1 + $0x18] sm:$0xff pattern:$0x75316420]
    %vm32 = vcmask 1043456
    %v33 = vsel %vm32, %v22, 0.0
    %v34 = vrot.slane %v33, 4
    %v35 = vadd.f32 %v33, %v34
    %v36 = vrot.slane %v35, 2
    %v37 = vadd.f32 %v35, %v36
    %v38 = vrot.slane %v37, 1
    %v39 = vadd.f32 %v37, %v38
    %v40 = vsel %vm32, %v23, 0.0
    %v41 = vrot.slane %v40, 4
    %v42 = vadd.f32 %v40, %v41
    %v43 = vrot.slane %v42, 2
    %v44 = vadd.f32 %v42, %v43
    %v45 = vrot.slane %v44, 1
    %v46 = vadd.f32 %v44, %v45
    %v47 = vsel %vm32, %v26, 0.0
    %v48 = vrot.slane %v47, 4
    %v49 = vadd.f32 %v47, %v48
    %v50 = vrot.slane %v49, 2
    %v51 = vadd.f32 %v49, %v50
    %v52 = vrot.slane %v51, 1
    %v53 = vadd.f32 %v51, %v52
    %v54 = vsel %vm32, %v27, 0.0
    %v55 = vrot.slane %v54, 4
    %v56 = vadd.f32 %v54, %v55
    %v57 = vrot.slane %v56, 2
    %v58 = vadd.f32 %v56, %v57
    %v59 = vrot.slane %v58, 1
    %v60 = vadd.f32 %v58, %v59
    %v61 = vpack.c.bf16 %v39, %v39
    %v62 = vpack.c.bf16 %v46, %v46
    %v63 = vpack.c.bf16 %v53, %v53
    %v64 = vpack.c.bf16 %v60, %v60
    %v65 = vld [vmem:[%s1] sm:$0xf]
    %v66 = vld [vmem:[%s1 + $0x4] sm:$0xf]
    %v67 = vld [vmem:[%s1 + $0x8] sm:$0xf]
    %v68 = vld [vmem:[%s1 + $0xc] sm:$0xf]
    %v69 = vld [vmem:[%s1 + $0x10] sm:$0xf]
    %v70 = vld [vmem:[%s1 + $0x14] sm:$0xf]
    %v71 = vld [vmem:[%s1 + $0x18] sm:$0xf]
    %v72 = vld [vmem:[%s1 + $0x1c] sm:$0xf]
    %v73 = vld [vmem:[%s1 + $0x20] sm:$0xf]
    %v74 = vld [vmem:[%s1 + $0x24] sm:$0xf]
    %v75 = vld [vmem:[%s1 + $0x28] sm:$0xf]
    %v76 = vld [vmem:[%s1 + $0x2c] sm:$0xf]
    %v77 = vld [vmem:[%s1 + $0x30] sm:$0xf]
    %v78 = vld [vmem:[%s1 + $0x34] sm:$0xf]
    %v79 = vld [vmem:[%s1 + $0x38] sm:$0xf]
    %v80 = vld [vmem:[%s1 + $0x3c] sm:$0xf]
    %v81 = vld [vmem:[%s1 + $0x40] sm:$0xf]
    %v82 = vld [vmem:[%s1 + $0x44] sm:$0xf]
    %v83 = vld [vmem:[%s1 + $0x48] sm:$0xf]
    %v84 = vld [vmem:[%s1 + $0x4c] sm:$0xf]
    %v85 = vld [vmem:[%s1 + $0x50] sm:$0xf]
    %v86 = vld [vmem:[%s1 + $0x54] sm:$0xf]
    %v87 = vld [vmem:[%s1 + $0x58] sm:$0xf]
    %v88 = vld [vmem:[%s1 + $0x5c] sm:$0xf]
    %v89 = vld [vmem:[%s1 + $0x60] sm:$0xf]
    %v90 = vld [vmem:[%s1 + $0x64] sm:$0xf]
    %v91 = vld [vmem:[%s1 + $0x68] sm:$0xf]
    %v92 = vld [vmem:[%s1 + $0x6c] sm:$0xf]
    %v93 = vld [vmem:[%s1 + $0x70] sm:$0xf]
    %v94 = vld [vmem:[%s1 + $0x74] sm:$0xf]
    %v95 = vld [vmem:[%s1 + $0x78] sm:$0xf]
    %v96 = vld [vmem:[%s1 + $0x7c] sm:$0xf]
    %v97 = vld [vmem:[%s2] sm:$0x1]
    %v99 = vperm.slane %v97, 0
    %v105 = vunpack.c.l.b16 %v61
    %v106 = vunpack.c.l.b16 %v62
    %v107 = vunpack.c.l.b16 %v63
    %v108 = vunpack.c.l.b16 %v64
    %vm109 = vcmask 1041409
    %v110 = vsel %vm109, %v107, %v105
    %v111 = vsel %vm109, %v108, %v106
    %v112 = vpack.c.b16 %v110, %v110
    %v113 = vpack.c.b16 %v111, %v111
    %v148 = vunpack.c.l.b16 %v65
    %v149 = vunpack.c.l.b16 %v66
    %v150 = vunpack.c.l.b16 %v67
    %v151 = vunpack.c.l.b16 %v68
    %v152 = vunpack.c.l.b16 %v69
    %v153 = vunpack.c.l.b16 %v70
    %v154 = vunpack.c.l.b16 %v71
    %v155 = vunpack.c.l.b16 %v72
    %v156 = vunpack.c.l.b16 %v73
    %v157 = vunpack.c.l.b16 %v74
    %v158 = vunpack.c.l.b16 %v75
    %v159 = vunpack.c.l.b16 %v76
    %v160 = vunpack.c.l.b16 %v77
    %v161 = vunpack.c.l.b16 %v78
    %v162 = vunpack.c.l.b16 %v79
    %v163 = vunpack.c.l.b16 %v80
    %v164 = vunpack.c.l.b16 %v81
    %v165 = vunpack.c.l.b16 %v82
    %v166 = vunpack.c.l.b16 %v83
    %v167 = vunpack.c.l.b16 %v84
    %v168 = vunpack.c.l.b16 %v85
    %v169 = vunpack.c.l.b16 %v86
    %v170 = vunpack.c.l.b16 %v87
    %v171 = vunpack.c.l.b16 %v88
    %v172 = vunpack.c.l.b16 %v89
    %v173 = vunpack.c.l.b16 %v90
    %v174 = vunpack.c.l.b16 %v91
    %v175 = vunpack.c.l.b16 %v92
    %v176 = vunpack.c.l.b16 %v93
    %v177 = vunpack.c.l.b16 %v94
    %v178 = vunpack.c.l.b16 %v95
    %v179 = vunpack.c.l.b16 %v96
    %v180 = vpack.c.b16 %v149, %v148
    %v181 = vpack.c.b16 %v151, %v150
    %v182 = vpack.c.b16 %v153, %v152
    %v183 = vpack.c.b16 %v155, %v154
    %v184 = vpack.c.b16 %v157, %v156
    %v185 = vpack.c.b16 %v159, %v158
    %v186 = vpack.c.b16 %v161, %v160
    %v187 = vpack.c.b16 %v163, %v162
    %v188 = vpack.c.b16 %v165, %v164
    %v189 = vpack.c.b16 %v167, %v166
    %v190 = vpack.c.b16 %v169, %v168
    %v191 = vpack.c.b16 %v171, %v170
    %v192 = vpack.c.b16 %v173, %v172
    %v193 = vpack.c.b16 %v175, %v174
    %v194 = vpack.c.b16 %v177, %v176
    %v195 = vpack.c.b16 %v179, %v178
    %212 = vmatpush.bf16.msra.mxu0 %v187
    %213 = vmatpush.bf16.msra.mxu0 %v186
    %214 = vmatpush.bf16.msra.mxu0 %v185
    %215 = vmatpush.bf16.msra.mxu0 %v184
    %216 = vmatpush.bf16.msra.mxu0 %v183
    %217 = vmatpush.bf16.msra.mxu0 %v182
    %218 = vmatpush.bf16.msra.mxu0 %v181
    %219 = vmatpush.bf16.msra.mxu0 %v180
    %220 = vmatmul.bf16.gmra.mxu0 %v112
    %v221 = vpop.f32.mrf.mxu0
    %v222 = vadd.f32 %v99, %v221
    %v223 = vpop.f32.mrf.mxu0
    %224 = vdwg.mxu0
    %225 = vmatpush.bf16.msra.mxu0 %v195
    %226 = vmatpush.bf16.msra.mxu0 %v194
    %227 = vmatpush.bf16.msra.mxu0 %v193
    %228 = vmatpush.bf16.msra.mxu0 %v192
    %229 = vmatpush.bf16.msra.mxu0 %v191
    %230 = vmatpush.bf16.msra.mxu0 %v190
    %231 = vmatpush.bf16.msra.mxu0 %v189
    %232 = vmatpush.bf16.msra.mxu0 %v188
    %233 = vmatmul.bf16.gmra.mxu0 %v113
    %v234 = vpop.f32.mrf.mxu0
    %v235 = vadd.f32 %v222, %v234
    %v236 = vpop.f32.mrf.mxu0
    %237 = vdwg.mxu0
    %238 = vst [vmem:[#allocation2] sm:$0x3] %v235
    // Predicated region
    $region14: #{cnn_encoder_forward.19} parent=1 // pred_check
      _
    $region15: #{cnn_encoder_forward.19} parent=1 // pred_check_branch
      %240 = sbr.rel (0) target = $region17
    $region16: #{cnn_encoder_forward.19} parent=1 // pred_region
      %242 = vsyncadd [#allocation3], 0
      %s244 = sshll.u32 [#allocation2], 4
      %s245 = int_to_ptr.vmem [resolvable:$true] %s244
      %s246 = sshll.u32 %s3, 4
      %s247 = int_to_ptr.hbm [resolvable:$true] %s246
      %249 = dma.vmem_to_hbm [thread:$0]  %s245, 32, %s247, [#allocation3]
    $region17: #{cnn_encoder_forward.19} parent=1 // pred_fallthru
      _
    // Predicated region
    $region18: #{cnn_encoder_forward.19} parent=1 // pred_check
      _
    $region19: #{cnn_encoder_forward.19} parent=1 // pred_check_branch
      %251 = sbr.rel (0) target = $region21
    $region20: #{cnn_encoder_forward.19} parent=1 // pred_region
      %253 = dma.done [#allocation3], 32
    $region21: #{cnn_encoder_forward.19} parent=1 // pred_fallthru
      _
    %254 = vsyncpa [#allocation3], 1

// kernel: cnn_encoder_forward.18
$region0: #{cnn_encoder_forward.18}
  #allocation0 [shape = 'u32[]', space=smem, size = 0x4, offset = 0x4, fixed_abs, tag = 'smem constant byte address 0x4 - core index']
  #allocation1 [shape = 'u32[72,128]{1,0:T(1,128)}', space=vmem, size = 0x9000, scoped, tag = 'internal scratch']
  #allocation2 [shape = 'f32[16,256]{1,0:T(8,128)}', space=vmem, size = 0x4000, scoped, tag = 'scratch operand']
  %s0 = inlined_call_operand.vmem [shape: bf16[8,896], index: 0, kind: input, shape index: {}]
  %s1 = inlined_call_operand.vmem [shape: bf16[896,256], index: 1, kind: input, shape index: {}]
  %s2 = inlined_call_operand.vmem [shape: f32[1,256], index: 2, kind: input, shape index: {}]
  %s3 = inlined_call_operand.vmem [shape: bf16[8,256], index: 3, kind: output, shape index: {}]
  %s4 = sld [smem:[#allocation0]]
  $region64: #{cnn_encoder_forward.18} parent=0
    _
  %s6 = ssub.s32 1, %s4
  %s7 = scalar_select 0, %s6, %s4
  $region1: #{cnn_encoder_forward.18} parent=0
    #allocation3 [shape = 'u8[8192]{0}', space=vmem, size = 0x2000, scoped, tag = 'output window, operand 0, single buffered']
    // Predicated region
    $region2: #{cnn_encoder_forward.18} parent=1 // pred_check
      _
    $region3: #{cnn_encoder_forward.18} parent=1 // pred_check_branch
      %9 = sbr.rel (0) target = $region5
    $region4: #{cnn_encoder_forward.18} parent=1 // pred_region
      _
    $region5: #{cnn_encoder_forward.18} parent=1 // pred_fallthru
      _
    // Predicated region
    $region6: #{cnn_encoder_forward.18} parent=1 // pred_check
      _
    $region7: #{cnn_encoder_forward.18} parent=1 // pred_check_branch
      %11 = sbr.rel (0) target = $region9
    $region8: #{cnn_encoder_forward.18} parent=1 // pred_region
      _
    $region9: #{cnn_encoder_forward.18} parent=1 // pred_fallthru
      _
    // Predicated region
    $region10: #{cnn_encoder_forward.18} parent=1 // pred_check
      _
    $region11: #{cnn_encoder_forward.18} parent=1 // pred_check_branch
      %13 = sbr.rel (0) target = $region13
    $region12: #{cnn_encoder_forward.18} parent=1 // pred_region
      _
    $region13: #{cnn_encoder_forward.18} parent=1 // pred_fallthru
      _
    %p14 = scmp.eq.s32.totalorder 0, 0
    // Predicated region
    $region14: #{cnn_encoder_forward.18} parent=1 // pred_check
      %p15 = pneg %p14
    $region15: #{cnn_encoder_forward.18} parent=1 // pred_check_branch
      %17 = sbr.rel (%p15) target = $region17
    $region16: #{cnn_encoder_forward.18} parent=1 // pred_region
      %18 = vst [vmem:[#allocation2] sm:$0xff] 0.0
      %19 = vst [vmem:[#allocation2 + $0x8] sm:$0xff] 0.0
      %20 = vst [vmem:[#allocation2 + $0x10] sm:$0xff] 0.0
      %21 = vst [vmem:[#allocation2 + $0x18] sm:$0xff] 0.0
    $region17: #{cnn_encoder_forward.18} parent=1 // pred_fallthru
      _
    %v22 = vld [vmem:[#allocation2] sm:$0xff]
    %v23 = vld [vmem:[#allocation2 + $0x8] sm:$0xff]
    %v24 = vld [vmem:[#allocation2 + $0x10] sm:$0xff]
    %v25 = vld [vmem:[#allocation2 + $0x18] sm:$0xff]
    %v26 = vld [vmem:[%s0] sm:$0xff]
    %v27 = vld [vmem:[%s0 + $0x8] sm:$0xff]
    %v28 = vld [vmem:[%s0 + $0x10] sm:$0xff]
    %v29 = vld [vmem:[%s0 + $0x18] sm:$0xf]
    %v30 = vld [vmem:[%s0 + $0x1c] sm:$0xff]
    %v31 = vld [vmem:[%s0 + $0x24] sm:$0xff]
    %v32 = vld [vmem:[%s0 + $0x2c] sm:$0xff]
    %v33 = vld [vmem:[%s0 + $0x34] sm:$0xf]
    %v34 = vld [vmem:[%s1] sm:$0xff]
    %v35 = vld [vmem:[%s1 + $0x8] sm:$0xff]
    %v36 = vld [vmem:[%s1 + $0x10] sm:$0xff]
    %v37 = vld [vmem:[%s1 + $0x18] sm:$0xff]
    %v38 = vld [vmem:[%s1 + $0x20] sm:$0xff]
    %v39 = vld [vmem:[%s1 + $0x28] sm:$0xff]
    %v40 = vld [vmem:[%s1 + $0x30] sm:$0xff]
    %v41 = vld [vmem:[%s1 + $0x38] sm:$0xff]
    %v42 = vld [vmem:[%s1 + $0x40] sm:$0xff]
    %v43 = vld [vmem:[%s1 + $0x48] sm:$0xff]
    %v44 = vld [vmem:[%s1 + $0x50] sm:$0xff]
    %v45 = vld [vmem:[%s1 + $0x58] sm:$0xff]
    %v46 = vld [vmem:[%s1 + $0x60] sm:$0xff]
    %v47 = vld [vmem:[%s1 + $0x68] sm:$0xff]
    %v48 = vld [vmem:[%s1 + $0x70] sm:$0xff]
    %v49 = vld [vmem:[%s1 + $0x78] sm:$0xff]
    %v50 = vld [vmem:[%s1 + $0x80] sm:$0xff]
    %v51 = vld [vmem:[%s1 + $0x88] sm:$0xff]
    %v52 = vld [vmem:[%s1 + $0x90] sm:$0xff]
    %v53 = vld [vmem:[%s1 + $0x98] sm:$0xff]
    %v54 = vld [vmem:[%s1 + $0xa0] sm:$0xff]
    %v55 = vld [vmem:[%s1 + $0xa8] sm:$0xff]
    %v56 = vld [vmem:[%s1 + $0xb0] sm:$0xff]
    %v57 = vld [vmem:[%s1 + $0xb8] sm:$0xff]
    %v58 = vld [vmem:[%s1 + $0xc0] sm:$0xff]
    %v59 = vld [vmem:[%s1 + $0xc8] sm:$0xff]
    %v60 = vld [vmem:[%s1 + $0xd0] sm:$0xff]
    %v61 = vld [vmem:[%s1 + $0xd8] sm:$0xff]
    %v62 = vld [vmem:[%s1 + $0xe0] sm:$0xff]
    %v63 = vld [vmem:[%s1 + $0xe8] sm:$0xff]
    %v64 = vld [vmem:[%s1 + $0xf0] sm:$0xff]
    %v65 = vld [vmem:[%s1 + $0xf8] sm:$0xff]
    %v66 = vld [vmem:[%s1 + $0x100] sm:$0xff]
    %v67 = vld [vmem:[%s1 + $0x108] sm:$0xff]
    %v68 = vld [vmem:[%s1 + $0x110] sm:$0xff]
    %v69 = vld [vmem:[%s1 + $0x118] sm:$0xff]
    %v70 = vld [vmem:[%s1 + $0x120] sm:$0xff]
    %v71 = vld [vmem:[%s1 + $0x128] sm:$0xff]
    %v72 = vld [vmem:[%s1 + $0x130] sm:$0xff]
    %v73 = vld [vmem:[%s1 + $0x138] sm:$0xff]
    %v74 = vld [vmem:[%s1 + $0x140] sm:$0xff]
    %v75 = vld [vmem:[%s1 + $0x148] sm:$0xff]
    %v76 = vld [vmem:[%s1 + $0x150] sm:$0xff]
    %v77 = vld [vmem:[%s1 + $0x158] sm:$0xff]
    %v78 = vld [vmem:[%s1 + $0x160] sm:$0xff]
    %v79 = vld [vmem:[%s1 + $0x168] sm:$0xff]
    %v80 = vld [vmem:[%s1 + $0x170] sm:$0xff]
    %v81 = vld [vmem:[%s1 + $0x178] sm:$0xff]
    %v82 = vld [vmem:[%s1 + $0x180] sm:$0xff]
    %v83 = vld [vmem:[%s1 + $0x188] sm:$0xff]
    %v84 = vld [vmem:[%s1 + $0x190] sm:$0xff]
    %v85 = vld [vmem:[%s1 + $0x198] sm:$0xff]
    %v86 = vld [vmem:[%s1 + $0x1a0] sm:$0xff]
    %v87 = vld [vmem:[%s1 + $0x1a8] sm:$0xff]
    %v88 = vld [vmem:[%s1 + $0x1b0] sm:$0xff]
    %v89 = vld [vmem:[%s1 + $0x1b8] sm:$0xff]
    %v90 = vld [vmem:[%s1 + $0x1c0] sm:$0xff]
    %v91 = vld [vmem:[%s1 + $0x1c8] sm:$0xff]
    %v92 = vld [vmem:[%s1 + $0x1d0] sm:$0xff]
    %v93 = vld [vmem:[%s1 + $0x1d8] sm:$0xff]
    %v94 = vld [vmem:[%s1 + $0x1e0] sm:$0xff]
    %v95 = vld [vmem:[%s1 + $0x1e8] sm:$0xff]
    %v96 = vld [vmem:[%s1 + $0x1f0] sm:$0xff]
    %v97 = vld [vmem:[%s1 + $0x1f8] sm:$0xff]
    %v98 = vld [vmem:[%s1 + $0x200] sm:$0xff]
    %v99 = vld [vmem:[%s1 + $0x208] sm:$0xff]
    %v100 = vld [vmem:[%s1 + $0x210] sm:$0xff]
    %v101 = vld [vmem:[%s1 + $0x218] sm:$0xff]
    %v102 = vld [vmem:[%s1 + $0x220] sm:$0xff]
    %v103 = vld [vmem:[%s1 + $0x228] sm:$0xff]
    %v104 = vld [vmem:[%s1 + $0x230] sm:$0xff]
    %v105 = vld [vmem:[%s1 + $0x238] sm:$0xff]
    %v106 = vld [vmem:[%s1 + $0x240] sm:$0xff]
    %v107 = vld [vmem:[%s1 + $0x248] sm:$0xff]
    %v108 = vld [vmem:[%s1 + $0x250] sm:$0xff]
    %v109 = vld [vmem:[%s1 + $0x258] sm:$0xff]
    %v110 = vld [vmem:[%s1 + $0x260] sm:$0xff]
    %v111 = vld [vmem:[%s1 + $0x268] sm:$0xff]
    %v112 = vld [vmem:[%s1 + $0x270] sm:$0xff]
    %v113 = vld [vmem:[%s1 + $0x278] sm:$0xff]
    %v114 = vld [vmem:[%s1 + $0x280] sm:$0xff]
    %v115 = vld [vmem:[%s1 + $0x288] sm:$0xff]
    %v116 = vld [vmem:[%s1 + $0x290] sm:$0xff]
    %v117 = vld [vmem:[%s1 + $0x298] sm:$0xff]
    %v118 = vld [vmem:[%s1 + $0x2a0] sm:$0xff]
    %v119 = vld [vmem:[%s1 + $0x2a8] sm:$0xff]
    %v120 = vld [vmem:[%s1 + $0x2b0] sm:$0xff]
    %v121 = vld [vmem:[%s1 + $0x2b8] sm:$0xff]
    %v122 = vld [vmem:[%s1 + $0x2c0] sm:$0xff]
    %v123 = vld [vmem:[%s1 + $0x2c8] sm:$0xff]
    %v124 = vld [vmem:[%s1 + $0x2d0] sm:$0xff]
    %v125 = vld [vmem:[%s1 + $0x2d8] sm:$0xff]
    %v126 = vld [vmem:[%s1 + $0x2e0] sm:$0xff]
    %v127 = vld [vmem:[%s1 + $0x2e8] sm:$0xff]
    %v128 = vld [vmem:[%s1 + $0x2f0] sm:$0xff]
    %v129 = vld [vmem:[%s1 + $0x2f8] sm:$0xff]
    %v130 = vld [vmem:[%s1 + $0x300] sm:$0xff]
    %v131 = vld [vmem:[%s1 + $0x308] sm:$0xff]
    %v132 = vld [vmem:[%s1 + $0x310] sm:$0xff]
    %v133 = vld [vmem:[%s1 + $0x318] sm:$0xff]
    %v134 = vld [vmem:[%s1 + $0x320] sm:$0xff]
    %v135 = vld [vmem:[%s1 + $0x328] sm:$0xff]
    %v136 = vld [vmem:[%s1 + $0x330] sm:$0xff]
    %v137 = vld [vmem:[%s1 + $0x338] sm:$0xff]
    %v138 = vld [vmem:[%s1 + $0x340] sm:$0xff]
    %v139 = vld [vmem:[%s1 + $0x348] sm:$0xff]
    %v140 = vld [vmem:[%s1 + $0x350] sm:$0xff]
    %v141 = vld [vmem:[%s1 + $0x358] sm:$0xff]
    %v142 = vld [vmem:[%s1 + $0x360] sm:$0xff]
    %v143 = vld [vmem:[%s1 + $0x368] sm:$0xff]
    %v144 = vld [vmem:[%s1 + $0x370] sm:$0xff]
    %v145 = vld [vmem:[%s1 + $0x378] sm:$0xff]
    %v154 = vunpack.c.l.b16 %v26
    %v155 = vunpack.c.h.b16 %v26
    %v156 = vunpack.c.l.b16 %v27
    %v157 = vunpack.c.h.b16 %v27
    %v158 = vunpack.c.l.b16 %v28
    %v159 = vunpack.c.h.b16 %v28
    %v160 = vunpack.c.l.b16 %v29
    %v161 = vunpack.c.l.b16 %v30
    %v162 = vunpack.c.h.b16 %v30
    %v163 = vunpack.c.l.b16 %v31
    %v164 = vunpack.c.h.b16 %v31
    %v165 = vunpack.c.l.b16 %v32
    %v166 = vunpack.c.h.b16 %v32
    %v167 = vunpack.c.l.b16 %v33
    %v168 = vpack.c.b16 %v161, %v154
    %v169 = vpack.c.b16 %v162, %v155
    %v170 = vpack.c.b16 %v163, %v156
    %v171 = vpack.c.b16 %v164, %v157
    %v172 = vpack.c.b16 %v165, %v158
    %v173 = vpack.c.b16 %v166, %v159
    %v174 = vpack.c.b16 %v167, %v160
    %v294 = vunpack.c.l.b16 %v34
    %v295 = vunpack.c.h.b16 %v34
    %v296 = vunpack.c.l.b16 %v35
    %v297 = vunpack.c.h.b16 %v35
    %v298 = vunpack.c.l.b16 %v36
    %v299 = vunpack.c.h.b16 %v36
    %v300 = vunpack.c.l.b16 %v37
    %v301 = vunpack.c.h.b16 %v37
    %v302 = vunpack.c.l.b16 %v38
    %v303 = vunpack.c.h.b16 %v38
    %v304 = vunpack.c.l.b16 %v39
    %v305 = vunpack.c.h.b16 %v39
    %v306 = vunpack.c.l.b16 %v40
    %v307 = vunpack.c.h.b16 %v40
    %v308 = vunpack.c.l.b16 %v41
    %v309 = vunpack.c.h.b16 %v41
    %v310 = vunpack.c.l.b16 %v42
    %v311 = vunpack.c.h.b16 %v42
    %v312 = vunpack.c.l.b16 %v43
    %v313 = vunpack.c.h.b16 %v43
    %v314 = vunpack.c.l.b16 %v44
    %v315 = vunpack.c.h.b16 %v44
    %v316 = vunpack.c.l.b16 %v45
    %v317 = vunpack.c.h.b16 %v45
    %v318 = vunpack.c.l.b16 %v46
    %v319 = vunpack.c.h.b16 %v46
    %v320 = vunpack.c.l.b16 %v47
    %v321 = vunpack.c.h.b16 %v47
    %v322 = vunpack.c.l.b16 %v48
    %v323 = vunpack.c.h.b16 %v48
    %v324 = vunpack.c.l.b16 %v49
    %v325 = vunpack.c.h.b16 %v49
    %v326 = vunpack.c.l.b16 %v50
    %v327 = vunpack.c.h.b16 %v50
    %v328 = vunpack.c.l.b16 %v51
    %v329 = vunpack.c.h.b16 %v51
    %v330 = vunpack.c.l.b16 %v52
    %v331 = vunpack.c.h.b16 %v52
    %v332 = vunpack.c.l.b16 %v53
    %v333 = vunpack.c.h.b16 %v53
    %v334 = vunpack.c.l.b16 %v54
    %v335 = vunpack.c.h.b16 %v54
    %v336 = vunpack.c.l.b16 %v55
    %v337 = vunpack.c.h.b16 %v55
    %v338 = vunpack.c.l.b16 %v56
    %v339 = vunpack.c.h.b16 %v56
    %v340 = vunpack.c.l.b16 %v57
    %v341 = vunpack.c.h.b16 %v57
    %v342 = vunpack.c.l.b16 %v58
    %v343 = vunpack.c.h.b16 %v58
    %v344 = vunpack.c.l.b16 %v59
    %v345 = vunpack.c.h.b16 %v59
    %v346 = vunpack.c.l.b16 %v60
    %v347 = vunpack.c.h.b16 %v60
    %v348 = vunpack.c.l.b16 %v61
    %v349 = vunpack.c.h.b16 %v61
    %v350 = vunpack.c.l.b16 %v62
    %v351 = vunpack.c.h.b16 %v62
    %v352 = vunpack.c.l.b16 %v63
    %v353 = vunpack.c.h.b16 %v63
    %v354 = vunpack.c.l.b16 %v64
    %v355 = vunpack.c.h.b16 %v64
    %v356 = vunpack.c.l.b16 %v65
    %v357 = vunpack.c.h.b16 %v65
    %v358 = vunpack.c.l.b16 %v66
    %v359 = vunpack.c.h.b16 %v66
    %v360 = vunpack.c.l.b16 %v67
    %v361 = vunpack.c.h.b16 %v67
    %v362 = vunpack.c.l.b16 %v68
    %v363 = vunpack.c.h.b16 %v68
    %v364 = vunpack.c.l.b16 %v69
    %v365 = vunpack.c.h.b16 %v69
    %v366 = vunpack.c.l.b16 %v70
    %v367 = vunpack.c.h.b16 %v70
    %v368 = vunpack.c.l.b16 %v71
    %v369 = vunpack.c.h.b16 %v71
    %v370 = vunpack.c.l.b16 %v72
    %v371 = vunpack.c.h.b16 %v72
    %v372 = vunpack.c.l.b16 %v73
    %v373 = vunpack.c.h.b16 %v73
    %v374 = vunpack.c.l.b16 %v74
    %v375 = vunpack.c.h.b16 %v74
    %v376 = vunpack.c.l.b16 %v75
    %v377 = vunpack.c.h.b16 %v75
    %v378 = vunpack.c.l.b16 %v76
    %v379 = vunpack.c.h.b16 %v76
    %v380 = vunpack.c.l.b16 %v77
    %v381 = vunpack.c.h.b16 %v77
    %v382 = vunpack.c.l.b16 %v78
    %v383 = vunpack.c.h.b16 %v78
    %v384 = vunpack.c.l.b16 %v79
    %v385 = vunpack.c.h.b16 %v79
    %v386 = vunpack.c.l.b16 %v80
    %v387 = vunpack.c.h.b16 %v80
    %v388 = vunpack.c.l.b16 %v81
    %v389 = vunpack.c.h.b16 %v81
    %v390 = vunpack.c.l.b16 %v82
    %v391 = vunpack.c.h.b16 %v82
    %v392 = vunpack.c.l.b16 %v83
    %v393 = vunpack.c.h.b16 %v83
    %v394 = vunpack.c.l.b16 %v84
    %v395 = vunpack.c.h.b16 %v84
    %v396 = vunpack.c.l.b16 %v85
    %v397 = vunpack.c.h.b16 %v85
    %v398 = vunpack.c.l.b16 %v86
    %v399 = vunpack.c.h.b16 %v86
    %v400 = vunpack.c.l.b16 %v87
    %v401 = vunpack.c.h.b16 %v87
    %v402 = vunpack.c.l.b16 %v88
    %v403 = vunpack.c.h.b16 %v88
    %v404 = vunpack.c.l.b16 %v89
    %v405 = vunpack.c.h.b16 %v89
    %v406 = vunpack.c.l.b16 %v90
    %v407 = vunpack.c.h.b16 %v90
    %v408 = vunpack.c.l.b16 %v91
    %v409 = vunpack.c.h.b16 %v91
    %v410 = vunpack.c.l.b16 %v92
    %v411 = vunpack.c.h.b16 %v92
    %v412 = vunpack.c.l.b16 %v93
    %v413 = vunpack.c.h.b16 %v93
    %v414 = vunpack.c.l.b16 %v94
    %v415 = vunpack.c.h.b16 %v94
    %v416 = vunpack.c.l.b16 %v95
    %v417 = vunpack.c.h.b16 %v95
    %v418 = vunpack.c.l.b16 %v96
    %v419 = vunpack.c.h.b16 %v96
    %v420 = vunpack.c.l.b16 %v97
    %v421 = vunpack.c.h.b16 %v97
    %v422 = vunpack.c.l.b16 %v98
    %v423 = vunpack.c.h.b16 %v98
    %v424 = vunpack.c.l.b16 %v99
    %v425 = vunpack.c.h.b16 %v99
    %v426 = vunpack.c.l.b16 %v100
    %v427 = vunpack.c.h.b16 %v100
    %v428 = vunpack.c.l.b16 %v101
    %v429 = vunpack.c.h.b16 %v101
    %v430 = vunpack.c.l.b16 %v102
    %v431 = vunpack.c.h.b16 %v102
    %v432 = vunpack.c.l.b16 %v103
    %v433 = vunpack.c.h.b16 %v103
    %v434 = vunpack.c.l.b16 %v104
    %v435 = vunpack.c.h.b16 %v104
    %v436 = vunpack.c.l.b16 %v105
    %v437 = vunpack.c.h.b16 %v105
    %v438 = vunpack.c.l.b16 %v106
    %v439 = vunpack.c.h.b16 %v106
    %v440 = vunpack.c.l.b16 %v107
    %v441 = vunpack.c.h.b16 %v107
    %v442 = vunpack.c.l.b16 %v108
    %v443 = vunpack.c.h.b16 %v108
    %v444 = vunpack.c.l.b16 %v109
    %v445 = vunpack.c.h.b16 %v109
    %v446 = vunpack.c.l.b16 %v110
    %v447 = vunpack.c.h.b16 %v110
    %v448 = vunpack.c.l.b16 %v111
    %v449 = vunpack.c.h.b16 %v111
    %v450 = vunpack.c.l.b16 %v112
    %v451 = vunpack.c.h.b16 %v112
    %v452 = vunpack.c.l.b16 %v113
    %v453 = vunpack.c.h.b16 %v113
    %v454 = vunpack.c.l.b16 %v114
    %v455 = vunpack.c.h.b16 %v114
    %v456 = vunpack.c.l.b16 %v115
    %v457 = vunpack.c.h.b16 %v115
    %v458 = vunpack.c.l.b16 %v116
    %v459 = vunpack.c.h.b16 %v116
    %v460 = vunpack.c.l.b16 %v117
    %v461 = vunpack.c.h.b16 %v117
    %v462 = vunpack.c.l.b16 %v118
    %v463 = vunpack.c.h.b16 %v118
    %v464 = vunpack.c.l.b16 %v119
    %v465 = vunpack.c.h.b16 %v119
    %v466 = vunpack.c.l.b16 %v120
    %v467 = vunpack.c.h.b16 %v120
    %v468 = vunpack.c.l.b16 %v121
    %v469 = vunpack.c.h.b16 %v121
    %v470 = vunpack.c.l.b16 %v122
    %v471 = vunpack.c.h.b16 %v122
    %v472 = vunpack.c.l.b16 %v123
    %v473 = vunpack.c.h.b16 %v123
    %v474 = vunpack.c.l.b16 %v124
    %v475 = vunpack.c.h.b16 %v124
    %v476 = vunpack.c.l.b16 %v125
    %v477 = vunpack.c.h.b16 %v125
    %v478 = vunpack.c.l.b16 %v126
    %v479 = vunpack.c.h.b16 %v126
    %v480 = vunpack.c.l.b16 %v127
    %v481 = vunpack.c.h.b16 %v127
    %v482 = vunpack.c.l.b16 %v128
    %v483 = vunpack.c.h.b16 %v128
    %v484 = vunpack.c.l.b16 %v129
    %v485 = vunpack.c.h.b16 %v129
    %v486 = vunpack.c.l.b16 %v130
    %v487 = vunpack.c.h.b16 %v130
    %v488 = vunpack.c.l.b16 %v131
    %v489 = vunpack.c.h.b16 %v131
    %v490 = vunpack.c.l.b16 %v132
    %v491 = vunpack.c.h.b16 %v132
    %v492 = vunpack.c.l.b16 %v133
    %v493 = vunpack.c.h.b16 %v133
    %v494 = vunpack.c.l.b16 %v134
    %v495 = vunpack.c.h.b16 %v134
    %v496 = vunpack.c.l.b16 %v135
    %v497 = vunpack.c.h.b16 %v135
    %v498 = vunpack.c.l.b16 %v136
    %v499 = vunpack.c.h.b16 %v136
    %v500 = vunpack.c.l.b16 %v137
    %v501 = vunpack.c.h.b16 %v137
    %v502 = vunpack.c.l.b16 %v138
    %v503 = vunpack.c.h.b16 %v138
    %v504 = vunpack.c.l.b16 %v139
    %v505 = vunpack.c.h.b16 %v139
    %v506 = vunpack.c.l.b16 %v140
    %v507 = vunpack.c.h.b16 %v140
    %v508 = vunpack.c.l.b16 %v141
    %v509 = vunpack.c.h.b16 %v141
    %v510 = vunpack.c.l.b16 %v142
    %v511 = vunpack.c.h.b16 %v142
    %v512 = vunpack.c.l.b16 %v143
    %v513 = vunpack.c.h.b16 %v143
    %v514 = vunpack.c.l.b16 %v144
    %v515 = vunpack.c.h.b16 %v144
    %v516 = vunpack.c.l.b16 %v145
    %v517 = vunpack.c.h.b16 %v145
    %v518 = vpack.c.b16 %v296, %v294
    %v519 = vpack.c.b16 %v297, %v295
    %v520 = vpack.c.b16 %v300, %v298
    %v521 = vpack.c.b16 %v301, %v299
    %v522 = vpack.c.b16 %v304, %v302
    %v523 = vpack.c.b16 %v305, %v303
    %v524 = vpack.c.b16 %v308, %v306
    %v525 = vpack.c.b16 %v309, %v307
    %v526 = vpack.c.b16 %v312, %v310
    %v527 = vpack.c.b16 %v313, %v311
    %v528 = vpack.c.b16 %v316, %v314
    %v529 = vpack.c.b16 %v317, %v315
    %v530 = vpack.c.b16 %v320, %v318
    %v531 = vpack.c.b16 %v321, %v319
    %v532 = vpack.c.b16 %v324, %v322
    %v533 = vpack.c.b16 %v325, %v323
    %v534 = vpack.c.b16 %v328, %v326
    %v535 = vpack.c.b16 %v329, %v327
    %v536 = vpack.c.b16 %v332, %v330
    %v537 = vpack.c.b16 %v333, %v331
    %v538 = vpack.c.b16 %v336, %v334
    %v539 = vpack.c.b16 %v337, %v335
    %v540 = vpack.c.b16 %v340, %v338
    %v541 = vpack.c.b16 %v341, %v339
    %v542 = vpack.c.b16 %v344, %v342
    %v543 = vpack.c.b16 %v345, %v343
    %v544 = vpack.c.b16 %v348, %v346
    %v545 = vpack.c.b16 %v349, %v347
    %v546 = vpack.c.b16 %v352, %v350
    %v547 = vpack.c.b16 %v353, %v351
    %v548 = vpack.c.b16 %v356, %v354
    %v549 = vpack.c.b16 %v357, %v355
    %v550 = vpack.c.b16 %v360, %v358
    %v551 = vpack.c.b16 %v361, %v359
    %v552 = vpack.c.b16 %v364, %v362
    %v553 = vpack.c.b16 %v365, %v363
    %v554 = vpack.c.b16 %v368, %v366
    %v555 = vpack.c.b16 %v369, %v367
    %v556 = vpack.c.b16 %v372, %v370
    %v557 = vpack.c.b16 %v373, %v371
    %v558 = vpack.c.b16 %v376, %v374
    %v559 = vpack.c.b16 %v377, %v375
    %v560 = vpack.c.b16 %v380, %v378
    %v561 = vpack.c.b16 %v381, %v379
    %v562 = vpack.c.b16 %v384, %v382
    %v563 = vpack.c.b16 %v385, %v383
    %v564 = vpack.c.b16 %v388, %v386
    %v565 = vpack.c.b16 %v389, %v387
    %v566 = vpack.c.b16 %v392, %v390
    %v567 = vpack.c.b16 %v393, %v391
    %v568 = vpack.c.b16 %v396, %v394
    %v569 = vpack.c.b16 %v397, %v395
    %v570 = vpack.c.b16 %v400, %v398
    %v571 = vpack.c.b16 %v401, %v399
    %v572 = vpack.c.b16 %v404, %v402
    %v573 = vpack.c.b16 %v405, %v403
    %v574 = vpack.c.b16 %v408, %v406
    %v575 = vpack.c.b16 %v409, %v407
    %v576 = vpack.c.b16 %v412, %v410
    %v577 = vpack.c.b16 %v413, %v411
    %v578 = vpack.c.b16 %v416, %v414
    %v579 = vpack.c.b16 %v417, %v415
    %v580 = vpack.c.b16 %v420, %v418
    %v581 = vpack.c.b16 %v421, %v419
    %v582 = vpack.c.b16 %v424, %v422
    %v583 = vpack.c.b16 %v425, %v423
    %v584 = vpack.c.b16 %v428, %v426
    %v585 = vpack.c.b16 %v429, %v427
    %v586 = vpack.c.b16 %v432, %v430
    %v587 = vpack.c.b16 %v433, %v431
    %v588 = vpack.c.b16 %v436, %v434
    %v589 = vpack.c.b16 %v437, %v435
    %v590 = vpack.c.b16 %v440, %v438
    %v591 = vpack.c.b16 %v441, %v439
    %v592 = vpack.c.b16 %v444, %v442
    %v593 = vpack.c.b16 %v445, %v443
    %v594 = vpack.c.b16 %v448, %v446
    %v595 = vpack.c.b16 %v449, %v447
    %v596 = vpack.c.b16 %v452, %v450
    %v597 = vpack.c.b16 %v453, %v451
    %v598 = vpack.c.b16 %v456, %v454
    %v599 = vpack.c.b16 %v457, %v455
    %v600 = vpack.c.b16 %v460, %v458
    %v601 = vpack.c.b16 %v461, %v459
    %v602 = vpack.c.b16 %v464, %v462
    %v603 = vpack.c.b16 %v465, %v463
    %v604 = vpack.c.b16 %v468, %v466
    %v605 = vpack.c.b16 %v469, %v467
    %v606 = vpack.c.b16 %v472, %v470
    %v607 = vpack.c.b16 %v473, %v471
    %v608 = vpack.c.b16 %v476, %v474
    %v609 = vpack.c.b16 %v477, %v475
    %v610 = vpack.c.b16 %v480, %v478
    %v611 = vpack.c.b16 %v481, %v479
    %v612 = vpack.c.b16 %v484, %v482
    %v613 = vpack.c.b16 %v485, %v483
    %v614 = vpack.c.b16 %v488, %v486
    %v615 = vpack.c.b16 %v489, %v487
    %v616 = vpack.c.b16 %v492, %v490
    %v617 = vpack.c.b16 %v493, %v491
    %v618 = vpack.c.b16 %v496, %v494
    %v619 = vpack.c.b16 %v497, %v495
    %v620 = vpack.c.b16 %v500, %v498
    %v621 = vpack.c.b16 %v501, %v499
    %v622 = vpack.c.b16 %v504, %v502
    %v623 = vpack.c.b16 %v505, %v503
    %v624 = vpack.c.b16 %v508, %v506
    %v625 = vpack.c.b16 %v509, %v507
    %v626 = vpack.c.b16 %v512, %v510
    %v627 = vpack.c.b16 %v513, %v511
    %v628 = vpack.c.b16 %v516, %v514
    %v629 = vpack.c.b16 %v517, %v515
    %742 = vmatpush.bf16.msra.mxu0 %v532
    %743 = vmatpush.bf16.msra.mxu0 %v530
    %744 = vmatpush.bf16.msra.mxu0 %v528
    %745 = vmatpush.bf16.msra.mxu0 %v526
    %746 = vmatpush.bf16.msra.mxu0 %v524
    %747 = vmatpush.bf16.msra.mxu0 %v522
    %748 = vmatpush.bf16.msra.mxu0 %v520
    %749 = vmatpush.bf16.msra.mxu0 %v518
    %750 = vmatmul.bf16.gmra.mxu0 %v168
    %v751 = vpop.f32.mrf.mxu0
    %v752 = vadd.f32 0.0, %v751
    %v753 = vpop.f32.mrf.mxu0
    %v754 = vadd.f32 0.0, %v753
    %755 = vdwg.mxu0
    %756 = vmatpush.bf16.msra.mxu0 %v548
    %757 = vmatpush.bf16.msra.mxu0 %v546
    %758 = vmatpush.bf16.msra.mxu0 %v544
    %759 = vmatpush.bf16.msra.mxu0 %v542
    %760 = vmatpush.bf16.msra.mxu0 %v540
    %761 = vmatpush.bf16.msra.mxu0 %v538
    %762 = vmatpush.bf16.msra.mxu0 %v536
    %763 = vmatpush.bf16.msra.mxu0 %v534
    %764 = vmatmul.bf16.gmra.mxu0 %v169
    %v765 = vpop.f32.mrf.mxu0
    %v766 = vadd.f32 %v752, %v765
    %v767 = vpop.f32.mrf.mxu0
    %v768 = vadd.f32 %v754, %v767
    %769 = vdwg.mxu0
    %770 = vmatpush.bf16.msra.mxu0 %v564
    %771 = vmatpush.bf16.msra.mxu0 %v562
    %772 = vmatpush.bf16.msra.mxu0 %v560
    %773 = vmatpush.bf16.msra.mxu0 %v558
    %774 = vmatpush.bf16.msra.mxu0 %v556
    %775 = vmatpush.bf16.msra.mxu0 %v554
    %776 = vmatpush.bf16.msra.mxu0 %v552
    %777 = vmatpush.bf16.msra.mxu0 %v550
    %778 = vmatmul.bf16.gmra.mxu0 %v170
    %v779 = vpop.f32.mrf.mxu0
    %v780 = vadd.f32 %v766, %v779
    %v781 = vpop.f32.mrf.mxu0
    %v782 = vadd.f32 %v768, %v781
    %783 = vdwg.mxu0
    %784 = vmatpush.bf16.msra.mxu0 %v580
    %785 = vmatpush.bf16.msra.mxu0 %v578
    %786 = vmatpush.bf16.msra.mxu0 %v576
    %787 = vmatpush.bf16.msra.mxu0 %v574
    %788 = vmatpush.bf16.msra.mxu0 %v572
    %789 = vmatpush.bf16.msra.mxu0 %v570
    %790 = vmatpush.bf16.msra.mxu0 %v568
    %791 = vmatpush.bf16.msra.mxu0 %v566
    %792 = vmatmul.bf16.gmra.mxu0 %v171
    %v793 = vpop.f32.mrf.mxu0
    %v794 = vadd.f32 %v780, %v793
    %v795 = vpop.f32.mrf.mxu0
    %v796 = vadd.f32 %v782, %v795
    %797 = vdwg.mxu0
    %798 = vmatpush.bf16.msra.mxu0 %v596
    %799 = vmatpush.bf16.msra.mxu0 %v594
    %800 = vmatpush.bf16.msra.mxu0 %v592
    %801 = vmatpush.bf16.msra.mxu0 %v590
    %802 = vmatpush.bf16.msra.mxu0 %v588
    %803 = vmatpush.bf16.msra.mxu0 %v586
    %804 = vmatpush.bf16.msra.mxu0 %v584
    %805 = vmatpush.bf16.msra.mxu0 %v582
    %806 = vmatmul.bf16.gmra.mxu0 %v172
    %v807 = vpop.f32.mrf.mxu0
    %v808 = vadd.f32 %v794, %v807
    %v809 = vpop.f32.mrf.mxu0
    %v810 = vadd.f32 %v796, %v809
    %811 = vdwg.mxu0
    %812 = vmatpush.bf16.msra.mxu0 %v612
    %813 = vmatpush.bf16.msra.mxu0 %v610
    %814 = vmatpush.bf16.msra.mxu0 %v608
    %815 = vmatpush.bf16.msra.mxu0 %v606
    %816 = vmatpush.bf16.msra.mxu0 %v604
    %817 = vmatpush.bf16.msra.mxu0 %v602
    %818 = vmatpush.bf16.msra.mxu0 %v600
    %819 = vmatpush.bf16.msra.mxu0 %v598
    %820 = vmatmul.bf16.gmra.mxu0 %v173
    %v821 = vpop.f32.mrf.mxu0
    %v822 = vadd.f32 %v808, %v821
    %v823 = vpop.f32.mrf.mxu0
    %v824 = vadd.f32 %v810, %v823
    %825 = vdwg.mxu0
    %826 = vmatpush.bf16.msra.mxu0 %v628
    %827 = vmatpush.bf16.msra.mxu0 %v626
    %828 = vmatpush.bf16.msra.mxu0 %v624
    %829 = vmatpush.bf16.msra.mxu0 %v622
    %830 = vmatpush.bf16.msra.mxu0 %v620
    %831 = vmatpush.bf16.msra.mxu0 %v618
    %832 = vmatpush.bf16.msra.mxu0 %v616
    %833 = vmatpush.bf16.msra.mxu0 %v614
    %834 = vmatmul.bf16.gmra.mxu0 %v174
    %v835 = vpop.f32.mrf.mxu0
    %v836 = vadd.f32 %v822, %v835
    %v837 = vpop.f32.mrf.mxu0
    %v838 = vadd.f32 %v824, %v837
    %839 = vdwg.mxu0
    %840 = vmatpush.bf16.msra.mxu0 %v533
    %841 = vmatpush.bf16.msra.mxu0 %v531
    %842 = vmatpush.bf16.msra.mxu0 %v529
    %843 = vmatpush.bf16.msra.mxu0 %v527
    %844 = vmatpush.bf16.msra.mxu0 %v525
    %845 = vmatpush.bf16.msra.mxu0 %v523
    %846 = vmatpush.bf16.msra.mxu0 %v521
    %847 = vmatpush.bf16.msra.mxu0 %v519
    %848 = vmatmul.bf16.gmra.mxu0 %v168
    %v849 = vpop.f32.mrf.mxu0
    %v850 = vadd.f32 0.0, %v849
    %v851 = vpop.f32.mrf.mxu0
    %v852 = vadd.f32 0.0, %v851
    %853 = vdwg.mxu0
    %854 = vmatpush.bf16.msra.mxu0 %v549
    %855 = vmatpush.bf16.msra.mxu0 %v547
    %856 = vmatpush.bf16.msra.mxu0 %v545
    %857 = vmatpush.bf16.msra.mxu0 %v543
    %858 = vmatpush.bf16.msra.mxu0 %v541
    %859 = vmatpush.bf16.msra.mxu0 %v539
    %860 = vmatpush.bf16.msra.mxu0 %v537
    %861 = vmatpush.bf16.msra.mxu0 %v535
    %862 = vmatmul.bf16.gmra.mxu0 %v169
    %v863 = vpop.f32.mrf.mxu0
    %v864 = vadd.f32 %v850, %v863
    %v865 = vpop.f32.mrf.mxu0
    %v866 = vadd.f32 %v852, %v865
    %867 = vdwg.mxu0
    %868 = vmatpush.bf16.msra.mxu0 %v565
    %869 = vmatpush.bf16.msra.mxu0 %v563
    %870 = vmatpush.bf16.msra.mxu0 %v561
    %871 = vmatpush.bf16.msra.mxu0 %v559
    %872 = vmatpush.bf16.msra.mxu0 %v557
    %873 = vmatpush.bf16.msra.mxu0 %v555
    %874 = vmatpush.bf16.msra.mxu0 %v553
    %875 = vmatpush.bf16.msra.mxu0 %v551
    %876 = vmatmul.bf16.gmra.mxu0 %v170
    %v877 = vpop.f32.mrf.mxu0
    %v878 = vadd.f32 %v864, %v877
    %v879 = vpop.f32.mrf.mxu0
    %v880 = vadd.f32 %v866, %v879
    %881 = vdwg.mxu0
    %882 = vmatpush.bf16.msra.mxu0 %v581
    %883 = vmatpush.bf16.msra.mxu0 %v579
    %884 = vmatpush.bf16.msra.mxu0 %v577
    %885 = vmatpush.bf16.msra.mxu0 %v575
    %886 = vmatpush.bf16.msra.mxu0 %v573
    %887 = vmatpush.bf16.msra.mxu0 %v571
    %888 = vmatpush.bf16.msra.mxu0 %v569
    %889 = vmatpush.bf16.msra.mxu0 %v567
    %890 = vmatmul.bf16.gmra.mxu0 %v171
    %v891 = vpop.f32.mrf.mxu0
    %v892 = vadd.f32 %v878, %v891
    %v893 = vpop.f32.mrf.mxu0
    %v894 = vadd.f32 %v880, %v893
    %895 = vdwg.mxu0
    %896 = vmatpush.bf16.msra.mxu0 %v597
    %897 = vmatpush.bf16.msra.mxu0 %v595
    %898 = vmatpush.bf16.msra.mxu0 %v593
    %899 = vmatpush.bf16.msra.mxu0 %v591
    %900 = vmatpush.bf16.msra.mxu0 %v589
    %901 = vmatpush.bf16.msra.mxu0 %v587
    %902 = vmatpush.bf16.msra.mxu0 %v585
    %903 = vmatpush.bf16.msra.mxu0 %v583
    %904 = vmatmul.bf16.gmra.mxu0 %v172
    %v905 = vpop.f32.mrf.mxu0
    %v906 = vadd.f32 %v892, %v905
    %v907 = vpop.f32.mrf.mxu0
    %v908 = vadd.f32 %v894, %v907
    %909 = vdwg.mxu0
    %910 = vmatpush.bf16.msra.mxu0 %v613
    %911 = vmatpush.bf16.msra.mxu0 %v611
    %912 = vmatpush.bf16.msra.mxu0 %v609
    %913 = vmatpush.bf16.msra.mxu0 %v607
    %914 = vmatpush.bf16.msra.mxu0 %v605
    %915 = vmatpush.bf16.msra.mxu0 %v603
    %916 = vmatpush.bf16.msra.mxu0 %v601
    %917 = vmatpush.bf16.msra.mxu0 %v599
    %918 = vmatmul.bf16.gmra.mxu0 %v173
    %v919 = vpop.f32.mrf.mxu0
    %v920 = vadd.f32 %v906, %v919
    %v921 = vpop.f32.mrf.mxu0
    %v922 = vadd.f32 %v908, %v921
    %923 = vdwg.mxu0
    %924 = vmatpush.bf16.msra.mxu0 %v629
    %925 = vmatpush.bf16.msra.mxu0 %v627
    %926 = vmatpush.bf16.msra.mxu0 %v625
    %927 = vmatpush.bf16.msra.mxu0 %v623
    %928 = vmatpush.bf16.msra.mxu0 %v621
    %929 = vmatpush.bf16.msra.mxu0 %v619
    %930 = vmatpush.bf16.msra.mxu0 %v617
    %931 = vmatpush.bf16.msra.mxu0 %v615
    %932 = vmatmul.bf16.gmra.mxu0 %v174
    %v933 = vpop.f32.mrf.mxu0
    %v934 = vadd.f32 %v920, %v933
    %v935 = vpop.f32.mrf.mxu0
    %v936 = vadd.f32 %v922, %v935
    %937 = vdwg.mxu0
    %v938 = vadd.f32 %v22, %v836
    %v939 = vadd.f32 %v23, %v934
    %v940 = vadd.f32 %v24, %v838
    %v941 = vadd.f32 %v25, %v936
    %942 = vst [vmem:[#allocation2] sm:$0xff] %v938
    %943 = vst [vmem:[#allocation2 + $0x8] sm:$0xff] %v939
    %944 = vst [vmem:[#allocation2 + $0x10] sm:$0xff] %v940
    %945 = vst [vmem:[#allocation2 + $0x18] sm:$0xff] %v941
    // Predicated region
    $region18: #{cnn_encoder_forward.18} parent=1 // pred_check
      %p946 = pneg %p14
    $region19: #{cnn_encoder_forward.18} parent=1 // pred_check_branch
      %948 = sbr.rel (%p946) target = $region21
    $region20: #{cnn_encoder_forward.18} parent=1 // pred_region
      %v949 = vld [vmem:[#allocation2] sm:$0xff]
      %v950 = vld [vmem:[#allocation2 + $0x8] sm:$0xff]
      %v951 = vld [vmem:[#allocation2 + $0x10] sm:$0xff]
      %v952 = vld [vmem:[#allocation2 + $0x18] sm:$0xff]
      %v953 = vld [vmem:[%s2] sm:$0x3]
      %v955 = vperm.slane %v953, 0
      %v956 = vperm.slane %v953, 1
      %v959 = vadd.f32 %v949, %v955
      %v960 = vadd.f32 %v950, %v956
      %v961 = vadd.f32 %v951, %v955
      %v962 = vadd.f32 %v952, %v956
      %v963 = vmax.f32 %v959, 0.0
      %v964 = vmax.f32 %v960, 0.0
      %v965 = vmax.f32 %v961, 0.0
      %v966 = vmax.f32 %v962, 0.0
      %v967 = vpack.c.bf16 %v964, %v963
      %v968 = vpack.c.bf16 %v966, %v965
      %969 = vst [vmem:[#allocation3] sm:$0xff] %v967
      %970 = vst [vmem:[#allocation3 + $0x8] sm:$0xff] %v968
    $region21: #{cnn_encoder_forward.18} parent=1 // pred_fallthru
      _
    // Predicated region
    $region22: #{cnn_encoder_forward.18} parent=1 // pred_check
      _
    $region23: #{cnn_encoder_forward.18} parent=1 // pred_check_branch
      %972 = sbr.rel (0) target = $region25
    $region24: #{cnn_encoder_forward.18} parent=1 // pred_region
      // Predicated region
      $region26: #{cnn_encoder_forward.18} parent=24 // pred_check
        _
      $region27: #{cnn_encoder_forward.18} parent=24 // pred_check_branch
        %974 = sbr.rel (0) target = $region29
      $region28: #{cnn_encoder_forward.18} parent=24 // pred_region
        // Predicated region
        $region30: #{cnn_encoder_forward.18} parent=28 // pred_check
          _
        $region31: #{cnn_encoder_forward.18} parent=28 // pred_check_branch
          %976 = sbr.rel (0) target = $region33
        $region32: #{cnn_encoder_forward.18} parent=28 // pred_region
          // Predicated region
          $region45: #{cnn_encoder_forward.18} parent=32 // pred_check
            _
          $region46: #{cnn_encoder_forward.18} parent=32 // pred_check_branch
            %992 = sbr.rel (0) target = $region48
          $region47: #{cnn_encoder_forward.18} parent=32 // pred_region
            loop: start=0, step=1, limit=1
            $region49: #{cnn_encoder_forward.18} parent=47 // loop_pre_header
              _
            $region50: #{cnn_encoder_forward.18} parent=47 // loop_header
              %s994 = sphi 0, %s998
              %p995 = scmp.ge.s32.totalorder %s994, 1
              %s999 = sphi [#allocation3], [#allocation3]
              %s1000 = sphi %s3, %s3
            $region51: #{cnn_encoder_forward.18} parent=47 // loop_header_branch
              %997 = sbr.rel (%p995) target = $region55
            $region52: #{cnn_encoder_forward.18} parent=47 // loop_body
              %v1001 = vld [vmem:[%s999] sm:$0xff]
              %1002 = vst [vmem:[%s1000] sm:$0xff] %v1001
            $region53: #{cnn_encoder_forward.18} parent=47 // loop_footer
              %s998 = sadd.s32 1, %s994
            $region54: #{cnn_encoder_forward.18} parent=47 // loop_footer_branch
              %993 = sbr.rel target = $region50
            $region55: #{cnn_encoder_forward.18} parent=47 // loop_exit
              _
          $region48: #{cnn_encoder_forward.18} parent=32 // pred_fallthru
            _
          // Predicated region
          $region56: #{cnn_encoder_forward.18} parent=32 // pred_check
            _
          $region57: #{cnn_encoder_forward.18} parent=32 // pred_check_branch
            %1004 = sbr.rel target = $region59
          $region58: #{cnn_encoder_forward.18} parent=32 // pred_region
            _
          $region59: #{cnn_encoder_forward.18} parent=32 // pred_fallthru
            _
        $region33: #{cnn_encoder_forward.18} parent=28 // pred_fallthru
          _
        // Predicated region
        $region34: #{cnn_encoder_forward.18} parent=28 // pred_check
          _
        $region35: #{cnn_encoder_forward.18} parent=28 // pred_check_branch
          %978 = sbr.rel target = $region37
        $region36: #{cnn_encoder_forward.18} parent=28 // pred_region
          %s980 = ssub.s32 256, 1
          loop: start=0, step=1, limit=1
          $region38: #{cnn_encoder_forward.18} parent=36 // loop_pre_header
            _
          $region39: #{cnn_encoder_forward.18} parent=36 // loop_header
            %s982 = sphi 0, %s986
            %p983 = scmp.ge.s32.totalorder %s982, 1
            %s987 = sphi [#allocation3], [#allocation3]
            %s988 = sphi %s3, %s3
          $region40: #{cnn_encoder_forward.18} parent=36 // loop_header_branch
            %985 = sbr.rel (%p983) target = $region44
          $region41: #{cnn_encoder_forward.18} parent=36 // loop_body
            %v989 = vld [vmem:[%s987] sm:%s980]
            %990 = vst [vmem:[%s988] sm:%s980] %v989
          $region42: #{cnn_encoder_forward.18} parent=36 // loop_footer
            %s986 = sadd.s32 1, %s982
          $region43: #{cnn_encoder_forward.18} parent=36 // loop_footer_branch
            %981 = sbr.rel target = $region39
          $region44: #{cnn_encoder_forward.18} parent=36 // loop_exit
            _
        $region37: #{cnn_encoder_forward.18} parent=28 // pred_fallthru
          _
      $region29: #{cnn_encoder_forward.18} parent=24 // pred_fallthru
        _
      %1005 = vnop
    $region25: #{cnn_encoder_forward.18} parent=1 // pred_fallthru
      _
    // Predicated region
    $region60: #{cnn_encoder_forward.18} parent=1 // pred_check
      _
    $region61: #{cnn_encoder_forward.18} parent=1 // pred_check_branch
      %1007 = sbr.rel (0) target = $region63
    $region62: #{cnn_encoder_forward.18} parent=1 // pred_region
      _
    $region63: #{cnn_encoder_forward.18} parent=1 // pred_fallthru
      _

</llo_original>
